<compile_context>
chip_gen: v5e
topology: v5e:2x2
jax: 0.10.0
libtpu: 0.0.40
codegen_flags: <defaults>
</compile_context>

<pallas_src>
import functools

import jax
import jax.numpy as jnp
from jax import lax
from jax.experimental import pallas as pl
from jax.experimental.pallas import tpu as pltpu

EPS = 1e-6
BALL_EPS = 1e-5
BN_EPS = 1e-5


# ---------------- Poincare-ball math on (channels, rows) slabs ----------------
# Manifold (channel) dimension is axis 0 (sublanes, <=16 deep); rows are on the
# 128-lane axis, so channel reductions are cheap sublane reductions.
def _artanh(x):
    x = jnp.clip(x, -1.0 + BALL_EPS, 1.0 - BALL_EPS)
    # Exact divide: near the boundary 1/(1-x) ~ 1e5, approx-rcp error would leak
    # straight into logmap0 magnitudes.
    return 0.5 * jnp.log((1.0 + x) / (1.0 - x))


def _logmap0(x):
    sq = jnp.sum(x * x, axis=0, keepdims=True)
    inv_n = lax.rsqrt(jnp.maximum(sq, EPS * EPS))     # 1 / max(||x||, EPS)
    n = jnp.clip(sq * inv_n, EPS, 1.0 - BALL_EPS)     # ||x|| (clipped to ball)
    return x * (_artanh(n) * inv_n)


def _expmap0(v):
    sq = jnp.sum(v * v, axis=0, keepdims=True)
    inv_n = lax.rsqrt(jnp.maximum(sq, EPS * EPS))
    n = jnp.maximum(sq * inv_n, EPS)
    return v * (jnp.tanh(n) * inv_n)


def _project(x):
    sq = jnp.sum(x * x, axis=0, keepdims=True)
    max_n = 1.0 - BALL_EPS
    inv_n = lax.rsqrt(jnp.maximum(sq, EPS * EPS))
    scale = jnp.where(sq > max_n * max_n, max_n * inv_n, 1.0)
    return x * scale


def _batchnorm(y, gamma, beta):
    # Whole slab is resident (grid=()) so the statistics are a correct global
    # single pass: lane-axis mean/var on (C, rows).
    mean = jnp.mean(y, axis=1, keepdims=True)
    var = jnp.mean(jnp.square(y - mean), axis=1, keepdims=True)
    scale = gamma * lax.rsqrt(var + BN_EPS)
    return y * scale + (beta - mean * scale)


def _mobius_join_relu(r, v):
    # expmap0 both tangent inputs onto the ball, mobius_add (c=1), project,
    # logmap0 back to the tangent space, ReLU.
    x = _expmap0(r)
    y = _expmap0(v)
    xy = jnp.sum(x * y, axis=0, keepdims=True)
    x2 = jnp.sum(x * x, axis=0, keepdims=True)
    y2 = jnp.sum(y * y, axis=0, keepdims=True)
    num = (1.0 + 2.0 * xy + y2) * x + (1.0 - x2) * y
    den = jnp.maximum(1.0 + 2.0 * xy + x2 * y2, EPS)
    z = _project(num / den)
    return jnp.maximum(_logmap0(z), 0.0)


# ------------------------------- Pallas kernels --------------------------------
def logmap0_kernel(x_ref, o_ref):
    o_ref[...] = _logmap0(x_ref[...])


def conv_bn_kernel(w_ref, p_ref, b_ref, g_ref, beta_ref, o_ref, *, relu):
    # Fused conv (as (Cout,KKC) @ (KKC,rows) matmul) + bias + BatchNorm + ReLU.
    y = jnp.dot(w_ref[...], p_ref[...], preferred_element_type=jnp.float32)
    y = _batchnorm(y + b_ref[...], g_ref[...], beta_ref[...])
    if relu:
        y = jnp.maximum(y, 0.0)
    o_ref[...] = y


def block_tail_kernel(w2_ref, p2_ref, b2_ref, g2_ref, be2_ref, r_ref, o_ref):
    # conv2 + bn2 + Mobius residual join (identity shortcut) + ReLU, fused.
    v = jnp.dot(w2_ref[...], p2_ref[...], preferred_element_type=jnp.float32)
    v = _batchnorm(v + b2_ref[...], g2_ref[...], be2_ref[...])
    o_ref[...] = _mobius_join_relu(r_ref[...], v)


def block_tail_ds_kernel(w2_ref, p2_ref, b2_ref, g2_ref, be2_ref,
                         wd_ref, pd_ref, bd_ref, o_ref):
    # conv2 + bn2 + 1x1 downsample conv on the shortcut + Mobius join + ReLU.
    v = jnp.dot(w2_ref[...], p2_ref[...], preferred_element_type=jnp.float32)
    v = _batchnorm(v + b2_ref[...], g2_ref[...], be2_ref[...])
    r = jnp.dot(wd_ref[...], pd_ref[...], preferred_element_type=jnp.float32)
    o_ref[...] = _mobius_join_relu(r + bd_ref[...], v)


def head_kernel(v_ref, pool_ref, w_ref, b_ref, o_ref):
    # Fused HAvgPool2d(8) (global spatial mean of the final 8x8 map, expressed
    # as a matmul with a tiny pooling matrix) + HLinear + expmap0 onto the ball.
    pooled = jnp.dot(v_ref[...], pool_ref[...], preferred_element_type=jnp.float32)
    logits = jnp.dot(w_ref[...], pooled, preferred_element_type=jnp.float32) + b_ref[...]
    o_ref[...] = _expmap0(logits)


# --------------------------------- wrappers -------------------------------------
def _vmem_spec():
    return pl.BlockSpec(memory_space=pltpu.MemorySpace.VMEM)


def _call(kernel, out_shape, *args):
    # grid=() : single invocation, every operand mapped whole into VMEM.
    return pl.pallas_call(
        kernel,
        out_shape=jax.ShapeDtypeStruct(out_shape, jnp.float32),
        in_specs=[_vmem_spec() for _ in args],
        out_specs=_vmem_spec(),
    )(*args)


def _im2col_cf(u4, k, stride, pad):
    # u4: (C, N, H, W) tangent activation (channels-first).  Builds the
    # transposed patch matrix (k*k*C, N*OH*OW) so the conv matmul output is
    # lane-dense (Cout, rows) without any extra transpose.
    c, n, h, w = u4.shape
    if pad:
        u4 = jnp.pad(u4, ((0, 0), (0, 0), (pad, pad), (pad, pad)))
    oh = (h + 2 * pad - k) // stride + 1
    ow = (w + 2 * pad - k) // stride + 1
    cols = []
    for i in range(k):
        for j in range(k):
            cols.append(u4[:, :, i:i + stride * oh:stride, j:j + stride * ow:stride])
    p = jnp.concatenate(cols, axis=0)                 # (k*k*C, N, OH, OW)
    return p.reshape(k * k * c, n * oh * ow), oh, ow


def conv_bn_tangent(u4, conv_p, bn_p, *, ksize, stride, pad, relu):
    # TODO(synk): hypll HConvolution2d is a Poincare FC over beta-concatenated
    # patches and HBatchNorm2d uses Frechet mean/variance; the tangent-space
    # (logmap0) lift is used here, fused into a single pallas_call.
    w, b = conv_p
    gamma, beta = bn_p
    cout = w.shape[0]
    p, oh, ow = _im2col_cf(u4, ksize, stride, pad)
    n = u4.shape[1]
    out = _call(functools.partial(conv_bn_kernel, relu=relu),
                (cout, n * oh * ow), w, p, b, gamma, beta)
    return out.reshape(cout, n, oh, ow)


def residual_block(u4, blk):
    # u4: (Cin, N, H, W) tangent activation of the block input.
    v4 = conv_bn_tangent(u4, blk['conv1'], blk['bn1'],
                         ksize=3, stride=blk['stride'], pad=1, relu=True)
    w2, b2 = blk['conv2']
    g2, be2 = blk['bn2']
    cout = w2.shape[0]
    p2, oh, ow = _im2col_cf(v4, 3, 1, 1)
    n = v4.shape[1]
    rows = n * oh * ow
    if blk['downsample'] is not None:
        wd, bd = blk['downsample']
        pd, _, _ = _im2col_cf(u4, 1, blk['stride'], 0)   # strided spatial subsample
        out = _call(block_tail_ds_kernel, (cout, rows),
                    w2, p2, b2, g2, be2, wd, pd, bd)
    else:
        out = _call(block_tail_kernel, (cout, rows),
                    w2, p2, b2, g2, be2, u4.reshape(cout, rows))
    return out.reshape(cout, n, oh, ow)


def head_tangent(u4, fc_p):
    # TODO(synk): hypll HAvgPool2d uses the gyro-midpoint and HLinear the Poincare
    # hyperplane form; tangent-space mean + affine + expmap0 is used here.
    w_fc, b_fc = fc_p
    c, n, h, w = u4.shape
    v = u4.reshape(c, n * h * w)
    pool = jnp.repeat(jnp.eye(n, dtype=jnp.float32), h * w, axis=0) / float(h * w)
    out = _call(head_kernel, (w_fc.shape[0], n), v, pool, w_fc, b_fc)
    return out.T                                      # (N, 10), points on the ball


# ------------------------------ model definition --------------------------------
def poincare_resnet_forward(x_nchw, params):
    n, c, h, w = x_nchw.shape
    xb = jnp.transpose(x_nchw, (1, 0, 2, 3)).reshape(c, n * h * w)   # ball coords
    u = _call(logmap0_kernel, (c, n * h * w), xb).reshape(c, n, h, w)  # -> tangent
    u = conv_bn_tangent(u, params['conv'], params['bn'],
                        ksize=3, stride=1, pad=1, relu=True)
    for group in params['groups']:
        for blk in group:
            u = residual_block(u, blk)
    return head_tangent(u, params['fc'])              # (N, 10)


def init_params(key, channel_sizes=(4, 8, 16), group_depths=(1, 1, 1)):
    keys = list(jax.random.split(key, 256))
    ctr = iter(range(len(keys)))

    def conv_p(cin, cout, k):
        w = jax.random.normal(keys[next(ctr)], (cout, k * k * cin), jnp.float32)
        w = w * (0.1 / (k * k * cin) ** 0.5)
        b = jnp.zeros((cout, 1), jnp.float32)
        return (w, b)

    def bn_p(c):
        return (jnp.ones((c, 1), jnp.float32), jnp.zeros((c, 1), jnp.float32))

    def block_p(cin, cout, stride):
        ds = conv_p(cin, cout, 1) if (stride != 1 or cin != cout) else None
        return {'stride': stride,
                'conv1': conv_p(cin, cout, 3), 'bn1': bn_p(cout),
                'conv2': conv_p(cout, cout, 3), 'bn2': bn_p(cout),
                'downsample': ds}

    def group_p(cin, cout, depth, stride):
        blocks = [block_p(cin, cout, stride)]
        for _ in range(1, depth):
            blocks.append(block_p(cout, cout, 1))
        return blocks

    c0, c1, c2 = channel_sizes
    return {
        'conv': conv_p(3, c0, 3),
        'bn': bn_p(c0),
        'groups': [group_p(c0, c0, group_depths[0], 1),
                   group_p(c0, c1, group_depths[1], 2),
                   group_p(c1, c2, group_depths[2], 2)],
        'fc': conv_p(c2, 10, 1),                      # weight (10, c2), bias (10, 1)
    }


if __name__ == "__main__":
    key = jax.random.PRNGKey(0)
    pkey, xkey = jax.random.split(key)
    params = init_params(pkey, channel_sizes=(4, 8, 16), group_depths=(1, 1, 1))

    # 32x32 spatial so the hard-coded HAvgPool2d(kernel_size=8) pools 8x8 -> 1x1.
    N, H, W = 2, 32, 32
    x_eu = jax.random.normal(xkey, (N, 3, H, W), jnp.float32) * 0.3

    # Map the Euclidean input onto the Poincare ball (manifold dim = channels),
    # mirroring the ManifoldTensor input of the torch module.
    norm = jnp.sqrt(jnp.sum(x_eu * x_eu, axis=1, keepdims=True))
    norm = jnp.maximum(norm, EPS)
    x = x_eu * (jnp.tanh(norm) / norm)                # NCHW, on the ball

    fwd = jax.jit(lambda xin: poincare_resnet_forward(xin, params))
    out = jax.block_until_ready(fwd(x))
    assert out.shape == (N, 10), out.shape
    assert bool(jnp.all(jnp.isfinite(out)))
    print("KERNEL_OK")
</pallas_src>

<mosaic_0001>
module attributes {stable_mosaic.version = 11 : i64} {
  func.func @logmap0_kernel(%arg0: memref<3x2048xf32, #tpu.memory_space<vmem>>, %arg1: memref<3x2048xf32, #tpu.memory_space<vmem>>) attributes {dimension_semantics = [], scalar_prefetch = 0 : i64, scratch_operands = 0 : i64, tpu.core_type = #tpu.core_type<tc>} {
    %c0 = arith.constant 0 : index
    %c0_0 = arith.constant 0 : index
    %0 = vector.load %arg0[%c0, %c0_0] : memref<3x2048xf32, #tpu.memory_space<vmem>>, vector<3x2048xf32>
    %1 = arith.mulf %0, %0 : vector<3x2048xf32>
    %cst = arith.constant dense<0.000000e+00> : vector<2048xf32>
    %2 = vector.multi_reduction <add>, %1, %cst [0] : vector<3x2048xf32> to vector<2048xf32>
    %3 = vector.shape_cast %2 : vector<2048xf32> to vector<1x2048xf32>
    %cst_1 = arith.constant 9.99999996E-13 : f32
    %4 = vector.broadcast %cst_1 : f32 to vector<1x2048xf32>
    %5 = arith.maximumf %3, %4 : vector<1x2048xf32>
    %6 = math.rsqrt %5 : vector<1x2048xf32>
    %7 = arith.mulf %3, %6 : vector<1x2048xf32>
    %cst_2 = arith.constant 9.99999997E-7 : f32
    %cst_3 = arith.constant 0.999989986 : f32
    %8 = vector.broadcast %cst_2 : f32 to vector<1x2048xf32>
    %9 = arith.maximumf %8, %7 : vector<1x2048xf32>
    %10 = vector.broadcast %cst_3 : f32 to vector<1x2048xf32>
    %11 = arith.minimumf %10, %9 : vector<1x2048xf32>
    %cst_4 = arith.constant -0.999989986 : f32
    %cst_5 = arith.constant 0.999989986 : f32
    %12 = vector.broadcast %cst_4 : f32 to vector<1x2048xf32>
    %13 = arith.maximumf %12, %11 : vector<1x2048xf32>
    %14 = vector.broadcast %cst_5 : f32 to vector<1x2048xf32>
    %15 = arith.minimumf %14, %13 : vector<1x2048xf32>
    %cst_6 = arith.constant 1.000000e+00 : f32
    %16 = vector.broadcast %cst_6 : f32 to vector<1x2048xf32>
    %17 = arith.addf %16, %15 : vector<1x2048xf32>
    %cst_7 = arith.constant 1.000000e+00 : f32
    %18 = vector.broadcast %cst_7 : f32 to vector<1x2048xf32>
    %19 = arith.subf %18, %15 : vector<1x2048xf32>
    %20 = arith.divf %17, %19 : vector<1x2048xf32>
    %21 = math.log %20 : vector<1x2048xf32>
    %cst_8 = arith.constant 5.000000e-01 : f32
    %22 = vector.broadcast %cst_8 : f32 to vector<1x2048xf32>
    %23 = arith.mulf %22, %21 : vector<1x2048xf32>
    %24 = arith.mulf %23, %6 : vector<1x2048xf32>
    %25 = vector.broadcast %24 : vector<1x2048xf32> to vector<3x2048xf32>
    %26 = arith.mulf %0, %25 : vector<3x2048xf32>
    %c0_9 = arith.constant 0 : index
    %c0_10 = arith.constant 0 : index
    %27 = vector.load %arg1[%c0_9, %c0_10] : memref<3x2048xf32, #tpu.memory_space<vmem>>, vector<3x2048xf32>
    tpu.vector_store %arg1[%c0_9, %c0_10], %26 {strides = array<i32>} : memref<3x2048xf32, #tpu.memory_space<vmem>>, vector<3x2048xf32>,
    return
  }
}

module attributes {stable_mosaic.version = 11 : i64} {
  func.func @conv_bn_kernel(%arg0: memref<4x27xf32, #tpu.memory_space<vmem>>, %arg1: memref<27x2048xf32, #tpu.memory_space<vmem>>, %arg2: memref<4x1xf32, #tpu.memory_space<vmem>>, %arg3: memref<4x1xf32, #tpu.memory_space<vmem>>, %arg4: memref<4x1xf32, #tpu.memory_space<vmem>>, %arg5: memref<4x2048xf32, #tpu.memory_space<vmem>>) attributes {dimension_semantics = [], scalar_prefetch = 0 : i64, scratch_operands = 0 : i64, tpu.core_type = #tpu.core_type<tc>} {
    %c0 = arith.constant 0 : index
    %c0_0 = arith.constant 0 : index
    %0 = vector.load %arg0[%c0, %c0_0] : memref<4x27xf32, #tpu.memory_space<vmem>>, vector<4x27xf32>
    %c0_1 = arith.constant 0 : index
    %c0_2 = arith.constant 0 : index
    %1 = vector.load %arg1[%c0_1, %c0_2] : memref<27x2048xf32, #tpu.memory_space<vmem>>, vector<27x2048xf32>
    %cst = arith.constant dense<0.000000e+00> : vector<4x2048xf32>
    %2 = tpu.matmul %0, %1, %cst {dimension_numbers = #tpu.dot_dimension_numbers<[1], [0], [0], [1], [0, 0, 1, 1], [], []>} : vector<4x27xf32>, vector<27x2048xf32>, vector<4x2048xf32> -> vector<4x2048xf32>
    %c0_3 = arith.constant 0 : index
    %c0_4 = arith.constant 0 : index
    %3 = vector.load %arg2[%c0_3, %c0_4] : memref<4x1xf32, #tpu.memory_space<vmem>>, vector<4x1xf32>
    %4 = vector.broadcast %3 : vector<4x1xf32> to vector<4x2048xf32>
    %5 = arith.addf %2, %4 : vector<4x2048xf32>
    %c0_5 = arith.constant 0 : index
    %c0_6 = arith.constant 0 : index
    %6 = vector.load %arg3[%c0_5, %c0_6] : memref<4x1xf32, #tpu.memory_space<vmem>>, vector<4x1xf32>
    %c0_7 = arith.constant 0 : index
    %c0_8 = arith.constant 0 : index
    %7 = vector.load %arg4[%c0_7, %c0_8] : memref<4x1xf32, #tpu.memory_space<vmem>>, vector<4x1xf32>
    %cst_9 = arith.constant dense<0.000000e+00> : vector<4xf32>
    %8 = vector.multi_reduction <add>, %5, %cst_9 [1] : vector<4x2048xf32> to vector<4xf32>
    %9 = vector.shape_cast %8 : vector<4xf32> to vector<4x1xf32>
    %cst_10 = arith.constant 2.048000e+03 : f32
    %10 = vector.broadcast %cst_10 : f32 to vector<4x1xf32>
    %11 = arith.divf %9, %10 : vector<4x1xf32>
    %12 = vector.broadcast %11 : vector<4x1xf32> to vector<4x2048xf32>
    %13 = arith.subf %5, %12 : vector<4x2048xf32>
    %14 = arith.mulf %13, %13 : vector<4x2048xf32>
    %cst_11 = arith.constant dense<0.000000e+00> : vector<4xf32>
    %15 = vector.multi_reduction <add>, %14, %cst_11 [1] : vector<4x2048xf32> to vector<4xf32>
    %16 = vector.shape_cast %15 : vector<4xf32> to vector<4x1xf32>
    %cst_12 = arith.constant 2.048000e+03 : f32
    %17 = vector.broadcast %cst_12 : f32 to vector<4x1xf32>
    %18 = arith.divf %16, %17 : vector<4x1xf32>
    %cst_13 = arith.constant 9.99999974E-6 : f32
    %19 = vector.broadcast %cst_13 : f32 to vector<4x1xf32>
    %20 = arith.addf %18, %19 : vector<4x1xf32>
    %21 = math.rsqrt %20 : vector<4x1xf32>
    %22 = arith.mulf %6, %21 : vector<4x1xf32>
    %23 = vector.broadcast %22 : vector<4x1xf32> to vector<4x2048xf32>
    %24 = arith.mulf %5, %23 : vector<4x2048xf32>
    %25 = arith.mulf %11, %22 : vector<4x1xf32>
    %26 = arith.subf %7, %25 : vector<4x1xf32>
    %27 = vector.broadcast %26 : vector<4x1xf32> to vector<4x2048xf32>
    %28 = arith.addf %24, %27 : vector<4x2048xf32>
    %cst_14 = arith.constant 0.000000e+00 : f32
    %29 = vector.broadcast %cst_14 : f32 to vector<4x2048xf32>
    %30 = arith.maximumf %28, %29 : vector<4x2048xf32>
    %c0_15 = arith.constant 0 : index
    %c0_16 = arith.constant 0 : index
    %31 = vector.load %arg5[%c0_15, %c0_16] : memref<4x2048xf32, #tpu.memory_space<vmem>>, vector<4x2048xf32>
    tpu.vector_store %arg5[%c0_15, %c0_16], %30 {strides = array<i32>} : memref<4x2048xf32, #tpu.memory_space<vmem>>, vector<4x2048xf32>,
    return
  }
}

module attributes {stable_mosaic.version = 11 : i64} {
  func.func @conv_bn_kernel(%arg0: memref<4x36xf32, #tpu.memory_space<vmem>>, %arg1: memref<36x2048xf32, #tpu.memory_space<vmem>>, %arg2: memref<4x1xf32, #tpu.memory_space<vmem>>, %arg3: memref<4x1xf32, #tpu.memory_space<vmem>>, %arg4: memref<4x1xf32, #tpu.memory_space<vmem>>, %arg5: memref<4x2048xf32, #tpu.memory_space<vmem>>) attributes {dimension_semantics = [], scalar_prefetch = 0 : i64, scratch_operands = 0 : i64, tpu.core_type = #tpu.core_type<tc>} {
    %c0 = arith.constant 0 : index
    %c0_0 = arith.constant 0 : index
    %0 = vector.load %arg0[%c0, %c0_0] : memref<4x36xf32, #tpu.memory_space<vmem>>, vector<4x36xf32>
    %c0_1 = arith.constant 0 : index
    %c0_2 = arith.constant 0 : index
    %1 = vector.load %arg1[%c0_1, %c0_2] : memref<36x2048xf32, #tpu.memory_space<vmem>>, vector<36x2048xf32>
    %cst = arith.constant dense<0.000000e+00> : vector<4x2048xf32>
    %2 = tpu.matmul %0, %1, %cst {dimension_numbers = #tpu.dot_dimension_numbers<[1], [0], [0], [1], [0, 0, 1, 1], [], []>} : vector<4x36xf32>, vector<36x2048xf32>, vector<4x2048xf32> -> vector<4x2048xf32>
    %c0_3 = arith.constant 0 : index
    %c0_4 = arith.constant 0 : index
    %3 = vector.load %arg2[%c0_3, %c0_4] : memref<4x1xf32, #tpu.memory_space<vmem>>, vector<4x1xf32>
    %4 = vector.broadcast %3 : vector<4x1xf32> to vector<4x2048xf32>
    %5 = arith.addf %2, %4 : vector<4x2048xf32>
    %c0_5 = arith.constant 0 : index
    %c0_6 = arith.constant 0 : index
    %6 = vector.load %arg3[%c0_5, %c0_6] : memref<4x1xf32, #tpu.memory_space<vmem>>, vector<4x1xf32>
    %c0_7 = arith.constant 0 : index
    %c0_8 = arith.constant 0 : index
    %7 = vector.load %arg4[%c0_7, %c0_8] : memref<4x1xf32, #tpu.memory_space<vmem>>, vector<4x1xf32>
    %cst_9 = arith.constant dense<0.000000e+00> : vector<4xf32>
    %8 = vector.multi_reduction <add>, %5, %cst_9 [1] : vector<4x2048xf32> to vector<4xf32>
    %9 = vector.shape_cast %8 : vector<4xf32> to vector<4x1xf32>
    %cst_10 = arith.constant 2.048000e+03 : f32
    %10 = vector.broadcast %cst_10 : f32 to vector<4x1xf32>
    %11 = arith.divf %9, %10 : vector<4x1xf32>
    %12 = vector.broadcast %11 : vector<4x1xf32> to vector<4x2048xf32>
    %13 = arith.subf %5, %12 : vector<4x2048xf32>
    %14 = arith.mulf %13, %13 : vector<4x2048xf32>
    %cst_11 = arith.constant dense<0.000000e+00> : vector<4xf32>
    %15 = vector.multi_reduction <add>, %14, %cst_11 [1] : vector<4x2048xf32> to vector<4xf32>
    %16 = vector.shape_cast %15 : vector<4xf32> to vector<4x1xf32>
    %cst_12 = arith.constant 2.048000e+03 : f32
    %17 = vector.broadcast %cst_12 : f32 to vector<4x1xf32>
    %18 = arith.divf %16, %17 : vector<4x1xf32>
    %cst_13 = arith.constant 9.99999974E-6 : f32
    %19 = vector.broadcast %cst_13 : f32 to vector<4x1xf32>
    %20 = arith.addf %18, %19 : vector<4x1xf32>
    %21 = math.rsqrt %20 : vector<4x1xf32>
    %22 = arith.mulf %6, %21 : vector<4x1xf32>
    %23 = vector.broadcast %22 : vector<4x1xf32> to vector<4x2048xf32>
    %24 = arith.mulf %5, %23 : vector<4x2048xf32>
    %25 = arith.mulf %11, %22 : vector<4x1xf32>
    %26 = arith.subf %7, %25 : vector<4x1xf32>
    %27 = vector.broadcast %26 : vector<4x1xf32> to vector<4x2048xf32>
    %28 = arith.addf %24, %27 : vector<4x2048xf32>
    %cst_14 = arith.constant 0.000000e+00 : f32
    %29 = vector.broadcast %cst_14 : f32 to vector<4x2048xf32>
    %30 = arith.maximumf %28, %29 : vector<4x2048xf32>
    %c0_15 = arith.constant 0 : index
    %c0_16 = arith.constant 0 : index
    %31 = vector.load %arg5[%c0_15, %c0_16] : memref<4x2048xf32, #tpu.memory_space<vmem>>, vector<4x2048xf32>
    tpu.vector_store %arg5[%c0_15, %c0_16], %30 {strides = array<i32>} : memref<4x2048xf32, #tpu.memory_space<vmem>>, vector<4x2048xf32>,
    return
  }
}

module attributes {stable_mosaic.version = 11 : i64} {
  func.func @block_tail_kernel(%arg0: memref<4x36xf32, #tpu.memory_space<vmem>>, %arg1: memref<36x2048xf32, #tpu.memory_space<vmem>>, %arg2: memref<4x1xf32, #tpu.memory_space<vmem>>, %arg3: memref<4x1xf32, #tpu.memory_space<vmem>>, %arg4: memref<4x1xf32, #tpu.memory_space<vmem>>, %arg5: memref<4x2048xf32, #tpu.memory_space<vmem>>, %arg6: memref<4x2048xf32, #tpu.memory_space<vmem>>) attributes {dimension_semantics = [], scalar_prefetch = 0 : i64, scratch_operands = 0 : i64, tpu.core_type = #tpu.core_type<tc>} {
    %c0 = arith.constant 0 : index
    %c0_0 = arith.constant 0 : index
    %0 = vector.load %arg0[%c0, %c0_0] : memref<4x36xf32, #tpu.memory_space<vmem>>, vector<4x36xf32>
    %c0_1 = arith.constant 0 : index
    %c0_2 = arith.constant 0 : index
    %1 = vector.load %arg1[%c0_1, %c0_2] : memref<36x2048xf32, #tpu.memory_space<vmem>>, vector<36x2048xf32>
    %cst = arith.constant dense<0.000000e+00> : vector<4x2048xf32>
    %2 = tpu.matmul %0, %1, %cst {dimension_numbers = #tpu.dot_dimension_numbers<[1], [0], [0], [1], [0, 0, 1, 1], [], []>} : vector<4x36xf32>, vector<36x2048xf32>, vector<4x2048xf32> -> vector<4x2048xf32>
    %c0_3 = arith.constant 0 : index
    %c0_4 = arith.constant 0 : index
    %3 = vector.load %arg2[%c0_3, %c0_4] : memref<4x1xf32, #tpu.memory_space<vmem>>, vector<4x1xf32>
    %4 = vector.broadcast %3 : vector<4x1xf32> to vector<4x2048xf32>
    %5 = arith.addf %2, %4 : vector<4x2048xf32>
    %c0_5 = arith.constant 0 : index
    %c0_6 = arith.constant 0 : index
    %6 = vector.load %arg3[%c0_5, %c0_6] : memref<4x1xf32, #tpu.memory_space<vmem>>, vector<4x1xf32>
    %c0_7 = arith.constant 0 : index
    %c0_8 = arith.constant 0 : index
    %7 = vector.load %arg4[%c0_7, %c0_8] : memref<4x1xf32, #tpu.memory_space<vmem>>, vector<4x1xf32>
    %cst_9 = arith.constant dense<0.000000e+00> : vector<4xf32>
    %8 = vector.multi_reduction <add>, %5, %cst_9 [1] : vector<4x2048xf32> to vector<4xf32>
    %9 = vector.shape_cast %8 : vector<4xf32> to vector<4x1xf32>
    %cst_10 = arith.constant 2.048000e+03 : f32
    %10 = vector.broadcast %cst_10 : f32 to vector<4x1xf32>
    %11 = arith.divf %9, %10 : vector<4x1xf32>
    %12 = vector.broadcast %11 : vector<4x1xf32> to vector<4x2048xf32>
    %13 = arith.subf %5, %12 : vector<4x2048xf32>
    %14 = arith.mulf %13, %13 : vector<4x2048xf32>
    %cst_11 = arith.constant dense<0.000000e+00> : vector<4xf32>
    %15 = vector.multi_reduction <add>, %14, %cst_11 [1] : vector<4x2048xf32> to vector<4xf32>
    %16 = vector.shape_cast %15 : vector<4xf32> to vector<4x1xf32>
    %cst_12 = arith.constant 2.048000e+03 : f32
    %17 = vector.broadcast %cst_12 : f32 to vector<4x1xf32>
    %18 = arith.divf %16, %17 : vector<4x1xf32>
    %cst_13 = arith.constant 9.99999974E-6 : f32
    %19 = vector.broadcast %cst_13 : f32 to vector<4x1xf32>
    %20 = arith.addf %18, %19 : vector<4x1xf32>
    %21 = math.rsqrt %20 : vector<4x1xf32>
    %22 = arith.mulf %6, %21 : vector<4x1xf32>
    %23 = vector.broadcast %22 : vector<4x1xf32> to vector<4x2048xf32>
    %24 = arith.mulf %5, %23 : vector<4x2048xf32>
    %25 = arith.mulf %11, %22 : vector<4x1xf32>
    %26 = arith.subf %7, %25 : vector<4x1xf32>
    %27 = vector.broadcast %26 : vector<4x1xf32> to vector<4x2048xf32>
    %28 = arith.addf %24, %27 : vector<4x2048xf32>
    %c0_14 = arith.constant 0 : index
    %c0_15 = arith.constant 0 : index
    %29 = vector.load %arg5[%c0_14, %c0_15] : memref<4x2048xf32, #tpu.memory_space<vmem>>, vector<4x2048xf32>
    %30 = arith.mulf %29, %29 : vector<4x2048xf32>
    %cst_16 = arith.constant dense<0.000000e+00> : vector<2048xf32>
    %31 = vector.multi_reduction <add>, %30, %cst_16 [0] : vector<4x2048xf32> to vector<2048xf32>
    %32 = vector.shape_cast %31 : vector<2048xf32> to vector<1x2048xf32>
    %cst_17 = arith.constant 9.99999996E-13 : f32
    %33 = vector.broadcast %cst_17 : f32 to vector<1x2048xf32>
    %34 = arith.maximumf %32, %33 : vector<1x2048xf32>
    %35 = math.rsqrt %34 : vector<1x2048xf32>
    %36 = arith.mulf %32, %35 : vector<1x2048xf32>
    %cst_18 = arith.constant 9.99999997E-7 : f32
    %37 = vector.broadcast %cst_18 : f32 to vector<1x2048xf32>
    %38 = arith.maximumf %36, %37 : vector<1x2048xf32>
    %39 = math.tanh %38 : vector<1x2048xf32>
    %40 = arith.mulf %39, %35 : vector<1x2048xf32>
    %41 = vector.broadcast %40 : vector<1x2048xf32> to vector<4x2048xf32>
    %42 = arith.mulf %29, %41 : vector<4x2048xf32>
    %43 = arith.mulf %28, %28 : vector<4x2048xf32>
    %cst_19 = arith.constant dense<0.000000e+00> : vector<2048xf32>
    %44 = vector.multi_reduction <add>, %43, %cst_19 [0] : vector<4x2048xf32> to vector<2048xf32>
    %45 = vector.shape_cast %44 : vector<2048xf32> to vector<1x2048xf32>
    %cst_20 = arith.constant 9.99999996E-13 : f32
    %46 = vector.broadcast %cst_20 : f32 to vector<1x2048xf32>
    %47 = arith.maximumf %45, %46 : vector<1x2048xf32>
    %48 = math.rsqrt %47 : vector<1x2048xf32>
    %49 = arith.mulf %45, %48 : vector<1x2048xf32>
    %cst_21 = arith.constant 9.99999997E-7 : f32
    %50 = vector.broadcast %cst_21 : f32 to vector<1x2048xf32>
    %51 = arith.maximumf %49, %50 : vector<1x2048xf32>
    %52 = math.tanh %51 : vector<1x2048xf32>
    %53 = arith.mulf %52, %48 : vector<1x2048xf32>
    %54 = vector.broadcast %53 : vector<1x2048xf32> to vector<4x2048xf32>
    %55 = arith.mulf %28, %54 : vector<4x2048xf32>
    %56 = arith.mulf %42, %55 : vector<4x2048xf32>
    %cst_22 = arith.constant dense<0.000000e+00> : vector<2048xf32>
    %57 = vector.multi_reduction <add>, %56, %cst_22 [0] : vector<4x2048xf32> to vector<2048xf32>
    %58 = vector.shape_cast %57 : vector<2048xf32> to vector<1x2048xf32>
    %59 = arith.mulf %42, %42 : vector<4x2048xf32>
    %cst_23 = arith.constant dense<0.000000e+00> : vector<2048xf32>
    %60 = vector.multi_reduction <add>, %59, %cst_23 [0] : vector<4x2048xf32> to vector<2048xf32>
    %61 = vector.shape_cast %60 : vector<2048xf32> to vector<1x2048xf32>
    %62 = arith.mulf %55, %55 : vector<4x2048xf32>
    %cst_24 = arith.constant dense<0.000000e+00> : vector<2048xf32>
    %63 = vector.multi_reduction <add>, %62, %cst_24 [0] : vector<4x2048xf32> to vector<2048xf32>
    %64 = vector.shape_cast %63 : vector<2048xf32> to vector<1x2048xf32>
    %cst_25 = arith.constant 2.000000e+00 : f32
    %65 = vector.broadcast %cst_25 : f32 to vector<1x2048xf32>
    %66 = arith.mulf %65, %58 : vector<1x2048xf32>
    %cst_26 = arith.constant 1.000000e+00 : f32
    %67 = vector.broadcast %cst_26 : f32 to vector<1x2048xf32>
    %68 = arith.addf %67, %66 : vector<1x2048xf32>
    %69 = arith.addf %68, %64 : vector<1x2048xf32>
    %70 = vector.broadcast %69 : vector<1x2048xf32> to vector<4x2048xf32>
    %71 = arith.mulf %70, %42 : vector<4x2048xf32>
    %cst_27 = arith.constant 1.000000e+00 : f32
    %72 = vector.broadcast %cst_27 : f32 to vector<1x2048xf32>
    %73 = arith.subf %72, %61 : vector<1x2048xf32>
    %74 = vector.broadcast %73 : vector<1x2048xf32> to vector<4x2048xf32>
    %75 = arith.mulf %74, %55 : vector<4x2048xf32>
    %76 = arith.addf %71, %75 : vector<4x2048xf32>
    %cst_28 = arith.constant 2.000000e+00 : f32
    %77 = vector.broadcast %cst_28 : f32 to vector<1x2048xf32>
    %78 = arith.mulf %77, %58 : vector<1x2048xf32>
    %cst_29 = arith.constant 1.000000e+00 : f32
    %79 = vector.broadcast %cst_29 : f32 to vector<1x2048xf32>
    %80 = arith.addf %79, %78 : vector<1x2048xf32>
    %81 = arith.mulf %61, %64 : vector<1x2048xf32>
    %82 = arith.addf %80, %81 : vector<1x2048xf32>
    %cst_30 = arith.constant 9.99999997E-7 : f32
    %83 = vector.broadcast %cst_30 : f32 to vector<1x2048xf32>
    %84 = arith.maximumf %82, %83 : vector<1x2048xf32>
    %85 = vector.broadcast %84 : vector<1x2048xf32> to vector<4x2048xf32>
    %86 = arith.divf %76, %85 : vector<4x2048xf32>
    %87 = arith.mulf %86, %86 : vector<4x2048xf32>
    %cst_31 = arith.constant dense<0.000000e+00> : vector<2048xf32>
    %88 = vector.multi_reduction <add>, %87, %cst_31 [0] : vector<4x2048xf32> to vector<2048xf32>
    %89 = vector.shape_cast %88 : vector<2048xf32> to vector<1x2048xf32>
    %cst_32 = arith.constant 9.99999996E-13 : f32
    %90 = vector.broadcast %cst_32 : f32 to vector<1x2048xf32>
    %91 = arith.maximumf %89, %90 : vector<1x2048xf32>
    %92 = math.rsqrt %91 : vector<1x2048xf32>
    %cst_33 = arith.constant 0.999979972 : f32
    %93 = vector.broadcast %cst_33 : f32 to vector<1x2048xf32>
    %94 = arith.cmpf ogt, %89, %93 : vector<1x2048xf32>
    %cst_34 = arith.constant 0.999989986 : f32
    %95 = vector.broadcast %cst_34 : f32 to vector<1x2048xf32>
    %96 = arith.mulf %95, %92 : vector<1x2048xf32>
    %cst_35 = arith.constant 1.000000e+00 : f32
    %97 = vector.broadcast %cst_35 : f32 to vector<1x2048xf32>
    %98 = arith.select %94, %96, %97 : vector<1x2048xi1>, vector<1x2048xf32>
    %99 = vector.broadcast %98 : vector<1x2048xf32> to vector<4x2048xf32>
    %100 = arith.mulf %86, %99 : vector<4x2048xf32>
    %101 = arith.mulf %100, %100 : vector<4x2048xf32>
    %cst_36 = arith.constant dense<0.000000e+00> : vector<2048xf32>
    %102 = vector.multi_reduction <add>, %101, %cst_36 [0] : vector<4x2048xf32> to vector<2048xf32>
    %103 = vector.shape_cast %102 : vector<2048xf32> to vector<1x2048xf32>
    %cst_37 = arith.constant 9.99999996E-13 : f32
    %104 = vector.broadcast %cst_37 : f32 to vector<1x2048xf32>
    %105 = arith.maximumf %103, %104 : vector<1x2048xf32>
    %106 = math.rsqrt %105 : vector<1x2048xf32>
    %107 = arith.mulf %103, %106 : vector<1x2048xf32>
    %cst_38 = arith.constant 9.99999997E-7 : f32
    %cst_39 = arith.constant 0.999989986 : f32
    %108 = vector.broadcast %cst_38 : f32 to vector<1x2048xf32>
    %109 = arith.maximumf %108, %107 : vector<1x2048xf32>
    %110 = vector.broadcast %cst_39 : f32 to vector<1x2048xf32>
    %111 = arith.minimumf %110, %109 : vector<1x2048xf32>
    %cst_40 = arith.constant -0.999989986 : f32
    %cst_41 = arith.constant 0.999989986 : f32
    %112 = vector.broadcast %cst_40 : f32 to vector<1x2048xf32>
    %113 = arith.maximumf %112, %111 : vector<1x2048xf32>
    %114 = vector.broadcast %cst_41 : f32 to vector<1x2048xf32>
    %115 = arith.minimumf %114, %113 : vector<1x2048xf32>
    %cst_42 = arith.constant 1.000000e+00 : f32
    %116 = vector.broadcast %cst_42 : f32 to vector<1x2048xf32>
    %117 = arith.addf %116, %115 : vector<1x2048xf32>
    %cst_43 = arith.constant 1.000000e+00 : f32
    %118 = vector.broadcast %cst_43 : f32 to vector<1x2048xf32>
    %119 = arith.subf %118, %115 : vector<1x2048xf32>
    %120 = arith.divf %117, %119 : vector<1x2048xf32>
    %121 = math.log %120 : vector<1x2048xf32>
    %cst_44 = arith.constant 5.000000e-01 : f32
    %122 = vector.broadcast %cst_44 : f32 to vector<1x2048xf32>
    %123 = arith.mulf %122, %121 : vector<1x2048xf32>
    %124 = arith.mulf %123, %106 : vector<1x2048xf32>
    %125 = vector.broadcast %124 : vector<1x2048xf32> to vector<4x2048xf32>
    %126 = arith.mulf %100, %125 : vector<4x2048xf32>
    %cst_45 = arith.constant 0.000000e+00 : f32
    %127 = vector.broadcast %cst_45 : f32 to vector<4x2048xf32>
    %128 = arith.maximumf %126, %127 : vector<4x2048xf32>
    %c0_46 = arith.constant 0 : index
    %c0_47 = arith.constant 0 : index
    %129 = vector.load %arg6[%c0_46, %c0_47] : memref<4x2048xf32, #tpu.memory_space<vmem>>, vector<4x2048xf32>
    tpu.vector_store %arg6[%c0_46, %c0_47], %128 {strides = array<i32>} : memref<4x2048xf32, #tpu.memory_space<vmem>>, vector<4x2048xf32>,
    return
  }
}

module attributes {stable_mosaic.version = 11 : i64} {
  func.func @conv_bn_kernel(%arg0: memref<8x36xf32, #tpu.memory_space<vmem>>, %arg1: memref<36x512xf32, #tpu.memory_space<vmem>>, %arg2: memref<8x1xf32, #tpu.memory_space<vmem>>, %arg3: memref<8x1xf32, #tpu.memory_space<vmem>>, %arg4: memref<8x1xf32, #tpu.memory_space<vmem>>, %arg5: memref<8x512xf32, #tpu.memory_space<vmem>>) attributes {dimension_semantics = [], scalar_prefetch = 0 : i64, scratch_operands = 0 : i64, tpu.core_type = #tpu.core_type<tc>} {
    %c0 = arith.constant 0 : index
    %c0_0 = arith.constant 0 : index
    %0 = vector.load %arg0[%c0, %c0_0] : memref<8x36xf32, #tpu.memory_space<vmem>>, vector<8x36xf32>
    %c0_1 = arith.constant 0 : index
    %c0_2 = arith.constant 0 : index
    %1 = vector.load %arg1[%c0_1, %c0_2] : memref<36x512xf32, #tpu.memory_space<vmem>>, vector<36x512xf32>
    %cst = arith.constant dense<0.000000e+00> : vector<8x512xf32>
    %2 = tpu.matmul %0, %1, %cst {dimension_numbers = #tpu.dot_dimension_numbers<[1], [0], [0], [1], [0, 0, 1, 1], [], []>} : vector<8x36xf32>, vector<36x512xf32>, vector<8x512xf32> -> vector<8x512xf32>
    %c0_3 = arith.constant 0 : index
    %c0_4 = arith.constant 0 : index
    %3 = vector.load %arg2[%c0_3, %c0_4] : memref<8x1xf32, #tpu.memory_space<vmem>>, vector<8x1xf32>
    %4 = vector.broadcast %3 : vector<8x1xf32> to vector<8x512xf32>
    %5 = arith.addf %2, %4 : vector<8x512xf32>
    %c0_5 = arith.constant 0 : index
    %c0_6 = arith.constant 0 : index
    %6 = vector.load %arg3[%c0_5, %c0_6] : memref<8x1xf32, #tpu.memory_space<vmem>>, vector<8x1xf32>
    %c0_7 = arith.constant 0 : index
    %c0_8 = arith.constant 0 : index
    %7 = vector.load %arg4[%c0_7, %c0_8] : memref<8x1xf32, #tpu.memory_space<vmem>>, vector<8x1xf32>
    %cst_9 = arith.constant dense<0.000000e+00> : vector<8xf32>
    %8 = vector.multi_reduction <add>, %5, %cst_9 [1] : vector<8x512xf32> to vector<8xf32>
    %9 = vector.shape_cast %8 : vector<8xf32> to vector<8x1xf32>
    %cst_10 = arith.constant 5.120000e+02 : f32
    %10 = vector.broadcast %cst_10 : f32 to vector<8x1xf32>
    %11 = arith.divf %9, %10 : vector<8x1xf32>
    %12 = vector.broadcast %11 : vector<8x1xf32> to vector<8x512xf32>
    %13 = arith.subf %5, %12 : vector<8x512xf32>
    %14 = arith.mulf %13, %13 : vector<8x512xf32>
    %cst_11 = arith.constant dense<0.000000e+00> : vector<8xf32>
    %15 = vector.multi_reduction <add>, %14, %cst_11 [1] : vector<8x512xf32> to vector<8xf32>
    %16 = vector.shape_cast %15 : vector<8xf32> to vector<8x1xf32>
    %cst_12 = arith.constant 5.120000e+02 : f32
    %17 = vector.broadcast %cst_12 : f32 to vector<8x1xf32>
    %18 = arith.divf %16, %17 : vector<8x1xf32>
    %cst_13 = arith.constant 9.99999974E-6 : f32
    %19 = vector.broadcast %cst_13 : f32 to vector<8x1xf32>
    %20 = arith.addf %18, %19 : vector<8x1xf32>
    %21 = math.rsqrt %20 : vector<8x1xf32>
    %22 = arith.mulf %6, %21 : vector<8x1xf32>
    %23 = vector.broadcast %22 : vector<8x1xf32> to vector<8x512xf32>
    %24 = arith.mulf %5, %23 : vector<8x512xf32>
    %25 = arith.mulf %11, %22 : vector<8x1xf32>
    %26 = arith.subf %7, %25 : vector<8x1xf32>
    %27 = vector.broadcast %26 : vector<8x1xf32> to vector<8x512xf32>
    %28 = arith.addf %24, %27 : vector<8x512xf32>
    %cst_14 = arith.constant 0.000000e+00 : f32
    %29 = vector.broadcast %cst_14 : f32 to vector<8x512xf32>
    %30 = arith.maximumf %28, %29 : vector<8x512xf32>
    %c0_15 = arith.constant 0 : index
    %c0_16 = arith.constant 0 : index
    %31 = vector.load %arg5[%c0_15, %c0_16] : memref<8x512xf32, #tpu.memory_space<vmem>>, vector<8x512xf32>
    tpu.vector_store %arg5[%c0_15, %c0_16], %30 {strides = array<i32>} : memref<8x512xf32, #tpu.memory_space<vmem>>, vector<8x512xf32>,
    return
  }
}

module attributes {stable_mosaic.version = 11 : i64} {
  func.func @block_tail_ds_kernel(%arg0: memref<8x72xf32, #tpu.memory_space<vmem>>, %arg1: memref<72x512xf32, #tpu.memory_space<vmem>>, %arg2: memref<8x1xf32, #tpu.memory_space<vmem>>, %arg3: memref<8x1xf32, #tpu.memory_space<vmem>>, %arg4: memref<8x1xf32, #tpu.memory_space<vmem>>, %arg5: memref<8x4xf32, #tpu.memory_space<vmem>>, %arg6: memref<4x512xf32, #tpu.memory_space<vmem>>, %arg7: memref<8x1xf32, #tpu.memory_space<vmem>>, %arg8: memref<8x512xf32, #tpu.memory_space<vmem>>) attributes {dimension_semantics = [], scalar_prefetch = 0 : i64, scratch_operands = 0 : i64, tpu.core_type = #tpu.core_type<tc>} {
    %c0 = arith.constant 0 : index
    %c0_0 = arith.constant 0 : index
    %0 = vector.load %arg0[%c0, %c0_0] : memref<8x72xf32, #tpu.memory_space<vmem>>, vector<8x72xf32>
    %c0_1 = arith.constant 0 : index
    %c0_2 = arith.constant 0 : index
    %1 = vector.load %arg1[%c0_1, %c0_2] : memref<72x512xf32, #tpu.memory_space<vmem>>, vector<72x512xf32>
    %cst = arith.constant dense<0.000000e+00> : vector<8x512xf32>
    %2 = tpu.matmul %0, %1, %cst {dimension_numbers = #tpu.dot_dimension_numbers<[1], [0], [0], [1], [0, 0, 1, 1], [], []>} : vector<8x72xf32>, vector<72x512xf32>, vector<8x512xf32> -> vector<8x512xf32>
    %c0_3 = arith.constant 0 : index
    %c0_4 = arith.constant 0 : index
    %3 = vector.load %arg2[%c0_3, %c0_4] : memref<8x1xf32, #tpu.memory_space<vmem>>, vector<8x1xf32>
    %4 = vector.broadcast %3 : vector<8x1xf32> to vector<8x512xf32>
    %5 = arith.addf %2, %4 : vector<8x512xf32>
    %c0_5 = arith.constant 0 : index
    %c0_6 = arith.constant 0 : index
    %6 = vector.load %arg3[%c0_5, %c0_6] : memref<8x1xf32, #tpu.memory_space<vmem>>, vector<8x1xf32>
    %c0_7 = arith.constant 0 : index
    %c0_8 = arith.constant 0 : index
    %7 = vector.load %arg4[%c0_7, %c0_8] : memref<8x1xf32, #tpu.memory_space<vmem>>, vector<8x1xf32>
    %cst_9 = arith.constant dense<0.000000e+00> : vector<8xf32>
    %8 = vector.multi_reduction <add>, %5, %cst_9 [1] : vector<8x512xf32> to vector<8xf32>
    %9 = vector.shape_cast %8 : vector<8xf32> to vector<8x1xf32>
    %cst_10 = arith.constant 5.120000e+02 : f32
    %10 = vector.broadcast %cst_10 : f32 to vector<8x1xf32>
    %11 = arith.divf %9, %10 : vector<8x1xf32>
    %12 = vector.broadcast %11 : vector<8x1xf32> to vector<8x512xf32>
    %13 = arith.subf %5, %12 : vector<8x512xf32>
    %14 = arith.mulf %13, %13 : vector<8x512xf32>
    %cst_11 = arith.constant dense<0.000000e+00> : vector<8xf32>
    %15 = vector.multi_reduction <add>, %14, %cst_11 [1] : vector<8x512xf32> to vector<8xf32>
    %16 = vector.shape_cast %15 : vector<8xf32> to vector<8x1xf32>
    %cst_12 = arith.constant 5.120000e+02 : f32
    %17 = vector.broadcast %cst_12 : f32 to vector<8x1xf32>
    %18 = arith.divf %16, %17 : vector<8x1xf32>
    %cst_13 = arith.constant 9.99999974E-6 : f32
    %19 = vector.broadcast %cst_13 : f32 to vector<8x1xf32>
    %20 = arith.addf %18, %19 : vector<8x1xf32>
    %21 = math.rsqrt %20 : vector<8x1xf32>
    %22 = arith.mulf %6, %21 : vector<8x1xf32>
    %23 = vector.broadcast %22 : vector<8x1xf32> to vector<8x512xf32>
    %24 = arith.mulf %5, %23 : vector<8x512xf32>
    %25 = arith.mulf %11, %22 : vector<8x1xf32>
    %26 = arith.subf %7, %25 : vector<8x1xf32>
    %27 = vector.broadcast %26 : vector<8x1xf32> to vector<8x512xf32>
    %28 = arith.addf %24, %27 : vector<8x512xf32>
    %c0_14 = arith.constant 0 : index
    %c0_15 = arith.constant 0 : index
    %29 = vector.load %arg5[%c0_14, %c0_15] : memref<8x4xf32, #tpu.memory_space<vmem>>, vector<8x4xf32>
    %c0_16 = arith.constant 0 : index
    %c0_17 = arith.constant 0 : index
    %30 = vector.load %arg6[%c0_16, %c0_17] : memref<4x512xf32, #tpu.memory_space<vmem>>, vector<4x512xf32>
    %cst_18 = arith.constant dense<0.000000e+00> : vector<8x512xf32>
    %31 = tpu.matmul %29, %30, %cst_18 {dimension_numbers = #tpu.dot_dimension_numbers<[1], [0], [0], [1], [0, 0, 1, 1], [], []>} : vector<8x4xf32>, vector<4x512xf32>, vector<8x512xf32> -> vector<8x512xf32>
    %c0_19 = arith.constant 0 : index
    %c0_20 = arith.constant 0 : index
    %32 = vector.load %arg7[%c0_19, %c0_20] : memref<8x1xf32, #tpu.memory_space<vmem>>, vector<8x1xf32>
    %33 = vector.broadcast %32 : vector<8x1xf32> to vector<8x512xf32>
    %34 = arith.addf %31, %33 : vector<8x512xf32>
    %35 = arith.mulf %34, %34 : vector<8x512xf32>
    %cst_21 = arith.constant dense<0.000000e+00> : vector<512xf32>
    %36 = vector.multi_reduction <add>, %35, %cst_21 [0] : vector<8x512xf32> to vector<512xf32>
    %37 = vector.shape_cast %36 : vector<512xf32> to vector<1x512xf32>
    %cst_22 = arith.constant 9.99999996E-13 : f32
    %38 = vector.broadcast %cst_22 : f32 to vector<1x512xf32>
    %39 = arith.maximumf %37, %38 : vector<1x512xf32>
    %40 = math.rsqrt %39 : vector<1x512xf32>
    %41 = arith.mulf %37, %40 : vector<1x512xf32>
    %cst_23 = arith.constant 9.99999997E-7 : f32
    %42 = vector.broadcast %cst_23 : f32 to vector<1x512xf32>
    %43 = arith.maximumf %41, %42 : vector<1x512xf32>
    %44 = math.tanh %43 : vector<1x512xf32>
    %45 = arith.mulf %44, %40 : vector<1x512xf32>
    %46 = vector.broadcast %45 : vector<1x512xf32> to vector<8x512xf32>
    %47 = arith.mulf %34, %46 : vector<8x512xf32>
    %48 = arith.mulf %28, %28 : vector<8x512xf32>
    %cst_24 = arith.constant dense<0.000000e+00> : vector<512xf32>
    %49 = vector.multi_reduction <add>, %48, %cst_24 [0] : vector<8x512xf32> to vector<512xf32>
    %50 = vector.shape_cast %49 : vector<512xf32> to vector<1x512xf32>
    %cst_25 = arith.constant 9.99999996E-13 : f32
    %51 = vector.broadcast %cst_25 : f32 to vector<1x512xf32>
    %52 = arith.maximumf %50, %51 : vector<1x512xf32>
    %53 = math.rsqrt %52 : vector<1x512xf32>
    %54 = arith.mulf %50, %53 : vector<1x512xf32>
    %cst_26 = arith.constant 9.99999997E-7 : f32
    %55 = vector.broadcast %cst_26 : f32 to vector<1x512xf32>
    %56 = arith.maximumf %54, %55 : vector<1x512xf32>
    %57 = math.tanh %56 : vector<1x512xf32>
    %58 = arith.mulf %57, %53 : vector<1x512xf32>
    %59 = vector.broadcast %58 : vector<1x512xf32> to vector<8x512xf32>
    %60 = arith.mulf %28, %59 : vector<8x512xf32>
    %61 = arith.mulf %47, %60 : vector<8x512xf32>
    %cst_27 = arith.constant dense<0.000000e+00> : vector<512xf32>
    %62 = vector.multi_reduction <add>, %61, %cst_27 [0] : vector<8x512xf32> to vector<512xf32>
    %63 = vector.shape_cast %62 : vector<512xf32> to vector<1x512xf32>
    %64 = arith.mulf %47, %47 : vector<8x512xf32>
    %cst_28 = arith.constant dense<0.000000e+00> : vector<512xf32>
    %65 = vector.multi_reduction <add>, %64, %cst_28 [0] : vector<8x512xf32> to vector<512xf32>
    %66 = vector.shape_cast %65 : vector<512xf32> to vector<1x512xf32>
    %67 = arith.mulf %60, %60 : vector<8x512xf32>
    %cst_29 = arith.constant dense<0.000000e+00> : vector<512xf32>
    %68 = vector.multi_reduction <add>, %67, %cst_29 [0] : vector<8x512xf32> to vector<512xf32>
    %69 = vector.shape_cast %68 : vector<512xf32> to vector<1x512xf32>
    %cst_30 = arith.constant 2.000000e+00 : f32
    %70 = vector.broadcast %cst_30 : f32 to vector<1x512xf32>
    %71 = arith.mulf %70, %63 : vector<1x512xf32>
    %cst_31 = arith.constant 1.000000e+00 : f32
    %72 = vector.broadcast %cst_31 : f32 to vector<1x512xf32>
    %73 = arith.addf %72, %71 : vector<1x512xf32>
    %74 = arith.addf %73, %69 : vector<1x512xf32>
    %75 = vector.broadcast %74 : vector<1x512xf32> to vector<8x512xf32>
    %76 = arith.mulf %75, %47 : vector<8x512xf32>
    %cst_32 = arith.constant 1.000000e+00 : f32
    %77 = vector.broadcast %cst_32 : f32 to vector<1x512xf32>
    %78 = arith.subf %77, %66 : vector<1x512xf32>
    %79 = vector.broadcast %78 : vector<1x512xf32> to vector<8x512xf32>
    %80 = arith.mulf %79, %60 : vector<8x512xf32>
    %81 = arith.addf %76, %80 : vector<8x512xf32>
    %cst_33 = arith.constant 2.000000e+00 : f32
    %82 = vector.broadcast %cst_33 : f32 to vector<1x512xf32>
    %83 = arith.mulf %82, %63 : vector<1x512xf32>
    %cst_34 = arith.constant 1.000000e+00 : f32
    %84 = vector.broadcast %cst_34 : f32 to vector<1x512xf32>
    %85 = arith.addf %84, %83 : vector<1x512xf32>
    %86 = arith.mulf %66, %69 : vector<1x512xf32>
    %87 = arith.addf %85, %86 : vector<1x512xf32>
    %cst_35 = arith.constant 9.99999997E-7 : f32
    %88 = vector.broadcast %cst_35 : f32 to vector<1x512xf32>
    %89 = arith.maximumf %87, %88 : vector<1x512xf32>
    %90 = vector.broadcast %89 : vector<1x512xf32> to vector<8x512xf32>
    %91 = arith.divf %81, %90 : vector<8x512xf32>
    %92 = arith.mulf %91, %91 : vector<8x512xf32>
    %cst_36 = arith.constant dense<0.000000e+00> : vector<512xf32>
    %93 = vector.multi_reduction <add>, %92, %cst_36 [0] : vector<8x512xf32> to vector<512xf32>
    %94 = vector.shape_cast %93 : vector<512xf32> to vector<1x512xf32>
    %cst_37 = arith.constant 9.99999996E-13 : f32
    %95 = vector.broadcast %cst_37 : f32 to vector<1x512xf32>
    %96 = arith.maximumf %94, %95 : vector<1x512xf32>
    %97 = math.rsqrt %96 : vector<1x512xf32>
    %cst_38 = arith.constant 0.999979972 : f32
    %98 = vector.broadcast %cst_38 : f32 to vector<1x512xf32>
    %99 = arith.cmpf ogt, %94, %98 : vector<1x512xf32>
    %cst_39 = arith.constant 0.999989986 : f32
    %100 = vector.broadcast %cst_39 : f32 to vector<1x512xf32>
    %101 = arith.mulf %100, %97 : vector<1x512xf32>
    %cst_40 = arith.constant 1.000000e+00 : f32
    %102 = vector.broadcast %cst_40 : f32 to vector<1x512xf32>
    %103 = arith.select %99, %101, %102 : vector<1x512xi1>, vector<1x512xf32>
    %104 = vector.broadcast %103 : vector<1x512xf32> to vector<8x512xf32>
    %105 = arith.mulf %91, %104 : vector<8x512xf32>
    %106 = arith.mulf %105, %105 : vector<8x512xf32>
    %cst_41 = arith.constant dense<0.000000e+00> : vector<512xf32>
    %107 = vector.multi_reduction <add>, %106, %cst_41 [0] : vector<8x512xf32> to vector<512xf32>
    %108 = vector.shape_cast %107 : vector<512xf32> to vector<1x512xf32>
    %cst_42 = arith.constant 9.99999996E-13 : f32
    %109 = vector.broadcast %cst_42 : f32 to vector<1x512xf32>
    %110 = arith.maximumf %108, %109 : vector<1x512xf32>
    %111 = math.rsqrt %110 : vector<1x512xf32>
    %112 = arith.mulf %108, %111 : vector<1x512xf32>
    %cst_43 = arith.constant 9.99999997E-7 : f32
    %cst_44 = arith.constant 0.999989986 : f32
    %113 = vector.broadcast %cst_43 : f32 to vector<1x512xf32>
    %114 = arith.maximumf %113, %112 : vector<1x512xf32>
    %115 = vector.broadcast %cst_44 : f32 to vector<1x512xf32>
    %116 = arith.minimumf %115, %114 : vector<1x512xf32>
    %cst_45 = arith.constant -0.999989986 : f32
    %cst_46 = arith.constant 0.999989986 : f32
    %117 = vector.broadcast %cst_45 : f32 to vector<1x512xf32>
    %118 = arith.maximumf %117, %116 : vector<1x512xf32>
    %119 = vector.broadcast %cst_46 : f32 to vector<1x512xf32>
    %120 = arith.minimumf %119, %118 : vector<1x512xf32>
    %cst_47 = arith.constant 1.000000e+00 : f32
    %121 = vector.broadcast %cst_47 : f32 to vector<1x512xf32>
    %122 = arith.addf %121, %120 : vector<1x512xf32>
    %cst_48 = arith.constant 1.000000e+00 : f32
    %123 = vector.broadcast %cst_48 : f32 to vector<1x512xf32>
    %124 = arith.subf %123, %120 : vector<1x512xf32>
    %125 = arith.divf %122, %124 : vector<1x512xf32>
    %126 = math.log %125 : vector<1x512xf32>
    %cst_49 = arith.constant 5.000000e-01 : f32
    %127 = vector.broadcast %cst_49 : f32 to vector<1x512xf32>
    %128 = arith.mulf %127, %126 : vector<1x512xf32>
    %129 = arith.mulf %128, %111 : vector<1x512xf32>
    %130 = vector.broadcast %129 : vector<1x512xf32> to vector<8x512xf32>
    %131 = arith.mulf %105, %130 : vector<8x512xf32>
    %cst_50 = arith.constant 0.000000e+00 : f32
    %132 = vector.broadcast %cst_50 : f32 to vector<8x512xf32>
    %133 = arith.maximumf %131, %132 : vector<8x512xf32>
    %c0_51 = arith.constant 0 : index
    %c0_52 = arith.constant 0 : index
    %134 = vector.load %arg8[%c0_51, %c0_52] : memref<8x512xf32, #tpu.memory_space<vmem>>, vector<8x512xf32>
    tpu.vector_store %arg8[%c0_51, %c0_52], %133 {strides = array<i32>} : memref<8x512xf32, #tpu.memory_space<vmem>>, vector<8x512xf32>,
    return
  }
}

module attributes {stable_mosaic.version = 11 : i64} {
  func.func @conv_bn_kernel(%arg0: memref<16x72xf32, #tpu.memory_space<vmem>>, %arg1: memref<72x128xf32, #tpu.memory_space<vmem>>, %arg2: memref<16x1xf32, #tpu.memory_space<vmem>>, %arg3: memref<16x1xf32, #tpu.memory_space<vmem>>, %arg4: memref<16x1xf32, #tpu.memory_space<vmem>>, %arg5: memref<16x128xf32, #tpu.memory_space<vmem>>) attributes {dimension_semantics = [], scalar_prefetch = 0 : i64, scratch_operands = 0 : i64, tpu.core_type = #tpu.core_type<tc>} {
    %c0 = arith.constant 0 : index
    %c0_0 = arith.constant 0 : index
    %0 = vector.load %arg0[%c0, %c0_0] : memref<16x72xf32, #tpu.memory_space<vmem>>, vector<16x72xf32>
    %c0_1 = arith.constant 0 : index
    %c0_2 = arith.constant 0 : index
    %1 = vector.load %arg1[%c0_1, %c0_2] : memref<72x128xf32, #tpu.memory_space<vmem>>, vector<72x128xf32>
    %cst = arith.constant dense<0.000000e+00> : vector<16x128xf32>
    %2 = tpu.matmul %0, %1, %cst {dimension_numbers = #tpu.dot_dimension_numbers<[1], [0], [0], [1], [0, 0, 1, 1], [], []>} : vector<16x72xf32>, vector<72x128xf32>, vector<16x128xf32> -> vector<16x128xf32>
    %c0_3 = arith.constant 0 : index
    %c0_4 = arith.constant 0 : index
    %3 = vector.load %arg2[%c0_3, %c0_4] : memref<16x1xf32, #tpu.memory_space<vmem>>, vector<16x1xf32>
    %4 = vector.broadcast %3 : vector<16x1xf32> to vector<16x128xf32>
    %5 = arith.addf %2, %4 : vector<16x128xf32>
    %c0_5 = arith.constant 0 : index
    %c0_6 = arith.constant 0 : index
    %6 = vector.load %arg3[%c0_5, %c0_6] : memref<16x1xf32, #tpu.memory_space<vmem>>, vector<16x1xf32>
    %c0_7 = arith.constant 0 : index
    %c0_8 = arith.constant 0 : index
    %7 = vector.load %arg4[%c0_7, %c0_8] : memref<16x1xf32, #tpu.memory_space<vmem>>, vector<16x1xf32>
    %cst_9 = arith.constant dense<0.000000e+00> : vector<16xf32>
    %8 = vector.multi_reduction <add>, %5, %cst_9 [1] : vector<16x128xf32> to vector<16xf32>
    %9 = vector.shape_cast %8 : vector<16xf32> to vector<16x1xf32>
    %cst_10 = arith.constant 1.280000e+02 : f32
    %10 = vector.broadcast %cst_10 : f32 to vector<16x1xf32>
    %11 = arith.divf %9, %10 : vector<16x1xf32>
    %12 = vector.broadcast %11 : vector<16x1xf32> to vector<16x128xf32>
    %13 = arith.subf %5, %12 : vector<16x128xf32>
    %14 = arith.mulf %13, %13 : vector<16x128xf32>
    %cst_11 = arith.constant dense<0.000000e+00> : vector<16xf32>
    %15 = vector.multi_reduction <add>, %14, %cst_11 [1] : vector<16x128xf32> to vector<16xf32>
    %16 = vector.shape_cast %15 : vector<16xf32> to vector<16x1xf32>
    %cst_12 = arith.constant 1.280000e+02 : f32
    %17 = vector.broadcast %cst_12 : f32 to vector<16x1xf32>
    %18 = arith.divf %16, %17 : vector<16x1xf32>
    %cst_13 = arith.constant 9.99999974E-6 : f32
    %19 = vector.broadcast %cst_13 : f32 to vector<16x1xf32>
    %20 = arith.addf %18, %19 : vector<16x1xf32>
    %21 = math.rsqrt %20 : vector<16x1xf32>
    %22 = arith.mulf %6, %21 : vector<16x1xf32>
    %23 = vector.broadcast %22 : vector<16x1xf32> to vector<16x128xf32>
    %24 = arith.mulf %5, %23 : vector<16x128xf32>
    %25 = arith.mulf %11, %22 : vector<16x1xf32>
    %26 = arith.subf %7, %25 : vector<16x1xf32>
    %27 = vector.broadcast %26 : vector<16x1xf32> to vector<16x128xf32>
    %28 = arith.addf %24, %27 : vector<16x128xf32>
    %cst_14 = arith.constant 0.000000e+00 : f32
    %29 = vector.broadcast %cst_14 : f32 to vector<16x128xf32>
    %30 = arith.maximumf %28, %29 : vector<16x128xf32>
    %c0_15 = arith.constant 0 : index
    %c0_16 = arith.constant 0 : index
    %31 = vector.load %arg5[%c0_15, %c0_16] : memref<16x128xf32, #tpu.memory_space<vmem>>, vector<16x128xf32>
    tpu.vector_store %arg5[%c0_15, %c0_16], %30 {strides = array<i32>} : memref<16x128xf32, #tpu.memory_space<vmem>>, vector<16x128xf32>,
    return
  }
}

module attributes {stable_mosaic.version = 11 : i64} {
  func.func @head_kernel(%arg0: memref<16x128xf32, #tpu.memory_space<vmem>>, %arg1: memref<128x2xf32, #tpu.memory_space<vmem>>, %arg2: memref<10x16xf32, #tpu.memory_space<vmem>>, %arg3: memref<10x1xf32, #tpu.memory_space<vmem>>, %arg4: memref<10x2xf32, #tpu.memory_space<vmem>>) attributes {dimension_semantics = [], scalar_prefetch = 0 : i64, scratch_operands = 0 : i64, tpu.core_type = #tpu.core_type<tc>} {
    %c0 = arith.constant 0 : index
    %c0_0 = arith.constant 0 : index
    %0 = vector.load %arg0[%c0, %c0_0] : memref<16x128xf32, #tpu.memory_space<vmem>>, vector<16x128xf32>
    %c0_1 = arith.constant 0 : index
    %c0_2 = arith.constant 0 : index
    %1 = vector.load %arg1[%c0_1, %c0_2] : memref<128x2xf32, #tpu.memory_space<vmem>>, vector<128x2xf32>
    %cst = arith.constant dense<0.000000e+00> : vector<16x2xf32>
    %2 = tpu.matmul %0, %1, %cst {dimension_numbers = #tpu.dot_dimension_numbers<[1], [0], [0], [1], [0, 0, 1, 1], [], []>} : vector<16x128xf32>, vector<128x2xf32>, vector<16x2xf32> -> vector<16x2xf32>
    %c0_3 = arith.constant 0 : index
    %c0_4 = arith.constant 0 : index
    %3 = vector.load %arg2[%c0_3, %c0_4] : memref<10x16xf32, #tpu.memory_space<vmem>>, vector<10x16xf32>
    %cst_5 = arith.constant dense<0.000000e+00> : vector<10x2xf32>
    %4 = tpu.matmul %3, %2, %cst_5 {dimension_numbers = #tpu.dot_dimension_numbers<[1], [0], [0], [1], [0, 0, 1, 1], [], []>} : vector<10x16xf32>, vector<16x2xf32>, vector<10x2xf32> -> vector<10x2xf32>
    %c0_6 = arith.constant 0 : index
    %c0_7 = arith.constant 0 : index
    %5 = vector.load %arg3[%c0_6, %c0_7] : memref<10x1xf32, #tpu.memory_space<vmem>>, vector<10x1xf32>
    %6 = vector.broadcast %5 : vector<10x1xf32> to vector<10x2xf32>
    %7 = arith.addf %4, %6 : vector<10x2xf32>
    %8 = arith.mulf %7, %7 : vector<10x2xf32>
    %cst_8 = arith.constant dense<0.000000e+00> : vector<2xf32>
    %9 = vector.multi_reduction <add>, %8, %cst_8 [0] : vector<10x2xf32> to vector<2xf32>
    %10 = vector.shape_cast %9 : vector<2xf32> to vector<1x2xf32>
    %cst_9 = arith.constant 9.99999996E-13 : f32
    %11 = vector.broadcast %cst_9 : f32 to vector<1x2xf32>
    %12 = arith.maximumf %10, %11 : vector<1x2xf32>
    %13 = math.rsqrt %12 : vector<1x2xf32>
    %14 = arith.mulf %10, %13 : vector<1x2xf32>
    %cst_10 = arith.constant 9.99999997E-7 : f32
    %15 = vector.broadcast %cst_10 : f32 to vector<1x2xf32>
    %16 = arith.maximumf %14, %15 : vector<1x2xf32>
    %17 = math.tanh %16 : vector<1x2xf32>
    %18 = arith.mulf %17, %13 : vector<1x2xf32>
    %19 = vector.broadcast %18 : vector<1x2xf32> to vector<10x2xf32>
    %20 = arith.mulf %7, %19 : vector<10x2xf32>
    %c0_11 = arith.constant 0 : index
    %c0_12 = arith.constant 0 : index
    %21 = vector.load %arg4[%c0_11, %c0_12] : memref<10x2xf32, #tpu.memory_space<vmem>>, vector<10x2xf32>
    tpu.vector_store %arg4[%c0_11, %c0_12], %20 {strides = array<i32>} : memref<10x2xf32, #tpu.memory_space<vmem>>, vector<10x2xf32>,
    return
  }
}

module attributes {stable_mosaic.version = 11 : i64} {
  func.func @block_tail_ds_kernel(%arg0: memref<16x144xf32, #tpu.memory_space<vmem>>, %arg1: memref<144x128xf32, #tpu.memory_space<vmem>>, %arg2: memref<16x1xf32, #tpu.memory_space<vmem>>, %arg3: memref<16x1xf32, #tpu.memory_space<vmem>>, %arg4: memref<16x1xf32, #tpu.memory_space<vmem>>, %arg5: memref<16x8xf32, #tpu.memory_space<vmem>>, %arg6: memref<8x128xf32, #tpu.memory_space<vmem>>, %arg7: memref<16x1xf32, #tpu.memory_space<vmem>>, %arg8: memref<16x128xf32, #tpu.memory_space<vmem>>) attributes {dimension_semantics = [], scalar_prefetch = 0 : i64, scratch_operands = 0 : i64, tpu.core_type = #tpu.core_type<tc>} {
    %c0 = arith.constant 0 : index
    %c0_0 = arith.constant 0 : index
    %0 = vector.load %arg0[%c0, %c0_0] : memref<16x144xf32, #tpu.memory_space<vmem>>, vector<16x144xf32>
    %c0_1 = arith.constant 0 : index
    %c0_2 = arith.constant 0 : index
    %1 = vector.load %arg1[%c0_1, %c0_2] : memref<144x128xf32, #tpu.memory_space<vmem>>, vector<144x128xf32>
    %cst = arith.constant dense<0.000000e+00> : vector<16x128xf32>
    %2 = tpu.matmul %0, %1, %cst {dimension_numbers = #tpu.dot_dimension_numbers<[1], [0], [0], [1], [0, 0, 1, 1], [], []>} : vector<16x144xf32>, vector<144x128xf32>, vector<16x128xf32> -> vector<16x128xf32>
    %c0_3 = arith.constant 0 : index
    %c0_4 = arith.constant 0 : index
    %3 = vector.load %arg2[%c0_3, %c0_4] : memref<16x1xf32, #tpu.memory_space<vmem>>, vector<16x1xf32>
    %4 = vector.broadcast %3 : vector<16x1xf32> to vector<16x128xf32>
    %5 = arith.addf %2, %4 : vector<16x128xf32>
    %c0_5 = arith.constant 0 : index
    %c0_6 = arith.constant 0 : index
    %6 = vector.load %arg3[%c0_5, %c0_6] : memref<16x1xf32, #tpu.memory_space<vmem>>, vector<16x1xf32>
    %c0_7 = arith.constant 0 : index
    %c0_8 = arith.constant 0 : index
    %7 = vector.load %arg4[%c0_7, %c0_8] : memref<16x1xf32, #tpu.memory_space<vmem>>, vector<16x1xf32>
    %cst_9 = arith.constant dense<0.000000e+00> : vector<16xf32>
    %8 = vector.multi_reduction <add>, %5, %cst_9 [1] : vector<16x128xf32> to vector<16xf32>
    %9 = vector.shape_cast %8 : vector<16xf32> to vector<16x1xf32>
    %cst_10 = arith.constant 1.280000e+02 : f32
    %10 = vector.broadcast %cst_10 : f32 to vector<16x1xf32>
    %11 = arith.divf %9, %10 : vector<16x1xf32>
    %12 = vector.broadcast %11 : vector<16x1xf32> to vector<16x128xf32>
    %13 = arith.subf %5, %12 : vector<16x128xf32>
    %14 = arith.mulf %13, %13 : vector<16x128xf32>
    %cst_11 = arith.constant dense<0.000000e+00> : vector<16xf32>
    %15 = vector.multi_reduction <add>, %14, %cst_11 [1] : vector<16x128xf32> to vector<16xf32>
    %16 = vector.shape_cast %15 : vector<16xf32> to vector<16x1xf32>
    %cst_12 = arith.constant 1.280000e+02 : f32
    %17 = vector.broadcast %cst_12 : f32 to vector<16x1xf32>
    %18 = arith.divf %16, %17 : vector<16x1xf32>
    %cst_13 = arith.constant 9.99999974E-6 : f32
    %19 = vector.broadcast %cst_13 : f32 to vector<16x1xf32>
    %20 = arith.addf %18, %19 : vector<16x1xf32>
    %21 = math.rsqrt %20 : vector<16x1xf32>
    %22 = arith.mulf %6, %21 : vector<16x1xf32>
    %23 = vector.broadcast %22 : vector<16x1xf32> to vector<16x128xf32>
    %24 = arith.mulf %5, %23 : vector<16x128xf32>
    %25 = arith.mulf %11, %22 : vector<16x1xf32>
    %26 = arith.subf %7, %25 : vector<16x1xf32>
    %27 = vector.broadcast %26 : vector<16x1xf32> to vector<16x128xf32>
    %28 = arith.addf %24, %27 : vector<16x128xf32>
    %c0_14 = arith.constant 0 : index
    %c0_15 = arith.constant 0 : index
    %29 = vector.load %arg5[%c0_14, %c0_15] : memref<16x8xf32, #tpu.memory_space<vmem>>, vector<16x8xf32>
    %c0_16 = arith.constant 0 : index
    %c0_17 = arith.constant 0 : index
    %30 = vector.load %arg6[%c0_16, %c0_17] : memref<8x128xf32, #tpu.memory_space<vmem>>, vector<8x128xf32>
    %cst_18 = arith.constant dense<0.000000e+00> : vector<16x128xf32>
    %31 = tpu.matmul %29, %30, %cst_18 {dimension_numbers = #tpu.dot_dimension_numbers<[1], [0], [0], [1], [0, 0, 1, 1], [], []>} : vector<16x8xf32>, vector<8x128xf32>, vector<16x128xf32> -> vector<16x128xf32>
    %c0_19 = arith.constant 0 : index
    %c0_20 = arith.constant 0 : index
    %32 = vector.load %arg7[%c0_19, %c0_20] : memref<16x1xf32, #tpu.memory_space<vmem>>, vector<16x1xf32>
    %33 = vector.broadcast %32 : vector<16x1xf32> to vector<16x128xf32>
    %34 = arith.addf %31, %33 : vector<16x128xf32>
    %35 = arith.mulf %34, %34 : vector<16x128xf32>
    %cst_21 = arith.constant dense<0.000000e+00> : vector<128xf32>
    %36 = vector.multi_reduction <add>, %35, %cst_21 [0] : vector<16x128xf32> to vector<128xf32>
    %37 = vector.shape_cast %36 : vector<128xf32> to vector<1x128xf32>
    %cst_22 = arith.constant 9.99999996E-13 : f32
    %38 = vector.broadcast %cst_22 : f32 to vector<1x128xf32>
    %39 = arith.maximumf %37, %38 : vector<1x128xf32>
    %40 = math.rsqrt %39 : vector<1x128xf32>
    %41 = arith.mulf %37, %40 : vector<1x128xf32>
    %cst_23 = arith.constant 9.99999997E-7 : f32
    %42 = vector.broadcast %cst_23 : f32 to vector<1x128xf32>
    %43 = arith.maximumf %41, %42 : vector<1x128xf32>
    %44 = math.tanh %43 : vector<1x128xf32>
    %45 = arith.mulf %44, %40 : vector<1x128xf32>
    %46 = vector.broadcast %45 : vector<1x128xf32> to vector<16x128xf32>
    %47 = arith.mulf %34, %46 : vector<16x128xf32>
    %48 = arith.mulf %28, %28 : vector<16x128xf32>
    %cst_24 = arith.constant dense<0.000000e+00> : vector<128xf32>
    %49 = vector.multi_reduction <add>, %48, %cst_24 [0] : vector<16x128xf32> to vector<128xf32>
    %50 = vector.shape_cast %49 : vector<128xf32> to vector<1x128xf32>
    %cst_25 = arith.constant 9.99999996E-13 : f32
    %51 = vector.broadcast %cst_25 : f32 to vector<1x128xf32>
    %52 = arith.maximumf %50, %51 : vector<1x128xf32>
    %53 = math.rsqrt %52 : vector<1x128xf32>
    %54 = arith.mulf %50, %53 : vector<1x128xf32>
    %cst_26 = arith.constant 9.99999997E-7 : f32
    %55 = vector.broadcast %cst_26 : f32 to vector<1x128xf32>
    %56 = arith.maximumf %54, %55 : vector<1x128xf32>
    %57 = math.tanh %56 : vector<1x128xf32>
    %58 = arith.mulf %57, %53 : vector<1x128xf32>
    %59 = vector.broadcast %58 : vector<1x128xf32> to vector<16x128xf32>
    %60 = arith.mulf %28, %59 : vector<16x128xf32>
    %61 = arith.mulf %47, %60 : vector<16x128xf32>
    %cst_27 = arith.constant dense<0.000000e+00> : vector<128xf32>
    %62 = vector.multi_reduction <add>, %61, %cst_27 [0] : vector<16x128xf32> to vector<128xf32>
    %63 = vector.shape_cast %62 : vector<128xf32> to vector<1x128xf32>
    %64 = arith.mulf %47, %47 : vector<16x128xf32>
    %cst_28 = arith.constant dense<0.000000e+00> : vector<128xf32>
    %65 = vector.multi_reduction <add>, %64, %cst_28 [0] : vector<16x128xf32> to vector<128xf32>
    %66 = vector.shape_cast %65 : vector<128xf32> to vector<1x128xf32>
    %67 = arith.mulf %60, %60 : vector<16x128xf32>
    %cst_29 = arith.constant dense<0.000000e+00> : vector<128xf32>
    %68 = vector.multi_reduction <add>, %67, %cst_29 [0] : vector<16x128xf32> to vector<128xf32>
    %69 = vector.shape_cast %68 : vector<128xf32> to vector<1x128xf32>
    %cst_30 = arith.constant 2.000000e+00 : f32
    %70 = vector.broadcast %cst_30 : f32 to vector<1x128xf32>
    %71 = arith.mulf %70, %63 : vector<1x128xf32>
    %cst_31 = arith.constant 1.000000e+00 : f32
    %72 = vector.broadcast %cst_31 : f32 to vector<1x128xf32>
    %73 = arith.addf %72, %71 : vector<1x128xf32>
    %74 = arith.addf %73, %69 : vector<1x128xf32>
    %75 = vector.broadcast %74 : vector<1x128xf32> to vector<16x128xf32>
    %76 = arith.mulf %75, %47 : vector<16x128xf32>
    %cst_32 = arith.constant 1.000000e+00 : f32
    %77 = vector.broadcast %cst_32 : f32 to vector<1x128xf32>
    %78 = arith.subf %77, %66 : vector<1x128xf32>
    %79 = vector.broadcast %78 : vector<1x128xf32> to vector<16x128xf32>
    %80 = arith.mulf %79, %60 : vector<16x128xf32>
    %81 = arith.addf %76, %80 : vector<16x128xf32>
    %cst_33 = arith.constant 2.000000e+00 : f32
    %82 = vector.broadcast %cst_33 : f32 to vector<1x128xf32>
    %83 = arith.mulf %82, %63 : vector<1x128xf32>
    %cst_34 = arith.constant 1.000000e+00 : f32
    %84 = vector.broadcast %cst_34 : f32 to vector<1x128xf32>
    %85 = arith.addf %84, %83 : vector<1x128xf32>
    %86 = arith.mulf %66, %69 : vector<1x128xf32>
    %87 = arith.addf %85, %86 : vector<1x128xf32>
    %cst_35 = arith.constant 9.99999997E-7 : f32
    %88 = vector.broadcast %cst_35 : f32 to vector<1x128xf32>
    %89 = arith.maximumf %87, %88 : vector<1x128xf32>
    %90 = vector.broadcast %89 : vector<1x128xf32> to vector<16x128xf32>
    %91 = arith.divf %81, %90 : vector<16x128xf32>
    %92 = arith.mulf %91, %91 : vector<16x128xf32>
    %cst_36 = arith.constant dense<0.000000e+00> : vector<128xf32>
    %93 = vector.multi_reduction <add>, %92, %cst_36 [0] : vector<16x128xf32> to vector<128xf32>
    %94 = vector.shape_cast %93 : vector<128xf32> to vector<1x128xf32>
    %cst_37 = arith.constant 9.99999996E-13 : f32
    %95 = vector.broadcast %cst_37 : f32 to vector<1x128xf32>
    %96 = arith.maximumf %94, %95 : vector<1x128xf32>
    %97 = math.rsqrt %96 : vector<1x128xf32>
    %cst_38 = arith.constant 0.999979972 : f32
    %98 = vector.broadcast %cst_38 : f32 to vector<1x128xf32>
    %99 = arith.cmpf ogt, %94, %98 : vector<1x128xf32>
    %cst_39 = arith.constant 0.999989986 : f32
    %100 = vector.broadcast %cst_39 : f32 to vector<1x128xf32>
    %101 = arith.mulf %100, %97 : vector<1x128xf32>
    %cst_40 = arith.constant 1.000000e+00 : f32
    %102 = vector.broadcast %cst_40 : f32 to vector<1x128xf32>
    %103 = arith.select %99, %101, %102 : vector<1x128xi1>, vector<1x128xf32>
    %104 = vector.broadcast %103 : vector<1x128xf32> to vector<16x128xf32>
    %105 = arith.mulf %91, %104 : vector<16x128xf32>
    %106 = arith.mulf %105, %105 : vector<16x128xf32>
    %cst_41 = arith.constant dense<0.000000e+00> : vector<128xf32>
    %107 = vector.multi_reduction <add>, %106, %cst_41 [0] : vector<16x128xf32> to vector<128xf32>
    %108 = vector.shape_cast %107 : vector<128xf32> to vector<1x128xf32>
    %cst_42 = arith.constant 9.99999996E-13 : f32
    %109 = vector.broadcast %cst_42 : f32 to vector<1x128xf32>
    %110 = arith.maximumf %108, %109 : vector<1x128xf32>
    %111 = math.rsqrt %110 : vector<1x128xf32>
    %112 = arith.mulf %108, %111 : vector<1x128xf32>
    %cst_43 = arith.constant 9.99999997E-7 : f32
    %cst_44 = arith.constant 0.999989986 : f32
    %113 = vector.broadcast %cst_43 : f32 to vector<1x128xf32>
    %114 = arith.maximumf %113, %112 : vector<1x128xf32>
    %115 = vector.broadcast %cst_44 : f32 to vector<1x128xf32>
    %116 = arith.minimumf %115, %114 : vector<1x128xf32>
    %cst_45 = arith.constant -0.999989986 : f32
    %cst_46 = arith.constant 0.999989986 : f32
    %117 = vector.broadcast %cst_45 : f32 to vector<1x128xf32>
    %118 = arith.maximumf %117, %116 : vector<1x128xf32>
    %119 = vector.broadcast %cst_46 : f32 to vector<1x128xf32>
    %120 = arith.minimumf %119, %118 : vector<1x128xf32>
    %cst_47 = arith.constant 1.000000e+00 : f32
    %121 = vector.broadcast %cst_47 : f32 to vector<1x128xf32>
    %122 = arith.addf %121, %120 : vector<1x128xf32>
    %cst_48 = arith.constant 1.000000e+00 : f32
    %123 = vector.broadcast %cst_48 : f32 to vector<1x128xf32>
    %124 = arith.subf %123, %120 : vector<1x128xf32>
    %125 = arith.divf %122, %124 : vector<1x128xf32>
    %126 = math.log %125 : vector<1x128xf32>
    %cst_49 = arith.constant 5.000000e-01 : f32
    %127 = vector.broadcast %cst_49 : f32 to vector<1x128xf32>
    %128 = arith.mulf %127, %126 : vector<1x128xf32>
    %129 = arith.mulf %128, %111 : vector<1x128xf32>
    %130 = vector.broadcast %129 : vector<1x128xf32> to vector<16x128xf32>
    %131 = arith.mulf %105, %130 : vector<16x128xf32>
    %cst_50 = arith.constant 0.000000e+00 : f32
    %132 = vector.broadcast %cst_50 : f32 to vector<16x128xf32>
    %133 = arith.maximumf %131, %132 : vector<16x128xf32>
    %c0_51 = arith.constant 0 : index
    %c0_52 = arith.constant 0 : index
    %134 = vector.load %arg8[%c0_51, %c0_52] : memref<16x128xf32, #tpu.memory_space<vmem>>, vector<16x128xf32>
    tpu.vector_store %arg8[%c0_51, %c0_52], %133 {strides = array<i32>} : memref<16x128xf32, #tpu.memory_space<vmem>>, vector<16x128xf32>,
    return
  }
}

</mosaic_0001>

<llo_original>
// kernel: _lambda_.9
$region0: #{_lambda_.9}
  #allocation0 [shape = 'u32[]', space=smem, size = 0x4, offset = 0x4, fixed_abs, tag = 'smem constant byte address 0x4 - core index']
  #allocation1 [shape = 'u32[72,128]{1,0:T(1,128)}', space=vmem, size = 0x9000, scoped, tag = 'internal scratch']
  %s0 = inlined_call_operand.vmem [shape: f32[3,2048], index: 0, kind: input, shape index: {}]
  %s1 = inlined_call_operand.vmem [shape: f32[3,2048], index: 1, kind: output, shape index: {}]
  %s2 = sld [smem:[#allocation0]]
  $region14: #{_lambda_.9} parent=0
    _
  %s4 = ssub.s32 1, %s2
  %s5 = scalar_select 0, %s4, %s2
  // Predicated region
  $region2: #{_lambda_.9} parent=0 // pred_check
    _
  $region3: #{_lambda_.9} parent=0 // pred_check_branch
    %7 = sbr.rel (0) target = $region5
  $region4: #{_lambda_.9} parent=0 // pred_region
    _
  $region5: #{_lambda_.9} parent=0 // pred_fallthru
    _
  %v8 = vld [vmem:[%s0] sm:$0x77]
  %v9 = vld [vmem:[%s0 + $0x8] sm:$0x77]
  %v10 = vld [vmem:[%s0 + $0x10] sm:$0x77]
  %v11 = vld [vmem:[%s0 + $0x18] sm:$0x77]
  %v12 = vld [vmem:[%s0 + $0x20] sm:$0x77]
  %v13 = vld [vmem:[%s0 + $0x28] sm:$0x77]
  %v14 = vld [vmem:[%s0 + $0x30] sm:$0x77]
  %v15 = vld [vmem:[%s0 + $0x38] sm:$0x77]
  %v16 = vmul.f32 %v8, %v8
  %v17 = vmul.f32 %v9, %v9
  %v18 = vmul.f32 %v10, %v10
  %v19 = vmul.f32 %v11, %v11
  %v20 = vmul.f32 %v12, %v12
  %v21 = vmul.f32 %v13, %v13
  %v22 = vmul.f32 %v14, %v14
  %v23 = vmul.f32 %v15, %v15
  %32 = vst [vmem:[#allocation1] ss:$2 sm:$0xff] %v16
  %s33 = scalar_lea.vmem [#allocation1], 16
  %34 = vst [vmem:[%s33] ss:$2 sm:$0xff] %v17
  %s35 = scalar_lea.vmem [#allocation1], 32
  %36 = vst [vmem:[%s35] ss:$2 sm:$0xff] %v18
  %s37 = scalar_lea.vmem [#allocation1], 48
  %38 = vst [vmem:[%s37] ss:$2 sm:$0xff] %v19
  %v39 = vld.sshfl [vmem:[#allocation1] sm:$0xff pattern:$0x75316420]
  %v40 = vld.sshfl [vmem:[#allocation1 + $0x8] sm:$0xff pattern:$0x75316420]
  %v41 = vld.sshfl [vmem:[#allocation1 + $0x10] sm:$0xff pattern:$0x75316420]
  %v42 = vld.sshfl [vmem:[#allocation1 + $0x18] sm:$0xff pattern:$0x75316420]
  %v43 = vld.sshfl [vmem:[#allocation1 + $0x20] sm:$0xff pattern:$0x75316420]
  %v44 = vld.sshfl [vmem:[#allocation1 + $0x28] sm:$0xff pattern:$0x75316420]
  %v45 = vld.sshfl [vmem:[#allocation1 + $0x30] sm:$0xff pattern:$0x75316420]
  %v46 = vld.sshfl [vmem:[#allocation1 + $0x38] sm:$0xff pattern:$0x75316420]
  %47 = vst [vmem:[#allocation1] ss:$2 sm:$0xff] %v20
  %48 = vst [vmem:[%s33] ss:$2 sm:$0xff] %v21
  %49 = vst [vmem:[%s35] ss:$2 sm:$0xff] %v22
  %50 = vst [vmem:[%s37] ss:$2 sm:$0xff] %v23
  %v51 = vld.sshfl [vmem:[#allocation1] sm:$0xff pattern:$0x75316420]
  %v52 = vld.sshfl [vmem:[#allocation1 + $0x8] sm:$0xff pattern:$0x75316420]
  %v53 = vld.sshfl [vmem:[#allocation1 + $0x10] sm:$0xff pattern:$0x75316420]
  %v54 = vld.sshfl [vmem:[#allocation1 + $0x18] sm:$0xff pattern:$0x75316420]
  %v55 = vld.sshfl [vmem:[#allocation1 + $0x20] sm:$0xff pattern:$0x75316420]
  %v56 = vld.sshfl [vmem:[#allocation1 + $0x28] sm:$0xff pattern:$0x75316420]
  %v57 = vld.sshfl [vmem:[#allocation1 + $0x30] sm:$0xff pattern:$0x75316420]
  %v58 = vld.sshfl [vmem:[#allocation1 + $0x38] sm:$0xff pattern:$0x75316420]
  %vm75 = vcmask 1042432
  %v76 = vsel %vm75, %v39, 0.0
  %v77 = vrot.slane %v76, 4
  %v78 = vadd.f32 %v76, %v77
  %v79 = vrot.slane %v78, 2
  %v80 = vadd.f32 %v78, %v79
  %v81 = vrot.slane %v80, 1
  %v82 = vadd.f32 %v80, %v81
  %v83 = vsel %vm75, %v40, 0.0
  %v84 = vrot.slane %v83, 4
  %v85 = vadd.f32 %v83, %v84
  %v86 = vrot.slane %v85, 2
  %v87 = vadd.f32 %v85, %v86
  %v88 = vrot.slane %v87, 1
  %v89 = vadd.f32 %v87, %v88
  %v90 = vsel %vm75, %v41, 0.0
  %v91 = vrot.slane %v90, 4
  %v92 = vadd.f32 %v90, %v91
  %v93 = vrot.slane %v92, 2
  %v94 = vadd.f32 %v92, %v93
  %v95 = vrot.slane %v94, 1
  %v96 = vadd.f32 %v94, %v95
  %v97 = vsel %vm75, %v42, 0.0
  %v98 = vrot.slane %v97, 4
  %v99 = vadd.f32 %v97, %v98
  %v100 = vrot.slane %v99, 2
  %v101 = vadd.f32 %v99, %v100
  %v102 = vrot.slane %v101, 1
  %v103 = vadd.f32 %v101, %v102
  %v104 = vsel %vm75, %v43, 0.0
  %v105 = vrot.slane %v104, 4
  %v106 = vadd.f32 %v104, %v105
  %v107 = vrot.slane %v106, 2
  %v108 = vadd.f32 %v106, %v107
  %v109 = vrot.slane %v108, 1
  %v110 = vadd.f32 %v108, %v109
  %v111 = vsel %vm75, %v44, 0.0
  %v112 = vrot.slane %v111, 4
  %v113 = vadd.f32 %v111, %v112
  %v114 = vrot.slane %v113, 2
  %v115 = vadd.f32 %v113, %v114
  %v116 = vrot.slane %v115, 1
  %v117 = vadd.f32 %v115, %v116
  %v118 = vsel %vm75, %v45, 0.0
  %v119 = vrot.slane %v118, 4
  %v120 = vadd.f32 %v118, %v119
  %v121 = vrot.slane %v120, 2
  %v122 = vadd.f32 %v120, %v121
  %v123 = vrot.slane %v122, 1
  %v124 = vadd.f32 %v122, %v123
  %v125 = vsel %vm75, %v46, 0.0
  %v126 = vrot.slane %v125, 4
  %v127 = vadd.f32 %v125, %v126
  %v128 = vrot.slane %v127, 2
  %v129 = vadd.f32 %v127, %v128
  %v130 = vrot.slane %v129, 1
  %v131 = vadd.f32 %v129, %v130
  %v132 = vsel %vm75, %v51, 0.0
  %v133 = vrot.slane %v132, 4
  %v134 = vadd.f32 %v132, %v133
  %v135 = vrot.slane %v134, 2
  %v136 = vadd.f32 %v134, %v135
  %v137 = vrot.slane %v136, 1
  %v138 = vadd.f32 %v136, %v137
  %v139 = vsel %vm75, %v52, 0.0
  %v140 = vrot.slane %v139, 4
  %v141 = vadd.f32 %v139, %v140
  %v142 = vrot.slane %v141, 2
  %v143 = vadd.f32 %v141, %v142
  %v144 = vrot.slane %v143, 1
  %v145 = vadd.f32 %v143, %v144
  %v146 = vsel %vm75, %v53, 0.0
  %v147 = vrot.slane %v146, 4
  %v148 = vadd.f32 %v146, %v147
  %v149 = vrot.slane %v148, 2
  %v150 = vadd.f32 %v148, %v149
  %v151 = vrot.slane %v150, 1
  %v152 = vadd.f32 %v150, %v151
  %v153 = vsel %vm75, %v54, 0.0
  %v154 = vrot.slane %v153, 4
  %v155 = vadd.f32 %v153, %v154
  %v156 = vrot.slane %v155, 2
  %v157 = vadd.f32 %v155, %v156
  %v158 = vrot.slane %v157, 1
  %v159 = vadd.f32 %v157, %v158
  %v160 = vsel %vm75, %v55, 0.0
  %v161 = vrot.slane %v160, 4
  %v162 = vadd.f32 %v160, %v161
  %v163 = vrot.slane %v162, 2
  %v164 = vadd.f32 %v162, %v163
  %v165 = vrot.slane %v164, 1
  %v166 = vadd.f32 %v164, %v165
  %v167 = vsel %vm75, %v56, 0.0
  %v168 = vrot.slane %v167, 4
  %v169 = vadd.f32 %v167, %v168
  %v170 = vrot.slane %v169, 2
  %v171 = vadd.f32 %v169, %v170
  %v172 = vrot.slane %v171, 1
  %v173 = vadd.f32 %v171, %v172
  %v174 = vsel %vm75, %v57, 0.0
  %v175 = vrot.slane %v174, 4
  %v176 = vadd.f32 %v174, %v175
  %v177 = vrot.slane %v176, 2
  %v178 = vadd.f32 %v176, %v177
  %v179 = vrot.slane %v178, 1
  %v180 = vadd.f32 %v178, %v179
  %v181 = vsel %vm75, %v58, 0.0
  %v182 = vrot.slane %v181, 4
  %v183 = vadd.f32 %v181, %v182
  %v184 = vrot.slane %v183, 2
  %v185 = vadd.f32 %v183, %v184
  %v186 = vrot.slane %v185, 1
  %v187 = vadd.f32 %v185, %v186
  %v188 = vmax.f32 %v82, 1e-12
  %v189 = vmax.f32 %v89, 1e-12
  %v190 = vmax.f32 %v96, 1e-12
  %v191 = vmax.f32 %v103, 1e-12
  %v192 = vmax.f32 %v110, 1e-12
  %v193 = vmax.f32 %v117, 1e-12
  %v194 = vmax.f32 %v124, 1e-12
  %v195 = vmax.f32 %v131, 1e-12
  %v196 = vmax.f32 %v138, 1e-12
  %v197 = vmax.f32 %v145, 1e-12
  %v198 = vmax.f32 %v152, 1e-12
  %v199 = vmax.f32 %v159, 1e-12
  %v200 = vmax.f32 %v166, 1e-12
  %v201 = vmax.f32 %v173, 1e-12
  %v202 = vmax.f32 %v180, 1e-12
  %v203 = vmax.f32 %v187, 1e-12
  %v204 = vrsqrt.pop %v188
  %v205 = vmul.f32 %v204, %v188
  %v206 = vmul.f32 %v205, %v204
  %v207 = vmul.f32 0.5, %v206
  %v208 = vsub.f32 1.5, %v207
  %v209 = vmul.f32 %v204, %v208
  %vm210 = vweird.f32 %v188
  %vm211 = vweird.f32 %v204
  %vm212 = vmor %vm210, %vm211
  %v213 = vsel %vm212, %v204, %v209
  %v214 = vrsqrt.pop %v189
  %v215 = vmul.f32 %v214, %v189
  %v216 = vmul.f32 %v215, %v214
  %v217 = vmul.f32 0.5, %v216
  %v218 = vsub.f32 1.5, %v217
  %v219 = vmul.f32 %v214, %v218
  %vm220 = vweird.f32 %v189
  %vm221 = vweird.f32 %v214
  %vm222 = vmor %vm220, %vm221
  %v223 = vsel %vm222, %v214, %v219
  %v224 = vrsqrt.pop %v190
  %v225 = vmul.f32 %v224, %v190
  %v226 = vmul.f32 %v225, %v224
  %v227 = vmul.f32 0.5, %v226
  %v228 = vsub.f32 1.5, %v227
  %v229 = vmul.f32 %v224, %v228
  %vm230 = vweird.f32 %v190
  %vm231 = vweird.f32 %v224
  %vm232 = vmor %vm230, %vm231
  %v233 = vsel %vm232, %v224, %v229
  %v234 = vrsqrt.pop %v191
  %v235 = vmul.f32 %v234, %v191
  %v236 = vmul.f32 %v235, %v234
  %v237 = vmul.f32 0.5, %v236
  %v238 = vsub.f32 1.5, %v237
  %v239 = vmul.f32 %v234, %v238
  %vm240 = vweird.f32 %v191
  %vm241 = vweird.f32 %v234
  %vm242 = vmor %vm240, %vm241
  %v243 = vsel %vm242, %v234, %v239
  %v244 = vrsqrt.pop %v192
  %v245 = vmul.f32 %v244, %v192
  %v246 = vmul.f32 %v245, %v244
  %v247 = vmul.f32 0.5, %v246
  %v248 = vsub.f32 1.5, %v247
  %v249 = vmul.f32 %v244, %v248
  %vm250 = vweird.f32 %v192
  %vm251 = vweird.f32 %v244
  %vm252 = vmor %vm250, %vm251
  %v253 = vsel %vm252, %v244, %v249
  %v254 = vrsqrt.pop %v193
  %v255 = vmul.f32 %v254, %v193
  %v256 = vmul.f32 %v255, %v254
  %v257 = vmul.f32 0.5, %v256
  %v258 = vsub.f32 1.5, %v257
  %v259 = vmul.f32 %v254, %v258
  %vm260 = vweird.f32 %v193
  %vm261 = vweird.f32 %v254
  %vm262 = vmor %vm260, %vm261
  %v263 = vsel %vm262, %v254, %v259
  %v264 = vrsqrt.pop %v194
  %v265 = vmul.f32 %v264, %v194
  %v266 = vmul.f32 %v265, %v264
  %v267 = vmul.f32 0.5, %v266
  %v268 = vsub.f32 1.5, %v267
  %v269 = vmul.f32 %v264, %v268
  %vm270 = vweird.f32 %v194
  %vm271 = vweird.f32 %v264
  %vm272 = vmor %vm270, %vm271
  %v273 = vsel %vm272, %v264, %v269
  %v274 = vrsqrt.pop %v195
  %v275 = vmul.f32 %v274, %v195
  %v276 = vmul.f32 %v275, %v274
  %v277 = vmul.f32 0.5, %v276
  %v278 = vsub.f32 1.5, %v277
  %v279 = vmul.f32 %v274, %v278
  %vm280 = vweird.f32 %v195
  %vm281 = vweird.f32 %v274
  %vm282 = vmor %vm280, %vm281
  %v283 = vsel %vm282, %v274, %v279
  %v284 = vrsqrt.pop %v196
  %v285 = vmul.f32 %v284, %v196
  %v286 = vmul.f32 %v285, %v284
  %v287 = vmul.f32 0.5, %v286
  %v288 = vsub.f32 1.5, %v287
  %v289 = vmul.f32 %v284, %v288
  %vm290 = vweird.f32 %v196
  %vm291 = vweird.f32 %v284
  %vm292 = vmor %vm290, %vm291
  %v293 = vsel %vm292, %v284, %v289
  %v294 = vrsqrt.pop %v197
  %v295 = vmul.f32 %v294, %v197
  %v296 = vmul.f32 %v295, %v294
  %v297 = vmul.f32 0.5, %v296
  %v298 = vsub.f32 1.5, %v297
  %v299 = vmul.f32 %v294, %v298
  %vm300 = vweird.f32 %v197
  %vm301 = vweird.f32 %v294
  %vm302 = vmor %vm300, %vm301
  %v303 = vsel %vm302, %v294, %v299
  %v304 = vrsqrt.pop %v198
  %v305 = vmul.f32 %v304, %v198
  %v306 = vmul.f32 %v305, %v304
  %v307 = vmul.f32 0.5, %v306
  %v308 = vsub.f32 1.5, %v307
  %v309 = vmul.f32 %v304, %v308
  %vm310 = vweird.f32 %v198
  %vm311 = vweird.f32 %v304
  %vm312 = vmor %vm310, %vm311
  %v313 = vsel %vm312, %v304, %v309
  %v314 = vrsqrt.pop %v199
  %v315 = vmul.f32 %v314, %v199
  %v316 = vmul.f32 %v315, %v314
  %v317 = vmul.f32 0.5, %v316
  %v318 = vsub.f32 1.5, %v317
  %v319 = vmul.f32 %v314, %v318
  %vm320 = vweird.f32 %v199
  %vm321 = vweird.f32 %v314
  %vm322 = vmor %vm320, %vm321
  %v323 = vsel %vm322, %v314, %v319
  %v324 = vrsqrt.pop %v200
  %v325 = vmul.f32 %v324, %v200
  %v326 = vmul.f32 %v325, %v324
  %v327 = vmul.f32 0.5, %v326
  %v328 = vsub.f32 1.5, %v327
  %v329 = vmul.f32 %v324, %v328
  %vm330 = vweird.f32 %v200
  %vm331 = vweird.f32 %v324
  %vm332 = vmor %vm330, %vm331
  %v333 = vsel %vm332, %v324, %v329
  %v334 = vrsqrt.pop %v201
  %v335 = vmul.f32 %v334, %v201
  %v336 = vmul.f32 %v335, %v334
  %v337 = vmul.f32 0.5, %v336
  %v338 = vsub.f32 1.5, %v337
  %v339 = vmul.f32 %v334, %v338
  %vm340 = vweird.f32 %v201
  %vm341 = vweird.f32 %v334
  %vm342 = vmor %vm340, %vm341
  %v343 = vsel %vm342, %v334, %v339
  %v344 = vrsqrt.pop %v202
  %v345 = vmul.f32 %v344, %v202
  %v346 = vmul.f32 %v345, %v344
  %v347 = vmul.f32 0.5, %v346
  %v348 = vsub.f32 1.5, %v347
  %v349 = vmul.f32 %v344, %v348
  %vm350 = vweird.f32 %v202
  %vm351 = vweird.f32 %v344
  %vm352 = vmor %vm350, %vm351
  %v353 = vsel %vm352, %v344, %v349
  %v354 = vrsqrt.pop %v203
  %v355 = vmul.f32 %v354, %v203
  %v356 = vmul.f32 %v355, %v354
  %v357 = vmul.f32 0.5, %v356
  %v358 = vsub.f32 1.5, %v357
  %v359 = vmul.f32 %v354, %v358
  %vm360 = vweird.f32 %v203
  %vm361 = vweird.f32 %v354
  %vm362 = vmor %vm360, %vm361
  %v363 = vsel %vm362, %v354, %v359
  %v364 = vmul.f32 %v82, %v213
  %v365 = vmul.f32 %v89, %v223
  %v366 = vmul.f32 %v96, %v233
  %v367 = vmul.f32 %v103, %v243
  %v368 = vmul.f32 %v110, %v253
  %v369 = vmul.f32 %v117, %v263
  %v370 = vmul.f32 %v124, %v273
  %v371 = vmul.f32 %v131, %v283
  %v372 = vmul.f32 %v138, %v293
  %v373 = vmul.f32 %v145, %v303
  %v374 = vmul.f32 %v152, %v313
  %v375 = vmul.f32 %v159, %v323
  %v376 = vmul.f32 %v166, %v333
  %v377 = vmul.f32 %v173, %v343
  %v378 = vmul.f32 %v180, %v353
  %v379 = vmul.f32 %v187, %v363
  %v380 = vmax.f32 %v364, 1e-06
  %v381 = vmax.f32 %v365, 1e-06
  %v382 = vmax.f32 %v366, 1e-06
  %v383 = vmax.f32 %v367, 1e-06
  %v384 = vmax.f32 %v368, 1e-06
  %v385 = vmax.f32 %v369, 1e-06
  %v386 = vmax.f32 %v370, 1e-06
  %v387 = vmax.f32 %v371, 1e-06
  %v388 = vmax.f32 %v372, 1e-06
  %v389 = vmax.f32 %v373, 1e-06
  %v390 = vmax.f32 %v374, 1e-06
  %v391 = vmax.f32 %v375, 1e-06
  %v392 = vmax.f32 %v376, 1e-06
  %v393 = vmax.f32 %v377, 1e-06
  %v394 = vmax.f32 %v378, 1e-06
  %v395 = vmax.f32 %v379, 1e-06
  %v396 = vmin.f32 %v380, 0.99999
  %v397 = vmin.f32 %v381, 0.99999
  %v398 = vmin.f32 %v382, 0.99999
  %v399 = vmin.f32 %v383, 0.99999
  %v400 = vmin.f32 %v384, 0.99999
  %v401 = vmin.f32 %v385, 0.99999
  %v402 = vmin.f32 %v386, 0.99999
  %v403 = vmin.f32 %v387, 0.99999
  %v404 = vmin.f32 %v388, 0.99999
  %v405 = vmin.f32 %v389, 0.99999
  %v406 = vmin.f32 %v390, 0.99999
  %v407 = vmin.f32 %v391, 0.99999
  %v408 = vmin.f32 %v392, 0.99999
  %v409 = vmin.f32 %v393, 0.99999
  %v410 = vmin.f32 %v394, 0.99999
  %v411 = vmin.f32 %v395, 0.99999
  %v412 = vmax.f32 %v396, -0.99999
  %v413 = vmax.f32 %v397, -0.99999
  %v414 = vmax.f32 %v398, -0.99999
  %v415 = vmax.f32 %v399, -0.99999
  %v416 = vmax.f32 %v400, -0.99999
  %v417 = vmax.f32 %v401, -0.99999
  %v418 = vmax.f32 %v402, -0.99999
  %v419 = vmax.f32 %v403, -0.99999
  %v420 = vmax.f32 %v404, -0.99999
  %v421 = vmax.f32 %v405, -0.99999
  %v422 = vmax.f32 %v406, -0.99999
  %v423 = vmax.f32 %v407, -0.99999
  %v424 = vmax.f32 %v408, -0.99999
  %v425 = vmax.f32 %v409, -0.99999
  %v426 = vmax.f32 %v410, -0.99999
  %v427 = vmax.f32 %v411, -0.99999
  %v428 = vmin.f32 %v412, 0.99999
  %v429 = vmin.f32 %v413, 0.99999
  %v430 = vmin.f32 %v414, 0.99999
  %v431 = vmin.f32 %v415, 0.99999
  %v432 = vmin.f32 %v416, 0.99999
  %v433 = vmin.f32 %v417, 0.99999
  %v434 = vmin.f32 %v418, 0.99999
  %v435 = vmin.f32 %v419, 0.99999
  %v436 = vmin.f32 %v420, 0.99999
  %v437 = vmin.f32 %v421, 0.99999
  %v438 = vmin.f32 %v422, 0.99999
  %v439 = vmin.f32 %v423, 0.99999
  %v440 = vmin.f32 %v424, 0.99999
  %v441 = vmin.f32 %v425, 0.99999
  %v442 = vmin.f32 %v426, 0.99999
  %v443 = vmin.f32 %v427, 0.99999
  %v444 = vadd.f32 %v428, 1.0
  %v445 = vadd.f32 %v429, 1.0
  %v446 = vadd.f32 %v430, 1.0
  %v447 = vadd.f32 %v431, 1.0
  %v448 = vadd.f32 %v432, 1.0
  %v449 = vadd.f32 %v433, 1.0
  %v450 = vadd.f32 %v434, 1.0
  %v451 = vadd.f32 %v435, 1.0
  %v452 = vadd.f32 %v436, 1.0
  %v453 = vadd.f32 %v437, 1.0
  %v454 = vadd.f32 %v438, 1.0
  %v455 = vadd.f32 %v439, 1.0
  %v456 = vadd.f32 %v440, 1.0
  %v457 = vadd.f32 %v441, 1.0
  %v458 = vadd.f32 %v442, 1.0
  %v459 = vadd.f32 %v443, 1.0
  %v460 = vsub.f32 1.0, %v428
  %v461 = vsub.f32 1.0, %v429
  %v462 = vsub.f32 1.0, %v430
  %v463 = vsub.f32 1.0, %v431
  %v464 = vsub.f32 1.0, %v432
  %v465 = vsub.f32 1.0, %v433
  %v466 = vsub.f32 1.0, %v434
  %v467 = vsub.f32 1.0, %v435
  %v468 = vsub.f32 1.0, %v436
  %v469 = vsub.f32 1.0, %v437
  %v470 = vsub.f32 1.0, %v438
  %v471 = vsub.f32 1.0, %v439
  %v472 = vsub.f32 1.0, %v440
  %v473 = vsub.f32 1.0, %v441
  %v474 = vsub.f32 1.0, %v442
  %v475 = vsub.f32 1.0, %v443
  %v476 = vrcp.pop %v460
  %v477 = vmul.f32 %v460, %v476
  %v478 = vsub.f32 1.0, %v477
  %v479 = vmul.f32 %v476, %v478
  %v480 = vadd.f32 %v476, %v479
  %vm481 = vweird.f32 %v460
  %vm482 = vweird.f32 %v476
  %vm483 = vmor %vm481, %vm482
  %v484 = vsel %vm483, %v476, %v480
  %v485 = vand.u32 2147483647, %v460
  %vm486 = vcmp.eq.f32.partialorder %v485, 8.507059e+37
  %v487 = vand.u32 %v460, 2147483648
  %v488 = vor.u32 1.1754944e-38, %v487
  %v489 = vsel %vm486, %v488, %v484
  %v490 = vmul.f32 %v444, %v489
  %v491 = vrcp.pop %v461
  %v492 = vmul.f32 %v461, %v491
  %v493 = vsub.f32 1.0, %v492
  %v494 = vmul.f32 %v491, %v493
  %v495 = vadd.f32 %v491, %v494
  %vm496 = vweird.f32 %v461
  %vm497 = vweird.f32 %v491
  %vm498 = vmor %vm496, %vm497
  %v499 = vsel %vm498, %v491, %v495
  %v500 = vand.u32 2147483647, %v461
  %vm501 = vcmp.eq.f32.partialorder %v500, 8.507059e+37
  %v502 = vand.u32 %v461, 2147483648
  %v503 = vor.u32 1.1754944e-38, %v502
  %v504 = vsel %vm501, %v503, %v499
  %v505 = vmul.f32 %v445, %v504
  %v506 = vrcp.pop %v462
  %v507 = vmul.f32 %v462, %v506
  %v508 = vsub.f32 1.0, %v507
  %v509 = vmul.f32 %v506, %v508
  %v510 = vadd.f32 %v506, %v509
  %vm511 = vweird.f32 %v462
  %vm512 = vweird.f32 %v506
  %vm513 = vmor %vm511, %vm512
  %v514 = vsel %vm513, %v506, %v510
  %v515 = vand.u32 2147483647, %v462
  %vm516 = vcmp.eq.f32.partialorder %v515, 8.507059e+37
  %v517 = vand.u32 %v462, 2147483648
  %v518 = vor.u32 1.1754944e-38, %v517
  %v519 = vsel %vm516, %v518, %v514
  %v520 = vmul.f32 %v446, %v519
  %v521 = vrcp.pop %v463
  %v522 = vmul.f32 %v463, %v521
  %v523 = vsub.f32 1.0, %v522
  %v524 = vmul.f32 %v521, %v523
  %v525 = vadd.f32 %v521, %v524
  %vm526 = vweird.f32 %v463
  %vm527 = vweird.f32 %v521
  %vm528 = vmor %vm526, %vm527
  %v529 = vsel %vm528, %v521, %v525
  %v530 = vand.u32 2147483647, %v463
  %vm531 = vcmp.eq.f32.partialorder %v530, 8.507059e+37
  %v532 = vand.u32 %v463, 2147483648
  %v533 = vor.u32 1.1754944e-38, %v532
  %v534 = vsel %vm531, %v533, %v529
  %v535 = vmul.f32 %v447, %v534
  %v536 = vrcp.pop %v464
  %v537 = vmul.f32 %v464, %v536
  %v538 = vsub.f32 1.0, %v537
  %v539 = vmul.f32 %v536, %v538
  %v540 = vadd.f32 %v536, %v539
  %vm541 = vweird.f32 %v464
  %vm542 = vweird.f32 %v536
  %vm543 = vmor %vm541, %vm542
  %v544 = vsel %vm543, %v536, %v540
  %v545 = vand.u32 2147483647, %v464
  %vm546 = vcmp.eq.f32.partialorder %v545, 8.507059e+37
  %v547 = vand.u32 %v464, 2147483648
  %v548 = vor.u32 1.1754944e-38, %v547
  %v549 = vsel %vm546, %v548, %v544
  %v550 = vmul.f32 %v448, %v549
  %v551 = vrcp.pop %v465
  %v552 = vmul.f32 %v465, %v551
  %v553 = vsub.f32 1.0, %v552
  %v554 = vmul.f32 %v551, %v553
  %v555 = vadd.f32 %v551, %v554
  %vm556 = vweird.f32 %v465
  %vm557 = vweird.f32 %v551
  %vm558 = vmor %vm556, %vm557
  %v559 = vsel %vm558, %v551, %v555
  %v560 = vand.u32 2147483647, %v465
  %vm561 = vcmp.eq.f32.partialorder %v560, 8.507059e+37
  %v562 = vand.u32 %v465, 2147483648
  %v563 = vor.u32 1.1754944e-38, %v562
  %v564 = vsel %vm561, %v563, %v559
  %v565 = vmul.f32 %v449, %v564
  %v566 = vrcp.pop %v466
  %v567 = vmul.f32 %v466, %v566
  %v568 = vsub.f32 1.0, %v567
  %v569 = vmul.f32 %v566, %v568
  %v570 = vadd.f32 %v566, %v569
  %vm571 = vweird.f32 %v466
  %vm572 = vweird.f32 %v566
  %vm573 = vmor %vm571, %vm572
  %v574 = vsel %vm573, %v566, %v570
  %v575 = vand.u32 2147483647, %v466
  %vm576 = vcmp.eq.f32.partialorder %v575, 8.507059e+37
  %v577 = vand.u32 %v466, 2147483648
  %v578 = vor.u32 1.1754944e-38, %v577
  %v579 = vsel %vm576, %v578, %v574
  %v580 = vmul.f32 %v450, %v579
  %v581 = vrcp.pop %v467
  %v582 = vmul.f32 %v467, %v581
  %v583 = vsub.f32 1.0, %v582
  %v584 = vmul.f32 %v581, %v583
  %v585 = vadd.f32 %v581, %v584
  %vm586 = vweird.f32 %v467
  %vm587 = vweird.f32 %v581
  %vm588 = vmor %vm586, %vm587
  %v589 = vsel %vm588, %v581, %v585
  %v590 = vand.u32 2147483647, %v467
  %vm591 = vcmp.eq.f32.partialorder %v590, 8.507059e+37
  %v592 = vand.u32 %v467, 2147483648
  %v593 = vor.u32 1.1754944e-38, %v592
  %v594 = vsel %vm591, %v593, %v589
  %v595 = vmul.f32 %v451, %v594
  %v596 = vrcp.pop %v468
  %v597 = vmul.f32 %v468, %v596
  %v598 = vsub.f32 1.0, %v597
  %v599 = vmul.f32 %v596, %v598
  %v600 = vadd.f32 %v596, %v599
  %vm601 = vweird.f32 %v468
  %vm602 = vweird.f32 %v596
  %vm603 = vmor %vm601, %vm602
  %v604 = vsel %vm603, %v596, %v600
  %v605 = vand.u32 2147483647, %v468
  %vm606 = vcmp.eq.f32.partialorder %v605, 8.507059e+37
  %v607 = vand.u32 %v468, 2147483648
  %v608 = vor.u32 1.1754944e-38, %v607
  %v609 = vsel %vm606, %v608, %v604
  %v610 = vmul.f32 %v452, %v609
  %v611 = vrcp.pop %v469
  %v612 = vmul.f32 %v469, %v611
  %v613 = vsub.f32 1.0, %v612
  %v614 = vmul.f32 %v611, %v613
  %v615 = vadd.f32 %v611, %v614
  %vm616 = vweird.f32 %v469
  %vm617 = vweird.f32 %v611
  %vm618 = vmor %vm616, %vm617
  %v619 = vsel %vm618, %v611, %v615
  %v620 = vand.u32 2147483647, %v469
  %vm621 = vcmp.eq.f32.partialorder %v620, 8.507059e+37
  %v622 = vand.u32 %v469, 2147483648
  %v623 = vor.u32 1.1754944e-38, %v622
  %v624 = vsel %vm621, %v623, %v619
  %v625 = vmul.f32 %v453, %v624
  %v626 = vrcp.pop %v470
  %v627 = vmul.f32 %v470, %v626
  %v628 = vsub.f32 1.0, %v627
  %v629 = vmul.f32 %v626, %v628
  %v630 = vadd.f32 %v626, %v629
  %vm631 = vweird.f32 %v470
  %vm632 = vweird.f32 %v626
  %vm633 = vmor %vm631, %vm632
  %v634 = vsel %vm633, %v626, %v630
  %v635 = vand.u32 2147483647, %v470
  %vm636 = vcmp.eq.f32.partialorder %v635, 8.507059e+37
  %v637 = vand.u32 %v470, 2147483648
  %v638 = vor.u32 1.1754944e-38, %v637
  %v639 = vsel %vm636, %v638, %v634
  %v640 = vmul.f32 %v454, %v639
  %v641 = vrcp.pop %v471
  %v642 = vmul.f32 %v471, %v641
  %v643 = vsub.f32 1.0, %v642
  %v644 = vmul.f32 %v641, %v643
  %v645 = vadd.f32 %v641, %v644
  %vm646 = vweird.f32 %v471
  %vm647 = vweird.f32 %v641
  %vm648 = vmor %vm646, %vm647
  %v649 = vsel %vm648, %v641, %v645
  %v650 = vand.u32 2147483647, %v471
  %vm651 = vcmp.eq.f32.partialorder %v650, 8.507059e+37
  %v652 = vand.u32 %v471, 2147483648
  %v653 = vor.u32 1.1754944e-38, %v652
  %v654 = vsel %vm651, %v653, %v649
  %v655 = vmul.f32 %v455, %v654
  %v656 = vrcp.pop %v472
  %v657 = vmul.f32 %v472, %v656
  %v658 = vsub.f32 1.0, %v657
  %v659 = vmul.f32 %v656, %v658
  %v660 = vadd.f32 %v656, %v659
  %vm661 = vweird.f32 %v472
  %vm662 = vweird.f32 %v656
  %vm663 = vmor %vm661, %vm662
  %v664 = vsel %vm663, %v656, %v660
  %v665 = vand.u32 2147483647, %v472
  %vm666 = vcmp.eq.f32.partialorder %v665, 8.507059e+37
  %v667 = vand.u32 %v472, 2147483648
  %v668 = vor.u32 1.1754944e-38, %v667
  %v669 = vsel %vm666, %v668, %v664
  %v670 = vmul.f32 %v456, %v669
  %v671 = vrcp.pop %v473
  %v672 = vmul.f32 %v473, %v671
  %v673 = vsub.f32 1.0, %v672
  %v674 = vmul.f32 %v671, %v673
  %v675 = vadd.f32 %v671, %v674
  %vm676 = vweird.f32 %v473
  %vm677 = vweird.f32 %v671
  %vm678 = vmor %vm676, %vm677
  %v679 = vsel %vm678, %v671, %v675
  %v680 = vand.u32 2147483647, %v473
  %vm681 = vcmp.eq.f32.partialorder %v680, 8.507059e+37
  %v682 = vand.u32 %v473, 2147483648
  %v683 = vor.u32 1.1754944e-38, %v682
  %v684 = vsel %vm681, %v683, %v679
  %v685 = vmul.f32 %v457, %v684
  %v686 = vrcp.pop %v474
  %v687 = vmul.f32 %v474, %v686
  %v688 = vsub.f32 1.0, %v687
  %v689 = vmul.f32 %v686, %v688
  %v690 = vadd.f32 %v686, %v689
  %vm691 = vweird.f32 %v474
  %vm692 = vweird.f32 %v686
  %vm693 = vmor %vm691, %vm692
  %v694 = vsel %vm693, %v686, %v690
  %v695 = vand.u32 2147483647, %v474
  %vm696 = vcmp.eq.f32.partialorder %v695, 8.507059e+37
  %v697 = vand.u32 %v474, 2147483648
  %v698 = vor.u32 1.1754944e-38, %v697
  %v699 = vsel %vm696, %v698, %v694
  %v700 = vmul.f32 %v458, %v699
  %v701 = vrcp.pop %v475
  %v702 = vmul.f32 %v475, %v701
  %v703 = vsub.f32 1.0, %v702
  %v704 = vmul.f32 %v701, %v703
  %v705 = vadd.f32 %v701, %v704
  %vm706 = vweird.f32 %v475
  %vm707 = vweird.f32 %v701
  %vm708 = vmor %vm706, %vm707
  %v709 = vsel %vm708, %v701, %v705
  %v710 = vand.u32 2147483647, %v475
  %vm711 = vcmp.eq.f32.partialorder %v710, 8.507059e+37
  %v712 = vand.u32 %v475, 2147483648
  %v713 = vor.u32 1.1754944e-38, %v712
  %v714 = vsel %vm711, %v713, %v709
  %v715 = vmul.f32 %v459, %v714
  %v716 = vlog2.pop %v490
  %v717 = vmul.f32 %v716, 0.6931472
  %v718 = vlog2.pop %v505
  %v719 = vmul.f32 %v718, 0.6931472
  %v720 = vlog2.pop %v520
  %v721 = vmul.f32 %v720, 0.6931472
  %v722 = vlog2.pop %v535
  %v723 = vmul.f32 %v722, 0.6931472
  %v724 = vlog2.pop %v550
  %v725 = vmul.f32 %v724, 0.6931472
  %v726 = vlog2.pop %v565
  %v727 = vmul.f32 %v726, 0.6931472
  %v728 = vlog2.pop %v580
  %v729 = vmul.f32 %v728, 0.6931472
  %v730 = vlog2.pop %v595
  %v731 = vmul.f32 %v730, 0.6931472
  %v732 = vlog2.pop %v610
  %v733 = vmul.f32 %v732, 0.6931472
  %v734 = vlog2.pop %v625
  %v735 = vmul.f32 %v734, 0.6931472
  %v736 = vlog2.pop %v640
  %v737 = vmul.f32 %v736, 0.6931472
  %v738 = vlog2.pop %v655
  %v739 = vmul.f32 %v738, 0.6931472
  %v740 = vlog2.pop %v670
  %v741 = vmul.f32 %v740, 0.6931472
  %v742 = vlog2.pop %v685
  %v743 = vmul.f32 %v742, 0.6931472
  %v744 = vlog2.pop %v700
  %v745 = vmul.f32 %v744, 0.6931472
  %v746 = vlog2.pop %v715
  %v747 = vmul.f32 %v746, 0.6931472
  %v748 = vmul.f32 %v717, 0.5
  %v749 = vmul.f32 %v719, 0.5
  %v750 = vmul.f32 %v721, 0.5
  %v751 = vmul.f32 %v723, 0.5
  %v752 = vmul.f32 %v725, 0.5
  %v753 = vmul.f32 %v727, 0.5
  %v754 = vmul.f32 %v729, 0.5
  %v755 = vmul.f32 %v731, 0.5
  %v756 = vmul.f32 %v733, 0.5
  %v757 = vmul.f32 %v735, 0.5
  %v758 = vmul.f32 %v737, 0.5
  %v759 = vmul.f32 %v739, 0.5
  %v760 = vmul.f32 %v741, 0.5
  %v761 = vmul.f32 %v743, 0.5
  %v762 = vmul.f32 %v745, 0.5
  %v763 = vmul.f32 %v747, 0.5
  %v764 = vmul.f32 %v748, %v213
  %v765 = vmul.f32 %v749, %v223
  %v766 = vmul.f32 %v750, %v233
  %v767 = vmul.f32 %v751, %v243
  %v768 = vmul.f32 %v752, %v253
  %v769 = vmul.f32 %v753, %v263
  %v770 = vmul.f32 %v754, %v273
  %v771 = vmul.f32 %v755, %v283
  %v772 = vmul.f32 %v756, %v293
  %v773 = vmul.f32 %v757, %v303
  %v774 = vmul.f32 %v758, %v313
  %v775 = vmul.f32 %v759, %v323
  %v776 = vmul.f32 %v760, %v333
  %v777 = vmul.f32 %v761, %v343
  %v778 = vmul.f32 %v762, %v353
  %v779 = vmul.f32 %v763, %v363
  %v796 = vrot.slane %v765, 4
  %v797 = vrot.slane %v767, 4
  %v798 = vrot.slane %v769, 4
  %v799 = vrot.slane %v771, 4
  %v800 = vrot.slane %v773, 4
  %v801 = vrot.slane %v775, 4
  %v802 = vrot.slane %v777, 4
  %v803 = vrot.slane %v779, 4
  %vm804 = vcmask 1043456
  %v805 = vsel %vm804, %v764, %v796
  %v806 = vsel %vm804, %v766, %v797
  %v807 = vsel %vm804, %v768, %v798
  %v808 = vsel %vm804, %v770, %v799
  %v809 = vsel %vm804, %v772, %v800
  %v810 = vsel %vm804, %v774, %v801
  %v811 = vsel %vm804, %v776, %v802
  %v812 = vsel %vm804, %v778, %v803
  %v821 = vmul.f32 %v8, %v805
  %v822 = vmul.f32 %v9, %v806
  %v823 = vmul.f32 %v10, %v807
  %v824 = vmul.f32 %v11, %v808
  %v825 = vmul.f32 %v12, %v809
  %v826 = vmul.f32 %v13, %v810
  %v827 = vmul.f32 %v14, %v811
  %v828 = vmul.f32 %v15, %v812
  %829 = vst [vmem:[%s1] sm:$0x77] %v821
  %830 = vst [vmem:[%s1 + $0x8] sm:$0x77] %v822
  %831 = vst [vmem:[%s1 + $0x10] sm:$0x77] %v823
  %832 = vst [vmem:[%s1 + $0x18] sm:$0x77] %v824
  %833 = vst [vmem:[%s1 + $0x20] sm:$0x77] %v825
  %834 = vst [vmem:[%s1 + $0x28] sm:$0x77] %v826
  %835 = vst [vmem:[%s1 + $0x30] sm:$0x77] %v827
  %836 = vst [vmem:[%s1 + $0x38] sm:$0x77] %v828
  // Predicated region
  $region6: #{_lambda_.9} parent=0 // pred_check
    _
  $region7: #{_lambda_.9} parent=0 // pred_check_branch
    %838 = sbr.rel (0) target = $region9
  $region8: #{_lambda_.9} parent=0 // pred_region
    _
  $region9: #{_lambda_.9} parent=0 // pred_fallthru
    _
  // Predicated region
  $region10: #{_lambda_.9} parent=0 // pred_check
    _
  $region11: #{_lambda_.9} parent=0 // pred_check_branch
    %840 = sbr.rel (0) target = $region13
  $region12: #{_lambda_.9} parent=0 // pred_region
    _
  $region13: #{_lambda_.9} parent=0 // pred_fallthru
    _

// kernel: _lambda_.10
$region0: #{_lambda_.10}
  #allocation0 [shape = 'u32[]', space=smem, size = 0x4, offset = 0x4, fixed_abs, tag = 'smem constant byte address 0x4 - core index']
  #allocation1 [shape = 'u32[72,128]{1,0:T(1,128)}', space=vmem, size = 0x9000, scoped, tag = 'internal scratch']
  %s0 = inlined_call_operand.vmem [shape: f32[4,27], index: 0, kind: input, shape index: {}]
  %s1 = inlined_call_operand.vmem [shape: f32[27,2048], index: 1, kind: input, shape index: {}]
  %s2 = inlined_call_operand.vmem [shape: f32[4,1], index: 2, kind: input, shape index: {}, may-alias: {2,4}]
  %s3 = inlined_call_operand.vmem [shape: f32[4,1], index: 3, kind: input, shape index: {}]
  %s4 = inlined_call_operand.vmem [shape: f32[4,1], index: 4, kind: input, shape index: {}, may-alias: {2,4}]
  %s5 = inlined_call_operand.vmem [shape: f32[4,2048], index: 5, kind: output, shape index: {}]
  %s6 = sld [smem:[#allocation0]]
  $region30: #{_lambda_.10} parent=0
    _
  %s8 = ssub.s32 1, %s6
  %s9 = scalar_select 0, %s8, %s6
  // Predicated region
  $region2: #{_lambda_.10} parent=0 // pred_check
    _
  $region3: #{_lambda_.10} parent=0 // pred_check_branch
    %11 = sbr.rel (0) target = $region5
  $region4: #{_lambda_.10} parent=0 // pred_region
    _
  $region5: #{_lambda_.10} parent=0 // pred_fallthru
    _
  // Predicated region
  $region6: #{_lambda_.10} parent=0 // pred_check
    _
  $region7: #{_lambda_.10} parent=0 // pred_check_branch
    %13 = sbr.rel (0) target = $region9
  $region8: #{_lambda_.10} parent=0 // pred_region
    _
  $region9: #{_lambda_.10} parent=0 // pred_fallthru
    _
  // Predicated region
  $region10: #{_lambda_.10} parent=0 // pred_check
    _
  $region11: #{_lambda_.10} parent=0 // pred_check_branch
    %15 = sbr.rel (0) target = $region13
  $region12: #{_lambda_.10} parent=0 // pred_region
    _
  $region13: #{_lambda_.10} parent=0 // pred_fallthru
    _
  // Predicated region
  $region14: #{_lambda_.10} parent=0 // pred_check
    _
  $region15: #{_lambda_.10} parent=0 // pred_check_branch
    %17 = sbr.rel (0) target = $region17
  $region16: #{_lambda_.10} parent=0 // pred_region
    _
  $region17: #{_lambda_.10} parent=0 // pred_fallthru
    _
  // Predicated region
  $region18: #{_lambda_.10} parent=0 // pred_check
    _
  $region19: #{_lambda_.10} parent=0 // pred_check_branch
    %19 = sbr.rel (0) target = $region21
  $region20: #{_lambda_.10} parent=0 // pred_region
    _
  $region21: #{_lambda_.10} parent=0 // pred_fallthru
    _
  %v20 = vld [vmem:[%s0] sm:$0xf]
  %v21 = vld [vmem:[%s1] sm:$0xff]
  %v22 = vld [vmem:[%s1 + $0x8] sm:$0xff]
  %v23 = vld [vmem:[%s1 + $0x10] sm:$0xff]
  %v24 = vld [vmem:[%s1 + $0x18] sm:$0xff]
  %v25 = vld [vmem:[%s1 + $0x20] sm:$0xff]
  %v26 = vld [vmem:[%s1 + $0x28] sm:$0xff]
  %v27 = vld [vmem:[%s1 + $0x30] sm:$0xff]
  %v28 = vld [vmem:[%s1 + $0x38] sm:$0xff]
  %v29 = vld [vmem:[%s1 + $0x40] sm:$0xff]
  %v30 = vld [vmem:[%s1 + $0x48] sm:$0xff]
  %v31 = vld [vmem:[%s1 + $0x50] sm:$0xff]
  %v32 = vld [vmem:[%s1 + $0x58] sm:$0xff]
  %v33 = vld [vmem:[%s1 + $0x60] sm:$0xff]
  %v34 = vld [vmem:[%s1 + $0x68] sm:$0xff]
  %v35 = vld [vmem:[%s1 + $0x70] sm:$0xff]
  %v36 = vld [vmem:[%s1 + $0x78] sm:$0xff]
  %v37 = vld [vmem:[%s1 + $0x80] sm:$0xff]
  %v38 = vld [vmem:[%s1 + $0x88] sm:$0xff]
  %v39 = vld [vmem:[%s1 + $0x90] sm:$0xff]
  %v40 = vld [vmem:[%s1 + $0x98] sm:$0xff]
  %v41 = vld [vmem:[%s1 + $0xa0] sm:$0xff]
  %v42 = vld [vmem:[%s1 + $0xa8] sm:$0xff]
  %v43 = vld [vmem:[%s1 + $0xb0] sm:$0xff]
  %v44 = vld [vmem:[%s1 + $0xb8] sm:$0xff]
  %v45 = vld [vmem:[%s1 + $0xc0] sm:$0xff]
  %v46 = vld [vmem:[%s1 + $0xc8] sm:$0xff]
  %v47 = vld [vmem:[%s1 + $0xd0] sm:$0xff]
  %v48 = vld [vmem:[%s1 + $0xd8] sm:$0xff]
  %v49 = vld [vmem:[%s1 + $0xe0] sm:$0xff]
  %v50 = vld [vmem:[%s1 + $0xe8] sm:$0xff]
  %v51 = vld [vmem:[%s1 + $0xf0] sm:$0xff]
  %v52 = vld [vmem:[%s1 + $0xf8] sm:$0xff]
  %v53 = vld [vmem:[%s1 + $0x100] sm:$0xff]
  %v54 = vld [vmem:[%s1 + $0x108] sm:$0xff]
  %v55 = vld [vmem:[%s1 + $0x110] sm:$0xff]
  %v56 = vld [vmem:[%s1 + $0x118] sm:$0xff]
  %v57 = vld [vmem:[%s1 + $0x120] sm:$0xff]
  %v58 = vld [vmem:[%s1 + $0x128] sm:$0xff]
  %v59 = vld [vmem:[%s1 + $0x130] sm:$0xff]
  %v60 = vld [vmem:[%s1 + $0x138] sm:$0xff]
  %v61 = vld [vmem:[%s1 + $0x140] sm:$0xff]
  %v62 = vld [vmem:[%s1 + $0x148] sm:$0xff]
  %v63 = vld [vmem:[%s1 + $0x150] sm:$0xff]
  %v64 = vld [vmem:[%s1 + $0x158] sm:$0xff]
  %v65 = vld [vmem:[%s1 + $0x160] sm:$0xff]
  %v66 = vld [vmem:[%s1 + $0x168] sm:$0xff]
  %v67 = vld [vmem:[%s1 + $0x170] sm:$0xff]
  %v68 = vld [vmem:[%s1 + $0x178] sm:$0xff]
  %v69 = vld [vmem:[%s1 + $0x180] sm:$0x7]
  %v70 = vld [vmem:[%s1 + $0x188] sm:$0x7]
  %v71 = vld [vmem:[%s1 + $0x190] sm:$0x7]
  %v72 = vld [vmem:[%s1 + $0x198] sm:$0x7]
  %v73 = vld [vmem:[%s1 + $0x1a0] sm:$0x7]
  %v74 = vld [vmem:[%s1 + $0x1a8] sm:$0x7]
  %v75 = vld [vmem:[%s1 + $0x1b0] sm:$0x7]
  %v76 = vld [vmem:[%s1 + $0x1b8] sm:$0x7]
  %v77 = vld [vmem:[%s1 + $0x1c0] sm:$0x7]
  %v78 = vld [vmem:[%s1 + $0x1c8] sm:$0x7]
  %v79 = vld [vmem:[%s1 + $0x1d0] sm:$0x7]
  %v80 = vld [vmem:[%s1 + $0x1d8] sm:$0x7]
  %v81 = vld [vmem:[%s1 + $0x1e0] sm:$0x7]
  %v82 = vld [vmem:[%s1 + $0x1e8] sm:$0x7]
  %v83 = vld [vmem:[%s1 + $0x1f0] sm:$0x7]
  %v84 = vld [vmem:[%s1 + $0x1f8] sm:$0x7]
  %v85 = vld [vmem:[%s2] sm:$0xf]
  %87 = vset.pattern.permute.xlu0 0
  %88 = vperm.xlu0 %87, %v85
  %v89 = vpop.permute.xlu0 %88
  %vm91 = vcmask 220160
  %v93 = vsel %vm91, %v20, 0
  %vm95 = vcmask 1042432
  %v97 = vsel %vm95, %v69, 0
  %v100 = vsel %vm95, %v70, 0
  %v103 = vsel %vm95, %v71, 0
  %v106 = vsel %vm95, %v72, 0
  %v109 = vsel %vm95, %v73, 0
  %v112 = vsel %vm95, %v74, 0
  %v115 = vsel %vm95, %v75, 0
  %v118 = vsel %vm95, %v76, 0
  %v121 = vsel %vm95, %v77, 0
  %v124 = vsel %vm95, %v78, 0
  %v127 = vsel %vm95, %v79, 0
  %v130 = vsel %vm95, %v80, 0
  %v133 = vsel %vm95, %v81, 0
  %v136 = vsel %vm95, %v82, 0
  %v139 = vsel %vm95, %v83, 0
  %v142 = vsel %vm95, %v84, 0
  %144 = vmatpush.msra.mxu0 0.0
  %145 = vmatpush.msra.mxu0 0.0
  %146 = vmatpush.msra.mxu0 0.0
  %147 = vmatpush.msra.mxu0 0.0
  %148 = vmatpush.msra.mxu0 0.0
  %149 = vmatpush.msra.mxu0 0.0
  %150 = vmatpush.msra.mxu0 0.0
  %151 = vmatpush.msra.mxu0 0.0
  %152 = vmatpush.msra.mxu0 0.0
  %153 = vmatpush.msra.mxu0 0.0
  %154 = vmatpush.msra.mxu0 0.0
  %155 = vmatpush.msra.mxu0 0.0
  %156 = vmatpush.msra.mxu0 %v97
  %157 = vmatpush.msra.mxu0 %v53
  %158 = vmatpush.msra.mxu0 %v37
  %159 = vmatpush.msra.mxu0 %v21
  %160 = vmatmul.f32.gmra.mxu0 %v93
  %v161 = vpop.f32.mrf.mxu0
  %v162 = vadd.f32 %v89, %v161
  %163 = vdwg.mxu0
  %164 = vmatpush.msra.mxu0 0.0
  %165 = vmatpush.msra.mxu0 0.0
  %166 = vmatpush.msra.mxu0 0.0
  %167 = vmatpush.msra.mxu0 0.0
  %168 = vmatpush.msra.mxu0 0.0
  %169 = vmatpush.msra.mxu0 0.0
  %170 = vmatpush.msra.mxu0 0.0
  %171 = vmatpush.msra.mxu0 0.0
  %172 = vmatpush.msra.mxu0 0.0
  %173 = vmatpush.msra.mxu0 0.0
  %174 = vmatpush.msra.mxu0 0.0
  %175 = vmatpush.msra.mxu0 0.0
  %176 = vmatpush.msra.mxu0 %v100
  %177 = vmatpush.msra.mxu0 %v54
  %178 = vmatpush.msra.mxu0 %v38
  %179 = vmatpush.msra.mxu0 %v22
  %180 = vmatmul.f32.gmra.mxu0 %v93
  %v181 = vpop.f32.mrf.mxu0
  %v182 = vadd.f32 %v89, %v181
  %183 = vdwg.mxu0
  %184 = vmatpush.msra.mxu0 0.0
  %185 = vmatpush.msra.mxu0 0.0
  %186 = vmatpush.msra.mxu0 0.0
  %187 = vmatpush.msra.mxu0 0.0
  %188 = vmatpush.msra.mxu0 0.0
  %189 = vmatpush.msra.mxu0 0.0
  %190 = vmatpush.msra.mxu0 0.0
  %191 = vmatpush.msra.mxu0 0.0
  %192 = vmatpush.msra.mxu0 0.0
  %193 = vmatpush.msra.mxu0 0.0
  %194 = vmatpush.msra.mxu0 0.0
  %195 = vmatpush.msra.mxu0 0.0
  %196 = vmatpush.msra.mxu0 %v103
  %197 = vmatpush.msra.mxu0 %v55
  %198 = vmatpush.msra.mxu0 %v39
  %199 = vmatpush.msra.mxu0 %v23
  %200 = vmatmul.f32.gmra.mxu0 %v93
  %v201 = vpop.f32.mrf.mxu0
  %v202 = vadd.f32 %v89, %v201
  %203 = vdwg.mxu0
  %204 = vmatpush.msra.mxu0 0.0
  %205 = vmatpush.msra.mxu0 0.0
  %206 = vmatpush.msra.mxu0 0.0
  %207 = vmatpush.msra.mxu0 0.0
  %208 = vmatpush.msra.mxu0 0.0
  %209 = vmatpush.msra.mxu0 0.0
  %210 = vmatpush.msra.mxu0 0.0
  %211 = vmatpush.msra.mxu0 0.0
  %212 = vmatpush.msra.mxu0 0.0
  %213 = vmatpush.msra.mxu0 0.0
  %214 = vmatpush.msra.mxu0 0.0
  %215 = vmatpush.msra.mxu0 0.0
  %216 = vmatpush.msra.mxu0 %v106
  %217 = vmatpush.msra.mxu0 %v56
  %218 = vmatpush.msra.mxu0 %v40
  %219 = vmatpush.msra.mxu0 %v24
  %220 = vmatmul.f32.gmra.mxu0 %v93
  %v221 = vpop.f32.mrf.mxu0
  %v222 = vadd.f32 %v89, %v221
  %223 = vdwg.mxu0
  %224 = vmatpush.msra.mxu0 0.0
  %225 = vmatpush.msra.mxu0 0.0
  %226 = vmatpush.msra.mxu0 0.0
  %227 = vmatpush.msra.mxu0 0.0
  %228 = vmatpush.msra.mxu0 0.0
  %229 = vmatpush.msra.mxu0 0.0
  %230 = vmatpush.msra.mxu0 0.0
  %231 = vmatpush.msra.mxu0 0.0
  %232 = vmatpush.msra.mxu0 0.0
  %233 = vmatpush.msra.mxu0 0.0
  %234 = vmatpush.msra.mxu0 0.0
  %235 = vmatpush.msra.mxu0 0.0
  %236 = vmatpush.msra.mxu0 %v109
  %237 = vmatpush.msra.mxu0 %v57
  %238 = vmatpush.msra.mxu0 %v41
  %239 = vmatpush.msra.mxu0 %v25
  %240 = vmatmul.f32.gmra.mxu0 %v93
  %v241 = vpop.f32.mrf.mxu0
  %v242 = vadd.f32 %v89, %v241
  %243 = vdwg.mxu0
  %244 = vmatpush.msra.mxu0 0.0
  %245 = vmatpush.msra.mxu0 0.0
  %246 = vmatpush.msra.mxu0 0.0
  %247 = vmatpush.msra.mxu0 0.0
  %248 = vmatpush.msra.mxu0 0.0
  %249 = vmatpush.msra.mxu0 0.0
  %250 = vmatpush.msra.mxu0 0.0
  %251 = vmatpush.msra.mxu0 0.0
  %252 = vmatpush.msra.mxu0 0.0
  %253 = vmatpush.msra.mxu0 0.0
  %254 = vmatpush.msra.mxu0 0.0
  %255 = vmatpush.msra.mxu0 0.0
  %256 = vmatpush.msra.mxu0 %v112
  %257 = vmatpush.msra.mxu0 %v58
  %258 = vmatpush.msra.mxu0 %v42
  %259 = vmatpush.msra.mxu0 %v26
  %260 = vmatmul.f32.gmra.mxu0 %v93
  %v261 = vpop.f32.mrf.mxu0
  %v262 = vadd.f32 %v89, %v261
  %263 = vdwg.mxu0
  %264 = vmatpush.msra.mxu0 0.0
  %265 = vmatpush.msra.mxu0 0.0
  %266 = vmatpush.msra.mxu0 0.0
  %267 = vmatpush.msra.mxu0 0.0
  %268 = vmatpush.msra.mxu0 0.0
  %269 = vmatpush.msra.mxu0 0.0
  %270 = vmatpush.msra.mxu0 0.0
  %271 = vmatpush.msra.mxu0 0.0
  %272 = vmatpush.msra.mxu0 0.0
  %273 = vmatpush.msra.mxu0 0.0
  %274 = vmatpush.msra.mxu0 0.0
  %275 = vmatpush.msra.mxu0 0.0
  %276 = vmatpush.msra.mxu0 %v115
  %277 = vmatpush.msra.mxu0 %v59
  %278 = vmatpush.msra.mxu0 %v43
  %279 = vmatpush.msra.mxu0 %v27
  %280 = vmatmul.f32.gmra.mxu0 %v93
  %v281 = vpop.f32.mrf.mxu0
  %v282 = vadd.f32 %v89, %v281
  %283 = vdwg.mxu0
  %284 = vmatpush.msra.mxu0 0.0
  %285 = vmatpush.msra.mxu0 0.0
  %286 = vmatpush.msra.mxu0 0.0
  %287 = vmatpush.msra.mxu0 0.0
  %288 = vmatpush.msra.mxu0 0.0
  %289 = vmatpush.msra.mxu0 0.0
  %290 = vmatpush.msra.mxu0 0.0
  %291 = vmatpush.msra.mxu0 0.0
  %292 = vmatpush.msra.mxu0 0.0
  %293 = vmatpush.msra.mxu0 0.0
  %294 = vmatpush.msra.mxu0 0.0
  %295 = vmatpush.msra.mxu0 0.0
  %296 = vmatpush.msra.mxu0 %v118
  %297 = vmatpush.msra.mxu0 %v60
  %298 = vmatpush.msra.mxu0 %v44
  %299 = vmatpush.msra.mxu0 %v28
  %300 = vmatmul.f32.gmra.mxu0 %v93
  %v301 = vpop.f32.mrf.mxu0
  %v302 = vadd.f32 %v89, %v301
  %303 = vdwg.mxu0
  %304 = vmatpush.msra.mxu0 0.0
  %305 = vmatpush.msra.mxu0 0.0
  %306 = vmatpush.msra.mxu0 0.0
  %307 = vmatpush.msra.mxu0 0.0
  %308 = vmatpush.msra.mxu0 0.0
  %309 = vmatpush.msra.mxu0 0.0
  %310 = vmatpush.msra.mxu0 0.0
  %311 = vmatpush.msra.mxu0 0.0
  %312 = vmatpush.msra.mxu0 0.0
  %313 = vmatpush.msra.mxu0 0.0
  %314 = vmatpush.msra.mxu0 0.0
  %315 = vmatpush.msra.mxu0 0.0
  %316 = vmatpush.msra.mxu0 %v121
  %317 = vmatpush.msra.mxu0 %v61
  %318 = vmatpush.msra.mxu0 %v45
  %319 = vmatpush.msra.mxu0 %v29
  %320 = vmatmul.f32.gmra.mxu0 %v93
  %v321 = vpop.f32.mrf.mxu0
  %v322 = vadd.f32 %v89, %v321
  %323 = vdwg.mxu0
  %324 = vmatpush.msra.mxu0 0.0
  %325 = vmatpush.msra.mxu0 0.0
  %326 = vmatpush.msra.mxu0 0.0
  %327 = vmatpush.msra.mxu0 0.0
  %328 = vmatpush.msra.mxu0 0.0
  %329 = vmatpush.msra.mxu0 0.0
  %330 = vmatpush.msra.mxu0 0.0
  %331 = vmatpush.msra.mxu0 0.0
  %332 = vmatpush.msra.mxu0 0.0
  %333 = vmatpush.msra.mxu0 0.0
  %334 = vmatpush.msra.mxu0 0.0
  %335 = vmatpush.msra.mxu0 0.0
  %336 = vmatpush.msra.mxu0 %v124
  %337 = vmatpush.msra.mxu0 %v62
  %338 = vmatpush.msra.mxu0 %v46
  %339 = vmatpush.msra.mxu0 %v30
  %340 = vmatmul.f32.gmra.mxu0 %v93
  %v341 = vpop.f32.mrf.mxu0
  %v342 = vadd.f32 %v89, %v341
  %343 = vdwg.mxu0
  %344 = vmatpush.msra.mxu0 0.0
  %345 = vmatpush.msra.mxu0 0.0
  %346 = vmatpush.msra.mxu0 0.0
  %347 = vmatpush.msra.mxu0 0.0
  %348 = vmatpush.msra.mxu0 0.0
  %349 = vmatpush.msra.mxu0 0.0
  %350 = vmatpush.msra.mxu0 0.0
  %351 = vmatpush.msra.mxu0 0.0
  %352 = vmatpush.msra.mxu0 0.0
  %353 = vmatpush.msra.mxu0 0.0
  %354 = vmatpush.msra.mxu0 0.0
  %355 = vmatpush.msra.mxu0 0.0
  %356 = vmatpush.msra.mxu0 %v127
  %357 = vmatpush.msra.mxu0 %v63
  %358 = vmatpush.msra.mxu0 %v47
  %359 = vmatpush.msra.mxu0 %v31
  %360 = vmatmul.f32.gmra.mxu0 %v93
  %v361 = vpop.f32.mrf.mxu0
  %v362 = vadd.f32 %v89, %v361
  %363 = vdwg.mxu0
  %364 = vmatpush.msra.mxu0 0.0
  %365 = vmatpush.msra.mxu0 0.0
  %366 = vmatpush.msra.mxu0 0.0
  %367 = vmatpush.msra.mxu0 0.0
  %368 = vmatpush.msra.mxu0 0.0
  %369 = vmatpush.msra.mxu0 0.0
  %370 = vmatpush.msra.mxu0 0.0
  %371 = vmatpush.msra.mxu0 0.0
  %372 = vmatpush.msra.mxu0 0.0
  %373 = vmatpush.msra.mxu0 0.0
  %374 = vmatpush.msra.mxu0 0.0
  %375 = vmatpush.msra.mxu0 0.0
  %376 = vmatpush.msra.mxu0 %v130
  %377 = vmatpush.msra.mxu0 %v64
  %378 = vmatpush.msra.mxu0 %v48
  %379 = vmatpush.msra.mxu0 %v32
  %380 = vmatmul.f32.gmra.mxu0 %v93
  %v381 = vpop.f32.mrf.mxu0
  %v382 = vadd.f32 %v89, %v381
  %383 = vdwg.mxu0
  %384 = vmatpush.msra.mxu0 0.0
  %385 = vmatpush.msra.mxu0 0.0
  %386 = vmatpush.msra.mxu0 0.0
  %387 = vmatpush.msra.mxu0 0.0
  %388 = vmatpush.msra.mxu0 0.0
  %389 = vmatpush.msra.mxu0 0.0
  %390 = vmatpush.msra.mxu0 0.0
  %391 = vmatpush.msra.mxu0 0.0
  %392 = vmatpush.msra.mxu0 0.0
  %393 = vmatpush.msra.mxu0 0.0
  %394 = vmatpush.msra.mxu0 0.0
  %395 = vmatpush.msra.mxu0 0.0
  %396 = vmatpush.msra.mxu0 %v133
  %397 = vmatpush.msra.mxu0 %v65
  %398 = vmatpush.msra.mxu0 %v49
  %399 = vmatpush.msra.mxu0 %v33
  %400 = vmatmul.f32.gmra.mxu0 %v93
  %v401 = vpop.f32.mrf.mxu0
  %v402 = vadd.f32 %v89, %v401
  %403 = vdwg.mxu0
  %404 = vmatpush.msra.mxu0 0.0
  %405 = vmatpush.msra.mxu0 0.0
  %406 = vmatpush.msra.mxu0 0.0
  %407 = vmatpush.msra.mxu0 0.0
  %408 = vmatpush.msra.mxu0 0.0
  %409 = vmatpush.msra.mxu0 0.0
  %410 = vmatpush.msra.mxu0 0.0
  %411 = vmatpush.msra.mxu0 0.0
  %412 = vmatpush.msra.mxu0 0.0
  %413 = vmatpush.msra.mxu0 0.0
  %414 = vmatpush.msra.mxu0 0.0
  %415 = vmatpush.msra.mxu0 0.0
  %416 = vmatpush.msra.mxu0 %v136
  %417 = vmatpush.msra.mxu0 %v66
  %418 = vmatpush.msra.mxu0 %v50
  %419 = vmatpush.msra.mxu0 %v34
  %420 = vmatmul.f32.gmra.mxu0 %v93
  %v421 = vpop.f32.mrf.mxu0
  %v422 = vadd.f32 %v89, %v421
  %423 = vdwg.mxu0
  %424 = vmatpush.msra.mxu0 0.0
  %425 = vmatpush.msra.mxu0 0.0
  %426 = vmatpush.msra.mxu0 0.0
  %427 = vmatpush.msra.mxu0 0.0
  %428 = vmatpush.msra.mxu0 0.0
  %429 = vmatpush.msra.mxu0 0.0
  %430 = vmatpush.msra.mxu0 0.0
  %431 = vmatpush.msra.mxu0 0.0
  %432 = vmatpush.msra.mxu0 0.0
  %433 = vmatpush.msra.mxu0 0.0
  %434 = vmatpush.msra.mxu0 0.0
  %435 = vmatpush.msra.mxu0 0.0
  %436 = vmatpush.msra.mxu0 %v139
  %437 = vmatpush.msra.mxu0 %v67
  %438 = vmatpush.msra.mxu0 %v51
  %439 = vmatpush.msra.mxu0 %v35
  %440 = vmatmul.f32.gmra.mxu0 %v93
  %v441 = vpop.f32.mrf.mxu0
  %v442 = vadd.f32 %v89, %v441
  %443 = vdwg.mxu0
  %444 = vmatpush.msra.mxu0 0.0
  %445 = vmatpush.msra.mxu0 0.0
  %446 = vmatpush.msra.mxu0 0.0
  %447 = vmatpush.msra.mxu0 0.0
  %448 = vmatpush.msra.mxu0 0.0
  %449 = vmatpush.msra.mxu0 0.0
  %450 = vmatpush.msra.mxu0 0.0
  %451 = vmatpush.msra.mxu0 0.0
  %452 = vmatpush.msra.mxu0 0.0
  %453 = vmatpush.msra.mxu0 0.0
  %454 = vmatpush.msra.mxu0 0.0
  %455 = vmatpush.msra.mxu0 0.0
  %456 = vmatpush.msra.mxu0 %v142
  %457 = vmatpush.msra.mxu0 %v68
  %458 = vmatpush.msra.mxu0 %v52
  %459 = vmatpush.msra.mxu0 %v36
  %460 = vmatmul.f32.gmra.mxu0 %v93
  %v461 = vpop.f32.mrf.mxu0
  %v462 = vadd.f32 %v89, %v461
  %463 = vdwg.mxu0
  %v464 = vld [vmem:[%s3] sm:$0xf]
  %v465 = vld [vmem:[%s4] sm:$0xf]
  %vm466 = vcmask 1043456
  %v467 = vsel %vm466, %v162, 0.0
  %v468 = vsel %vm466, %v182, 0.0
  %v469 = vadd.f32 %v467, %v468
  %v470 = vsel %vm466, %v202, 0.0
  %v471 = vadd.f32 %v469, %v470
  %v472 = vsel %vm466, %v222, 0.0
  %v473 = vadd.f32 %v471, %v472
  %v474 = vsel %vm466, %v242, 0.0
  %v475 = vadd.f32 %v473, %v474
  %v476 = vsel %vm466, %v262, 0.0
  %v477 = vadd.f32 %v475, %v476
  %v478 = vsel %vm466, %v282, 0.0
  %v479 = vadd.f32 %v477, %v478
  %v480 = vsel %vm466, %v302, 0.0
  %v481 = vadd.f32 %v479, %v480
  %v482 = vsel %vm466, %v322, 0.0
  %v483 = vadd.f32 %v481, %v482
  %v484 = vsel %vm466, %v342, 0.0
  %v485 = vadd.f32 %v483, %v484
  %v486 = vsel %vm466, %v362, 0.0
  %v487 = vadd.f32 %v485, %v486
  %v488 = vsel %vm466, %v382, 0.0
  %v489 = vadd.f32 %v487, %v488
  %v490 = vsel %vm466, %v402, 0.0
  %v491 = vadd.f32 %v489, %v490
  %v492 = vsel %vm466, %v422, 0.0
  %v493 = vadd.f32 %v491, %v492
  %v494 = vsel %vm466, %v442, 0.0
  %v495 = vadd.f32 %v493, %v494
  %v496 = vsel %vm466, %v462, 0.0
  %v497 = vadd.f32 %v495, %v496
  %498 = vadd.xlane.f32.xlu0 %v497
  %v499 = vpop.xlane.xlu0 %498
  %v500 = vrcp.pop 2048.0
  %v501 = vmul.f32 2048.0, %v500
  %v502 = vsub.f32 1.0, %v501
  %v503 = vmul.f32 %v500, %v502
  %v504 = vadd.f32 %v500, %v503
  %vm505 = vweird.f32 %v500
  %v506 = vsel %vm505, %v500, %v504
  %v507 = vmul.f32 %v499, %v506
  %v508 = vsub.f32 %v162, %v507
  %v509 = vsub.f32 %v182, %v507
  %v510 = vsub.f32 %v202, %v507
  %v511 = vsub.f32 %v222, %v507
  %v512 = vsub.f32 %v242, %v507
  %v513 = vsub.f32 %v262, %v507
  %v514 = vsub.f32 %v282, %v507
  %v515 = vsub.f32 %v302, %v507
  %v516 = vsub.f32 %v322, %v507
  %v517 = vsub.f32 %v342, %v507
  %v518 = vsub.f32 %v362, %v507
  %v519 = vsub.f32 %v382, %v507
  %v520 = vsub.f32 %v402, %v507
  %v521 = vsub.f32 %v422, %v507
  %v522 = vsub.f32 %v442, %v507
  %v523 = vsub.f32 %v462, %v507
  %v524 = vmul.f32 %v508, %v508
  %v525 = vmul.f32 %v509, %v509
  %v526 = vmul.f32 %v510, %v510
  %v527 = vmul.f32 %v511, %v511
  %v528 = vmul.f32 %v512, %v512
  %v529 = vmul.f32 %v513, %v513
  %v530 = vmul.f32 %v514, %v514
  %v531 = vmul.f32 %v515, %v515
  %v532 = vmul.f32 %v516, %v516
  %v533 = vmul.f32 %v517, %v517
  %v534 = vmul.f32 %v518, %v518
  %v535 = vmul.f32 %v519, %v519
  %v536 = vmul.f32 %v520, %v520
  %v537 = vmul.f32 %v521, %v521
  %v538 = vmul.f32 %v522, %v522
  %v539 = vmul.f32 %v523, %v523
  %v540 = vsel %vm466, %v524, 0.0
  %v541 = vsel %vm466, %v525, 0.0
  %v542 = vadd.f32 %v540, %v541
  %v543 = vsel %vm466, %v526, 0.0
  %v544 = vadd.f32 %v542, %v543
  %v545 = vsel %vm466, %v527, 0.0
  %v546 = vadd.f32 %v544, %v545
  %v547 = vsel %vm466, %v528, 0.0
  %v548 = vadd.f32 %v546, %v547
  %v549 = vsel %vm466, %v529, 0.0
  %v550 = vadd.f32 %v548, %v549
  %v551 = vsel %vm466, %v530, 0.0
  %v552 = vadd.f32 %v550, %v551
  %v553 = vsel %vm466, %v531, 0.0
  %v554 = vadd.f32 %v552, %v553
  %v555 = vsel %vm466, %v532, 0.0
  %v556 = vadd.f32 %v554, %v555
  %v557 = vsel %vm466, %v533, 0.0
  %v558 = vadd.f32 %v556, %v557
  %v559 = vsel %vm466, %v534, 0.0
  %v560 = vadd.f32 %v558, %v559
  %v561 = vsel %vm466, %v535, 0.0
  %v562 = vadd.f32 %v560, %v561
  %v563 = vsel %vm466, %v536, 0.0
  %v564 = vadd.f32 %v562, %v563
  %v565 = vsel %vm466, %v537, 0.0
  %v566 = vadd.f32 %v564, %v565
  %v567 = vsel %vm466, %v538, 0.0
  %v568 = vadd.f32 %v566, %v567
  %v569 = vsel %vm466, %v539, 0.0
  %v570 = vadd.f32 %v568, %v569
  %571 = vadd.xlane.f32.xlu0 %v570
  %v572 = vpop.xlane.xlu0 %571
  %v573 = vmul.f32 %v572, %v506
  %v574 = vadd.f32 %v573, 1e-05
  %v575 = vrsqrt.pop %v574
  %v576 = vmul.f32 %v575, %v574
  %v577 = vmul.f32 %v576, %v575
  %v578 = vmul.f32 0.5, %v577
  %v579 = vsub.f32 1.5, %v578
  %v580 = vmul.f32 %v575, %v579
  %vm581 = vweird.f32 %v574
  %vm582 = vweird.f32 %v575
  %vm583 = vmor %vm581, %vm582
  %v584 = vsel %vm583, %v575, %v580
  %v585 = vmul.f32 %v464, %v584
  %587 = vset.pattern.permute.xlu0 0
  %588 = vperm.xlu0 %587, %v585
  %v589 = vpop.permute.xlu0 %588
  %v591 = vmul.f32 %v162, %v589
  %v592 = vmul.f32 %v182, %v589
  %v593 = vmul.f32 %v202, %v589
  %v594 = vmul.f32 %v222, %v589
  %v595 = vmul.f32 %v242, %v589
  %v596 = vmul.f32 %v262, %v589
  %v597 = vmul.f32 %v282, %v589
  %v598 = vmul.f32 %v302, %v589
  %v599 = vmul.f32 %v322, %v589
  %v600 = vmul.f32 %v342, %v589
  %v601 = vmul.f32 %v362, %v589
  %v602 = vmul.f32 %v382, %v589
  %v603 = vmul.f32 %v402, %v589
  %v604 = vmul.f32 %v422, %v589
  %v605 = vmul.f32 %v442, %v589
  %v606 = vmul.f32 %v462, %v589
  %v607 = vmul.f32 %v507, %v585
  %v608 = vsub.f32 %v465, %v607
  %610 = vset.pattern.permute.xlu0 0
  %611 = vperm.xlu0 %610, %v608
  %v612 = vpop.permute.xlu0 %611
  %v614 = vadd.f32 %v591, %v612
  %v615 = vadd.f32 %v592, %v612
  %v616 = vadd.f32 %v593, %v612
  %v617 = vadd.f32 %v594, %v612
  %v618 = vadd.f32 %v595, %v612
  %v619 = vadd.f32 %v596, %v612
  %v620 = vadd.f32 %v597, %v612
  %v621 = vadd.f32 %v598, %v612
  %v622 = vadd.f32 %v599, %v612
  %v623 = vadd.f32 %v600, %v612
  %v624 = vadd.f32 %v601, %v612
  %v625 = vadd.f32 %v602, %v612
  %v626 = vadd.f32 %v603, %v612
  %v627 = vadd.f32 %v604, %v612
  %v628 = vadd.f32 %v605, %v612
  %v629 = vadd.f32 %v606, %v612
  %v630 = vmax.f32 %v614, 0.0
  %v631 = vmax.f32 %v615, 0.0
  %v632 = vmax.f32 %v616, 0.0
  %v633 = vmax.f32 %v617, 0.0
  %v634 = vmax.f32 %v618, 0.0
  %v635 = vmax.f32 %v619, 0.0
  %v636 = vmax.f32 %v620, 0.0
  %v637 = vmax.f32 %v621, 0.0
  %v638 = vmax.f32 %v622, 0.0
  %v639 = vmax.f32 %v623, 0.0
  %v640 = vmax.f32 %v624, 0.0
  %v641 = vmax.f32 %v625, 0.0
  %v642 = vmax.f32 %v626, 0.0
  %v643 = vmax.f32 %v627, 0.0
  %v644 = vmax.f32 %v628, 0.0
  %v645 = vmax.f32 %v629, 0.0
  %v662 = vrot.slane %v631, 4
  %v663 = vrot.slane %v633, 4
  %v664 = vrot.slane %v635, 4
  %v665 = vrot.slane %v637, 4
  %v666 = vrot.slane %v639, 4
  %v667 = vrot.slane %v641, 4
  %v668 = vrot.slane %v643, 4
  %v669 = vrot.slane %v645, 4
  %v670 = vsel %vm466, %v630, %v662
  %v671 = vsel %vm466, %v632, %v663
  %v672 = vsel %vm466, %v634, %v664
  %v673 = vsel %vm466, %v636, %v665
  %v674 = vsel %vm466, %v638, %v666
  %v675 = vsel %vm466, %v640, %v667
  %v676 = vsel %vm466, %v642, %v668
  %v677 = vsel %vm466, %v644, %v669
  %686 = vst [vmem:[%s5] sm:$0xff] %v670
  %687 = vst [vmem:[%s5 + $0x8] sm:$0xff] %v671
  %688 = vst [vmem:[%s5 + $0x10] sm:$0xff] %v672
  %689 = vst [vmem:[%s5 + $0x18] sm:$0xff] %v673
  %690 = vst [vmem:[%s5 + $0x20] sm:$0xff] %v674
  %691 = vst [vmem:[%s5 + $0x28] sm:$0xff] %v675
  %692 = vst [vmem:[%s5 + $0x30] sm:$0xff] %v676
  %693 = vst [vmem:[%s5 + $0x38] sm:$0xff] %v677
  // Predicated region
  $region22: #{_lambda_.10} parent=0 // pred_check
    _
  $region23: #{_lambda_.10} parent=0 // pred_check_branch
    %695 = sbr.rel (0) target = $region25
  $region24: #{_lambda_.10} parent=0 // pred_region
    _
  $region25: #{_lambda_.10} parent=0 // pred_fallthru
    _
  // Predicated region
  $region26: #{_lambda_.10} parent=0 // pred_check
    _
  $region27: #{_lambda_.10} parent=0 // pred_check_branch
    %697 = sbr.rel (0) target = $region29
  $region28: #{_lambda_.10} parent=0 // pred_region
    _
  $region29: #{_lambda_.10} parent=0 // pred_fallthru
    _

// kernel: _lambda_.11
$region0: #{_lambda_.11}
  #allocation0 [shape = 'u32[]', space=smem, size = 0x4, offset = 0x4, fixed_abs, tag = 'smem constant byte address 0x4 - core index']
  #allocation1 [shape = 'u32[72,128]{1,0:T(1,128)}', space=vmem, size = 0x9000, scoped, tag = 'internal scratch']
  %s0 = inlined_call_operand.vmem [shape: f32[4,36], index: 0, kind: input, shape index: {}]
  %s1 = inlined_call_operand.vmem [shape: f32[36,2048], index: 1, kind: input, shape index: {}]
  %s2 = inlined_call_operand.vmem [shape: f32[4,1], index: 2, kind: input, shape index: {}, may-alias: {2,4}]
  %s3 = inlined_call_operand.vmem [shape: f32[4,1], index: 3, kind: input, shape index: {}]
  %s4 = inlined_call_operand.vmem [shape: f32[4,1], index: 4, kind: input, shape index: {}, may-alias: {2,4}]
  %s5 = inlined_call_operand.vmem [shape: f32[4,2048], index: 5, kind: output, shape index: {}]
  %s6 = sld [smem:[#allocation0]]
  $region30: #{_lambda_.11} parent=0
    _
  %s8 = ssub.s32 1, %s6
  %s9 = scalar_select 0, %s8, %s6
  // Predicated region
  $region2: #{_lambda_.11} parent=0 // pred_check
    _
  $region3: #{_lambda_.11} parent=0 // pred_check_branch
    %11 = sbr.rel (0) target = $region5
  $region4: #{_lambda_.11} parent=0 // pred_region
    _
  $region5: #{_lambda_.11} parent=0 // pred_fallthru
    _
  // Predicated region
  $region6: #{_lambda_.11} parent=0 // pred_check
    _
  $region7: #{_lambda_.11} parent=0 // pred_check_branch
    %13 = sbr.rel (0) target = $region9
  $region8: #{_lambda_.11} parent=0 // pred_region
    _
  $region9: #{_lambda_.11} parent=0 // pred_fallthru
    _
  // Predicated region
  $region10: #{_lambda_.11} parent=0 // pred_check
    _
  $region11: #{_lambda_.11} parent=0 // pred_check_branch
    %15 = sbr.rel (0) target = $region13
  $region12: #{_lambda_.11} parent=0 // pred_region
    _
  $region13: #{_lambda_.11} parent=0 // pred_fallthru
    _
  // Predicated region
  $region14: #{_lambda_.11} parent=0 // pred_check
    _
  $region15: #{_lambda_.11} parent=0 // pred_check_branch
    %17 = sbr.rel (0) target = $region17
  $region16: #{_lambda_.11} parent=0 // pred_region
    _
  $region17: #{_lambda_.11} parent=0 // pred_fallthru
    _
  // Predicated region
  $region18: #{_lambda_.11} parent=0 // pred_check
    _
  $region19: #{_lambda_.11} parent=0 // pred_check_branch
    %19 = sbr.rel (0) target = $region21
  $region20: #{_lambda_.11} parent=0 // pred_region
    _
  $region21: #{_lambda_.11} parent=0 // pred_fallthru
    _
  %v20 = vld [vmem:[%s0] sm:$0xf]
  %v21 = vld [vmem:[%s1] sm:$0xff]
  %v22 = vld [vmem:[%s1 + $0x8] sm:$0xff]
  %v23 = vld [vmem:[%s1 + $0x10] sm:$0xff]
  %v24 = vld [vmem:[%s1 + $0x18] sm:$0xff]
  %v25 = vld [vmem:[%s1 + $0x20] sm:$0xff]
  %v26 = vld [vmem:[%s1 + $0x28] sm:$0xff]
  %v27 = vld [vmem:[%s1 + $0x30] sm:$0xff]
  %v28 = vld [vmem:[%s1 + $0x38] sm:$0xff]
  %v29 = vld [vmem:[%s1 + $0x40] sm:$0xff]
  %v30 = vld [vmem:[%s1 + $0x48] sm:$0xff]
  %v31 = vld [vmem:[%s1 + $0x50] sm:$0xff]
  %v32 = vld [vmem:[%s1 + $0x58] sm:$0xff]
  %v33 = vld [vmem:[%s1 + $0x60] sm:$0xff]
  %v34 = vld [vmem:[%s1 + $0x68] sm:$0xff]
  %v35 = vld [vmem:[%s1 + $0x70] sm:$0xff]
  %v36 = vld [vmem:[%s1 + $0x78] sm:$0xff]
  %v37 = vld [vmem:[%s1 + $0x80] sm:$0xff]
  %v38 = vld [vmem:[%s1 + $0x88] sm:$0xff]
  %v39 = vld [vmem:[%s1 + $0x90] sm:$0xff]
  %v40 = vld [vmem:[%s1 + $0x98] sm:$0xff]
  %v41 = vld [vmem:[%s1 + $0xa0] sm:$0xff]
  %v42 = vld [vmem:[%s1 + $0xa8] sm:$0xff]
  %v43 = vld [vmem:[%s1 + $0xb0] sm:$0xff]
  %v44 = vld [vmem:[%s1 + $0xb8] sm:$0xff]
  %v45 = vld [vmem:[%s1 + $0xc0] sm:$0xff]
  %v46 = vld [vmem:[%s1 + $0xc8] sm:$0xff]
  %v47 = vld [vmem:[%s1 + $0xd0] sm:$0xff]
  %v48 = vld [vmem:[%s1 + $0xd8] sm:$0xff]
  %v49 = vld [vmem:[%s1 + $0xe0] sm:$0xff]
  %v50 = vld [vmem:[%s1 + $0xe8] sm:$0xff]
  %v51 = vld [vmem:[%s1 + $0xf0] sm:$0xff]
  %v52 = vld [vmem:[%s1 + $0xf8] sm:$0xff]
  %v53 = vld [vmem:[%s1 + $0x100] sm:$0xff]
  %v54 = vld [vmem:[%s1 + $0x108] sm:$0xff]
  %v55 = vld [vmem:[%s1 + $0x110] sm:$0xff]
  %v56 = vld [vmem:[%s1 + $0x118] sm:$0xff]
  %v57 = vld [vmem:[%s1 + $0x120] sm:$0xff]
  %v58 = vld [vmem:[%s1 + $0x128] sm:$0xff]
  %v59 = vld [vmem:[%s1 + $0x130] sm:$0xff]
  %v60 = vld [vmem:[%s1 + $0x138] sm:$0xff]
  %v61 = vld [vmem:[%s1 + $0x140] sm:$0xff]
  %v62 = vld [vmem:[%s1 + $0x148] sm:$0xff]
  %v63 = vld [vmem:[%s1 + $0x150] sm:$0xff]
  %v64 = vld [vmem:[%s1 + $0x158] sm:$0xff]
  %v65 = vld [vmem:[%s1 + $0x160] sm:$0xff]
  %v66 = vld [vmem:[%s1 + $0x168] sm:$0xff]
  %v67 = vld [vmem:[%s1 + $0x170] sm:$0xff]
  %v68 = vld [vmem:[%s1 + $0x178] sm:$0xff]
  %v69 = vld [vmem:[%s1 + $0x180] sm:$0xff]
  %v70 = vld [vmem:[%s1 + $0x188] sm:$0xff]
  %v71 = vld [vmem:[%s1 + $0x190] sm:$0xff]
  %v72 = vld [vmem:[%s1 + $0x198] sm:$0xff]
  %v73 = vld [vmem:[%s1 + $0x1a0] sm:$0xff]
  %v74 = vld [vmem:[%s1 + $0x1a8] sm:$0xff]
  %v75 = vld [vmem:[%s1 + $0x1b0] sm:$0xff]
  %v76 = vld [vmem:[%s1 + $0x1b8] sm:$0xff]
  %v77 = vld [vmem:[%s1 + $0x1c0] sm:$0xff]
  %v78 = vld [vmem:[%s1 + $0x1c8] sm:$0xff]
  %v79 = vld [vmem:[%s1 + $0x1d0] sm:$0xff]
  %v80 = vld [vmem:[%s1 + $0x1d8] sm:$0xff]
  %v81 = vld [vmem:[%s1 + $0x1e0] sm:$0xff]
  %v82 = vld [vmem:[%s1 + $0x1e8] sm:$0xff]
  %v83 = vld [vmem:[%s1 + $0x1f0] sm:$0xff]
  %v84 = vld [vmem:[%s1 + $0x1f8] sm:$0xff]
  %v85 = vld [vmem:[%s1 + $0x200] sm:$0xf]
  %v86 = vld [vmem:[%s1 + $0x208] sm:$0xf]
  %v87 = vld [vmem:[%s1 + $0x210] sm:$0xf]
  %v88 = vld [vmem:[%s1 + $0x218] sm:$0xf]
  %v89 = vld [vmem:[%s1 + $0x220] sm:$0xf]
  %v90 = vld [vmem:[%s1 + $0x228] sm:$0xf]
  %v91 = vld [vmem:[%s1 + $0x230] sm:$0xf]
  %v92 = vld [vmem:[%s1 + $0x238] sm:$0xf]
  %v93 = vld [vmem:[%s1 + $0x240] sm:$0xf]
  %v94 = vld [vmem:[%s1 + $0x248] sm:$0xf]
  %v95 = vld [vmem:[%s1 + $0x250] sm:$0xf]
  %v96 = vld [vmem:[%s1 + $0x258] sm:$0xf]
  %v97 = vld [vmem:[%s1 + $0x260] sm:$0xf]
  %v98 = vld [vmem:[%s1 + $0x268] sm:$0xf]
  %v99 = vld [vmem:[%s1 + $0x270] sm:$0xf]
  %v100 = vld [vmem:[%s1 + $0x278] sm:$0xf]
  %v101 = vld [vmem:[%s2] sm:$0xf]
  %103 = vset.pattern.permute.xlu0 0
  %104 = vperm.xlu0 %103, %v101
  %v105 = vpop.permute.xlu0 %104
  %vm107 = vcmask 293888
  %v109 = vsel %vm107, %v20, 0
  %vm111 = vcmask 1043456
  %v113 = vsel %vm111, %v85, 0
  %v116 = vsel %vm111, %v86, 0
  %v119 = vsel %vm111, %v87, 0
  %v122 = vsel %vm111, %v88, 0
  %v125 = vsel %vm111, %v89, 0
  %v128 = vsel %vm111, %v90, 0
  %v131 = vsel %vm111, %v91, 0
  %v134 = vsel %vm111, %v92, 0
  %v137 = vsel %vm111, %v93, 0
  %v140 = vsel %vm111, %v94, 0
  %v143 = vsel %vm111, %v95, 0
  %v146 = vsel %vm111, %v96, 0
  %v149 = vsel %vm111, %v97, 0
  %v152 = vsel %vm111, %v98, 0
  %v155 = vsel %vm111, %v99, 0
  %v158 = vsel %vm111, %v100, 0
  %160 = vmatpush.msra.mxu0 0.0
  %161 = vmatpush.msra.mxu0 0.0
  %162 = vmatpush.msra.mxu0 0.0
  %163 = vmatpush.msra.mxu0 0.0
  %164 = vmatpush.msra.mxu0 0.0
  %165 = vmatpush.msra.mxu0 0.0
  %166 = vmatpush.msra.mxu0 0.0
  %167 = vmatpush.msra.mxu0 0.0
  %168 = vmatpush.msra.mxu0 0.0
  %169 = vmatpush.msra.mxu0 0.0
  %170 = vmatpush.msra.mxu0 0.0
  %171 = vmatpush.msra.mxu0 %v113
  %172 = vmatpush.msra.mxu0 %v69
  %173 = vmatpush.msra.mxu0 %v53
  %174 = vmatpush.msra.mxu0 %v37
  %175 = vmatpush.msra.mxu0 %v21
  %176 = vmatmul.f32.gmra.mxu0 %v109
  %v177 = vpop.f32.mrf.mxu0
  %v178 = vadd.f32 %v105, %v177
  %179 = vdwg.mxu0
  %180 = vmatpush.msra.mxu0 0.0
  %181 = vmatpush.msra.mxu0 0.0
  %182 = vmatpush.msra.mxu0 0.0
  %183 = vmatpush.msra.mxu0 0.0
  %184 = vmatpush.msra.mxu0 0.0
  %185 = vmatpush.msra.mxu0 0.0
  %186 = vmatpush.msra.mxu0 0.0
  %187 = vmatpush.msra.mxu0 0.0
  %188 = vmatpush.msra.mxu0 0.0
  %189 = vmatpush.msra.mxu0 0.0
  %190 = vmatpush.msra.mxu0 0.0
  %191 = vmatpush.msra.mxu0 %v116
  %192 = vmatpush.msra.mxu0 %v70
  %193 = vmatpush.msra.mxu0 %v54
  %194 = vmatpush.msra.mxu0 %v38
  %195 = vmatpush.msra.mxu0 %v22
  %196 = vmatmul.f32.gmra.mxu0 %v109
  %v197 = vpop.f32.mrf.mxu0
  %v198 = vadd.f32 %v105, %v197
  %199 = vdwg.mxu0
  %200 = vmatpush.msra.mxu0 0.0
  %201 = vmatpush.msra.mxu0 0.0
  %202 = vmatpush.msra.mxu0 0.0
  %203 = vmatpush.msra.mxu0 0.0
  %204 = vmatpush.msra.mxu0 0.0
  %205 = vmatpush.msra.mxu0 0.0
  %206 = vmatpush.msra.mxu0 0.0
  %207 = vmatpush.msra.mxu0 0.0
  %208 = vmatpush.msra.mxu0 0.0
  %209 = vmatpush.msra.mxu0 0.0
  %210 = vmatpush.msra.mxu0 0.0
  %211 = vmatpush.msra.mxu0 %v119
  %212 = vmatpush.msra.mxu0 %v71
  %213 = vmatpush.msra.mxu0 %v55
  %214 = vmatpush.msra.mxu0 %v39
  %215 = vmatpush.msra.mxu0 %v23
  %216 = vmatmul.f32.gmra.mxu0 %v109
  %v217 = vpop.f32.mrf.mxu0
  %v218 = vadd.f32 %v105, %v217
  %219 = vdwg.mxu0
  %220 = vmatpush.msra.mxu0 0.0
  %221 = vmatpush.msra.mxu0 0.0
  %222 = vmatpush.msra.mxu0 0.0
  %223 = vmatpush.msra.mxu0 0.0
  %224 = vmatpush.msra.mxu0 0.0
  %225 = vmatpush.msra.mxu0 0.0
  %226 = vmatpush.msra.mxu0 0.0
  %227 = vmatpush.msra.mxu0 0.0
  %228 = vmatpush.msra.mxu0 0.0
  %229 = vmatpush.msra.mxu0 0.0
  %230 = vmatpush.msra.mxu0 0.0
  %231 = vmatpush.msra.mxu0 %v122
  %232 = vmatpush.msra.mxu0 %v72
  %233 = vmatpush.msra.mxu0 %v56
  %234 = vmatpush.msra.mxu0 %v40
  %235 = vmatpush.msra.mxu0 %v24
  %236 = vmatmul.f32.gmra.mxu0 %v109
  %v237 = vpop.f32.mrf.mxu0
  %v238 = vadd.f32 %v105, %v237
  %239 = vdwg.mxu0
  %240 = vmatpush.msra.mxu0 0.0
  %241 = vmatpush.msra.mxu0 0.0
  %242 = vmatpush.msra.mxu0 0.0
  %243 = vmatpush.msra.mxu0 0.0
  %244 = vmatpush.msra.mxu0 0.0
  %245 = vmatpush.msra.mxu0 0.0
  %246 = vmatpush.msra.mxu0 0.0
  %247 = vmatpush.msra.mxu0 0.0
  %248 = vmatpush.msra.mxu0 0.0
  %249 = vmatpush.msra.mxu0 0.0
  %250 = vmatpush.msra.mxu0 0.0
  %251 = vmatpush.msra.mxu0 %v125
  %252 = vmatpush.msra.mxu0 %v73
  %253 = vmatpush.msra.mxu0 %v57
  %254 = vmatpush.msra.mxu0 %v41
  %255 = vmatpush.msra.mxu0 %v25
  %256 = vmatmul.f32.gmra.mxu0 %v109
  %v257 = vpop.f32.mrf.mxu0
  %v258 = vadd.f32 %v105, %v257
  %259 = vdwg.mxu0
  %260 = vmatpush.msra.mxu0 0.0
  %261 = vmatpush.msra.mxu0 0.0
  %262 = vmatpush.msra.mxu0 0.0
  %263 = vmatpush.msra.mxu0 0.0
  %264 = vmatpush.msra.mxu0 0.0
  %265 = vmatpush.msra.mxu0 0.0
  %266 = vmatpush.msra.mxu0 0.0
  %267 = vmatpush.msra.mxu0 0.0
  %268 = vmatpush.msra.mxu0 0.0
  %269 = vmatpush.msra.mxu0 0.0
  %270 = vmatpush.msra.mxu0 0.0
  %271 = vmatpush.msra.mxu0 %v128
  %272 = vmatpush.msra.mxu0 %v74
  %273 = vmatpush.msra.mxu0 %v58
  %274 = vmatpush.msra.mxu0 %v42
  %275 = vmatpush.msra.mxu0 %v26
  %276 = vmatmul.f32.gmra.mxu0 %v109
  %v277 = vpop.f32.mrf.mxu0
  %v278 = vadd.f32 %v105, %v277
  %279 = vdwg.mxu0
  %280 = vmatpush.msra.mxu0 0.0
  %281 = vmatpush.msra.mxu0 0.0
  %282 = vmatpush.msra.mxu0 0.0
  %283 = vmatpush.msra.mxu0 0.0
  %284 = vmatpush.msra.mxu0 0.0
  %285 = vmatpush.msra.mxu0 0.0
  %286 = vmatpush.msra.mxu0 0.0
  %287 = vmatpush.msra.mxu0 0.0
  %288 = vmatpush.msra.mxu0 0.0
  %289 = vmatpush.msra.mxu0 0.0
  %290 = vmatpush.msra.mxu0 0.0
  %291 = vmatpush.msra.mxu0 %v131
  %292 = vmatpush.msra.mxu0 %v75
  %293 = vmatpush.msra.mxu0 %v59
  %294 = vmatpush.msra.mxu0 %v43
  %295 = vmatpush.msra.mxu0 %v27
  %296 = vmatmul.f32.gmra.mxu0 %v109
  %v297 = vpop.f32.mrf.mxu0
  %v298 = vadd.f32 %v105, %v297
  %299 = vdwg.mxu0
  %300 = vmatpush.msra.mxu0 0.0
  %301 = vmatpush.msra.mxu0 0.0
  %302 = vmatpush.msra.mxu0 0.0
  %303 = vmatpush.msra.mxu0 0.0
  %304 = vmatpush.msra.mxu0 0.0
  %305 = vmatpush.msra.mxu0 0.0
  %306 = vmatpush.msra.mxu0 0.0
  %307 = vmatpush.msra.mxu0 0.0
  %308 = vmatpush.msra.mxu0 0.0
  %309 = vmatpush.msra.mxu0 0.0
  %310 = vmatpush.msra.mxu0 0.0
  %311 = vmatpush.msra.mxu0 %v134
  %312 = vmatpush.msra.mxu0 %v76
  %313 = vmatpush.msra.mxu0 %v60
  %314 = vmatpush.msra.mxu0 %v44
  %315 = vmatpush.msra.mxu0 %v28
  %316 = vmatmul.f32.gmra.mxu0 %v109
  %v317 = vpop.f32.mrf.mxu0
  %v318 = vadd.f32 %v105, %v317
  %319 = vdwg.mxu0
  %320 = vmatpush.msra.mxu0 0.0
  %321 = vmatpush.msra.mxu0 0.0
  %322 = vmatpush.msra.mxu0 0.0
  %323 = vmatpush.msra.mxu0 0.0
  %324 = vmatpush.msra.mxu0 0.0
  %325 = vmatpush.msra.mxu0 0.0
  %326 = vmatpush.msra.mxu0 0.0
  %327 = vmatpush.msra.mxu0 0.0
  %328 = vmatpush.msra.mxu0 0.0
  %329 = vmatpush.msra.mxu0 0.0
  %330 = vmatpush.msra.mxu0 0.0
  %331 = vmatpush.msra.mxu0 %v137
  %332 = vmatpush.msra.mxu0 %v77
  %333 = vmatpush.msra.mxu0 %v61
  %334 = vmatpush.msra.mxu0 %v45
  %335 = vmatpush.msra.mxu0 %v29
  %336 = vmatmul.f32.gmra.mxu0 %v109
  %v337 = vpop.f32.mrf.mxu0
  %v338 = vadd.f32 %v105, %v337
  %339 = vdwg.mxu0
  %340 = vmatpush.msra.mxu0 0.0
  %341 = vmatpush.msra.mxu0 0.0
  %342 = vmatpush.msra.mxu0 0.0
  %343 = vmatpush.msra.mxu0 0.0
  %344 = vmatpush.msra.mxu0 0.0
  %345 = vmatpush.msra.mxu0 0.0
  %346 = vmatpush.msra.mxu0 0.0
  %347 = vmatpush.msra.mxu0 0.0
  %348 = vmatpush.msra.mxu0 0.0
  %349 = vmatpush.msra.mxu0 0.0
  %350 = vmatpush.msra.mxu0 0.0
  %351 = vmatpush.msra.mxu0 %v140
  %352 = vmatpush.msra.mxu0 %v78
  %353 = vmatpush.msra.mxu0 %v62
  %354 = vmatpush.msra.mxu0 %v46
  %355 = vmatpush.msra.mxu0 %v30
  %356 = vmatmul.f32.gmra.mxu0 %v109
  %v357 = vpop.f32.mrf.mxu0
  %v358 = vadd.f32 %v105, %v357
  %359 = vdwg.mxu0
  %360 = vmatpush.msra.mxu0 0.0
  %361 = vmatpush.msra.mxu0 0.0
  %362 = vmatpush.msra.mxu0 0.0
  %363 = vmatpush.msra.mxu0 0.0
  %364 = vmatpush.msra.mxu0 0.0
  %365 = vmatpush.msra.mxu0 0.0
  %366 = vmatpush.msra.mxu0 0.0
  %367 = vmatpush.msra.mxu0 0.0
  %368 = vmatpush.msra.mxu0 0.0
  %369 = vmatpush.msra.mxu0 0.0
  %370 = vmatpush.msra.mxu0 0.0
  %371 = vmatpush.msra.mxu0 %v143
  %372 = vmatpush.msra.mxu0 %v79
  %373 = vmatpush.msra.mxu0 %v63
  %374 = vmatpush.msra.mxu0 %v47
  %375 = vmatpush.msra.mxu0 %v31
  %376 = vmatmul.f32.gmra.mxu0 %v109
  %v377 = vpop.f32.mrf.mxu0
  %v378 = vadd.f32 %v105, %v377
  %379 = vdwg.mxu0
  %380 = vmatpush.msra.mxu0 0.0
  %381 = vmatpush.msra.mxu0 0.0
  %382 = vmatpush.msra.mxu0 0.0
  %383 = vmatpush.msra.mxu0 0.0
  %384 = vmatpush.msra.mxu0 0.0
  %385 = vmatpush.msra.mxu0 0.0
  %386 = vmatpush.msra.mxu0 0.0
  %387 = vmatpush.msra.mxu0 0.0
  %388 = vmatpush.msra.mxu0 0.0
  %389 = vmatpush.msra.mxu0 0.0
  %390 = vmatpush.msra.mxu0 0.0
  %391 = vmatpush.msra.mxu0 %v146
  %392 = vmatpush.msra.mxu0 %v80
  %393 = vmatpush.msra.mxu0 %v64
  %394 = vmatpush.msra.mxu0 %v48
  %395 = vmatpush.msra.mxu0 %v32
  %396 = vmatmul.f32.gmra.mxu0 %v109
  %v397 = vpop.f32.mrf.mxu0
  %v398 = vadd.f32 %v105, %v397
  %399 = vdwg.mxu0
  %400 = vmatpush.msra.mxu0 0.0
  %401 = vmatpush.msra.mxu0 0.0
  %402 = vmatpush.msra.mxu0 0.0
  %403 = vmatpush.msra.mxu0 0.0
  %404 = vmatpush.msra.mxu0 0.0
  %405 = vmatpush.msra.mxu0 0.0
  %406 = vmatpush.msra.mxu0 0.0
  %407 = vmatpush.msra.mxu0 0.0
  %408 = vmatpush.msra.mxu0 0.0
  %409 = vmatpush.msra.mxu0 0.0
  %410 = vmatpush.msra.mxu0 0.0
  %411 = vmatpush.msra.mxu0 %v149
  %412 = vmatpush.msra.mxu0 %v81
  %413 = vmatpush.msra.mxu0 %v65
  %414 = vmatpush.msra.mxu0 %v49
  %415 = vmatpush.msra.mxu0 %v33
  %416 = vmatmul.f32.gmra.mxu0 %v109
  %v417 = vpop.f32.mrf.mxu0
  %v418 = vadd.f32 %v105, %v417
  %419 = vdwg.mxu0
  %420 = vmatpush.msra.mxu0 0.0
  %421 = vmatpush.msra.mxu0 0.0
  %422 = vmatpush.msra.mxu0 0.0
  %423 = vmatpush.msra.mxu0 0.0
  %424 = vmatpush.msra.mxu0 0.0
  %425 = vmatpush.msra.mxu0 0.0
  %426 = vmatpush.msra.mxu0 0.0
  %427 = vmatpush.msra.mxu0 0.0
  %428 = vmatpush.msra.mxu0 0.0
  %429 = vmatpush.msra.mxu0 0.0
  %430 = vmatpush.msra.mxu0 0.0
  %431 = vmatpush.msra.mxu0 %v152
  %432 = vmatpush.msra.mxu0 %v82
  %433 = vmatpush.msra.mxu0 %v66
  %434 = vmatpush.msra.mxu0 %v50
  %435 = vmatpush.msra.mxu0 %v34
  %436 = vmatmul.f32.gmra.mxu0 %v109
  %v437 = vpop.f32.mrf.mxu0
  %v438 = vadd.f32 %v105, %v437
  %439 = vdwg.mxu0
  %440 = vmatpush.msra.mxu0 0.0
  %441 = vmatpush.msra.mxu0 0.0
  %442 = vmatpush.msra.mxu0 0.0
  %443 = vmatpush.msra.mxu0 0.0
  %444 = vmatpush.msra.mxu0 0.0
  %445 = vmatpush.msra.mxu0 0.0
  %446 = vmatpush.msra.mxu0 0.0
  %447 = vmatpush.msra.mxu0 0.0
  %448 = vmatpush.msra.mxu0 0.0
  %449 = vmatpush.msra.mxu0 0.0
  %450 = vmatpush.msra.mxu0 0.0
  %451 = vmatpush.msra.mxu0 %v155
  %452 = vmatpush.msra.mxu0 %v83
  %453 = vmatpush.msra.mxu0 %v67
  %454 = vmatpush.msra.mxu0 %v51
  %455 = vmatpush.msra.mxu0 %v35
  %456 = vmatmul.f32.gmra.mxu0 %v109
  %v457 = vpop.f32.mrf.mxu0
  %v458 = vadd.f32 %v105, %v457
  %459 = vdwg.mxu0
  %460 = vmatpush.msra.mxu0 0.0
  %461 = vmatpush.msra.mxu0 0.0
  %462 = vmatpush.msra.mxu0 0.0
  %463 = vmatpush.msra.mxu0 0.0
  %464 = vmatpush.msra.mxu0 0.0
  %465 = vmatpush.msra.mxu0 0.0
  %466 = vmatpush.msra.mxu0 0.0
  %467 = vmatpush.msra.mxu0 0.0
  %468 = vmatpush.msra.mxu0 0.0
  %469 = vmatpush.msra.mxu0 0.0
  %470 = vmatpush.msra.mxu0 0.0
  %471 = vmatpush.msra.mxu0 %v158
  %472 = vmatpush.msra.mxu0 %v84
  %473 = vmatpush.msra.mxu0 %v68
  %474 = vmatpush.msra.mxu0 %v52
  %475 = vmatpush.msra.mxu0 %v36
  %476 = vmatmul.f32.gmra.mxu0 %v109
  %v477 = vpop.f32.mrf.mxu0
  %v478 = vadd.f32 %v105, %v477
  %479 = vdwg.mxu0
  %v480 = vld [vmem:[%s3] sm:$0xf]
  %v481 = vld [vmem:[%s4] sm:$0xf]
  %v482 = vsel %vm111, %v178, 0.0
  %v483 = vsel %vm111, %v198, 0.0
  %v484 = vadd.f32 %v482, %v483
  %v485 = vsel %vm111, %v218, 0.0
  %v486 = vadd.f32 %v484, %v485
  %v487 = vsel %vm111, %v238, 0.0
  %v488 = vadd.f32 %v486, %v487
  %v489 = vsel %vm111, %v258, 0.0
  %v490 = vadd.f32 %v488, %v489
  %v491 = vsel %vm111, %v278, 0.0
  %v492 = vadd.f32 %v490, %v491
  %v493 = vsel %vm111, %v298, 0.0
  %v494 = vadd.f32 %v492, %v493
  %v495 = vsel %vm111, %v318, 0.0
  %v496 = vadd.f32 %v494, %v495
  %v497 = vsel %vm111, %v338, 0.0
  %v498 = vadd.f32 %v496, %v497
  %v499 = vsel %vm111, %v358, 0.0
  %v500 = vadd.f32 %v498, %v499
  %v501 = vsel %vm111, %v378, 0.0
  %v502 = vadd.f32 %v500, %v501
  %v503 = vsel %vm111, %v398, 0.0
  %v504 = vadd.f32 %v502, %v503
  %v505 = vsel %vm111, %v418, 0.0
  %v506 = vadd.f32 %v504, %v505
  %v507 = vsel %vm111, %v438, 0.0
  %v508 = vadd.f32 %v506, %v507
  %v509 = vsel %vm111, %v458, 0.0
  %v510 = vadd.f32 %v508, %v509
  %v511 = vsel %vm111, %v478, 0.0
  %v512 = vadd.f32 %v510, %v511
  %513 = vadd.xlane.f32.xlu0 %v512
  %v514 = vpop.xlane.xlu0 %513
  %v515 = vrcp.pop 2048.0
  %v516 = vmul.f32 2048.0, %v515
  %v517 = vsub.f32 1.0, %v516
  %v518 = vmul.f32 %v515, %v517
  %v519 = vadd.f32 %v515, %v518
  %vm520 = vweird.f32 %v515
  %v521 = vsel %vm520, %v515, %v519
  %v522 = vmul.f32 %v514, %v521
  %v523 = vsub.f32 %v178, %v522
  %v524 = vsub.f32 %v198, %v522
  %v525 = vsub.f32 %v218, %v522
  %v526 = vsub.f32 %v238, %v522
  %v527 = vsub.f32 %v258, %v522
  %v528 = vsub.f32 %v278, %v522
  %v529 = vsub.f32 %v298, %v522
  %v530 = vsub.f32 %v318, %v522
  %v531 = vsub.f32 %v338, %v522
  %v532 = vsub.f32 %v358, %v522
  %v533 = vsub.f32 %v378, %v522
  %v534 = vsub.f32 %v398, %v522
  %v535 = vsub.f32 %v418, %v522
  %v536 = vsub.f32 %v438, %v522
  %v537 = vsub.f32 %v458, %v522
  %v538 = vsub.f32 %v478, %v522
  %v539 = vmul.f32 %v523, %v523
  %v540 = vmul.f32 %v524, %v524
  %v541 = vmul.f32 %v525, %v525
  %v542 = vmul.f32 %v526, %v526
  %v543 = vmul.f32 %v527, %v527
  %v544 = vmul.f32 %v528, %v528
  %v545 = vmul.f32 %v529, %v529
  %v546 = vmul.f32 %v530, %v530
  %v547 = vmul.f32 %v531, %v531
  %v548 = vmul.f32 %v532, %v532
  %v549 = vmul.f32 %v533, %v533
  %v550 = vmul.f32 %v534, %v534
  %v551 = vmul.f32 %v535, %v535
  %v552 = vmul.f32 %v536, %v536
  %v553 = vmul.f32 %v537, %v537
  %v554 = vmul.f32 %v538, %v538
  %v555 = vsel %vm111, %v539, 0.0
  %v556 = vsel %vm111, %v540, 0.0
  %v557 = vadd.f32 %v555, %v556
  %v558 = vsel %vm111, %v541, 0.0
  %v559 = vadd.f32 %v557, %v558
  %v560 = vsel %vm111, %v542, 0.0
  %v561 = vadd.f32 %v559, %v560
  %v562 = vsel %vm111, %v543, 0.0
  %v563 = vadd.f32 %v561, %v562
  %v564 = vsel %vm111, %v544, 0.0
  %v565 = vadd.f32 %v563, %v564
  %v566 = vsel %vm111, %v545, 0.0
  %v567 = vadd.f32 %v565, %v566
  %v568 = vsel %vm111, %v546, 0.0
  %v569 = vadd.f32 %v567, %v568
  %v570 = vsel %vm111, %v547, 0.0
  %v571 = vadd.f32 %v569, %v570
  %v572 = vsel %vm111, %v548, 0.0
  %v573 = vadd.f32 %v571, %v572
  %v574 = vsel %vm111, %v549, 0.0
  %v575 = vadd.f32 %v573, %v574
  %v576 = vsel %vm111, %v550, 0.0
  %v577 = vadd.f32 %v575, %v576
  %v578 = vsel %vm111, %v551, 0.0
  %v579 = vadd.f32 %v577, %v578
  %v580 = vsel %vm111, %v552, 0.0
  %v581 = vadd.f32 %v579, %v580
  %v582 = vsel %vm111, %v553, 0.0
  %v583 = vadd.f32 %v581, %v582
  %v584 = vsel %vm111, %v554, 0.0
  %v585 = vadd.f32 %v583, %v584
  %586 = vadd.xlane.f32.xlu0 %v585
  %v587 = vpop.xlane.xlu0 %586
  %v588 = vmul.f32 %v587, %v521
  %v589 = vadd.f32 %v588, 1e-05
  %v590 = vrsqrt.pop %v589
  %v591 = vmul.f32 %v590, %v589
  %v592 = vmul.f32 %v591, %v590
  %v593 = vmul.f32 0.5, %v592
  %v594 = vsub.f32 1.5, %v593
  %v595 = vmul.f32 %v590, %v594
  %vm596 = vweird.f32 %v589
  %vm597 = vweird.f32 %v590
  %vm598 = vmor %vm596, %vm597
  %v599 = vsel %vm598, %v590, %v595
  %v600 = vmul.f32 %v480, %v599
  %602 = vset.pattern.permute.xlu0 0
  %603 = vperm.xlu0 %602, %v600
  %v604 = vpop.permute.xlu0 %603
  %v606 = vmul.f32 %v178, %v604
  %v607 = vmul.f32 %v198, %v604
  %v608 = vmul.f32 %v218, %v604
  %v609 = vmul.f32 %v238, %v604
  %v610 = vmul.f32 %v258, %v604
  %v611 = vmul.f32 %v278, %v604
  %v612 = vmul.f32 %v298, %v604
  %v613 = vmul.f32 %v318, %v604
  %v614 = vmul.f32 %v338, %v604
  %v615 = vmul.f32 %v358, %v604
  %v616 = vmul.f32 %v378, %v604
  %v617 = vmul.f32 %v398, %v604
  %v618 = vmul.f32 %v418, %v604
  %v619 = vmul.f32 %v438, %v604
  %v620 = vmul.f32 %v458, %v604
  %v621 = vmul.f32 %v478, %v604
  %v622 = vmul.f32 %v522, %v600
  %v623 = vsub.f32 %v481, %v622
  %625 = vset.pattern.permute.xlu0 0
  %626 = vperm.xlu0 %625, %v623
  %v627 = vpop.permute.xlu0 %626
  %v629 = vadd.f32 %v606, %v627
  %v630 = vadd.f32 %v607, %v627
  %v631 = vadd.f32 %v608, %v627
  %v632 = vadd.f32 %v609, %v627
  %v633 = vadd.f32 %v610, %v627
  %v634 = vadd.f32 %v611, %v627
  %v635 = vadd.f32 %v612, %v627
  %v636 = vadd.f32 %v613, %v627
  %v637 = vadd.f32 %v614, %v627
  %v638 = vadd.f32 %v615, %v627
  %v639 = vadd.f32 %v616, %v627
  %v640 = vadd.f32 %v617, %v627
  %v641 = vadd.f32 %v618, %v627
  %v642 = vadd.f32 %v619, %v627
  %v643 = vadd.f32 %v620, %v627
  %v644 = vadd.f32 %v621, %v627
  %v645 = vmax.f32 %v629, 0.0
  %v646 = vmax.f32 %v630, 0.0
  %v647 = vmax.f32 %v631, 0.0
  %v648 = vmax.f32 %v632, 0.0
  %v649 = vmax.f32 %v633, 0.0
  %v650 = vmax.f32 %v634, 0.0
  %v651 = vmax.f32 %v635, 0.0
  %v652 = vmax.f32 %v636, 0.0
  %v653 = vmax.f32 %v637, 0.0
  %v654 = vmax.f32 %v638, 0.0
  %v655 = vmax.f32 %v639, 0.0
  %v656 = vmax.f32 %v640, 0.0
  %v657 = vmax.f32 %v641, 0.0
  %v658 = vmax.f32 %v642, 0.0
  %v659 = vmax.f32 %v643, 0.0
  %v660 = vmax.f32 %v644, 0.0
  %v677 = vrot.slane %v646, 4
  %v678 = vrot.slane %v648, 4
  %v679 = vrot.slane %v650, 4
  %v680 = vrot.slane %v652, 4
  %v681 = vrot.slane %v654, 4
  %v682 = vrot.slane %v656, 4
  %v683 = vrot.slane %v658, 4
  %v684 = vrot.slane %v660, 4
  %v685 = vsel %vm111, %v645, %v677
  %v686 = vsel %vm111, %v647, %v678
  %v687 = vsel %vm111, %v649, %v679
  %v688 = vsel %vm111, %v651, %v680
  %v689 = vsel %vm111, %v653, %v681
  %v690 = vsel %vm111, %v655, %v682
  %v691 = vsel %vm111, %v657, %v683
  %v692 = vsel %vm111, %v659, %v684
  %701 = vst [vmem:[%s5] sm:$0xff] %v685
  %702 = vst [vmem:[%s5 + $0x8] sm:$0xff] %v686
  %703 = vst [vmem:[%s5 + $0x10] sm:$0xff] %v687
  %704 = vst [vmem:[%s5 + $0x18] sm:$0xff] %v688
  %705 = vst [vmem:[%s5 + $0x20] sm:$0xff] %v689
  %706 = vst [vmem:[%s5 + $0x28] sm:$0xff] %v690
  %707 = vst [vmem:[%s5 + $0x30] sm:$0xff] %v691
  %708 = vst [vmem:[%s5 + $0x38] sm:$0xff] %v692
  // Predicated region
  $region22: #{_lambda_.11} parent=0 // pred_check
    _
  $region23: #{_lambda_.11} parent=0 // pred_check_branch
    %710 = sbr.rel (0) target = $region25
  $region24: #{_lambda_.11} parent=0 // pred_region
    _
  $region25: #{_lambda_.11} parent=0 // pred_fallthru
    _
  // Predicated region
  $region26: #{_lambda_.11} parent=0 // pred_check
    _
  $region27: #{_lambda_.11} parent=0 // pred_check_branch
    %712 = sbr.rel (0) target = $region29
  $region28: #{_lambda_.11} parent=0 // pred_region
    _
  $region29: #{_lambda_.11} parent=0 // pred_fallthru
    _

// kernel: _lambda_.12
$region0: #{_lambda_.12}
  #allocation0 [shape = 'u32[]', space=smem, size = 0x4, offset = 0x4, fixed_abs, tag = 'smem constant byte address 0x4 - core index']
  #allocation1 [shape = 'u32[72,128]{1,0:T(1,128)}', space=vmem, size = 0x9000, scoped, tag = 'internal scratch']
  %s0 = inlined_call_operand.vmem [shape: f32[4,36], index: 0, kind: input, shape index: {}]
  %s1 = inlined_call_operand.vmem [shape: f32[36,2048], index: 1, kind: input, shape index: {}]
  %s2 = inlined_call_operand.vmem [shape: f32[4,1], index: 2, kind: input, shape index: {}, may-alias: {2,4}]
  %s3 = inlined_call_operand.vmem [shape: f32[4,1], index: 3, kind: input, shape index: {}]
  %s4 = inlined_call_operand.vmem [shape: f32[4,1], index: 4, kind: input, shape index: {}, may-alias: {2,4}]
  %s5 = inlined_call_operand.vmem [shape: f32[4,2048], index: 5, kind: input, shape index: {}]
  %s6 = inlined_call_operand.vmem [shape: f32[4,2048], index: 6, kind: output, shape index: {}]
  %s7 = sld [smem:[#allocation0]]
  $region34: #{_lambda_.12} parent=0
    _
  %s9 = ssub.s32 1, %s7
  %s10 = scalar_select 0, %s9, %s7
  // Predicated region
  $region2: #{_lambda_.12} parent=0 // pred_check
    _
  $region3: #{_lambda_.12} parent=0 // pred_check_branch
    %12 = sbr.rel (0) target = $region5
  $region4: #{_lambda_.12} parent=0 // pred_region
    _
  $region5: #{_lambda_.12} parent=0 // pred_fallthru
    _
  // Predicated region
  $region6: #{_lambda_.12} parent=0 // pred_check
    _
  $region7: #{_lambda_.12} parent=0 // pred_check_branch
    %14 = sbr.rel (0) target = $region9
  $region8: #{_lambda_.12} parent=0 // pred_region
    _
  $region9: #{_lambda_.12} parent=0 // pred_fallthru
    _
  // Predicated region
  $region10: #{_lambda_.12} parent=0 // pred_check
    _
  $region11: #{_lambda_.12} parent=0 // pred_check_branch
    %16 = sbr.rel (0) target = $region13
  $region12: #{_lambda_.12} parent=0 // pred_region
    _
  $region13: #{_lambda_.12} parent=0 // pred_fallthru
    _
  // Predicated region
  $region14: #{_lambda_.12} parent=0 // pred_check
    _
  $region15: #{_lambda_.12} parent=0 // pred_check_branch
    %18 = sbr.rel (0) target = $region17
  $region16: #{_lambda_.12} parent=0 // pred_region
    _
  $region17: #{_lambda_.12} parent=0 // pred_fallthru
    _
  // Predicated region
  $region18: #{_lambda_.12} parent=0 // pred_check
    _
  $region19: #{_lambda_.12} parent=0 // pred_check_branch
    %20 = sbr.rel (0) target = $region21
  $region20: #{_lambda_.12} parent=0 // pred_region
    _
  $region21: #{_lambda_.12} parent=0 // pred_fallthru
    _
  // Predicated region
  $region22: #{_lambda_.12} parent=0 // pred_check
    _
  $region23: #{_lambda_.12} parent=0 // pred_check_branch
    %22 = sbr.rel (0) target = $region25
  $region24: #{_lambda_.12} parent=0 // pred_region
    _
  $region25: #{_lambda_.12} parent=0 // pred_fallthru
    _
  %v23 = vld [vmem:[%s0] sm:$0xf]
  %v24 = vld [vmem:[%s1] sm:$0xff]
  %v25 = vld [vmem:[%s1 + $0x8] sm:$0xff]
  %v26 = vld [vmem:[%s1 + $0x10] sm:$0xff]
  %v27 = vld [vmem:[%s1 + $0x18] sm:$0xff]
  %v28 = vld [vmem:[%s1 + $0x20] sm:$0xff]
  %v29 = vld [vmem:[%s1 + $0x28] sm:$0xff]
  %v30 = vld [vmem:[%s1 + $0x30] sm:$0xff]
  %v31 = vld [vmem:[%s1 + $0x38] sm:$0xff]
  %v32 = vld [vmem:[%s1 + $0x40] sm:$0xff]
  %v33 = vld [vmem:[%s1 + $0x48] sm:$0xff]
  %v34 = vld [vmem:[%s1 + $0x50] sm:$0xff]
  %v35 = vld [vmem:[%s1 + $0x58] sm:$0xff]
  %v36 = vld [vmem:[%s1 + $0x60] sm:$0xff]
  %v37 = vld [vmem:[%s1 + $0x68] sm:$0xff]
  %v38 = vld [vmem:[%s1 + $0x70] sm:$0xff]
  %v39 = vld [vmem:[%s1 + $0x78] sm:$0xff]
  %v40 = vld [vmem:[%s1 + $0x80] sm:$0xff]
  %v41 = vld [vmem:[%s1 + $0x88] sm:$0xff]
  %v42 = vld [vmem:[%s1 + $0x90] sm:$0xff]
  %v43 = vld [vmem:[%s1 + $0x98] sm:$0xff]
  %v44 = vld [vmem:[%s1 + $0xa0] sm:$0xff]
  %v45 = vld [vmem:[%s1 + $0xa8] sm:$0xff]
  %v46 = vld [vmem:[%s1 + $0xb0] sm:$0xff]
  %v47 = vld [vmem:[%s1 + $0xb8] sm:$0xff]
  %v48 = vld [vmem:[%s1 + $0xc0] sm:$0xff]
  %v49 = vld [vmem:[%s1 + $0xc8] sm:$0xff]
  %v50 = vld [vmem:[%s1 + $0xd0] sm:$0xff]
  %v51 = vld [vmem:[%s1 + $0xd8] sm:$0xff]
  %v52 = vld [vmem:[%s1 + $0xe0] sm:$0xff]
  %v53 = vld [vmem:[%s1 + $0xe8] sm:$0xff]
  %v54 = vld [vmem:[%s1 + $0xf0] sm:$0xff]
  %v55 = vld [vmem:[%s1 + $0xf8] sm:$0xff]
  %v56 = vld [vmem:[%s1 + $0x100] sm:$0xff]
  %v57 = vld [vmem:[%s1 + $0x108] sm:$0xff]
  %v58 = vld [vmem:[%s1 + $0x110] sm:$0xff]
  %v59 = vld [vmem:[%s1 + $0x118] sm:$0xff]
  %v60 = vld [vmem:[%s1 + $0x120] sm:$0xff]
  %v61 = vld [vmem:[%s1 + $0x128] sm:$0xff]
  %v62 = vld [vmem:[%s1 + $0x130] sm:$0xff]
  %v63 = vld [vmem:[%s1 + $0x138] sm:$0xff]
  %v64 = vld [vmem:[%s1 + $0x140] sm:$0xff]
  %v65 = vld [vmem:[%s1 + $0x148] sm:$0xff]
  %v66 = vld [vmem:[%s1 + $0x150] sm:$0xff]
  %v67 = vld [vmem:[%s1 + $0x158] sm:$0xff]
  %v68 = vld [vmem:[%s1 + $0x160] sm:$0xff]
  %v69 = vld [vmem:[%s1 + $0x168] sm:$0xff]
  %v70 = vld [vmem:[%s1 + $0x170] sm:$0xff]
  %v71 = vld [vmem:[%s1 + $0x178] sm:$0xff]
  %v72 = vld [vmem:[%s1 + $0x180] sm:$0xff]
  %v73 = vld [vmem:[%s1 + $0x188] sm:$0xff]
  %v74 = vld [vmem:[%s1 + $0x190] sm:$0xff]
  %v75 = vld [vmem:[%s1 + $0x198] sm:$0xff]
  %v76 = vld [vmem:[%s1 + $0x1a0] sm:$0xff]
  %v77 = vld [vmem:[%s1 + $0x1a8] sm:$0xff]
  %v78 = vld [vmem:[%s1 + $0x1b0] sm:$0xff]
  %v79 = vld [vmem:[%s1 + $0x1b8] sm:$0xff]
  %v80 = vld [vmem:[%s1 + $0x1c0] sm:$0xff]
  %v81 = vld [vmem:[%s1 + $0x1c8] sm:$0xff]
  %v82 = vld [vmem:[%s1 + $0x1d0] sm:$0xff]
  %v83 = vld [vmem:[%s1 + $0x1d8] sm:$0xff]
  %v84 = vld [vmem:[%s1 + $0x1e0] sm:$0xff]
  %v85 = vld [vmem:[%s1 + $0x1e8] sm:$0xff]
  %v86 = vld [vmem:[%s1 + $0x1f0] sm:$0xff]
  %v87 = vld [vmem:[%s1 + $0x1f8] sm:$0xff]
  %v88 = vld [vmem:[%s1 + $0x200] sm:$0xf]
  %v89 = vld [vmem:[%s1 + $0x208] sm:$0xf]
  %v90 = vld [vmem:[%s1 + $0x210] sm:$0xf]
  %v91 = vld [vmem:[%s1 + $0x218] sm:$0xf]
  %v92 = vld [vmem:[%s1 + $0x220] sm:$0xf]
  %v93 = vld [vmem:[%s1 + $0x228] sm:$0xf]
  %v94 = vld [vmem:[%s1 + $0x230] sm:$0xf]
  %v95 = vld [vmem:[%s1 + $0x238] sm:$0xf]
  %v96 = vld [vmem:[%s1 + $0x240] sm:$0xf]
  %v97 = vld [vmem:[%s1 + $0x248] sm:$0xf]
  %v98 = vld [vmem:[%s1 + $0x250] sm:$0xf]
  %v99 = vld [vmem:[%s1 + $0x258] sm:$0xf]
  %v100 = vld [vmem:[%s1 + $0x260] sm:$0xf]
  %v101 = vld [vmem:[%s1 + $0x268] sm:$0xf]
  %v102 = vld [vmem:[%s1 + $0x270] sm:$0xf]
  %v103 = vld [vmem:[%s1 + $0x278] sm:$0xf]
  %v104 = vld [vmem:[%s2] sm:$0xf]
  %106 = vset.pattern.permute.xlu0 0
  %107 = vperm.xlu0 %106, %v104
  %v108 = vpop.permute.xlu0 %107
  %vm110 = vcmask 293888
  %v112 = vsel %vm110, %v23, 0
  %vm114 = vcmask 1043456
  %v116 = vsel %vm114, %v88, 0
  %v119 = vsel %vm114, %v89, 0
  %v122 = vsel %vm114, %v90, 0
  %v125 = vsel %vm114, %v91, 0
  %v128 = vsel %vm114, %v92, 0
  %v131 = vsel %vm114, %v93, 0
  %v134 = vsel %vm114, %v94, 0
  %v137 = vsel %vm114, %v95, 0
  %v140 = vsel %vm114, %v96, 0
  %v143 = vsel %vm114, %v97, 0
  %v146 = vsel %vm114, %v98, 0
  %v149 = vsel %vm114, %v99, 0
  %v152 = vsel %vm114, %v100, 0
  %v155 = vsel %vm114, %v101, 0
  %v158 = vsel %vm114, %v102, 0
  %v161 = vsel %vm114, %v103, 0
  %163 = vmatpush.msra.mxu0 0.0
  %164 = vmatpush.msra.mxu0 0.0
  %165 = vmatpush.msra.mxu0 0.0
  %166 = vmatpush.msra.mxu0 0.0
  %167 = vmatpush.msra.mxu0 0.0
  %168 = vmatpush.msra.mxu0 0.0
  %169 = vmatpush.msra.mxu0 0.0
  %170 = vmatpush.msra.mxu0 0.0
  %171 = vmatpush.msra.mxu0 0.0
  %172 = vmatpush.msra.mxu0 0.0
  %173 = vmatpush.msra.mxu0 0.0
  %174 = vmatpush.msra.mxu0 %v116
  %175 = vmatpush.msra.mxu0 %v72
  %176 = vmatpush.msra.mxu0 %v56
  %177 = vmatpush.msra.mxu0 %v40
  %178 = vmatpush.msra.mxu0 %v24
  %179 = vmatmul.f32.gmra.mxu0 %v112
  %v180 = vpop.f32.mrf.mxu0
  %v181 = vadd.f32 %v108, %v180
  %182 = vdwg.mxu0
  %183 = vmatpush.msra.mxu0 0.0
  %184 = vmatpush.msra.mxu0 0.0
  %185 = vmatpush.msra.mxu0 0.0
  %186 = vmatpush.msra.mxu0 0.0
  %187 = vmatpush.msra.mxu0 0.0
  %188 = vmatpush.msra.mxu0 0.0
  %189 = vmatpush.msra.mxu0 0.0
  %190 = vmatpush.msra.mxu0 0.0
  %191 = vmatpush.msra.mxu0 0.0
  %192 = vmatpush.msra.mxu0 0.0
  %193 = vmatpush.msra.mxu0 0.0
  %194 = vmatpush.msra.mxu0 %v119
  %195 = vmatpush.msra.mxu0 %v73
  %196 = vmatpush.msra.mxu0 %v57
  %197 = vmatpush.msra.mxu0 %v41
  %198 = vmatpush.msra.mxu0 %v25
  %199 = vmatmul.f32.gmra.mxu0 %v112
  %v200 = vpop.f32.mrf.mxu0
  %v201 = vadd.f32 %v108, %v200
  %202 = vdwg.mxu0
  %203 = vmatpush.msra.mxu0 0.0
  %204 = vmatpush.msra.mxu0 0.0
  %205 = vmatpush.msra.mxu0 0.0
  %206 = vmatpush.msra.mxu0 0.0
  %207 = vmatpush.msra.mxu0 0.0
  %208 = vmatpush.msra.mxu0 0.0
  %209 = vmatpush.msra.mxu0 0.0
  %210 = vmatpush.msra.mxu0 0.0
  %211 = vmatpush.msra.mxu0 0.0
  %212 = vmatpush.msra.mxu0 0.0
  %213 = vmatpush.msra.mxu0 0.0
  %214 = vmatpush.msra.mxu0 %v122
  %215 = vmatpush.msra.mxu0 %v74
  %216 = vmatpush.msra.mxu0 %v58
  %217 = vmatpush.msra.mxu0 %v42
  %218 = vmatpush.msra.mxu0 %v26
  %219 = vmatmul.f32.gmra.mxu0 %v112
  %v220 = vpop.f32.mrf.mxu0
  %v221 = vadd.f32 %v108, %v220
  %222 = vdwg.mxu0
  %223 = vmatpush.msra.mxu0 0.0
  %224 = vmatpush.msra.mxu0 0.0
  %225 = vmatpush.msra.mxu0 0.0
  %226 = vmatpush.msra.mxu0 0.0
  %227 = vmatpush.msra.mxu0 0.0
  %228 = vmatpush.msra.mxu0 0.0
  %229 = vmatpush.msra.mxu0 0.0
  %230 = vmatpush.msra.mxu0 0.0
  %231 = vmatpush.msra.mxu0 0.0
  %232 = vmatpush.msra.mxu0 0.0
  %233 = vmatpush.msra.mxu0 0.0
  %234 = vmatpush.msra.mxu0 %v125
  %235 = vmatpush.msra.mxu0 %v75
  %236 = vmatpush.msra.mxu0 %v59
  %237 = vmatpush.msra.mxu0 %v43
  %238 = vmatpush.msra.mxu0 %v27
  %239 = vmatmul.f32.gmra.mxu0 %v112
  %v240 = vpop.f32.mrf.mxu0
  %v241 = vadd.f32 %v108, %v240
  %242 = vdwg.mxu0
  %243 = vmatpush.msra.mxu0 0.0
  %244 = vmatpush.msra.mxu0 0.0
  %245 = vmatpush.msra.mxu0 0.0
  %246 = vmatpush.msra.mxu0 0.0
  %247 = vmatpush.msra.mxu0 0.0
  %248 = vmatpush.msra.mxu0 0.0
  %249 = vmatpush.msra.mxu0 0.0
  %250 = vmatpush.msra.mxu0 0.0
  %251 = vmatpush.msra.mxu0 0.0
  %252 = vmatpush.msra.mxu0 0.0
  %253 = vmatpush.msra.mxu0 0.0
  %254 = vmatpush.msra.mxu0 %v128
  %255 = vmatpush.msra.mxu0 %v76
  %256 = vmatpush.msra.mxu0 %v60
  %257 = vmatpush.msra.mxu0 %v44
  %258 = vmatpush.msra.mxu0 %v28
  %259 = vmatmul.f32.gmra.mxu0 %v112
  %v260 = vpop.f32.mrf.mxu0
  %v261 = vadd.f32 %v108, %v260
  %262 = vdwg.mxu0
  %263 = vmatpush.msra.mxu0 0.0
  %264 = vmatpush.msra.mxu0 0.0
  %265 = vmatpush.msra.mxu0 0.0
  %266 = vmatpush.msra.mxu0 0.0
  %267 = vmatpush.msra.mxu0 0.0
  %268 = vmatpush.msra.mxu0 0.0
  %269 = vmatpush.msra.mxu0 0.0
  %270 = vmatpush.msra.mxu0 0.0
  %271 = vmatpush.msra.mxu0 0.0
  %272 = vmatpush.msra.mxu0 0.0
  %273 = vmatpush.msra.mxu0 0.0
  %274 = vmatpush.msra.mxu0 %v131
  %275 = vmatpush.msra.mxu0 %v77
  %276 = vmatpush.msra.mxu0 %v61
  %277 = vmatpush.msra.mxu0 %v45
  %278 = vmatpush.msra.mxu0 %v29
  %279 = vmatmul.f32.gmra.mxu0 %v112
  %v280 = vpop.f32.mrf.mxu0
  %v281 = vadd.f32 %v108, %v280
  %282 = vdwg.mxu0
  %283 = vmatpush.msra.mxu0 0.0
  %284 = vmatpush.msra.mxu0 0.0
  %285 = vmatpush.msra.mxu0 0.0
  %286 = vmatpush.msra.mxu0 0.0
  %287 = vmatpush.msra.mxu0 0.0
  %288 = vmatpush.msra.mxu0 0.0
  %289 = vmatpush.msra.mxu0 0.0
  %290 = vmatpush.msra.mxu0 0.0
  %291 = vmatpush.msra.mxu0 0.0
  %292 = vmatpush.msra.mxu0 0.0
  %293 = vmatpush.msra.mxu0 0.0
  %294 = vmatpush.msra.mxu0 %v134
  %295 = vmatpush.msra.mxu0 %v78
  %296 = vmatpush.msra.mxu0 %v62
  %297 = vmatpush.msra.mxu0 %v46
  %298 = vmatpush.msra.mxu0 %v30
  %299 = vmatmul.f32.gmra.mxu0 %v112
  %v300 = vpop.f32.mrf.mxu0
  %v301 = vadd.f32 %v108, %v300
  %302 = vdwg.mxu0
  %303 = vmatpush.msra.mxu0 0.0
  %304 = vmatpush.msra.mxu0 0.0
  %305 = vmatpush.msra.mxu0 0.0
  %306 = vmatpush.msra.mxu0 0.0
  %307 = vmatpush.msra.mxu0 0.0
  %308 = vmatpush.msra.mxu0 0.0
  %309 = vmatpush.msra.mxu0 0.0
  %310 = vmatpush.msra.mxu0 0.0
  %311 = vmatpush.msra.mxu0 0.0
  %312 = vmatpush.msra.mxu0 0.0
  %313 = vmatpush.msra.mxu0 0.0
  %314 = vmatpush.msra.mxu0 %v137
  %315 = vmatpush.msra.mxu0 %v79
  %316 = vmatpush.msra.mxu0 %v63
  %317 = vmatpush.msra.mxu0 %v47
  %318 = vmatpush.msra.mxu0 %v31
  %319 = vmatmul.f32.gmra.mxu0 %v112
  %v320 = vpop.f32.mrf.mxu0
  %v321 = vadd.f32 %v108, %v320
  %322 = vdwg.mxu0
  %323 = vmatpush.msra.mxu0 0.0
  %324 = vmatpush.msra.mxu0 0.0
  %325 = vmatpush.msra.mxu0 0.0
  %326 = vmatpush.msra.mxu0 0.0
  %327 = vmatpush.msra.mxu0 0.0
  %328 = vmatpush.msra.mxu0 0.0
  %329 = vmatpush.msra.mxu0 0.0
  %330 = vmatpush.msra.mxu0 0.0
  %331 = vmatpush.msra.mxu0 0.0
  %332 = vmatpush.msra.mxu0 0.0
  %333 = vmatpush.msra.mxu0 0.0
  %334 = vmatpush.msra.mxu0 %v140
  %335 = vmatpush.msra.mxu0 %v80
  %336 = vmatpush.msra.mxu0 %v64
  %337 = vmatpush.msra.mxu0 %v48
  %338 = vmatpush.msra.mxu0 %v32
  %339 = vmatmul.f32.gmra.mxu0 %v112
  %v340 = vpop.f32.mrf.mxu0
  %v341 = vadd.f32 %v108, %v340
  %342 = vdwg.mxu0
  %343 = vmatpush.msra.mxu0 0.0
  %344 = vmatpush.msra.mxu0 0.0
  %345 = vmatpush.msra.mxu0 0.0
  %346 = vmatpush.msra.mxu0 0.0
  %347 = vmatpush.msra.mxu0 0.0
  %348 = vmatpush.msra.mxu0 0.0
  %349 = vmatpush.msra.mxu0 0.0
  %350 = vmatpush.msra.mxu0 0.0
  %351 = vmatpush.msra.mxu0 0.0
  %352 = vmatpush.msra.mxu0 0.0
  %353 = vmatpush.msra.mxu0 0.0
  %354 = vmatpush.msra.mxu0 %v143
  %355 = vmatpush.msra.mxu0 %v81
  %356 = vmatpush.msra.mxu0 %v65
  %357 = vmatpush.msra.mxu0 %v49
  %358 = vmatpush.msra.mxu0 %v33
  %359 = vmatmul.f32.gmra.mxu0 %v112
  %v360 = vpop.f32.mrf.mxu0
  %v361 = vadd.f32 %v108, %v360
  %362 = vdwg.mxu0
  %363 = vmatpush.msra.mxu0 0.0
  %364 = vmatpush.msra.mxu0 0.0
  %365 = vmatpush.msra.mxu0 0.0
  %366 = vmatpush.msra.mxu0 0.0
  %367 = vmatpush.msra.mxu0 0.0
  %368 = vmatpush.msra.mxu0 0.0
  %369 = vmatpush.msra.mxu0 0.0
  %370 = vmatpush.msra.mxu0 0.0
  %371 = vmatpush.msra.mxu0 0.0
  %372 = vmatpush.msra.mxu0 0.0
  %373 = vmatpush.msra.mxu0 0.0
  %374 = vmatpush.msra.mxu0 %v146
  %375 = vmatpush.msra.mxu0 %v82
  %376 = vmatpush.msra.mxu0 %v66
  %377 = vmatpush.msra.mxu0 %v50
  %378 = vmatpush.msra.mxu0 %v34
  %379 = vmatmul.f32.gmra.mxu0 %v112
  %v380 = vpop.f32.mrf.mxu0
  %v381 = vadd.f32 %v108, %v380
  %382 = vdwg.mxu0
  %383 = vmatpush.msra.mxu0 0.0
  %384 = vmatpush.msra.mxu0 0.0
  %385 = vmatpush.msra.mxu0 0.0
  %386 = vmatpush.msra.mxu0 0.0
  %387 = vmatpush.msra.mxu0 0.0
  %388 = vmatpush.msra.mxu0 0.0
  %389 = vmatpush.msra.mxu0 0.0
  %390 = vmatpush.msra.mxu0 0.0
  %391 = vmatpush.msra.mxu0 0.0
  %392 = vmatpush.msra.mxu0 0.0
  %393 = vmatpush.msra.mxu0 0.0
  %394 = vmatpush.msra.mxu0 %v149
  %395 = vmatpush.msra.mxu0 %v83
  %396 = vmatpush.msra.mxu0 %v67
  %397 = vmatpush.msra.mxu0 %v51
  %398 = vmatpush.msra.mxu0 %v35
  %399 = vmatmul.f32.gmra.mxu0 %v112
  %v400 = vpop.f32.mrf.mxu0
  %v401 = vadd.f32 %v108, %v400
  %402 = vdwg.mxu0
  %403 = vmatpush.msra.mxu0 0.0
  %404 = vmatpush.msra.mxu0 0.0
  %405 = vmatpush.msra.mxu0 0.0
  %406 = vmatpush.msra.mxu0 0.0
  %407 = vmatpush.msra.mxu0 0.0
  %408 = vmatpush.msra.mxu0 0.0
  %409 = vmatpush.msra.mxu0 0.0
  %410 = vmatpush.msra.mxu0 0.0
  %411 = vmatpush.msra.mxu0 0.0
  %412 = vmatpush.msra.mxu0 0.0
  %413 = vmatpush.msra.mxu0 0.0
  %414 = vmatpush.msra.mxu0 %v152
  %415 = vmatpush.msra.mxu0 %v84
  %416 = vmatpush.msra.mxu0 %v68
  %417 = vmatpush.msra.mxu0 %v52
  %418 = vmatpush.msra.mxu0 %v36
  %419 = vmatmul.f32.gmra.mxu0 %v112
  %v420 = vpop.f32.mrf.mxu0
  %v421 = vadd.f32 %v108, %v420
  %422 = vdwg.mxu0
  %423 = vmatpush.msra.mxu0 0.0
  %424 = vmatpush.msra.mxu0 0.0
  %425 = vmatpush.msra.mxu0 0.0
  %426 = vmatpush.msra.mxu0 0.0
  %427 = vmatpush.msra.mxu0 0.0
  %428 = vmatpush.msra.mxu0 0.0
  %429 = vmatpush.msra.mxu0 0.0
  %430 = vmatpush.msra.mxu0 0.0
  %431 = vmatpush.msra.mxu0 0.0
  %432 = vmatpush.msra.mxu0 0.0
  %433 = vmatpush.msra.mxu0 0.0
  %434 = vmatpush.msra.mxu0 %v155
  %435 = vmatpush.msra.mxu0 %v85
  %436 = vmatpush.msra.mxu0 %v69
  %437 = vmatpush.msra.mxu0 %v53
  %438 = vmatpush.msra.mxu0 %v37
  %439 = vmatmul.f32.gmra.mxu0 %v112
  %v440 = vpop.f32.mrf.mxu0
  %v441 = vadd.f32 %v108, %v440
  %442 = vdwg.mxu0
  %443 = vmatpush.msra.mxu0 0.0
  %444 = vmatpush.msra.mxu0 0.0
  %445 = vmatpush.msra.mxu0 0.0
  %446 = vmatpush.msra.mxu0 0.0
  %447 = vmatpush.msra.mxu0 0.0
  %448 = vmatpush.msra.mxu0 0.0
  %449 = vmatpush.msra.mxu0 0.0
  %450 = vmatpush.msra.mxu0 0.0
  %451 = vmatpush.msra.mxu0 0.0
  %452 = vmatpush.msra.mxu0 0.0
  %453 = vmatpush.msra.mxu0 0.0
  %454 = vmatpush.msra.mxu0 %v158
  %455 = vmatpush.msra.mxu0 %v86
  %456 = vmatpush.msra.mxu0 %v70
  %457 = vmatpush.msra.mxu0 %v54
  %458 = vmatpush.msra.mxu0 %v38
  %459 = vmatmul.f32.gmra.mxu0 %v112
  %v460 = vpop.f32.mrf.mxu0
  %v461 = vadd.f32 %v108, %v460
  %462 = vdwg.mxu0
  %463 = vmatpush.msra.mxu0 0.0
  %464 = vmatpush.msra.mxu0 0.0
  %465 = vmatpush.msra.mxu0 0.0
  %466 = vmatpush.msra.mxu0 0.0
  %467 = vmatpush.msra.mxu0 0.0
  %468 = vmatpush.msra.mxu0 0.0
  %469 = vmatpush.msra.mxu0 0.0
  %470 = vmatpush.msra.mxu0 0.0
  %471 = vmatpush.msra.mxu0 0.0
  %472 = vmatpush.msra.mxu0 0.0
  %473 = vmatpush.msra.mxu0 0.0
  %474 = vmatpush.msra.mxu0 %v161
  %475 = vmatpush.msra.mxu0 %v87
  %476 = vmatpush.msra.mxu0 %v71
  %477 = vmatpush.msra.mxu0 %v55
  %478 = vmatpush.msra.mxu0 %v39
  %479 = vmatmul.f32.gmra.mxu0 %v112
  %v480 = vpop.f32.mrf.mxu0
  %v481 = vadd.f32 %v108, %v480
  %482 = vdwg.mxu0
  %v483 = vld [vmem:[%s3] sm:$0xf]
  %v484 = vld [vmem:[%s4] sm:$0xf]
  %v485 = vsel %vm114, %v181, 0.0
  %v486 = vsel %vm114, %v201, 0.0
  %v487 = vadd.f32 %v485, %v486
  %v488 = vsel %vm114, %v221, 0.0
  %v489 = vadd.f32 %v487, %v488
  %v490 = vsel %vm114, %v241, 0.0
  %v491 = vadd.f32 %v489, %v490
  %v492 = vsel %vm114, %v261, 0.0
  %v493 = vadd.f32 %v491, %v492
  %v494 = vsel %vm114, %v281, 0.0
  %v495 = vadd.f32 %v493, %v494
  %v496 = vsel %vm114, %v301, 0.0
  %v497 = vadd.f32 %v495, %v496
  %v498 = vsel %vm114, %v321, 0.0
  %v499 = vadd.f32 %v497, %v498
  %v500 = vsel %vm114, %v341, 0.0
  %v501 = vadd.f32 %v499, %v500
  %v502 = vsel %vm114, %v361, 0.0
  %v503 = vadd.f32 %v501, %v502
  %v504 = vsel %vm114, %v381, 0.0
  %v505 = vadd.f32 %v503, %v504
  %v506 = vsel %vm114, %v401, 0.0
  %v507 = vadd.f32 %v505, %v506
  %v508 = vsel %vm114, %v421, 0.0
  %v509 = vadd.f32 %v507, %v508
  %v510 = vsel %vm114, %v441, 0.0
  %v511 = vadd.f32 %v509, %v510
  %v512 = vsel %vm114, %v461, 0.0
  %v513 = vadd.f32 %v511, %v512
  %v514 = vsel %vm114, %v481, 0.0
  %v515 = vadd.f32 %v513, %v514
  %516 = vadd.xlane.f32.xlu0 %v515
  %v517 = vpop.xlane.xlu0 %516
  %v518 = vrcp.pop 2048.0
  %v519 = vmul.f32 2048.0, %v518
  %v520 = vsub.f32 1.0, %v519
  %v521 = vmul.f32 %v518, %v520
  %v522 = vadd.f32 %v518, %v521
  %vm523 = vweird.f32 %v518
  %v524 = vsel %vm523, %v518, %v522
  %v525 = vmul.f32 %v517, %v524
  %v526 = vsub.f32 %v181, %v525
  %v527 = vsub.f32 %v201, %v525
  %v528 = vsub.f32 %v221, %v525
  %v529 = vsub.f32 %v241, %v525
  %v530 = vsub.f32 %v261, %v525
  %v531 = vsub.f32 %v281, %v525
  %v532 = vsub.f32 %v301, %v525
  %v533 = vsub.f32 %v321, %v525
  %v534 = vsub.f32 %v341, %v525
  %v535 = vsub.f32 %v361, %v525
  %v536 = vsub.f32 %v381, %v525
  %v537 = vsub.f32 %v401, %v525
  %v538 = vsub.f32 %v421, %v525
  %v539 = vsub.f32 %v441, %v525
  %v540 = vsub.f32 %v461, %v525
  %v541 = vsub.f32 %v481, %v525
  %v542 = vmul.f32 %v526, %v526
  %v543 = vmul.f32 %v527, %v527
  %v544 = vmul.f32 %v528, %v528
  %v545 = vmul.f32 %v529, %v529
  %v546 = vmul.f32 %v530, %v530
  %v547 = vmul.f32 %v531, %v531
  %v548 = vmul.f32 %v532, %v532
  %v549 = vmul.f32 %v533, %v533
  %v550 = vmul.f32 %v534, %v534
  %v551 = vmul.f32 %v535, %v535
  %v552 = vmul.f32 %v536, %v536
  %v553 = vmul.f32 %v537, %v537
  %v554 = vmul.f32 %v538, %v538
  %v555 = vmul.f32 %v539, %v539
  %v556 = vmul.f32 %v540, %v540
  %v557 = vmul.f32 %v541, %v541
  %v558 = vsel %vm114, %v542, 0.0
  %v559 = vsel %vm114, %v543, 0.0
  %v560 = vadd.f32 %v558, %v559
  %v561 = vsel %vm114, %v544, 0.0
  %v562 = vadd.f32 %v560, %v561
  %v563 = vsel %vm114, %v545, 0.0
  %v564 = vadd.f32 %v562, %v563
  %v565 = vsel %vm114, %v546, 0.0
  %v566 = vadd.f32 %v564, %v565
  %v567 = vsel %vm114, %v547, 0.0
  %v568 = vadd.f32 %v566, %v567
  %v569 = vsel %vm114, %v548, 0.0
  %v570 = vadd.f32 %v568, %v569
  %v571 = vsel %vm114, %v549, 0.0
  %v572 = vadd.f32 %v570, %v571
  %v573 = vsel %vm114, %v550, 0.0
  %v574 = vadd.f32 %v572, %v573
  %v575 = vsel %vm114, %v551, 0.0
  %v576 = vadd.f32 %v574, %v575
  %v577 = vsel %vm114, %v552, 0.0
  %v578 = vadd.f32 %v576, %v577
  %v579 = vsel %vm114, %v553, 0.0
  %v580 = vadd.f32 %v578, %v579
  %v581 = vsel %vm114, %v554, 0.0
  %v582 = vadd.f32 %v580, %v581
  %v583 = vsel %vm114, %v555, 0.0
  %v584 = vadd.f32 %v582, %v583
  %v585 = vsel %vm114, %v556, 0.0
  %v586 = vadd.f32 %v584, %v585
  %v587 = vsel %vm114, %v557, 0.0
  %v588 = vadd.f32 %v586, %v587
  %589 = vadd.xlane.f32.xlu0 %v588
  %v590 = vpop.xlane.xlu0 %589
  %v591 = vmul.f32 %v590, %v524
  %v592 = vadd.f32 %v591, 1e-05
  %v593 = vrsqrt.pop %v592
  %v594 = vmul.f32 %v593, %v592
  %v595 = vmul.f32 %v594, %v593
  %v596 = vmul.f32 0.5, %v595
  %v597 = vsub.f32 1.5, %v596
  %v598 = vmul.f32 %v593, %v597
  %vm599 = vweird.f32 %v592
  %vm600 = vweird.f32 %v593
  %vm601 = vmor %vm599, %vm600
  %v602 = vsel %vm601, %v593, %v598
  %v603 = vmul.f32 %v483, %v602
  %605 = vset.pattern.permute.xlu0 0
  %606 = vperm.xlu0 %605, %v603
  %v607 = vpop.permute.xlu0 %606
  %v609 = vmul.f32 %v181, %v607
  %v610 = vmul.f32 %v201, %v607
  %v611 = vmul.f32 %v221, %v607
  %v612 = vmul.f32 %v241, %v607
  %v613 = vmul.f32 %v261, %v607
  %v614 = vmul.f32 %v281, %v607
  %v615 = vmul.f32 %v301, %v607
  %v616 = vmul.f32 %v321, %v607
  %v617 = vmul.f32 %v341, %v607
  %v618 = vmul.f32 %v361, %v607
  %v619 = vmul.f32 %v381, %v607
  %v620 = vmul.f32 %v401, %v607
  %v621 = vmul.f32 %v421, %v607
  %v622 = vmul.f32 %v441, %v607
  %v623 = vmul.f32 %v461, %v607
  %v624 = vmul.f32 %v481, %v607
  %v625 = vmul.f32 %v525, %v603
  %v626 = vsub.f32 %v484, %v625
  %628 = vset.pattern.permute.xlu0 0
  %629 = vperm.xlu0 %628, %v626
  %v630 = vpop.permute.xlu0 %629
  %v632 = vadd.f32 %v609, %v630
  %v633 = vadd.f32 %v610, %v630
  %v634 = vadd.f32 %v611, %v630
  %v635 = vadd.f32 %v612, %v630
  %v636 = vadd.f32 %v613, %v630
  %v637 = vadd.f32 %v614, %v630
  %v638 = vadd.f32 %v615, %v630
  %v639 = vadd.f32 %v616, %v630
  %v640 = vadd.f32 %v617, %v630
  %v641 = vadd.f32 %v618, %v630
  %v642 = vadd.f32 %v619, %v630
  %v643 = vadd.f32 %v620, %v630
  %v644 = vadd.f32 %v621, %v630
  %v645 = vadd.f32 %v622, %v630
  %v646 = vadd.f32 %v623, %v630
  %v647 = vadd.f32 %v624, %v630
  %v648 = vld [vmem:[%s5] sm:$0xff]
  %v649 = vld [vmem:[%s5 + $0x8] sm:$0xff]
  %v650 = vld [vmem:[%s5 + $0x10] sm:$0xff]
  %v651 = vld [vmem:[%s5 + $0x18] sm:$0xff]
  %v652 = vld [vmem:[%s5 + $0x20] sm:$0xff]
  %v653 = vld [vmem:[%s5 + $0x28] sm:$0xff]
  %v654 = vld [vmem:[%s5 + $0x30] sm:$0xff]
  %v655 = vld [vmem:[%s5 + $0x38] sm:$0xff]
  %v656 = vmul.f32 %v648, %v648
  %v657 = vmul.f32 %v649, %v649
  %v658 = vmul.f32 %v650, %v650
  %v659 = vmul.f32 %v651, %v651
  %v660 = vmul.f32 %v652, %v652
  %v661 = vmul.f32 %v653, %v653
  %v662 = vmul.f32 %v654, %v654
  %v663 = vmul.f32 %v655, %v655
  %672 = vst [vmem:[#allocation1] ss:$2 sm:$0xff] %v656
  %s673 = scalar_lea.vmem [#allocation1], 16
  %674 = vst [vmem:[%s673] ss:$2 sm:$0xff] %v657
  %s675 = scalar_lea.vmem [#allocation1], 32
  %676 = vst [vmem:[%s675] ss:$2 sm:$0xff] %v658
  %s677 = scalar_lea.vmem [#allocation1], 48
  %678 = vst [vmem:[%s677] ss:$2 sm:$0xff] %v659
  %v679 = vld.sshfl [vmem:[#allocation1] sm:$0xff pattern:$0x75316420]
  %v680 = vld.sshfl [vmem:[#allocation1 + $0x8] sm:$0xff pattern:$0x75316420]
  %v681 = vld.sshfl [vmem:[#allocation1 + $0x10] sm:$0xff pattern:$0x75316420]
  %v682 = vld.sshfl [vmem:[#allocation1 + $0x18] sm:$0xff pattern:$0x75316420]
  %v683 = vld.sshfl [vmem:[#allocation1 + $0x20] sm:$0xff pattern:$0x75316420]
  %v684 = vld.sshfl [vmem:[#allocation1 + $0x28] sm:$0xff pattern:$0x75316420]
  %v685 = vld.sshfl [vmem:[#allocation1 + $0x30] sm:$0xff pattern:$0x75316420]
  %v686 = vld.sshfl [vmem:[#allocation1 + $0x38] sm:$0xff pattern:$0x75316420]
  %687 = vst [vmem:[#allocation1] ss:$2 sm:$0xff] %v660
  %688 = vst [vmem:[%s673] ss:$2 sm:$0xff] %v661
  %689 = vst [vmem:[%s675] ss:$2 sm:$0xff] %v662
  %690 = vst [vmem:[%s677] ss:$2 sm:$0xff] %v663
  %v691 = vld.sshfl [vmem:[#allocation1] sm:$0xff pattern:$0x75316420]
  %v692 = vld.sshfl [vmem:[#allocation1 + $0x8] sm:$0xff pattern:$0x75316420]
  %v693 = vld.sshfl [vmem:[#allocation1 + $0x10] sm:$0xff pattern:$0x75316420]
  %v694 = vld.sshfl [vmem:[#allocation1 + $0x18] sm:$0xff pattern:$0x75316420]
  %v695 = vld.sshfl [vmem:[#allocation1 + $0x20] sm:$0xff pattern:$0x75316420]
  %v696 = vld.sshfl [vmem:[#allocation1 + $0x28] sm:$0xff pattern:$0x75316420]
  %v697 = vld.sshfl [vmem:[#allocation1 + $0x30] sm:$0xff pattern:$0x75316420]
  %v698 = vld.sshfl [vmem:[#allocation1 + $0x38] sm:$0xff pattern:$0x75316420]
  %v715 = vsel %vm114, %v679, 0.0
  %v716 = vrot.slane %v715, 4
  %v717 = vadd.f32 %v715, %v716
  %v718 = vrot.slane %v717, 2
  %v719 = vadd.f32 %v717, %v718
  %v720 = vrot.slane %v719, 1
  %v721 = vadd.f32 %v719, %v720
  %v722 = vsel %vm114, %v680, 0.0
  %v723 = vrot.slane %v722, 4
  %v724 = vadd.f32 %v722, %v723
  %v725 = vrot.slane %v724, 2
  %v726 = vadd.f32 %v724, %v725
  %v727 = vrot.slane %v726, 1
  %v728 = vadd.f32 %v726, %v727
  %v729 = vsel %vm114, %v681, 0.0
  %v730 = vrot.slane %v729, 4
  %v731 = vadd.f32 %v729, %v730
  %v732 = vrot.slane %v731, 2
  %v733 = vadd.f32 %v731, %v732
  %v734 = vrot.slane %v733, 1
  %v735 = vadd.f32 %v733, %v734
  %v736 = vsel %vm114, %v682, 0.0
  %v737 = vrot.slane %v736, 4
  %v738 = vadd.f32 %v736, %v737
  %v739 = vrot.slane %v738, 2
  %v740 = vadd.f32 %v738, %v739
  %v741 = vrot.slane %v740, 1
  %v742 = vadd.f32 %v740, %v741
  %v743 = vsel %vm114, %v683, 0.0
  %v744 = vrot.slane %v743, 4
  %v745 = vadd.f32 %v743, %v744
  %v746 = vrot.slane %v745, 2
  %v747 = vadd.f32 %v745, %v746
  %v748 = vrot.slane %v747, 1
  %v749 = vadd.f32 %v747, %v748
  %v750 = vsel %vm114, %v684, 0.0
  %v751 = vrot.slane %v750, 4
  %v752 = vadd.f32 %v750, %v751
  %v753 = vrot.slane %v752, 2
  %v754 = vadd.f32 %v752, %v753
  %v755 = vrot.slane %v754, 1
  %v756 = vadd.f32 %v754, %v755
  %v757 = vsel %vm114, %v685, 0.0
  %v758 = vrot.slane %v757, 4
  %v759 = vadd.f32 %v757, %v758
  %v760 = vrot.slane %v759, 2
  %v761 = vadd.f32 %v759, %v760
  %v762 = vrot.slane %v761, 1
  %v763 = vadd.f32 %v761, %v762
  %v764 = vsel %vm114, %v686, 0.0
  %v765 = vrot.slane %v764, 4
  %v766 = vadd.f32 %v764, %v765
  %v767 = vrot.slane %v766, 2
  %v768 = vadd.f32 %v766, %v767
  %v769 = vrot.slane %v768, 1
  %v770 = vadd.f32 %v768, %v769
  %v771 = vsel %vm114, %v691, 0.0
  %v772 = vrot.slane %v771, 4
  %v773 = vadd.f32 %v771, %v772
  %v774 = vrot.slane %v773, 2
  %v775 = vadd.f32 %v773, %v774
  %v776 = vrot.slane %v775, 1
  %v777 = vadd.f32 %v775, %v776
  %v778 = vsel %vm114, %v692, 0.0
  %v779 = vrot.slane %v778, 4
  %v780 = vadd.f32 %v778, %v779
  %v781 = vrot.slane %v780, 2
  %v782 = vadd.f32 %v780, %v781
  %v783 = vrot.slane %v782, 1
  %v784 = vadd.f32 %v782, %v783
  %v785 = vsel %vm114, %v693, 0.0
  %v786 = vrot.slane %v785, 4
  %v787 = vadd.f32 %v785, %v786
  %v788 = vrot.slane %v787, 2
  %v789 = vadd.f32 %v787, %v788
  %v790 = vrot.slane %v789, 1
  %v791 = vadd.f32 %v789, %v790
  %v792 = vsel %vm114, %v694, 0.0
  %v793 = vrot.slane %v792, 4
  %v794 = vadd.f32 %v792, %v793
  %v795 = vrot.slane %v794, 2
  %v796 = vadd.f32 %v794, %v795
  %v797 = vrot.slane %v796, 1
  %v798 = vadd.f32 %v796, %v797
  %v799 = vsel %vm114, %v695, 0.0
  %v800 = vrot.slane %v799, 4
  %v801 = vadd.f32 %v799, %v800
  %v802 = vrot.slane %v801, 2
  %v803 = vadd.f32 %v801, %v802
  %v804 = vrot.slane %v803, 1
  %v805 = vadd.f32 %v803, %v804
  %v806 = vsel %vm114, %v696, 0.0
  %v807 = vrot.slane %v806, 4
  %v808 = vadd.f32 %v806, %v807
  %v809 = vrot.slane %v808, 2
  %v810 = vadd.f32 %v808, %v809
  %v811 = vrot.slane %v810, 1
  %v812 = vadd.f32 %v810, %v811
  %v813 = vsel %vm114, %v697, 0.0
  %v814 = vrot.slane %v813, 4
  %v815 = vadd.f32 %v813, %v814
  %v816 = vrot.slane %v815, 2
  %v817 = vadd.f32 %v815, %v816
  %v818 = vrot.slane %v817, 1
  %v819 = vadd.f32 %v817, %v818
  %v820 = vsel %vm114, %v698, 0.0
  %v821 = vrot.slane %v820, 4
  %v822 = vadd.f32 %v820, %v821
  %v823 = vrot.slane %v822, 2
  %v824 = vadd.f32 %v822, %v823
  %v825 = vrot.slane %v824, 1
  %v826 = vadd.f32 %v824, %v825
  %v827 = vmax.f32 %v721, 1e-12
  %v828 = vmax.f32 %v728, 1e-12
  %v829 = vmax.f32 %v735, 1e-12
  %v830 = vmax.f32 %v742, 1e-12
  %v831 = vmax.f32 %v749, 1e-12
  %v832 = vmax.f32 %v756, 1e-12
  %v833 = vmax.f32 %v763, 1e-12
  %v834 = vmax.f32 %v770, 1e-12
  %v835 = vmax.f32 %v777, 1e-12
  %v836 = vmax.f32 %v784, 1e-12
  %v837 = vmax.f32 %v791, 1e-12
  %v838 = vmax.f32 %v798, 1e-12
  %v839 = vmax.f32 %v805, 1e-12
  %v840 = vmax.f32 %v812, 1e-12
  %v841 = vmax.f32 %v819, 1e-12
  %v842 = vmax.f32 %v826, 1e-12
  %v843 = vrsqrt.pop %v827
  %v844 = vmul.f32 %v843, %v827
  %v845 = vmul.f32 %v844, %v843
  %v846 = vmul.f32 0.5, %v845
  %v847 = vsub.f32 1.5, %v846
  %v848 = vmul.f32 %v843, %v847
  %vm849 = vweird.f32 %v827
  %vm850 = vweird.f32 %v843
  %vm851 = vmor %vm849, %vm850
  %v852 = vsel %vm851, %v843, %v848
  %v853 = vrsqrt.pop %v828
  %v854 = vmul.f32 %v853, %v828
  %v855 = vmul.f32 %v854, %v853
  %v856 = vmul.f32 0.5, %v855
  %v857 = vsub.f32 1.5, %v856
  %v858 = vmul.f32 %v853, %v857
  %vm859 = vweird.f32 %v828
  %vm860 = vweird.f32 %v853
  %vm861 = vmor %vm859, %vm860
  %v862 = vsel %vm861, %v853, %v858
  %v863 = vrsqrt.pop %v829
  %v864 = vmul.f32 %v863, %v829
  %v865 = vmul.f32 %v864, %v863
  %v866 = vmul.f32 0.5, %v865
  %v867 = vsub.f32 1.5, %v866
  %v868 = vmul.f32 %v863, %v867
  %vm869 = vweird.f32 %v829
  %vm870 = vweird.f32 %v863
  %vm871 = vmor %vm869, %vm870
  %v872 = vsel %vm871, %v863, %v868
  %v873 = vrsqrt.pop %v830
  %v874 = vmul.f32 %v873, %v830
  %v875 = vmul.f32 %v874, %v873
  %v876 = vmul.f32 0.5, %v875
  %v877 = vsub.f32 1.5, %v876
  %v878 = vmul.f32 %v873, %v877
  %vm879 = vweird.f32 %v830
  %vm880 = vweird.f32 %v873
  %vm881 = vmor %vm879, %vm880
  %v882 = vsel %vm881, %v873, %v878
  %v883 = vrsqrt.pop %v831
  %v884 = vmul.f32 %v883, %v831
  %v885 = vmul.f32 %v884, %v883
  %v886 = vmul.f32 0.5, %v885
  %v887 = vsub.f32 1.5, %v886
  %v888 = vmul.f32 %v883, %v887
  %vm889 = vweird.f32 %v831
  %vm890 = vweird.f32 %v883
  %vm891 = vmor %vm889, %vm890
  %v892 = vsel %vm891, %v883, %v888
  %v893 = vrsqrt.pop %v832
  %v894 = vmul.f32 %v893, %v832
  %v895 = vmul.f32 %v894, %v893
  %v896 = vmul.f32 0.5, %v895
  %v897 = vsub.f32 1.5, %v896
  %v898 = vmul.f32 %v893, %v897
  %vm899 = vweird.f32 %v832
  %vm900 = vweird.f32 %v893
  %vm901 = vmor %vm899, %vm900
  %v902 = vsel %vm901, %v893, %v898
  %v903 = vrsqrt.pop %v833
  %v904 = vmul.f32 %v903, %v833
  %v905 = vmul.f32 %v904, %v903
  %v906 = vmul.f32 0.5, %v905
  %v907 = vsub.f32 1.5, %v906
  %v908 = vmul.f32 %v903, %v907
  %vm909 = vweird.f32 %v833
  %vm910 = vweird.f32 %v903
  %vm911 = vmor %vm909, %vm910
  %v912 = vsel %vm911, %v903, %v908
  %v913 = vrsqrt.pop %v834
  %v914 = vmul.f32 %v913, %v834
  %v915 = vmul.f32 %v914, %v913
  %v916 = vmul.f32 0.5, %v915
  %v917 = vsub.f32 1.5, %v916
  %v918 = vmul.f32 %v913, %v917
  %vm919 = vweird.f32 %v834
  %vm920 = vweird.f32 %v913
  %vm921 = vmor %vm919, %vm920
  %v922 = vsel %vm921, %v913, %v918
  %v923 = vrsqrt.pop %v835
  %v924 = vmul.f32 %v923, %v835
  %v925 = vmul.f32 %v924, %v923
  %v926 = vmul.f32 0.5, %v925
  %v927 = vsub.f32 1.5, %v926
  %v928 = vmul.f32 %v923, %v927
  %vm929 = vweird.f32 %v835
  %vm930 = vweird.f32 %v923
  %vm931 = vmor %vm929, %vm930
  %v932 = vsel %vm931, %v923, %v928
  %v933 = vrsqrt.pop %v836
  %v934 = vmul.f32 %v933, %v836
  %v935 = vmul.f32 %v934, %v933
  %v936 = vmul.f32 0.5, %v935
  %v937 = vsub.f32 1.5, %v936
  %v938 = vmul.f32 %v933, %v937
  %vm939 = vweird.f32 %v836
  %vm940 = vweird.f32 %v933
  %vm941 = vmor %vm939, %vm940
  %v942 = vsel %vm941, %v933, %v938
  %v943 = vrsqrt.pop %v837
  %v944 = vmul.f32 %v943, %v837
  %v945 = vmul.f32 %v944, %v943
  %v946 = vmul.f32 0.5, %v945
  %v947 = vsub.f32 1.5, %v946
  %v948 = vmul.f32 %v943, %v947
  %vm949 = vweird.f32 %v837
  %vm950 = vweird.f32 %v943
  %vm951 = vmor %vm949, %vm950
  %v952 = vsel %vm951, %v943, %v948
  %v953 = vrsqrt.pop %v838
  %v954 = vmul.f32 %v953, %v838
  %v955 = vmul.f32 %v954, %v953
  %v956 = vmul.f32 0.5, %v955
  %v957 = vsub.f32 1.5, %v956
  %v958 = vmul.f32 %v953, %v957
  %vm959 = vweird.f32 %v838
  %vm960 = vweird.f32 %v953
  %vm961 = vmor %vm959, %vm960
  %v962 = vsel %vm961, %v953, %v958
  %v963 = vrsqrt.pop %v839
  %v964 = vmul.f32 %v963, %v839
  %v965 = vmul.f32 %v964, %v963
  %v966 = vmul.f32 0.5, %v965
  %v967 = vsub.f32 1.5, %v966
  %v968 = vmul.f32 %v963, %v967
  %vm969 = vweird.f32 %v839
  %vm970 = vweird.f32 %v963
  %vm971 = vmor %vm969, %vm970
  %v972 = vsel %vm971, %v963, %v968
  %v973 = vrsqrt.pop %v840
  %v974 = vmul.f32 %v973, %v840
  %v975 = vmul.f32 %v974, %v973
  %v976 = vmul.f32 0.5, %v975
  %v977 = vsub.f32 1.5, %v976
  %v978 = vmul.f32 %v973, %v977
  %vm979 = vweird.f32 %v840
  %vm980 = vweird.f32 %v973
  %vm981 = vmor %vm979, %vm980
  %v982 = vsel %vm981, %v973, %v978
  %v983 = vrsqrt.pop %v841
  %v984 = vmul.f32 %v983, %v841
  %v985 = vmul.f32 %v984, %v983
  %v986 = vmul.f32 0.5, %v985
  %v987 = vsub.f32 1.5, %v986
  %v988 = vmul.f32 %v983, %v987
  %vm989 = vweird.f32 %v841
  %vm990 = vweird.f32 %v983
  %vm991 = vmor %vm989, %vm990
  %v992 = vsel %vm991, %v983, %v988
  %v993 = vrsqrt.pop %v842
  %v994 = vmul.f32 %v993, %v842
  %v995 = vmul.f32 %v994, %v993
  %v996 = vmul.f32 0.5, %v995
  %v997 = vsub.f32 1.5, %v996
  %v998 = vmul.f32 %v993, %v997
  %vm999 = vweird.f32 %v842
  %vm1000 = vweird.f32 %v993
  %vm1001 = vmor %vm999, %vm1000
  %v1002 = vsel %vm1001, %v993, %v998
  %v1003 = vmul.f32 %v721, %v852
  %v1004 = vmul.f32 %v728, %v862
  %v1005 = vmul.f32 %v735, %v872
  %v1006 = vmul.f32 %v742, %v882
  %v1007 = vmul.f32 %v749, %v892
  %v1008 = vmul.f32 %v756, %v902
  %v1009 = vmul.f32 %v763, %v912
  %v1010 = vmul.f32 %v770, %v922
  %v1011 = vmul.f32 %v777, %v932
  %v1012 = vmul.f32 %v784, %v942
  %v1013 = vmul.f32 %v791, %v952
  %v1014 = vmul.f32 %v798, %v962
  %v1015 = vmul.f32 %v805, %v972
  %v1016 = vmul.f32 %v812, %v982
  %v1017 = vmul.f32 %v819, %v992
  %v1018 = vmul.f32 %v826, %v1002
  %v1019 = vmax.f32 %v1003, 1e-06
  %v1020 = vmax.f32 %v1004, 1e-06
  %v1021 = vmax.f32 %v1005, 1e-06
  %v1022 = vmax.f32 %v1006, 1e-06
  %v1023 = vmax.f32 %v1007, 1e-06
  %v1024 = vmax.f32 %v1008, 1e-06
  %v1025 = vmax.f32 %v1009, 1e-06
  %v1026 = vmax.f32 %v1010, 1e-06
  %v1027 = vmax.f32 %v1011, 1e-06
  %v1028 = vmax.f32 %v1012, 1e-06
  %v1029 = vmax.f32 %v1013, 1e-06
  %v1030 = vmax.f32 %v1014, 1e-06
  %v1031 = vmax.f32 %v1015, 1e-06
  %v1032 = vmax.f32 %v1016, 1e-06
  %v1033 = vmax.f32 %v1017, 1e-06
  %v1034 = vmax.f32 %v1018, 1e-06
  %v1035 = vtanh.pop %v1019
  %v1036 = vtanh.pop %v1020
  %v1037 = vtanh.pop %v1021
  %v1038 = vtanh.pop %v1022
  %v1039 = vtanh.pop %v1023
  %v1040 = vtanh.pop %v1024
  %v1041 = vtanh.pop %v1025
  %v1042 = vtanh.pop %v1026
  %v1043 = vtanh.pop %v1027
  %v1044 = vtanh.pop %v1028
  %v1045 = vtanh.pop %v1029
  %v1046 = vtanh.pop %v1030
  %v1047 = vtanh.pop %v1031
  %v1048 = vtanh.pop %v1032
  %v1049 = vtanh.pop %v1033
  %v1050 = vtanh.pop %v1034
  %v1051 = vmul.f32 %v1035, %v852
  %v1052 = vmul.f32 %v1036, %v862
  %v1053 = vmul.f32 %v1037, %v872
  %v1054 = vmul.f32 %v1038, %v882
  %v1055 = vmul.f32 %v1039, %v892
  %v1056 = vmul.f32 %v1040, %v902
  %v1057 = vmul.f32 %v1041, %v912
  %v1058 = vmul.f32 %v1042, %v922
  %v1059 = vmul.f32 %v1043, %v932
  %v1060 = vmul.f32 %v1044, %v942
  %v1061 = vmul.f32 %v1045, %v952
  %v1062 = vmul.f32 %v1046, %v962
  %v1063 = vmul.f32 %v1047, %v972
  %v1064 = vmul.f32 %v1048, %v982
  %v1065 = vmul.f32 %v1049, %v992
  %v1066 = vmul.f32 %v1050, %v1002
  %v1083 = vrot.slane %v1052, 4
  %v1084 = vrot.slane %v1054, 4
  %v1085 = vrot.slane %v1056, 4
  %v1086 = vrot.slane %v1058, 4
  %v1087 = vrot.slane %v1060, 4
  %v1088 = vrot.slane %v1062, 4
  %v1089 = vrot.slane %v1064, 4
  %v1090 = vrot.slane %v1066, 4
  %v1091 = vsel %vm114, %v1051, %v1083
  %v1092 = vsel %vm114, %v1053, %v1084
  %v1093 = vsel %vm114, %v1055, %v1085
  %v1094 = vsel %vm114, %v1057, %v1086
  %v1095 = vsel %vm114, %v1059, %v1087
  %v1096 = vsel %vm114, %v1061, %v1088
  %v1097 = vsel %vm114, %v1063, %v1089
  %v1098 = vsel %vm114, %v1065, %v1090
  %v1107 = vmul.f32 %v648, %v1091
  %v1108 = vmul.f32 %v649, %v1092
  %v1109 = vmul.f32 %v650, %v1093
  %v1110 = vmul.f32 %v651, %v1094
  %v1111 = vmul.f32 %v652, %v1095
  %v1112 = vmul.f32 %v653, %v1096
  %v1113 = vmul.f32 %v654, %v1097
  %v1114 = vmul.f32 %v655, %v1098
  %v1115 = vmul.f32 %v632, %v632
  %v1116 = vmul.f32 %v633, %v633
  %v1117 = vmul.f32 %v634, %v634
  %v1118 = vmul.f32 %v635, %v635
  %v1119 = vmul.f32 %v636, %v636
  %v1120 = vmul.f32 %v637, %v637
  %v1121 = vmul.f32 %v638, %v638
  %v1122 = vmul.f32 %v639, %v639
  %v1123 = vmul.f32 %v640, %v640
  %v1124 = vmul.f32 %v641, %v641
  %v1125 = vmul.f32 %v642, %v642
  %v1126 = vmul.f32 %v643, %v643
  %v1127 = vmul.f32 %v644, %v644
  %v1128 = vmul.f32 %v645, %v645
  %v1129 = vmul.f32 %v646, %v646
  %v1130 = vmul.f32 %v647, %v647
  %v1131 = vsel %vm114, %v1115, 0.0
  %v1132 = vrot.slane %v1131, 4
  %v1133 = vadd.f32 %v1131, %v1132
  %v1134 = vrot.slane %v1133, 2
  %v1135 = vadd.f32 %v1133, %v1134
  %v1136 = vrot.slane %v1135, 1
  %v1137 = vadd.f32 %v1135, %v1136
  %v1138 = vsel %vm114, %v1116, 0.0
  %v1139 = vrot.slane %v1138, 4
  %v1140 = vadd.f32 %v1138, %v1139
  %v1141 = vrot.slane %v1140, 2
  %v1142 = vadd.f32 %v1140, %v1141
  %v1143 = vrot.slane %v1142, 1
  %v1144 = vadd.f32 %v1142, %v1143
  %v1145 = vsel %vm114, %v1117, 0.0
  %v1146 = vrot.slane %v1145, 4
  %v1147 = vadd.f32 %v1145, %v1146
  %v1148 = vrot.slane %v1147, 2
  %v1149 = vadd.f32 %v1147, %v1148
  %v1150 = vrot.slane %v1149, 1
  %v1151 = vadd.f32 %v1149, %v1150
  %v1152 = vsel %vm114, %v1118, 0.0
  %v1153 = vrot.slane %v1152, 4
  %v1154 = vadd.f32 %v1152, %v1153
  %v1155 = vrot.slane %v1154, 2
  %v1156 = vadd.f32 %v1154, %v1155
  %v1157 = vrot.slane %v1156, 1
  %v1158 = vadd.f32 %v1156, %v1157
  %v1159 = vsel %vm114, %v1119, 0.0
  %v1160 = vrot.slane %v1159, 4
  %v1161 = vadd.f32 %v1159, %v1160
  %v1162 = vrot.slane %v1161, 2
  %v1163 = vadd.f32 %v1161, %v1162
  %v1164 = vrot.slane %v1163, 1
  %v1165 = vadd.f32 %v1163, %v1164
  %v1166 = vsel %vm114, %v1120, 0.0
  %v1167 = vrot.slane %v1166, 4
  %v1168 = vadd.f32 %v1166, %v1167
  %v1169 = vrot.slane %v1168, 2
  %v1170 = vadd.f32 %v1168, %v1169
  %v1171 = vrot.slane %v1170, 1
  %v1172 = vadd.f32 %v1170, %v1171
  %v1173 = vsel %vm114, %v1121, 0.0
  %v1174 = vrot.slane %v1173, 4
  %v1175 = vadd.f32 %v1173, %v1174
  %v1176 = vrot.slane %v1175, 2
  %v1177 = vadd.f32 %v1175, %v1176
  %v1178 = vrot.slane %v1177, 1
  %v1179 = vadd.f32 %v1177, %v1178
  %v1180 = vsel %vm114, %v1122, 0.0
  %v1181 = vrot.slane %v1180, 4
  %v1182 = vadd.f32 %v1180, %v1181
  %v1183 = vrot.slane %v1182, 2
  %v1184 = vadd.f32 %v1182, %v1183
  %v1185 = vrot.slane %v1184, 1
  %v1186 = vadd.f32 %v1184, %v1185
  %v1187 = vsel %vm114, %v1123, 0.0
  %v1188 = vrot.slane %v1187, 4
  %v1189 = vadd.f32 %v1187, %v1188
  %v1190 = vrot.slane %v1189, 2
  %v1191 = vadd.f32 %v1189, %v1190
  %v1192 = vrot.slane %v1191, 1
  %v1193 = vadd.f32 %v1191, %v1192
  %v1194 = vsel %vm114, %v1124, 0.0
  %v1195 = vrot.slane %v1194, 4
  %v1196 = vadd.f32 %v1194, %v1195
  %v1197 = vrot.slane %v1196, 2
  %v1198 = vadd.f32 %v1196, %v1197
  %v1199 = vrot.slane %v1198, 1
  %v1200 = vadd.f32 %v1198, %v1199
  %v1201 = vsel %vm114, %v1125, 0.0
  %v1202 = vrot.slane %v1201, 4
  %v1203 = vadd.f32 %v1201, %v1202
  %v1204 = vrot.slane %v1203, 2
  %v1205 = vadd.f32 %v1203, %v1204
  %v1206 = vrot.slane %v1205, 1
  %v1207 = vadd.f32 %v1205, %v1206
  %v1208 = vsel %vm114, %v1126, 0.0
  %v1209 = vrot.slane %v1208, 4
  %v1210 = vadd.f32 %v1208, %v1209
  %v1211 = vrot.slane %v1210, 2
  %v1212 = vadd.f32 %v1210, %v1211
  %v1213 = vrot.slane %v1212, 1
  %v1214 = vadd.f32 %v1212, %v1213
  %v1215 = vsel %vm114, %v1127, 0.0
  %v1216 = vrot.slane %v1215, 4
  %v1217 = vadd.f32 %v1215, %v1216
  %v1218 = vrot.slane %v1217, 2
  %v1219 = vadd.f32 %v1217, %v1218
  %v1220 = vrot.slane %v1219, 1
  %v1221 = vadd.f32 %v1219, %v1220
  %v1222 = vsel %vm114, %v1128, 0.0
  %v1223 = vrot.slane %v1222, 4
  %v1224 = vadd.f32 %v1222, %v1223
  %v1225 = vrot.slane %v1224, 2
  %v1226 = vadd.f32 %v1224, %v1225
  %v1227 = vrot.slane %v1226, 1
  %v1228 = vadd.f32 %v1226, %v1227
  %v1229 = vsel %vm114, %v1129, 0.0
  %v1230 = vrot.slane %v1229, 4
  %v1231 = vadd.f32 %v1229, %v1230
  %v1232 = vrot.slane %v1231, 2
  %v1233 = vadd.f32 %v1231, %v1232
  %v1234 = vrot.slane %v1233, 1
  %v1235 = vadd.f32 %v1233, %v1234
  %v1236 = vsel %vm114, %v1130, 0.0
  %v1237 = vrot.slane %v1236, 4
  %v1238 = vadd.f32 %v1236, %v1237
  %v1239 = vrot.slane %v1238, 2
  %v1240 = vadd.f32 %v1238, %v1239
  %v1241 = vrot.slane %v1240, 1
  %v1242 = vadd.f32 %v1240, %v1241
  %v1243 = vmax.f32 %v1137, 1e-12
  %v1244 = vmax.f32 %v1144, 1e-12
  %v1245 = vmax.f32 %v1151, 1e-12
  %v1246 = vmax.f32 %v1158, 1e-12
  %v1247 = vmax.f32 %v1165, 1e-12
  %v1248 = vmax.f32 %v1172, 1e-12
  %v1249 = vmax.f32 %v1179, 1e-12
  %v1250 = vmax.f32 %v1186, 1e-12
  %v1251 = vmax.f32 %v1193, 1e-12
  %v1252 = vmax.f32 %v1200, 1e-12
  %v1253 = vmax.f32 %v1207, 1e-12
  %v1254 = vmax.f32 %v1214, 1e-12
  %v1255 = vmax.f32 %v1221, 1e-12
  %v1256 = vmax.f32 %v1228, 1e-12
  %v1257 = vmax.f32 %v1235, 1e-12
  %v1258 = vmax.f32 %v1242, 1e-12
  %v1259 = vrsqrt.pop %v1243
  %v1260 = vmul.f32 %v1259, %v1243
  %v1261 = vmul.f32 %v1260, %v1259
  %v1262 = vmul.f32 0.5, %v1261
  %v1263 = vsub.f32 1.5, %v1262
  %v1264 = vmul.f32 %v1259, %v1263
  %vm1265 = vweird.f32 %v1243
  %vm1266 = vweird.f32 %v1259
  %vm1267 = vmor %vm1265, %vm1266
  %v1268 = vsel %vm1267, %v1259, %v1264
  %v1269 = vrsqrt.pop %v1244
  %v1270 = vmul.f32 %v1269, %v1244
  %v1271 = vmul.f32 %v1270, %v1269
  %v1272 = vmul.f32 0.5, %v1271
  %v1273 = vsub.f32 1.5, %v1272
  %v1274 = vmul.f32 %v1269, %v1273
  %vm1275 = vweird.f32 %v1244
  %vm1276 = vweird.f32 %v1269
  %vm1277 = vmor %vm1275, %vm1276
  %v1278 = vsel %vm1277, %v1269, %v1274
  %v1279 = vrsqrt.pop %v1245
  %v1280 = vmul.f32 %v1279, %v1245
  %v1281 = vmul.f32 %v1280, %v1279
  %v1282 = vmul.f32 0.5, %v1281
  %v1283 = vsub.f32 1.5, %v1282
  %v1284 = vmul.f32 %v1279, %v1283
  %vm1285 = vweird.f32 %v1245
  %vm1286 = vweird.f32 %v1279
  %vm1287 = vmor %vm1285, %vm1286
  %v1288 = vsel %vm1287, %v1279, %v1284
  %v1289 = vrsqrt.pop %v1246
  %v1290 = vmul.f32 %v1289, %v1246
  %v1291 = vmul.f32 %v1290, %v1289
  %v1292 = vmul.f32 0.5, %v1291
  %v1293 = vsub.f32 1.5, %v1292
  %v1294 = vmul.f32 %v1289, %v1293
  %vm1295 = vweird.f32 %v1246
  %vm1296 = vweird.f32 %v1289
  %vm1297 = vmor %vm1295, %vm1296
  %v1298 = vsel %vm1297, %v1289, %v1294
  %v1299 = vrsqrt.pop %v1247
  %v1300 = vmul.f32 %v1299, %v1247
  %v1301 = vmul.f32 %v1300, %v1299
  %v1302 = vmul.f32 0.5, %v1301
  %v1303 = vsub.f32 1.5, %v1302
  %v1304 = vmul.f32 %v1299, %v1303
  %vm1305 = vweird.f32 %v1247
  %vm1306 = vweird.f32 %v1299
  %vm1307 = vmor %vm1305, %vm1306
  %v1308 = vsel %vm1307, %v1299, %v1304
  %v1309 = vrsqrt.pop %v1248
  %v1310 = vmul.f32 %v1309, %v1248
  %v1311 = vmul.f32 %v1310, %v1309
  %v1312 = vmul.f32 0.5, %v1311
  %v1313 = vsub.f32 1.5, %v1312
  %v1314 = vmul.f32 %v1309, %v1313
  %vm1315 = vweird.f32 %v1248
  %vm1316 = vweird.f32 %v1309
  %vm1317 = vmor %vm1315, %vm1316
  %v1318 = vsel %vm1317, %v1309, %v1314
  %v1319 = vrsqrt.pop %v1249
  %v1320 = vmul.f32 %v1319, %v1249
  %v1321 = vmul.f32 %v1320, %v1319
  %v1322 = vmul.f32 0.5, %v1321
  %v1323 = vsub.f32 1.5, %v1322
  %v1324 = vmul.f32 %v1319, %v1323
  %vm1325 = vweird.f32 %v1249
  %vm1326 = vweird.f32 %v1319
  %vm1327 = vmor %vm1325, %vm1326
  %v1328 = vsel %vm1327, %v1319, %v1324
  %v1329 = vrsqrt.pop %v1250
  %v1330 = vmul.f32 %v1329, %v1250
  %v1331 = vmul.f32 %v1330, %v1329
  %v1332 = vmul.f32 0.5, %v1331
  %v1333 = vsub.f32 1.5, %v1332
  %v1334 = vmul.f32 %v1329, %v1333
  %vm1335 = vweird.f32 %v1250
  %vm1336 = vweird.f32 %v1329
  %vm1337 = vmor %vm1335, %vm1336
  %v1338 = vsel %vm1337, %v1329, %v1334
  %v1339 = vrsqrt.pop %v1251
  %v1340 = vmul.f32 %v1339, %v1251
  %v1341 = vmul.f32 %v1340, %v1339
  %v1342 = vmul.f32 0.5, %v1341
  %v1343 = vsub.f32 1.5, %v1342
  %v1344 = vmul.f32 %v1339, %v1343
  %vm1345 = vweird.f32 %v1251
  %vm1346 = vweird.f32 %v1339
  %vm1347 = vmor %vm1345, %vm1346
  %v1348 = vsel %vm1347, %v1339, %v1344
  %v1349 = vrsqrt.pop %v1252
  %v1350 = vmul.f32 %v1349, %v1252
  %v1351 = vmul.f32 %v1350, %v1349
  %v1352 = vmul.f32 0.5, %v1351
  %v1353 = vsub.f32 1.5, %v1352
  %v1354 = vmul.f32 %v1349, %v1353
  %vm1355 = vweird.f32 %v1252
  %vm1356 = vweird.f32 %v1349
  %vm1357 = vmor %vm1355, %vm1356
  %v1358 = vsel %vm1357, %v1349, %v1354
  %v1359 = vrsqrt.pop %v1253
  %v1360 = vmul.f32 %v1359, %v1253
  %v1361 = vmul.f32 %v1360, %v1359
  %v1362 = vmul.f32 0.5, %v1361
  %v1363 = vsub.f32 1.5, %v1362
  %v1364 = vmul.f32 %v1359, %v1363
  %vm1365 = vweird.f32 %v1253
  %vm1366 = vweird.f32 %v1359
  %vm1367 = vmor %vm1365, %vm1366
  %v1368 = vsel %vm1367, %v1359, %v1364
  %v1369 = vrsqrt.pop %v1254
  %v1370 = vmul.f32 %v1369, %v1254
  %v1371 = vmul.f32 %v1370, %v1369
  %v1372 = vmul.f32 0.5, %v1371
  %v1373 = vsub.f32 1.5, %v1372
  %v1374 = vmul.f32 %v1369, %v1373
  %vm1375 = vweird.f32 %v1254
  %vm1376 = vweird.f32 %v1369
  %vm1377 = vmor %vm1375, %vm1376
  %v1378 = vsel %vm1377, %v1369, %v1374
  %v1379 = vrsqrt.pop %v1255
  %v1380 = vmul.f32 %v1379, %v1255
  %v1381 = vmul.f32 %v1380, %v1379
  %v1382 = vmul.f32 0.5, %v1381
  %v1383 = vsub.f32 1.5, %v1382
  %v1384 = vmul.f32 %v1379, %v1383
  %vm1385 = vweird.f32 %v1255
  %vm1386 = vweird.f32 %v1379
  %vm1387 = vmor %vm1385, %vm1386
  %v1388 = vsel %vm1387, %v1379, %v1384
  %v1389 = vrsqrt.pop %v1256
  %v1390 = vmul.f32 %v1389, %v1256
  %v1391 = vmul.f32 %v1390, %v1389
  %v1392 = vmul.f32 0.5, %v1391
  %v1393 = vsub.f32 1.5, %v1392
  %v1394 = vmul.f32 %v1389, %v1393
  %vm1395 = vweird.f32 %v1256
  %vm1396 = vweird.f32 %v1389
  %vm1397 = vmor %vm1395, %vm1396
  %v1398 = vsel %vm1397, %v1389, %v1394
  %v1399 = vrsqrt.pop %v1257
  %v1400 = vmul.f32 %v1399, %v1257
  %v1401 = vmul.f32 %v1400, %v1399
  %v1402 = vmul.f32 0.5, %v1401
  %v1403 = vsub.f32 1.5, %v1402
  %v1404 = vmul.f32 %v1399, %v1403
  %vm1405 = vweird.f32 %v1257
  %vm1406 = vweird.f32 %v1399
  %vm1407 = vmor %vm1405, %vm1406
  %v1408 = vsel %vm1407, %v1399, %v1404
  %v1409 = vrsqrt.pop %v1258
  %v1410 = vmul.f32 %v1409, %v1258
  %v1411 = vmul.f32 %v1410, %v1409
  %v1412 = vmul.f32 0.5, %v1411
  %v1413 = vsub.f32 1.5, %v1412
  %v1414 = vmul.f32 %v1409, %v1413
  %vm1415 = vweird.f32 %v1258
  %vm1416 = vweird.f32 %v1409
  %vm1417 = vmor %vm1415, %vm1416
  %v1418 = vsel %vm1417, %v1409, %v1414
  %v1419 = vmul.f32 %v1137, %v1268
  %v1420 = vmul.f32 %v1144, %v1278
  %v1421 = vmul.f32 %v1151, %v1288
  %v1422 = vmul.f32 %v1158, %v1298
  %v1423 = vmul.f32 %v1165, %v1308
  %v1424 = vmul.f32 %v1172, %v1318
  %v1425 = vmul.f32 %v1179, %v1328
  %v1426 = vmul.f32 %v1186, %v1338
  %v1427 = vmul.f32 %v1193, %v1348
  %v1428 = vmul.f32 %v1200, %v1358
  %v1429 = vmul.f32 %v1207, %v1368
  %v1430 = vmul.f32 %v1214, %v1378
  %v1431 = vmul.f32 %v1221, %v1388
  %v1432 = vmul.f32 %v1228, %v1398
  %v1433 = vmul.f32 %v1235, %v1408
  %v1434 = vmul.f32 %v1242, %v1418
  %v1435 = vmax.f32 %v1419, 1e-06
  %v1436 = vmax.f32 %v1420, 1e-06
  %v1437 = vmax.f32 %v1421, 1e-06
  %v1438 = vmax.f32 %v1422, 1e-06
  %v1439 = vmax.f32 %v1423, 1e-06
  %v1440 = vmax.f32 %v1424, 1e-06
  %v1441 = vmax.f32 %v1425, 1e-06
  %v1442 = vmax.f32 %v1426, 1e-06
  %v1443 = vmax.f32 %v1427, 1e-06
  %v1444 = vmax.f32 %v1428, 1e-06
  %v1445 = vmax.f32 %v1429, 1e-06
  %v1446 = vmax.f32 %v1430, 1e-06
  %v1447 = vmax.f32 %v1431, 1e-06
  %v1448 = vmax.f32 %v1432, 1e-06
  %v1449 = vmax.f32 %v1433, 1e-06
  %v1450 = vmax.f32 %v1434, 1e-06
  %v1451 = vtanh.pop %v1435
  %v1452 = vtanh.pop %v1436
  %v1453 = vtanh.pop %v1437
  %v1454 = vtanh.pop %v1438
  %v1455 = vtanh.pop %v1439
  %v1456 = vtanh.pop %v1440
  %v1457 = vtanh.pop %v1441
  %v1458 = vtanh.pop %v1442
  %v1459 = vtanh.pop %v1443
  %v1460 = vtanh.pop %v1444
  %v1461 = vtanh.pop %v1445
  %v1462 = vtanh.pop %v1446
  %v1463 = vtanh.pop %v1447
  %v1464 = vtanh.pop %v1448
  %v1465 = vtanh.pop %v1449
  %v1466 = vtanh.pop %v1450
  %v1467 = vmul.f32 %v1451, %v1268
  %v1468 = vmul.f32 %v1452, %v1278
  %v1469 = vmul.f32 %v1453, %v1288
  %v1470 = vmul.f32 %v1454, %v1298
  %v1471 = vmul.f32 %v1455, %v1308
  %v1472 = vmul.f32 %v1456, %v1318
  %v1473 = vmul.f32 %v1457, %v1328
  %v1474 = vmul.f32 %v1458, %v1338
  %v1475 = vmul.f32 %v1459, %v1348
  %v1476 = vmul.f32 %v1460, %v1358
  %v1477 = vmul.f32 %v1461, %v1368
  %v1478 = vmul.f32 %v1462, %v1378
  %v1479 = vmul.f32 %v1463, %v1388
  %v1480 = vmul.f32 %v1464, %v1398
  %v1481 = vmul.f32 %v1465, %v1408
  %v1482 = vmul.f32 %v1466, %v1418
  %v1483 = vmul.f32 %v632, %v1467
  %v1484 = vmul.f32 %v633, %v1468
  %v1485 = vmul.f32 %v634, %v1469
  %v1486 = vmul.f32 %v635, %v1470
  %v1487 = vmul.f32 %v636, %v1471
  %v1488 = vmul.f32 %v637, %v1472
  %v1489 = vmul.f32 %v638, %v1473
  %v1490 = vmul.f32 %v639, %v1474
  %v1491 = vmul.f32 %v640, %v1475
  %v1492 = vmul.f32 %v641, %v1476
  %v1493 = vmul.f32 %v642, %v1477
  %v1494 = vmul.f32 %v643, %v1478
  %v1495 = vmul.f32 %v644, %v1479
  %v1496 = vmul.f32 %v645, %v1480
  %v1497 = vmul.f32 %v646, %v1481
  %v1498 = vmul.f32 %v647, %v1482
  %v1515 = vrot.slane %v1484, 4
  %v1516 = vrot.slane %v1486, 4
  %v1517 = vrot.slane %v1488, 4
  %v1518 = vrot.slane %v1490, 4
  %v1519 = vrot.slane %v1492, 4
  %v1520 = vrot.slane %v1494, 4
  %v1521 = vrot.slane %v1496, 4
  %v1522 = vrot.slane %v1498, 4
  %v1523 = vsel %vm114, %v1483, %v1515
  %v1524 = vsel %vm114, %v1485, %v1516
  %v1525 = vsel %vm114, %v1487, %v1517
  %v1526 = vsel %vm114, %v1489, %v1518
  %v1527 = vsel %vm114, %v1491, %v1519
  %v1528 = vsel %vm114, %v1493, %v1520
  %v1529 = vsel %vm114, %v1495, %v1521
  %v1530 = vsel %vm114, %v1497, %v1522
  %v1539 = vmul.f32 %v1107, %v1523
  %v1540 = vmul.f32 %v1108, %v1524
  %v1541 = vmul.f32 %v1109, %v1525
  %v1542 = vmul.f32 %v1110, %v1526
  %v1543 = vmul.f32 %v1111, %v1527
  %v1544 = vmul.f32 %v1112, %v1528
  %v1545 = vmul.f32 %v1113, %v1529
  %v1546 = vmul.f32 %v1114, %v1530
  %1555 = vst [vmem:[#allocation1] ss:$2 sm:$0xff] %v1539
  %s1556 = scalar_lea.vmem [#allocation1], 16
  %1557 = vst [vmem:[%s1556] ss:$2 sm:$0xff] %v1540
  %s1558 = scalar_lea.vmem [#allocation1], 32
  %1559 = vst [vmem:[%s1558] ss:$2 sm:$0xff] %v1541
  %s1560 = scalar_lea.vmem [#allocation1], 48
  %1561 = vst [vmem:[%s1560] ss:$2 sm:$0xff] %v1542
  %v1562 = vld.sshfl [vmem:[#allocation1] sm:$0xff pattern:$0x75316420]
  %v1563 = vld.sshfl [vmem:[#allocation1 + $0x8] sm:$0xff pattern:$0x75316420]
  %v1564 = vld.sshfl [vmem:[#allocation1 + $0x10] sm:$0xff pattern:$0x75316420]
  %v1565 = vld.sshfl [vmem:[#allocation1 + $0x18] sm:$0xff pattern:$0x75316420]
  %v1566 = vld.sshfl [vmem:[#allocation1 + $0x20] sm:$0xff pattern:$0x75316420]
  %v1567 = vld.sshfl [vmem:[#allocation1 + $0x28] sm:$0xff pattern:$0x75316420]
  %v1568 = vld.sshfl [vmem:[#allocation1 + $0x30] sm:$0xff pattern:$0x75316420]
  %v1569 = vld.sshfl [vmem:[#allocation1 + $0x38] sm:$0xff pattern:$0x75316420]
  %1570 = vst [vmem:[#allocation1] ss:$2 sm:$0xff] %v1543
  %1571 = vst [vmem:[%s1556] ss:$2 sm:$0xff] %v1544
  %1572 = vst [vmem:[%s1558] ss:$2 sm:$0xff] %v1545
  %1573 = vst [vmem:[%s1560] ss:$2 sm:$0xff] %v1546
  %v1574 = vld.sshfl [vmem:[#allocation1] sm:$0xff pattern:$0x75316420]
  %v1575 = vld.sshfl [vmem:[#allocation1 + $0x8] sm:$0xff pattern:$0x75316420]
  %v1576 = vld.sshfl [vmem:[#allocation1 + $0x10] sm:$0xff pattern:$0x75316420]
  %v1577 = vld.sshfl [vmem:[#allocation1 + $0x18] sm:$0xff pattern:$0x75316420]
  %v1578 = vld.sshfl [vmem:[#allocation1 + $0x20] sm:$0xff pattern:$0x75316420]
  %v1579 = vld.sshfl [vmem:[#allocation1 + $0x28] sm:$0xff pattern:$0x75316420]
  %v1580 = vld.sshfl [vmem:[#allocation1 + $0x30] sm:$0xff pattern:$0x75316420]
  %v1581 = vld.sshfl [vmem:[#allocation1 + $0x38] sm:$0xff pattern:$0x75316420]
  %v1598 = vsel %vm114, %v1562, 0.0
  %v1599 = vrot.slane %v1598, 4
  %v1600 = vadd.f32 %v1598, %v1599
  %v1601 = vrot.slane %v1600, 2
  %v1602 = vadd.f32 %v1600, %v1601
  %v1603 = vrot.slane %v1602, 1
  %v1604 = vadd.f32 %v1602, %v1603
  %v1605 = vsel %vm114, %v1563, 0.0
  %v1606 = vrot.slane %v1605, 4
  %v1607 = vadd.f32 %v1605, %v1606
  %v1608 = vrot.slane %v1607, 2
  %v1609 = vadd.f32 %v1607, %v1608
  %v1610 = vrot.slane %v1609, 1
  %v1611 = vadd.f32 %v1609, %v1610
  %v1612 = vsel %vm114, %v1564, 0.0
  %v1613 = vrot.slane %v1612, 4
  %v1614 = vadd.f32 %v1612, %v1613
  %v1615 = vrot.slane %v1614, 2
  %v1616 = vadd.f32 %v1614, %v1615
  %v1617 = vrot.slane %v1616, 1
  %v1618 = vadd.f32 %v1616, %v1617
  %v1619 = vsel %vm114, %v1565, 0.0
  %v1620 = vrot.slane %v1619, 4
  %v1621 = vadd.f32 %v1619, %v1620
  %v1622 = vrot.slane %v1621, 2
  %v1623 = vadd.f32 %v1621, %v1622
  %v1624 = vrot.slane %v1623, 1
  %v1625 = vadd.f32 %v1623, %v1624
  %v1626 = vsel %vm114, %v1566, 0.0
  %v1627 = vrot.slane %v1626, 4
  %v1628 = vadd.f32 %v1626, %v1627
  %v1629 = vrot.slane %v1628, 2
  %v1630 = vadd.f32 %v1628, %v1629
  %v1631 = vrot.slane %v1630, 1
  %v1632 = vadd.f32 %v1630, %v1631
  %v1633 = vsel %vm114, %v1567, 0.0
  %v1634 = vrot.slane %v1633, 4
  %v1635 = vadd.f32 %v1633, %v1634
  %v1636 = vrot.slane %v1635, 2
  %v1637 = vadd.f32 %v1635, %v1636
  %v1638 = vrot.slane %v1637, 1
  %v1639 = vadd.f32 %v1637, %v1638
  %v1640 = vsel %vm114, %v1568, 0.0
  %v1641 = vrot.slane %v1640, 4
  %v1642 = vadd.f32 %v1640, %v1641
  %v1643 = vrot.slane %v1642, 2
  %v1644 = vadd.f32 %v1642, %v1643
  %v1645 = vrot.slane %v1644, 1
  %v1646 = vadd.f32 %v1644, %v1645
  %v1647 = vsel %vm114, %v1569, 0.0
  %v1648 = vrot.slane %v1647, 4
  %v1649 = vadd.f32 %v1647, %v1648
  %v1650 = vrot.slane %v1649, 2
  %v1651 = vadd.f32 %v1649, %v1650
  %v1652 = vrot.slane %v1651, 1
  %v1653 = vadd.f32 %v1651, %v1652
  %v1654 = vsel %vm114, %v1574, 0.0
  %v1655 = vrot.slane %v1654, 4
  %v1656 = vadd.f32 %v1654, %v1655
  %v1657 = vrot.slane %v1656, 2
  %v1658 = vadd.f32 %v1656, %v1657
  %v1659 = vrot.slane %v1658, 1
  %v1660 = vadd.f32 %v1658, %v1659
  %v1661 = vsel %vm114, %v1575, 0.0
  %v1662 = vrot.slane %v1661, 4
  %v1663 = vadd.f32 %v1661, %v1662
  %v1664 = vrot.slane %v1663, 2
  %v1665 = vadd.f32 %v1663, %v1664
  %v1666 = vrot.slane %v1665, 1
  %v1667 = vadd.f32 %v1665, %v1666
  %v1668 = vsel %vm114, %v1576, 0.0
  %v1669 = vrot.slane %v1668, 4
  %v1670 = vadd.f32 %v1668, %v1669
  %v1671 = vrot.slane %v1670, 2
  %v1672 = vadd.f32 %v1670, %v1671
  %v1673 = vrot.slane %v1672, 1
  %v1674 = vadd.f32 %v1672, %v1673
  %v1675 = vsel %vm114, %v1577, 0.0
  %v1676 = vrot.slane %v1675, 4
  %v1677 = vadd.f32 %v1675, %v1676
  %v1678 = vrot.slane %v1677, 2
  %v1679 = vadd.f32 %v1677, %v1678
  %v1680 = vrot.slane %v1679, 1
  %v1681 = vadd.f32 %v1679, %v1680
  %v1682 = vsel %vm114, %v1578, 0.0
  %v1683 = vrot.slane %v1682, 4
  %v1684 = vadd.f32 %v1682, %v1683
  %v1685 = vrot.slane %v1684, 2
  %v1686 = vadd.f32 %v1684, %v1685
  %v1687 = vrot.slane %v1686, 1
  %v1688 = vadd.f32 %v1686, %v1687
  %v1689 = vsel %vm114, %v1579, 0.0
  %v1690 = vrot.slane %v1689, 4
  %v1691 = vadd.f32 %v1689, %v1690
  %v1692 = vrot.slane %v1691, 2
  %v1693 = vadd.f32 %v1691, %v1692
  %v1694 = vrot.slane %v1693, 1
  %v1695 = vadd.f32 %v1693, %v1694
  %v1696 = vsel %vm114, %v1580, 0.0
  %v1697 = vrot.slane %v1696, 4
  %v1698 = vadd.f32 %v1696, %v1697
  %v1699 = vrot.slane %v1698, 2
  %v1700 = vadd.f32 %v1698, %v1699
  %v1701 = vrot.slane %v1700, 1
  %v1702 = vadd.f32 %v1700, %v1701
  %v1703 = vsel %vm114, %v1581, 0.0
  %v1704 = vrot.slane %v1703, 4
  %v1705 = vadd.f32 %v1703, %v1704
  %v1706 = vrot.slane %v1705, 2
  %v1707 = vadd.f32 %v1705, %v1706
  %v1708 = vrot.slane %v1707, 1
  %v1709 = vadd.f32 %v1707, %v1708
  %v1710 = vmul.f32 %v1107, %v1107
  %v1711 = vmul.f32 %v1108, %v1108
  %v1712 = vmul.f32 %v1109, %v1109
  %v1713 = vmul.f32 %v1110, %v1110
  %v1714 = vmul.f32 %v1111, %v1111
  %v1715 = vmul.f32 %v1112, %v1112
  %v1716 = vmul.f32 %v1113, %v1113
  %v1717 = vmul.f32 %v1114, %v1114
  %1726 = vst [vmem:[#allocation1] ss:$2 sm:$0xff] %v1710
  %s1727 = scalar_lea.vmem [#allocation1], 16
  %1728 = vst [vmem:[%s1727] ss:$2 sm:$0xff] %v1711
  %s1729 = scalar_lea.vmem [#allocation1], 32
  %1730 = vst [vmem:[%s1729] ss:$2 sm:$0xff] %v1712
  %s1731 = scalar_lea.vmem [#allocation1], 48
  %1732 = vst [vmem:[%s1731] ss:$2 sm:$0xff] %v1713
  %v1733 = vld.sshfl [vmem:[#allocation1] sm:$0xff pattern:$0x75316420]
  %v1734 = vld.sshfl [vmem:[#allocation1 + $0x8] sm:$0xff pattern:$0x75316420]
  %v1735 = vld.sshfl [vmem:[#allocation1 + $0x10] sm:$0xff pattern:$0x75316420]
  %v1736 = vld.sshfl [vmem:[#allocation1 + $0x18] sm:$0xff pattern:$0x75316420]
  %v1737 = vld.sshfl [vmem:[#allocation1 + $0x20] sm:$0xff pattern:$0x75316420]
  %v1738 = vld.sshfl [vmem:[#allocation1 + $0x28] sm:$0xff pattern:$0x75316420]
  %v1739 = vld.sshfl [vmem:[#allocation1 + $0x30] sm:$0xff pattern:$0x75316420]
  %v1740 = vld.sshfl [vmem:[#allocation1 + $0x38] sm:$0xff pattern:$0x75316420]
  %1741 = vst [vmem:[#allocation1] ss:$2 sm:$0xff] %v1714
  %1742 = vst [vmem:[%s1727] ss:$2 sm:$0xff] %v1715
  %1743 = vst [vmem:[%s1729] ss:$2 sm:$0xff] %v1716
  %1744 = vst [vmem:[%s1731] ss:$2 sm:$0xff] %v1717
  %v1745 = vld.sshfl [vmem:[#allocation1] sm:$0xff pattern:$0x75316420]
  %v1746 = vld.sshfl [vmem:[#allocation1 + $0x8] sm:$0xff pattern:$0x75316420]
  %v1747 = vld.sshfl [vmem:[#allocation1 + $0x10] sm:$0xff pattern:$0x75316420]
  %v1748 = vld.sshfl [vmem:[#allocation1 + $0x18] sm:$0xff pattern:$0x75316420]
  %v1749 = vld.sshfl [vmem:[#allocation1 + $0x20] sm:$0xff pattern:$0x75316420]
  %v1750 = vld.sshfl [vmem:[#allocation1 + $0x28] sm:$0xff pattern:$0x75316420]
  %v1751 = vld.sshfl [vmem:[#allocation1 + $0x30] sm:$0xff pattern:$0x75316420]
  %v1752 = vld.sshfl [vmem:[#allocation1 + $0x38] sm:$0xff pattern:$0x75316420]
  %v1769 = vsel %vm114, %v1733, 0.0
  %v1770 = vrot.slane %v1769, 4
  %v1771 = vadd.f32 %v1769, %v1770
  %v1772 = vrot.slane %v1771, 2
  %v1773 = vadd.f32 %v1771, %v1772
  %v1774 = vrot.slane %v1773, 1
  %v1775 = vadd.f32 %v1773, %v1774
  %v1776 = vsel %vm114, %v1734, 0.0
  %v1777 = vrot.slane %v1776, 4
  %v1778 = vadd.f32 %v1776, %v1777
  %v1779 = vrot.slane %v1778, 2
  %v1780 = vadd.f32 %v1778, %v1779
  %v1781 = vrot.slane %v1780, 1
  %v1782 = vadd.f32 %v1780, %v1781
  %v1783 = vsel %vm114, %v1735, 0.0
  %v1784 = vrot.slane %v1783, 4
  %v1785 = vadd.f32 %v1783, %v1784
  %v1786 = vrot.slane %v1785, 2
  %v1787 = vadd.f32 %v1785, %v1786
  %v1788 = vrot.slane %v1787, 1
  %v1789 = vadd.f32 %v1787, %v1788
  %v1790 = vsel %vm114, %v1736, 0.0
  %v1791 = vrot.slane %v1790, 4
  %v1792 = vadd.f32 %v1790, %v1791
  %v1793 = vrot.slane %v1792, 2
  %v1794 = vadd.f32 %v1792, %v1793
  %v1795 = vrot.slane %v1794, 1
  %v1796 = vadd.f32 %v1794, %v1795
  %v1797 = vsel %vm114, %v1737, 0.0
  %v1798 = vrot.slane %v1797, 4
  %v1799 = vadd.f32 %v1797, %v1798
  %v1800 = vrot.slane %v1799, 2
  %v1801 = vadd.f32 %v1799, %v1800
  %v1802 = vrot.slane %v1801, 1
  %v1803 = vadd.f32 %v1801, %v1802
  %v1804 = vsel %vm114, %v1738, 0.0
  %v1805 = vrot.slane %v1804, 4
  %v1806 = vadd.f32 %v1804, %v1805
  %v1807 = vrot.slane %v1806, 2
  %v1808 = vadd.f32 %v1806, %v1807
  %v1809 = vrot.slane %v1808, 1
  %v1810 = vadd.f32 %v1808, %v1809
  %v1811 = vsel %vm114, %v1739, 0.0
  %v1812 = vrot.slane %v1811, 4
  %v1813 = vadd.f32 %v1811, %v1812
  %v1814 = vrot.slane %v1813, 2
  %v1815 = vadd.f32 %v1813, %v1814
  %v1816 = vrot.slane %v1815, 1
  %v1817 = vadd.f32 %v1815, %v1816
  %v1818 = vsel %vm114, %v1740, 0.0
  %v1819 = vrot.slane %v1818, 4
  %v1820 = vadd.f32 %v1818, %v1819
  %v1821 = vrot.slane %v1820, 2
  %v1822 = vadd.f32 %v1820, %v1821
  %v1823 = vrot.slane %v1822, 1
  %v1824 = vadd.f32 %v1822, %v1823
  %v1825 = vsel %vm114, %v1745, 0.0
  %v1826 = vrot.slane %v1825, 4
  %v1827 = vadd.f32 %v1825, %v1826
  %v1828 = vrot.slane %v1827, 2
  %v1829 = vadd.f32 %v1827, %v1828
  %v1830 = vrot.slane %v1829, 1
  %v1831 = vadd.f32 %v1829, %v1830
  %v1832 = vsel %vm114, %v1746, 0.0
  %v1833 = vrot.slane %v1832, 4
  %v1834 = vadd.f32 %v1832, %v1833
  %v1835 = vrot.slane %v1834, 2
  %v1836 = vadd.f32 %v1834, %v1835
  %v1837 = vrot.slane %v1836, 1
  %v1838 = vadd.f32 %v1836, %v1837
  %v1839 = vsel %vm114, %v1747, 0.0
  %v1840 = vrot.slane %v1839, 4
  %v1841 = vadd.f32 %v1839, %v1840
  %v1842 = vrot.slane %v1841, 2
  %v1843 = vadd.f32 %v1841, %v1842
  %v1844 = vrot.slane %v1843, 1
  %v1845 = vadd.f32 %v1843, %v1844
  %v1846 = vsel %vm114, %v1748, 0.0
  %v1847 = vrot.slane %v1846, 4
  %v1848 = vadd.f32 %v1846, %v1847
  %v1849 = vrot.slane %v1848, 2
  %v1850 = vadd.f32 %v1848, %v1849
  %v1851 = vrot.slane %v1850, 1
  %v1852 = vadd.f32 %v1850, %v1851
  %v1853 = vsel %vm114, %v1749, 0.0
  %v1854 = vrot.slane %v1853, 4
  %v1855 = vadd.f32 %v1853, %v1854
  %v1856 = vrot.slane %v1855, 2
  %v1857 = vadd.f32 %v1855, %v1856
  %v1858 = vrot.slane %v1857, 1
  %v1859 = vadd.f32 %v1857, %v1858
  %v1860 = vsel %vm114, %v1750, 0.0
  %v1861 = vrot.slane %v1860, 4
  %v1862 = vadd.f32 %v1860, %v1861
  %v1863 = vrot.slane %v1862, 2
  %v1864 = vadd.f32 %v1862, %v1863
  %v1865 = vrot.slane %v1864, 1
  %v1866 = vadd.f32 %v1864, %v1865
  %v1867 = vsel %vm114, %v1751, 0.0
  %v1868 = vrot.slane %v1867, 4
  %v1869 = vadd.f32 %v1867, %v1868
  %v1870 = vrot.slane %v1869, 2
  %v1871 = vadd.f32 %v1869, %v1870
  %v1872 = vrot.slane %v1871, 1
  %v1873 = vadd.f32 %v1871, %v1872
  %v1874 = vsel %vm114, %v1752, 0.0
  %v1875 = vrot.slane %v1874, 4
  %v1876 = vadd.f32 %v1874, %v1875
  %v1877 = vrot.slane %v1876, 2
  %v1878 = vadd.f32 %v1876, %v1877
  %v1879 = vrot.slane %v1878, 1
  %v1880 = vadd.f32 %v1878, %v1879
  %v1881 = vmul.f32 %v1483, %v1483
  %v1882 = vmul.f32 %v1484, %v1484
  %v1883 = vmul.f32 %v1485, %v1485
  %v1884 = vmul.f32 %v1486, %v1486
  %v1885 = vmul.f32 %v1487, %v1487
  %v1886 = vmul.f32 %v1488, %v1488
  %v1887 = vmul.f32 %v1489, %v1489
  %v1888 = vmul.f32 %v1490, %v1490
  %v1889 = vmul.f32 %v1491, %v1491
  %v1890 = vmul.f32 %v1492, %v1492
  %v1891 = vmul.f32 %v1493, %v1493
  %v1892 = vmul.f32 %v1494, %v1494
  %v1893 = vmul.f32 %v1495, %v1495
  %v1894 = vmul.f32 %v1496, %v1496
  %v1895 = vmul.f32 %v1497, %v1497
  %v1896 = vmul.f32 %v1498, %v1498
  %v1897 = vsel %vm114, %v1881, 0.0
  %v1898 = vrot.slane %v1897, 4
  %v1899 = vadd.f32 %v1897, %v1898
  %v1900 = vrot.slane %v1899, 2
  %v1901 = vadd.f32 %v1899, %v1900
  %v1902 = vrot.slane %v1901, 1
  %v1903 = vadd.f32 %v1901, %v1902
  %v1904 = vsel %vm114, %v1882, 0.0
  %v1905 = vrot.slane %v1904, 4
  %v1906 = vadd.f32 %v1904, %v1905
  %v1907 = vrot.slane %v1906, 2
  %v1908 = vadd.f32 %v1906, %v1907
  %v1909 = vrot.slane %v1908, 1
  %v1910 = vadd.f32 %v1908, %v1909
  %v1911 = vsel %vm114, %v1883, 0.0
  %v1912 = vrot.slane %v1911, 4
  %v1913 = vadd.f32 %v1911, %v1912
  %v1914 = vrot.slane %v1913, 2
  %v1915 = vadd.f32 %v1913, %v1914
  %v1916 = vrot.slane %v1915, 1
  %v1917 = vadd.f32 %v1915, %v1916
  %v1918 = vsel %vm114, %v1884, 0.0
  %v1919 = vrot.slane %v1918, 4
  %v1920 = vadd.f32 %v1918, %v1919
  %v1921 = vrot.slane %v1920, 2
  %v1922 = vadd.f32 %v1920, %v1921
  %v1923 = vrot.slane %v1922, 1
  %v1924 = vadd.f32 %v1922, %v1923
  %v1925 = vsel %vm114, %v1885, 0.0
  %v1926 = vrot.slane %v1925, 4
  %v1927 = vadd.f32 %v1925, %v1926
  %v1928 = vrot.slane %v1927, 2
  %v1929 = vadd.f32 %v1927, %v1928
  %v1930 = vrot.slane %v1929, 1
  %v1931 = vadd.f32 %v1929, %v1930
  %v1932 = vsel %vm114, %v1886, 0.0
  %v1933 = vrot.slane %v1932, 4
  %v1934 = vadd.f32 %v1932, %v1933
  %v1935 = vrot.slane %v1934, 2
  %v1936 = vadd.f32 %v1934, %v1935
  %v1937 = vrot.slane %v1936, 1
  %v1938 = vadd.f32 %v1936, %v1937
  %v1939 = vsel %vm114, %v1887, 0.0
  %v1940 = vrot.slane %v1939, 4
  %v1941 = vadd.f32 %v1939, %v1940
  %v1942 = vrot.slane %v1941, 2
  %v1943 = vadd.f32 %v1941, %v1942
  %v1944 = vrot.slane %v1943, 1
  %v1945 = vadd.f32 %v1943, %v1944
  %v1946 = vsel %vm114, %v1888, 0.0
  %v1947 = vrot.slane %v1946, 4
  %v1948 = vadd.f32 %v1946, %v1947
  %v1949 = vrot.slane %v1948, 2
  %v1950 = vadd.f32 %v1948, %v1949
  %v1951 = vrot.slane %v1950, 1
  %v1952 = vadd.f32 %v1950, %v1951
  %v1953 = vsel %vm114, %v1889, 0.0
  %v1954 = vrot.slane %v1953, 4
  %v1955 = vadd.f32 %v1953, %v1954
  %v1956 = vrot.slane %v1955, 2
  %v1957 = vadd.f32 %v1955, %v1956
  %v1958 = vrot.slane %v1957, 1
  %v1959 = vadd.f32 %v1957, %v1958
  %v1960 = vsel %vm114, %v1890, 0.0
  %v1961 = vrot.slane %v1960, 4
  %v1962 = vadd.f32 %v1960, %v1961
  %v1963 = vrot.slane %v1962, 2
  %v1964 = vadd.f32 %v1962, %v1963
  %v1965 = vrot.slane %v1964, 1
  %v1966 = vadd.f32 %v1964, %v1965
  %v1967 = vsel %vm114, %v1891, 0.0
  %v1968 = vrot.slane %v1967, 4
  %v1969 = vadd.f32 %v1967, %v1968
  %v1970 = vrot.slane %v1969, 2
  %v1971 = vadd.f32 %v1969, %v1970
  %v1972 = vrot.slane %v1971, 1
  %v1973 = vadd.f32 %v1971, %v1972
  %v1974 = vsel %vm114, %v1892, 0.0
  %v1975 = vrot.slane %v1974, 4
  %v1976 = vadd.f32 %v1974, %v1975
  %v1977 = vrot.slane %v1976, 2
  %v1978 = vadd.f32 %v1976, %v1977
  %v1979 = vrot.slane %v1978, 1
  %v1980 = vadd.f32 %v1978, %v1979
  %v1981 = vsel %vm114, %v1893, 0.0
  %v1982 = vrot.slane %v1981, 4
  %v1983 = vadd.f32 %v1981, %v1982
  %v1984 = vrot.slane %v1983, 2
  %v1985 = vadd.f32 %v1983, %v1984
  %v1986 = vrot.slane %v1985, 1
  %v1987 = vadd.f32 %v1985, %v1986
  %v1988 = vsel %vm114, %v1894, 0.0
  %v1989 = vrot.slane %v1988, 4
  %v1990 = vadd.f32 %v1988, %v1989
  %v1991 = vrot.slane %v1990, 2
  %v1992 = vadd.f32 %v1990, %v1991
  %v1993 = vrot.slane %v1992, 1
  %v1994 = vadd.f32 %v1992, %v1993
  %v1995 = vsel %vm114, %v1895, 0.0
  %v1996 = vrot.slane %v1995, 4
  %v1997 = vadd.f32 %v1995, %v1996
  %v1998 = vrot.slane %v1997, 2
  %v1999 = vadd.f32 %v1997, %v1998
  %v2000 = vrot.slane %v1999, 1
  %v2001 = vadd.f32 %v1999, %v2000
  %v2002 = vsel %vm114, %v1896, 0.0
  %v2003 = vrot.slane %v2002, 4
  %v2004 = vadd.f32 %v2002, %v2003
  %v2005 = vrot.slane %v2004, 2
  %v2006 = vadd.f32 %v2004, %v2005
  %v2007 = vrot.slane %v2006, 1
  %v2008 = vadd.f32 %v2006, %v2007
  %v2009 = vmul.f32 %v1604, 2.0
  %v2010 = vmul.f32 %v1611, 2.0
  %v2011 = vmul.f32 %v1618, 2.0
  %v2012 = vmul.f32 %v1625, 2.0
  %v2013 = vmul.f32 %v1632, 2.0
  %v2014 = vmul.f32 %v1639, 2.0
  %v2015 = vmul.f32 %v1646, 2.0
  %v2016 = vmul.f32 %v1653, 2.0
  %v2017 = vmul.f32 %v1660, 2.0
  %v2018 = vmul.f32 %v1667, 2.0
  %v2019 = vmul.f32 %v1674, 2.0
  %v2020 = vmul.f32 %v1681, 2.0
  %v2021 = vmul.f32 %v1688, 2.0
  %v2022 = vmul.f32 %v1695, 2.0
  %v2023 = vmul.f32 %v1702, 2.0
  %v2024 = vmul.f32 %v1709, 2.0
  %v2025 = vadd.f32 %v2009, 1.0
  %v2026 = vadd.f32 %v2010, 1.0
  %v2027 = vadd.f32 %v2011, 1.0
  %v2028 = vadd.f32 %v2012, 1.0
  %v2029 = vadd.f32 %v2013, 1.0
  %v2030 = vadd.f32 %v2014, 1.0
  %v2031 = vadd.f32 %v2015, 1.0
  %v2032 = vadd.f32 %v2016, 1.0
  %v2033 = vadd.f32 %v2017, 1.0
  %v2034 = vadd.f32 %v2018, 1.0
  %v2035 = vadd.f32 %v2019, 1.0
  %v2036 = vadd.f32 %v2020, 1.0
  %v2037 = vadd.f32 %v2021, 1.0
  %v2038 = vadd.f32 %v2022, 1.0
  %v2039 = vadd.f32 %v2023, 1.0
  %v2040 = vadd.f32 %v2024, 1.0
  %v2041 = vadd.f32 %v2025, %v1903
  %v2042 = vadd.f32 %v2026, %v1910
  %v2043 = vadd.f32 %v2027, %v1917
  %v2044 = vadd.f32 %v2028, %v1924
  %v2045 = vadd.f32 %v2029, %v1931
  %v2046 = vadd.f32 %v2030, %v1938
  %v2047 = vadd.f32 %v2031, %v1945
  %v2048 = vadd.f32 %v2032, %v1952
  %v2049 = vadd.f32 %v2033, %v1959
  %v2050 = vadd.f32 %v2034, %v1966
  %v2051 = vadd.f32 %v2035, %v1973
  %v2052 = vadd.f32 %v2036, %v1980
  %v2053 = vadd.f32 %v2037, %v1987
  %v2054 = vadd.f32 %v2038, %v1994
  %v2055 = vadd.f32 %v2039, %v2001
  %v2056 = vadd.f32 %v2040, %v2008
  %2065 = vst [vmem:[#allocation1] ss:$2 sm:$0xff] %v1107
  %s2066 = scalar_lea.vmem [#allocation1], 16
  %2067 = vst [vmem:[%s2066] ss:$2 sm:$0xff] %v1108
  %s2068 = scalar_lea.vmem [#allocation1], 32
  %2069 = vst [vmem:[%s2068] ss:$2 sm:$0xff] %v1109
  %s2070 = scalar_lea.vmem [#allocation1], 48
  %2071 = vst [vmem:[%s2070] ss:$2 sm:$0xff] %v1110
  %v2072 = vld.sshfl [vmem:[#allocation1] sm:$0xff pattern:$0x75316420]
  %v2073 = vld.sshfl [vmem:[#allocation1 + $0x8] sm:$0xff pattern:$0x75316420]
  %v2074 = vld.sshfl [vmem:[#allocation1 + $0x10] sm:$0xff pattern:$0x75316420]
  %v2075 = vld.sshfl [vmem:[#allocation1 + $0x18] sm:$0xff pattern:$0x75316420]
  %v2076 = vld.sshfl [vmem:[#allocation1 + $0x20] sm:$0xff pattern:$0x75316420]
  %v2077 = vld.sshfl [vmem:[#allocation1 + $0x28] sm:$0xff pattern:$0x75316420]
  %v2078 = vld.sshfl [vmem:[#allocation1 + $0x30] sm:$0xff pattern:$0x75316420]
  %v2079 = vld.sshfl [vmem:[#allocation1 + $0x38] sm:$0xff pattern:$0x75316420]
  %2080 = vst [vmem:[#allocation1] ss:$2 sm:$0xff] %v1111
  %2081 = vst [vmem:[%s2066] ss:$2 sm:$0xff] %v1112
  %2082 = vst [vmem:[%s2068] ss:$2 sm:$0xff] %v1113
  %2083 = vst [vmem:[%s2070] ss:$2 sm:$0xff] %v1114
  %v2084 = vld.sshfl [vmem:[#allocation1] sm:$0xff pattern:$0x75316420]
  %v2085 = vld.sshfl [vmem:[#allocation1 + $0x8] sm:$0xff pattern:$0x75316420]
  %v2086 = vld.sshfl [vmem:[#allocation1 + $0x10] sm:$0xff pattern:$0x75316420]
  %v2087 = vld.sshfl [vmem:[#allocation1 + $0x18] sm:$0xff pattern:$0x75316420]
  %v2088 = vld.sshfl [vmem:[#allocation1 + $0x20] sm:$0xff pattern:$0x75316420]
  %v2089 = vld.sshfl [vmem:[#allocation1 + $0x28] sm:$0xff pattern:$0x75316420]
  %v2090 = vld.sshfl [vmem:[#allocation1 + $0x30] sm:$0xff pattern:$0x75316420]
  %v2091 = vld.sshfl [vmem:[#allocation1 + $0x38] sm:$0xff pattern:$0x75316420]
  %v2108 = vmul.f32 %v2041, %v2072
  %v2109 = vmul.f32 %v2042, %v2073
  %v2110 = vmul.f32 %v2043, %v2074
  %v2111 = vmul.f32 %v2044, %v2075
  %v2112 = vmul.f32 %v2045, %v2076
  %v2113 = vmul.f32 %v2046, %v2077
  %v2114 = vmul.f32 %v2047, %v2078
  %v2115 = vmul.f32 %v2048, %v2079
  %v2116 = vmul.f32 %v2049, %v2084
  %v2117 = vmul.f32 %v2050, %v2085
  %v2118 = vmul.f32 %v2051, %v2086
  %v2119 = vmul.f32 %v2052, %v2087
  %v2120 = vmul.f32 %v2053, %v2088
  %v2121 = vmul.f32 %v2054, %v2089
  %v2122 = vmul.f32 %v2055, %v2090
  %v2123 = vmul.f32 %v2056, %v2091
  %v2124 = vsub.f32 1.0, %v1775
  %v2125 = vsub.f32 1.0, %v1782
  %v2126 = vsub.f32 1.0, %v1789
  %v2127 = vsub.f32 1.0, %v1796
  %v2128 = vsub.f32 1.0, %v1803
  %v2129 = vsub.f32 1.0, %v1810
  %v2130 = vsub.f32 1.0, %v1817
  %v2131 = vsub.f32 1.0, %v1824
  %v2132 = vsub.f32 1.0, %v1831
  %v2133 = vsub.f32 1.0, %v1838
  %v2134 = vsub.f32 1.0, %v1845
  %v2135 = vsub.f32 1.0, %v1852
  %v2136 = vsub.f32 1.0, %v1859
  %v2137 = vsub.f32 1.0, %v1866
  %v2138 = vsub.f32 1.0, %v1873
  %v2139 = vsub.f32 1.0, %v1880
  %v2140 = vmul.f32 %v2124, %v1483
  %v2141 = vmul.f32 %v2125, %v1484
  %v2142 = vmul.f32 %v2126, %v1485
  %v2143 = vmul.f32 %v2127, %v1486
  %v2144 = vmul.f32 %v2128, %v1487
  %v2145 = vmul.f32 %v2129, %v1488
  %v2146 = vmul.f32 %v2130, %v1489
  %v2147 = vmul.f32 %v2131, %v1490
  %v2148 = vmul.f32 %v2132, %v1491
  %v2149 = vmul.f32 %v2133, %v1492
  %v2150 = vmul.f32 %v2134, %v1493
  %v2151 = vmul.f32 %v2135, %v1494
  %v2152 = vmul.f32 %v2136, %v1495
  %v2153 = vmul.f32 %v2137, %v1496
  %v2154 = vmul.f32 %v2138, %v1497
  %v2155 = vmul.f32 %v2139, %v1498
  %v2156 = vadd.f32 %v2108, %v2140
  %v2157 = vadd.f32 %v2109, %v2141
  %v2158 = vadd.f32 %v2110, %v2142
  %v2159 = vadd.f32 %v2111, %v2143
  %v2160 = vadd.f32 %v2112, %v2144
  %v2161 = vadd.f32 %v2113, %v2145
  %v2162 = vadd.f32 %v2114, %v2146
  %v2163 = vadd.f32 %v2115, %v2147
  %v2164 = vadd.f32 %v2116, %v2148
  %v2165 = vadd.f32 %v2117, %v2149
  %v2166 = vadd.f32 %v2118, %v2150
  %v2167 = vadd.f32 %v2119, %v2151
  %v2168 = vadd.f32 %v2120, %v2152
  %v2169 = vadd.f32 %v2121, %v2153
  %v2170 = vadd.f32 %v2122, %v2154
  %v2171 = vadd.f32 %v2123, %v2155
  %v2172 = vmul.f32 %v1775, %v1903
  %v2173 = vmul.f32 %v1782, %v1910
  %v2174 = vmul.f32 %v1789, %v1917
  %v2175 = vmul.f32 %v1796, %v1924
  %v2176 = vmul.f32 %v1803, %v1931
  %v2177 = vmul.f32 %v1810, %v1938
  %v2178 = vmul.f32 %v1817, %v1945
  %v2179 = vmul.f32 %v1824, %v1952
  %v2180 = vmul.f32 %v1831, %v1959
  %v2181 = vmul.f32 %v1838, %v1966
  %v2182 = vmul.f32 %v1845, %v1973
  %v2183 = vmul.f32 %v1852, %v1980
  %v2184 = vmul.f32 %v1859, %v1987
  %v2185 = vmul.f32 %v1866, %v1994
  %v2186 = vmul.f32 %v1873, %v2001
  %v2187 = vmul.f32 %v1880, %v2008
  %v2188 = vadd.f32 %v2025, %v2172
  %v2189 = vadd.f32 %v2026, %v2173
  %v2190 = vadd.f32 %v2027, %v2174
  %v2191 = vadd.f32 %v2028, %v2175
  %v2192 = vadd.f32 %v2029, %v2176
  %v2193 = vadd.f32 %v2030, %v2177
  %v2194 = vadd.f32 %v2031, %v2178
  %v2195 = vadd.f32 %v2032, %v2179
  %v2196 = vadd.f32 %v2033, %v2180
  %v2197 = vadd.f32 %v2034, %v2181
  %v2198 = vadd.f32 %v2035, %v2182
  %v2199 = vadd.f32 %v2036, %v2183
  %v2200 = vadd.f32 %v2037, %v2184
  %v2201 = vadd.f32 %v2038, %v2185
  %v2202 = vadd.f32 %v2039, %v2186
  %v2203 = vadd.f32 %v2040, %v2187
  %v2204 = vmax.f32 %v2188, 1e-06
  %v2205 = vmax.f32 %v2189, 1e-06
  %v2206 = vmax.f32 %v2190, 1e-06
  %v2207 = vmax.f32 %v2191, 1e-06
  %v2208 = vmax.f32 %v2192, 1e-06
  %v2209 = vmax.f32 %v2193, 1e-06
  %v2210 = vmax.f32 %v2194, 1e-06
  %v2211 = vmax.f32 %v2195, 1e-06
  %v2212 = vmax.f32 %v2196, 1e-06
  %v2213 = vmax.f32 %v2197, 1e-06
  %v2214 = vmax.f32 %v2198, 1e-06
  %v2215 = vmax.f32 %v2199, 1e-06
  %v2216 = vmax.f32 %v2200, 1e-06
  %v2217 = vmax.f32 %v2201, 1e-06
  %v2218 = vmax.f32 %v2202, 1e-06
  %v2219 = vmax.f32 %v2203, 1e-06
  %v2220 = vrcp.pop %v2204
  %v2221 = vmul.f32 %v2204, %v2220
  %v2222 = vsub.f32 1.0, %v2221
  %v2223 = vmul.f32 %v2220, %v2222
  %v2224 = vadd.f32 %v2220, %v2223
  %vm2225 = vweird.f32 %v2204
  %vm2226 = vweird.f32 %v2220
  %vm2227 = vmor %vm2225, %vm2226
  %v2228 = vsel %vm2227, %v2220, %v2224
  %v2229 = vand.u32 2147483647, %v2204
  %vm2230 = vcmp.eq.f32.partialorder %v2229, 8.507059e+37
  %v2231 = vand.u32 %v2204, 2147483648
  %v2232 = vor.u32 1.1754944e-38, %v2231
  %v2233 = vsel %vm2230, %v2232, %v2228
  %v2234 = vmul.f32 %v2156, %v2233
  %v2235 = vrcp.pop %v2205
  %v2236 = vmul.f32 %v2205, %v2235
  %v2237 = vsub.f32 1.0, %v2236
  %v2238 = vmul.f32 %v2235, %v2237
  %v2239 = vadd.f32 %v2235, %v2238
  %vm2240 = vweird.f32 %v2205
  %vm2241 = vweird.f32 %v2235
  %vm2242 = vmor %vm2240, %vm2241
  %v2243 = vsel %vm2242, %v2235, %v2239
  %v2244 = vand.u32 2147483647, %v2205
  %vm2245 = vcmp.eq.f32.partialorder %v2244, 8.507059e+37
  %v2246 = vand.u32 %v2205, 2147483648
  %v2247 = vor.u32 1.1754944e-38, %v2246
  %v2248 = vsel %vm2245, %v2247, %v2243
  %v2249 = vmul.f32 %v2157, %v2248
  %v2250 = vrcp.pop %v2206
  %v2251 = vmul.f32 %v2206, %v2250
  %v2252 = vsub.f32 1.0, %v2251
  %v2253 = vmul.f32 %v2250, %v2252
  %v2254 = vadd.f32 %v2250, %v2253
  %vm2255 = vweird.f32 %v2206
  %vm2256 = vweird.f32 %v2250
  %vm2257 = vmor %vm2255, %vm2256
  %v2258 = vsel %vm2257, %v2250, %v2254
  %v2259 = vand.u32 2147483647, %v2206
  %vm2260 = vcmp.eq.f32.partialorder %v2259, 8.507059e+37
  %v2261 = vand.u32 %v2206, 2147483648
  %v2262 = vor.u32 1.1754944e-38, %v2261
  %v2263 = vsel %vm2260, %v2262, %v2258
  %v2264 = vmul.f32 %v2158, %v2263
  %v2265 = vrcp.pop %v2207
  %v2266 = vmul.f32 %v2207, %v2265
  %v2267 = vsub.f32 1.0, %v2266
  %v2268 = vmul.f32 %v2265, %v2267
  %v2269 = vadd.f32 %v2265, %v2268
  %vm2270 = vweird.f32 %v2207
  %vm2271 = vweird.f32 %v2265
  %vm2272 = vmor %vm2270, %vm2271
  %v2273 = vsel %vm2272, %v2265, %v2269
  %v2274 = vand.u32 2147483647, %v2207
  %vm2275 = vcmp.eq.f32.partialorder %v2274, 8.507059e+37
  %v2276 = vand.u32 %v2207, 2147483648
  %v2277 = vor.u32 1.1754944e-38, %v2276
  %v2278 = vsel %vm2275, %v2277, %v2273
  %v2279 = vmul.f32 %v2159, %v2278
  %v2280 = vrcp.pop %v2208
  %v2281 = vmul.f32 %v2208, %v2280
  %v2282 = vsub.f32 1.0, %v2281
  %v2283 = vmul.f32 %v2280, %v2282
  %v2284 = vadd.f32 %v2280, %v2283
  %vm2285 = vweird.f32 %v2208
  %vm2286 = vweird.f32 %v2280
  %vm2287 = vmor %vm2285, %vm2286
  %v2288 = vsel %vm2287, %v2280, %v2284
  %v2289 = vand.u32 2147483647, %v2208
  %vm2290 = vcmp.eq.f32.partialorder %v2289, 8.507059e+37
  %v2291 = vand.u32 %v2208, 2147483648
  %v2292 = vor.u32 1.1754944e-38, %v2291
  %v2293 = vsel %vm2290, %v2292, %v2288
  %v2294 = vmul.f32 %v2160, %v2293
  %v2295 = vrcp.pop %v2209
  %v2296 = vmul.f32 %v2209, %v2295
  %v2297 = vsub.f32 1.0, %v2296
  %v2298 = vmul.f32 %v2295, %v2297
  %v2299 = vadd.f32 %v2295, %v2298
  %vm2300 = vweird.f32 %v2209
  %vm2301 = vweird.f32 %v2295
  %vm2302 = vmor %vm2300, %vm2301
  %v2303 = vsel %vm2302, %v2295, %v2299
  %v2304 = vand.u32 2147483647, %v2209
  %vm2305 = vcmp.eq.f32.partialorder %v2304, 8.507059e+37
  %v2306 = vand.u32 %v2209, 2147483648
  %v2307 = vor.u32 1.1754944e-38, %v2306
  %v2308 = vsel %vm2305, %v2307, %v2303
  %v2309 = vmul.f32 %v2161, %v2308
  %v2310 = vrcp.pop %v2210
  %v2311 = vmul.f32 %v2210, %v2310
  %v2312 = vsub.f32 1.0, %v2311
  %v2313 = vmul.f32 %v2310, %v2312
  %v2314 = vadd.f32 %v2310, %v2313
  %vm2315 = vweird.f32 %v2210
  %vm2316 = vweird.f32 %v2310
  %vm2317 = vmor %vm2315, %vm2316
  %v2318 = vsel %vm2317, %v2310, %v2314
  %v2319 = vand.u32 2147483647, %v2210
  %vm2320 = vcmp.eq.f32.partialorder %v2319, 8.507059e+37
  %v2321 = vand.u32 %v2210, 2147483648
  %v2322 = vor.u32 1.1754944e-38, %v2321
  %v2323 = vsel %vm2320, %v2322, %v2318
  %v2324 = vmul.f32 %v2162, %v2323
  %v2325 = vrcp.pop %v2211
  %v2326 = vmul.f32 %v2211, %v2325
  %v2327 = vsub.f32 1.0, %v2326
  %v2328 = vmul.f32 %v2325, %v2327
  %v2329 = vadd.f32 %v2325, %v2328
  %vm2330 = vweird.f32 %v2211
  %vm2331 = vweird.f32 %v2325
  %vm2332 = vmor %vm2330, %vm2331
  %v2333 = vsel %vm2332, %v2325, %v2329
  %v2334 = vand.u32 2147483647, %v2211
  %vm2335 = vcmp.eq.f32.partialorder %v2334, 8.507059e+37
  %v2336 = vand.u32 %v2211, 2147483648
  %v2337 = vor.u32 1.1754944e-38, %v2336
  %v2338 = vsel %vm2335, %v2337, %v2333
  %v2339 = vmul.f32 %v2163, %v2338
  %v2340 = vrcp.pop %v2212
  %v2341 = vmul.f32 %v2212, %v2340
  %v2342 = vsub.f32 1.0, %v2341
  %v2343 = vmul.f32 %v2340, %v2342
  %v2344 = vadd.f32 %v2340, %v2343
  %vm2345 = vweird.f32 %v2212
  %vm2346 = vweird.f32 %v2340
  %vm2347 = vmor %vm2345, %vm2346
  %v2348 = vsel %vm2347, %v2340, %v2344
  %v2349 = vand.u32 2147483647, %v2212
  %vm2350 = vcmp.eq.f32.partialorder %v2349, 8.507059e+37
  %v2351 = vand.u32 %v2212, 2147483648
  %v2352 = vor.u32 1.1754944e-38, %v2351
  %v2353 = vsel %vm2350, %v2352, %v2348
  %v2354 = vmul.f32 %v2164, %v2353
  %v2355 = vrcp.pop %v2213
  %v2356 = vmul.f32 %v2213, %v2355
  %v2357 = vsub.f32 1.0, %v2356
  %v2358 = vmul.f32 %v2355, %v2357
  %v2359 = vadd.f32 %v2355, %v2358
  %vm2360 = vweird.f32 %v2213
  %vm2361 = vweird.f32 %v2355
  %vm2362 = vmor %vm2360, %vm2361
  %v2363 = vsel %vm2362, %v2355, %v2359
  %v2364 = vand.u32 2147483647, %v2213
  %vm2365 = vcmp.eq.f32.partialorder %v2364, 8.507059e+37
  %v2366 = vand.u32 %v2213, 2147483648
  %v2367 = vor.u32 1.1754944e-38, %v2366
  %v2368 = vsel %vm2365, %v2367, %v2363
  %v2369 = vmul.f32 %v2165, %v2368
  %v2370 = vrcp.pop %v2214
  %v2371 = vmul.f32 %v2214, %v2370
  %v2372 = vsub.f32 1.0, %v2371
  %v2373 = vmul.f32 %v2370, %v2372
  %v2374 = vadd.f32 %v2370, %v2373
  %vm2375 = vweird.f32 %v2214
  %vm2376 = vweird.f32 %v2370
  %vm2377 = vmor %vm2375, %vm2376
  %v2378 = vsel %vm2377, %v2370, %v2374
  %v2379 = vand.u32 2147483647, %v2214
  %vm2380 = vcmp.eq.f32.partialorder %v2379, 8.507059e+37
  %v2381 = vand.u32 %v2214, 2147483648
  %v2382 = vor.u32 1.1754944e-38, %v2381
  %v2383 = vsel %vm2380, %v2382, %v2378
  %v2384 = vmul.f32 %v2166, %v2383
  %v2385 = vrcp.pop %v2215
  %v2386 = vmul.f32 %v2215, %v2385
  %v2387 = vsub.f32 1.0, %v2386
  %v2388 = vmul.f32 %v2385, %v2387
  %v2389 = vadd.f32 %v2385, %v2388
  %vm2390 = vweird.f32 %v2215
  %vm2391 = vweird.f32 %v2385
  %vm2392 = vmor %vm2390, %vm2391
  %v2393 = vsel %vm2392, %v2385, %v2389
  %v2394 = vand.u32 2147483647, %v2215
  %vm2395 = vcmp.eq.f32.partialorder %v2394, 8.507059e+37
  %v2396 = vand.u32 %v2215, 2147483648
  %v2397 = vor.u32 1.1754944e-38, %v2396
  %v2398 = vsel %vm2395, %v2397, %v2393
  %v2399 = vmul.f32 %v2167, %v2398
  %v2400 = vrcp.pop %v2216
  %v2401 = vmul.f32 %v2216, %v2400
  %v2402 = vsub.f32 1.0, %v2401
  %v2403 = vmul.f32 %v2400, %v2402
  %v2404 = vadd.f32 %v2400, %v2403
  %vm2405 = vweird.f32 %v2216
  %vm2406 = vweird.f32 %v2400
  %vm2407 = vmor %vm2405, %vm2406
  %v2408 = vsel %vm2407, %v2400, %v2404
  %v2409 = vand.u32 2147483647, %v2216
  %vm2410 = vcmp.eq.f32.partialorder %v2409, 8.507059e+37
  %v2411 = vand.u32 %v2216, 2147483648
  %v2412 = vor.u32 1.1754944e-38, %v2411
  %v2413 = vsel %vm2410, %v2412, %v2408
  %v2414 = vmul.f32 %v2168, %v2413
  %v2415 = vrcp.pop %v2217
  %v2416 = vmul.f32 %v2217, %v2415
  %v2417 = vsub.f32 1.0, %v2416
  %v2418 = vmul.f32 %v2415, %v2417
  %v2419 = vadd.f32 %v2415, %v2418
  %vm2420 = vweird.f32 %v2217
  %vm2421 = vweird.f32 %v2415
  %vm2422 = vmor %vm2420, %vm2421
  %v2423 = vsel %vm2422, %v2415, %v2419
  %v2424 = vand.u32 2147483647, %v2217
  %vm2425 = vcmp.eq.f32.partialorder %v2424, 8.507059e+37
  %v2426 = vand.u32 %v2217, 2147483648
  %v2427 = vor.u32 1.1754944e-38, %v2426
  %v2428 = vsel %vm2425, %v2427, %v2423
  %v2429 = vmul.f32 %v2169, %v2428
  %v2430 = vrcp.pop %v2218
  %v2431 = vmul.f32 %v2218, %v2430
  %v2432 = vsub.f32 1.0, %v2431
  %v2433 = vmul.f32 %v2430, %v2432
  %v2434 = vadd.f32 %v2430, %v2433
  %vm2435 = vweird.f32 %v2218
  %vm2436 = vweird.f32 %v2430
  %vm2437 = vmor %vm2435, %vm2436
  %v2438 = vsel %vm2437, %v2430, %v2434
  %v2439 = vand.u32 2147483647, %v2218
  %vm2440 = vcmp.eq.f32.partialorder %v2439, 8.507059e+37
  %v2441 = vand.u32 %v2218, 2147483648
  %v2442 = vor.u32 1.1754944e-38, %v2441
  %v2443 = vsel %vm2440, %v2442, %v2438
  %v2444 = vmul.f32 %v2170, %v2443
  %v2445 = vrcp.pop %v2219
  %v2446 = vmul.f32 %v2219, %v2445
  %v2447 = vsub.f32 1.0, %v2446
  %v2448 = vmul.f32 %v2445, %v2447
  %v2449 = vadd.f32 %v2445, %v2448
  %vm2450 = vweird.f32 %v2219
  %vm2451 = vweird.f32 %v2445
  %vm2452 = vmor %vm2450, %vm2451
  %v2453 = vsel %vm2452, %v2445, %v2449
  %v2454 = vand.u32 2147483647, %v2219
  %vm2455 = vcmp.eq.f32.partialorder %v2454, 8.507059e+37
  %v2456 = vand.u32 %v2219, 2147483648
  %v2457 = vor.u32 1.1754944e-38, %v2456
  %v2458 = vsel %vm2455, %v2457, %v2453
  %v2459 = vmul.f32 %v2171, %v2458
  %v2460 = vmul.f32 %v2234, %v2234
  %v2461 = vmul.f32 %v2249, %v2249
  %v2462 = vmul.f32 %v2264, %v2264
  %v2463 = vmul.f32 %v2279, %v2279
  %v2464 = vmul.f32 %v2294, %v2294
  %v2465 = vmul.f32 %v2309, %v2309
  %v2466 = vmul.f32 %v2324, %v2324
  %v2467 = vmul.f32 %v2339, %v2339
  %v2468 = vmul.f32 %v2354, %v2354
  %v2469 = vmul.f32 %v2369, %v2369
  %v2470 = vmul.f32 %v2384, %v2384
  %v2471 = vmul.f32 %v2399, %v2399
  %v2472 = vmul.f32 %v2414, %v2414
  %v2473 = vmul.f32 %v2429, %v2429
  %v2474 = vmul.f32 %v2444, %v2444
  %v2475 = vmul.f32 %v2459, %v2459
  %v2476 = vsel %vm114, %v2460, 0.0
  %v2477 = vrot.slane %v2476, 4
  %v2478 = vadd.f32 %v2476, %v2477
  %v2479 = vrot.slane %v2478, 2
  %v2480 = vadd.f32 %v2478, %v2479
  %v2481 = vrot.slane %v2480, 1
  %v2482 = vadd.f32 %v2480, %v2481
  %v2483 = vsel %vm114, %v2461, 0.0
  %v2484 = vrot.slane %v2483, 4
  %v2485 = vadd.f32 %v2483, %v2484
  %v2486 = vrot.slane %v2485, 2
  %v2487 = vadd.f32 %v2485, %v2486
  %v2488 = vrot.slane %v2487, 1
  %v2489 = vadd.f32 %v2487, %v2488
  %v2490 = vsel %vm114, %v2462, 0.0
  %v2491 = vrot.slane %v2490, 4
  %v2492 = vadd.f32 %v2490, %v2491
  %v2493 = vrot.slane %v2492, 2
  %v2494 = vadd.f32 %v2492, %v2493
  %v2495 = vrot.slane %v2494, 1
  %v2496 = vadd.f32 %v2494, %v2495
  %v2497 = vsel %vm114, %v2463, 0.0
  %v2498 = vrot.slane %v2497, 4
  %v2499 = vadd.f32 %v2497, %v2498
  %v2500 = vrot.slane %v2499, 2
  %v2501 = vadd.f32 %v2499, %v2500
  %v2502 = vrot.slane %v2501, 1
  %v2503 = vadd.f32 %v2501, %v2502
  %v2504 = vsel %vm114, %v2464, 0.0
  %v2505 = vrot.slane %v2504, 4
  %v2506 = vadd.f32 %v2504, %v2505
  %v2507 = vrot.slane %v2506, 2
  %v2508 = vadd.f32 %v2506, %v2507
  %v2509 = vrot.slane %v2508, 1
  %v2510 = vadd.f32 %v2508, %v2509
  %v2511 = vsel %vm114, %v2465, 0.0
  %v2512 = vrot.slane %v2511, 4
  %v2513 = vadd.f32 %v2511, %v2512
  %v2514 = vrot.slane %v2513, 2
  %v2515 = vadd.f32 %v2513, %v2514
  %v2516 = vrot.slane %v2515, 1
  %v2517 = vadd.f32 %v2515, %v2516
  %v2518 = vsel %vm114, %v2466, 0.0
  %v2519 = vrot.slane %v2518, 4
  %v2520 = vadd.f32 %v2518, %v2519
  %v2521 = vrot.slane %v2520, 2
  %v2522 = vadd.f32 %v2520, %v2521
  %v2523 = vrot.slane %v2522, 1
  %v2524 = vadd.f32 %v2522, %v2523
  %v2525 = vsel %vm114, %v2467, 0.0
  %v2526 = vrot.slane %v2525, 4
  %v2527 = vadd.f32 %v2525, %v2526
  %v2528 = vrot.slane %v2527, 2
  %v2529 = vadd.f32 %v2527, %v2528
  %v2530 = vrot.slane %v2529, 1
  %v2531 = vadd.f32 %v2529, %v2530
  %v2532 = vsel %vm114, %v2468, 0.0
  %v2533 = vrot.slane %v2532, 4
  %v2534 = vadd.f32 %v2532, %v2533
  %v2535 = vrot.slane %v2534, 2
  %v2536 = vadd.f32 %v2534, %v2535
  %v2537 = vrot.slane %v2536, 1
  %v2538 = vadd.f32 %v2536, %v2537
  %v2539 = vsel %vm114, %v2469, 0.0
  %v2540 = vrot.slane %v2539, 4
  %v2541 = vadd.f32 %v2539, %v2540
  %v2542 = vrot.slane %v2541, 2
  %v2543 = vadd.f32 %v2541, %v2542
  %v2544 = vrot.slane %v2543, 1
  %v2545 = vadd.f32 %v2543, %v2544
  %v2546 = vsel %vm114, %v2470, 0.0
  %v2547 = vrot.slane %v2546, 4
  %v2548 = vadd.f32 %v2546, %v2547
  %v2549 = vrot.slane %v2548, 2
  %v2550 = vadd.f32 %v2548, %v2549
  %v2551 = vrot.slane %v2550, 1
  %v2552 = vadd.f32 %v2550, %v2551
  %v2553 = vsel %vm114, %v2471, 0.0
  %v2554 = vrot.slane %v2553, 4
  %v2555 = vadd.f32 %v2553, %v2554
  %v2556 = vrot.slane %v2555, 2
  %v2557 = vadd.f32 %v2555, %v2556
  %v2558 = vrot.slane %v2557, 1
  %v2559 = vadd.f32 %v2557, %v2558
  %v2560 = vsel %vm114, %v2472, 0.0
  %v2561 = vrot.slane %v2560, 4
  %v2562 = vadd.f32 %v2560, %v2561
  %v2563 = vrot.slane %v2562, 2
  %v2564 = vadd.f32 %v2562, %v2563
  %v2565 = vrot.slane %v2564, 1
  %v2566 = vadd.f32 %v2564, %v2565
  %v2567 = vsel %vm114, %v2473, 0.0
  %v2568 = vrot.slane %v2567, 4
  %v2569 = vadd.f32 %v2567, %v2568
  %v2570 = vrot.slane %v2569, 2
  %v2571 = vadd.f32 %v2569, %v2570
  %v2572 = vrot.slane %v2571, 1
  %v2573 = vadd.f32 %v2571, %v2572
  %v2574 = vsel %vm114, %v2474, 0.0
  %v2575 = vrot.slane %v2574, 4
  %v2576 = vadd.f32 %v2574, %v2575
  %v2577 = vrot.slane %v2576, 2
  %v2578 = vadd.f32 %v2576, %v2577
  %v2579 = vrot.slane %v2578, 1
  %v2580 = vadd.f32 %v2578, %v2579
  %v2581 = vsel %vm114, %v2475, 0.0
  %v2582 = vrot.slane %v2581, 4
  %v2583 = vadd.f32 %v2581, %v2582
  %v2584 = vrot.slane %v2583, 2
  %v2585 = vadd.f32 %v2583, %v2584
  %v2586 = vrot.slane %v2585, 1
  %v2587 = vadd.f32 %v2585, %v2586
  %v2588 = vmax.f32 %v2482, 1e-12
  %v2589 = vmax.f32 %v2489, 1e-12
  %v2590 = vmax.f32 %v2496, 1e-12
  %v2591 = vmax.f32 %v2503, 1e-12
  %v2592 = vmax.f32 %v2510, 1e-12
  %v2593 = vmax.f32 %v2517, 1e-12
  %v2594 = vmax.f32 %v2524, 1e-12
  %v2595 = vmax.f32 %v2531, 1e-12
  %v2596 = vmax.f32 %v2538, 1e-12
  %v2597 = vmax.f32 %v2545, 1e-12
  %v2598 = vmax.f32 %v2552, 1e-12
  %v2599 = vmax.f32 %v2559, 1e-12
  %v2600 = vmax.f32 %v2566, 1e-12
  %v2601 = vmax.f32 %v2573, 1e-12
  %v2602 = vmax.f32 %v2580, 1e-12
  %v2603 = vmax.f32 %v2587, 1e-12
  %v2604 = vrsqrt.pop %v2588
  %v2605 = vmul.f32 %v2604, %v2588
  %v2606 = vmul.f32 %v2605, %v2604
  %v2607 = vmul.f32 0.5, %v2606
  %v2608 = vsub.f32 1.5, %v2607
  %v2609 = vmul.f32 %v2604, %v2608
  %vm2610 = vweird.f32 %v2588
  %vm2611 = vweird.f32 %v2604
  %vm2612 = vmor %vm2610, %vm2611
  %v2613 = vsel %vm2612, %v2604, %v2609
  %v2614 = vrsqrt.pop %v2589
  %v2615 = vmul.f32 %v2614, %v2589
  %v2616 = vmul.f32 %v2615, %v2614
  %v2617 = vmul.f32 0.5, %v2616
  %v2618 = vsub.f32 1.5, %v2617
  %v2619 = vmul.f32 %v2614, %v2618
  %vm2620 = vweird.f32 %v2589
  %vm2621 = vweird.f32 %v2614
  %vm2622 = vmor %vm2620, %vm2621
  %v2623 = vsel %vm2622, %v2614, %v2619
  %v2624 = vrsqrt.pop %v2590
  %v2625 = vmul.f32 %v2624, %v2590
  %v2626 = vmul.f32 %v2625, %v2624
  %v2627 = vmul.f32 0.5, %v2626
  %v2628 = vsub.f32 1.5, %v2627
  %v2629 = vmul.f32 %v2624, %v2628
  %vm2630 = vweird.f32 %v2590
  %vm2631 = vweird.f32 %v2624
  %vm2632 = vmor %vm2630, %vm2631
  %v2633 = vsel %vm2632, %v2624, %v2629
  %v2634 = vrsqrt.pop %v2591
  %v2635 = vmul.f32 %v2634, %v2591
  %v2636 = vmul.f32 %v2635, %v2634
  %v2637 = vmul.f32 0.5, %v2636
  %v2638 = vsub.f32 1.5, %v2637
  %v2639 = vmul.f32 %v2634, %v2638
  %vm2640 = vweird.f32 %v2591
  %vm2641 = vweird.f32 %v2634
  %vm2642 = vmor %vm2640, %vm2641
  %v2643 = vsel %vm2642, %v2634, %v2639
  %v2644 = vrsqrt.pop %v2592
  %v2645 = vmul.f32 %v2644, %v2592
  %v2646 = vmul.f32 %v2645, %v2644
  %v2647 = vmul.f32 0.5, %v2646
  %v2648 = vsub.f32 1.5, %v2647
  %v2649 = vmul.f32 %v2644, %v2648
  %vm2650 = vweird.f32 %v2592
  %vm2651 = vweird.f32 %v2644
  %vm2652 = vmor %vm2650, %vm2651
  %v2653 = vsel %vm2652, %v2644, %v2649
  %v2654 = vrsqrt.pop %v2593
  %v2655 = vmul.f32 %v2654, %v2593
  %v2656 = vmul.f32 %v2655, %v2654
  %v2657 = vmul.f32 0.5, %v2656
  %v2658 = vsub.f32 1.5, %v2657
  %v2659 = vmul.f32 %v2654, %v2658
  %vm2660 = vweird.f32 %v2593
  %vm2661 = vweird.f32 %v2654
  %vm2662 = vmor %vm2660, %vm2661
  %v2663 = vsel %vm2662, %v2654, %v2659
  %v2664 = vrsqrt.pop %v2594
  %v2665 = vmul.f32 %v2664, %v2594
  %v2666 = vmul.f32 %v2665, %v2664
  %v2667 = vmul.f32 0.5, %v2666
  %v2668 = vsub.f32 1.5, %v2667
  %v2669 = vmul.f32 %v2664, %v2668
  %vm2670 = vweird.f32 %v2594
  %vm2671 = vweird.f32 %v2664
  %vm2672 = vmor %vm2670, %vm2671
  %v2673 = vsel %vm2672, %v2664, %v2669
  %v2674 = vrsqrt.pop %v2595
  %v2675 = vmul.f32 %v2674, %v2595
  %v2676 = vmul.f32 %v2675, %v2674
  %v2677 = vmul.f32 0.5, %v2676
  %v2678 = vsub.f32 1.5, %v2677
  %v2679 = vmul.f32 %v2674, %v2678
  %vm2680 = vweird.f32 %v2595
  %vm2681 = vweird.f32 %v2674
  %vm2682 = vmor %vm2680, %vm2681
  %v2683 = vsel %vm2682, %v2674, %v2679
  %v2684 = vrsqrt.pop %v2596
  %v2685 = vmul.f32 %v2684, %v2596
  %v2686 = vmul.f32 %v2685, %v2684
  %v2687 = vmul.f32 0.5, %v2686
  %v2688 = vsub.f32 1.5, %v2687
  %v2689 = vmul.f32 %v2684, %v2688
  %vm2690 = vweird.f32 %v2596
  %vm2691 = vweird.f32 %v2684
  %vm2692 = vmor %vm2690, %vm2691
  %v2693 = vsel %vm2692, %v2684, %v2689
  %v2694 = vrsqrt.pop %v2597
  %v2695 = vmul.f32 %v2694, %v2597
  %v2696 = vmul.f32 %v2695, %v2694
  %v2697 = vmul.f32 0.5, %v2696
  %v2698 = vsub.f32 1.5, %v2697
  %v2699 = vmul.f32 %v2694, %v2698
  %vm2700 = vweird.f32 %v2597
  %vm2701 = vweird.f32 %v2694
  %vm2702 = vmor %vm2700, %vm2701
  %v2703 = vsel %vm2702, %v2694, %v2699
  %v2704 = vrsqrt.pop %v2598
  %v2705 = vmul.f32 %v2704, %v2598
  %v2706 = vmul.f32 %v2705, %v2704
  %v2707 = vmul.f32 0.5, %v2706
  %v2708 = vsub.f32 1.5, %v2707
  %v2709 = vmul.f32 %v2704, %v2708
  %vm2710 = vweird.f32 %v2598
  %vm2711 = vweird.f32 %v2704
  %vm2712 = vmor %vm2710, %vm2711
  %v2713 = vsel %vm2712, %v2704, %v2709
  %v2714 = vrsqrt.pop %v2599
  %v2715 = vmul.f32 %v2714, %v2599
  %v2716 = vmul.f32 %v2715, %v2714
  %v2717 = vmul.f32 0.5, %v2716
  %v2718 = vsub.f32 1.5, %v2717
  %v2719 = vmul.f32 %v2714, %v2718
  %vm2720 = vweird.f32 %v2599
  %vm2721 = vweird.f32 %v2714
  %vm2722 = vmor %vm2720, %vm2721
  %v2723 = vsel %vm2722, %v2714, %v2719
  %v2724 = vrsqrt.pop %v2600
  %v2725 = vmul.f32 %v2724, %v2600
  %v2726 = vmul.f32 %v2725, %v2724
  %v2727 = vmul.f32 0.5, %v2726
  %v2728 = vsub.f32 1.5, %v2727
  %v2729 = vmul.f32 %v2724, %v2728
  %vm2730 = vweird.f32 %v2600
  %vm2731 = vweird.f32 %v2724
  %vm2732 = vmor %vm2730, %vm2731
  %v2733 = vsel %vm2732, %v2724, %v2729
  %v2734 = vrsqrt.pop %v2601
  %v2735 = vmul.f32 %v2734, %v2601
  %v2736 = vmul.f32 %v2735, %v2734
  %v2737 = vmul.f32 0.5, %v2736
  %v2738 = vsub.f32 1.5, %v2737
  %v2739 = vmul.f32 %v2734, %v2738
  %vm2740 = vweird.f32 %v2601
  %vm2741 = vweird.f32 %v2734
  %vm2742 = vmor %vm2740, %vm2741
  %v2743 = vsel %vm2742, %v2734, %v2739
  %v2744 = vrsqrt.pop %v2602
  %v2745 = vmul.f32 %v2744, %v2602
  %v2746 = vmul.f32 %v2745, %v2744
  %v2747 = vmul.f32 0.5, %v2746
  %v2748 = vsub.f32 1.5, %v2747
  %v2749 = vmul.f32 %v2744, %v2748
  %vm2750 = vweird.f32 %v2602
  %vm2751 = vweird.f32 %v2744
  %vm2752 = vmor %vm2750, %vm2751
  %v2753 = vsel %vm2752, %v2744, %v2749
  %v2754 = vrsqrt.pop %v2603
  %v2755 = vmul.f32 %v2754, %v2603
  %v2756 = vmul.f32 %v2755, %v2754
  %v2757 = vmul.f32 0.5, %v2756
  %v2758 = vsub.f32 1.5, %v2757
  %v2759 = vmul.f32 %v2754, %v2758
  %vm2760 = vweird.f32 %v2603
  %vm2761 = vweird.f32 %v2754
  %vm2762 = vmor %vm2760, %vm2761
  %v2763 = vsel %vm2762, %v2754, %v2759
  %vm2764 = vcmp.gt.f32.partialorder %v2482, 0.99998
  %vm2765 = vcmp.gt.f32.partialorder %v2489, 0.99998
  %vm2766 = vcmp.gt.f32.partialorder %v2496, 0.99998
  %vm2767 = vcmp.gt.f32.partialorder %v2503, 0.99998
  %vm2768 = vcmp.gt.f32.partialorder %v2510, 0.99998
  %vm2769 = vcmp.gt.f32.partialorder %v2517, 0.99998
  %vm2770 = vcmp.gt.f32.partialorder %v2524, 0.99998
  %vm2771 = vcmp.gt.f32.partialorder %v2531, 0.99998
  %vm2772 = vcmp.gt.f32.partialorder %v2538, 0.99998
  %vm2773 = vcmp.gt.f32.partialorder %v2545, 0.99998
  %vm2774 = vcmp.gt.f32.partialorder %v2552, 0.99998
  %vm2775 = vcmp.gt.f32.partialorder %v2559, 0.99998
  %vm2776 = vcmp.gt.f32.partialorder %v2566, 0.99998
  %vm2777 = vcmp.gt.f32.partialorder %v2573, 0.99998
  %vm2778 = vcmp.gt.f32.partialorder %v2580, 0.99998
  %vm2779 = vcmp.gt.f32.partialorder %v2587, 0.99998
  %v2780 = vmul.f32 %v2613, 0.99999
  %v2781 = vmul.f32 %v2623, 0.99999
  %v2782 = vmul.f32 %v2633, 0.99999
  %v2783 = vmul.f32 %v2643, 0.99999
  %v2784 = vmul.f32 %v2653, 0.99999
  %v2785 = vmul.f32 %v2663, 0.99999
  %v2786 = vmul.f32 %v2673, 0.99999
  %v2787 = vmul.f32 %v2683, 0.99999
  %v2788 = vmul.f32 %v2693, 0.99999
  %v2789 = vmul.f32 %v2703, 0.99999
  %v2790 = vmul.f32 %v2713, 0.99999
  %v2791 = vmul.f32 %v2723, 0.99999
  %v2792 = vmul.f32 %v2733, 0.99999
  %v2793 = vmul.f32 %v2743, 0.99999
  %v2794 = vmul.f32 %v2753, 0.99999
  %v2795 = vmul.f32 %v2763, 0.99999
  %v2796 = vsel %vm2764, %v2780, 1.0
  %v2797 = vsel %vm2765, %v2781, 1.0
  %v2798 = vsel %vm2766, %v2782, 1.0
  %v2799 = vsel %vm2767, %v2783, 1.0
  %v2800 = vsel %vm2768, %v2784, 1.0
  %v2801 = vsel %vm2769, %v2785, 1.0
  %v2802 = vsel %vm2770, %v2786, 1.0
  %v2803 = vsel %vm2771, %v2787, 1.0
  %v2804 = vsel %vm2772, %v2788, 1.0
  %v2805 = vsel %vm2773, %v2789, 1.0
  %v2806 = vsel %vm2774, %v2790, 1.0
  %v2807 = vsel %vm2775, %v2791, 1.0
  %v2808 = vsel %vm2776, %v2792, 1.0
  %v2809 = vsel %vm2777, %v2793, 1.0
  %v2810 = vsel %vm2778, %v2794, 1.0
  %v2811 = vsel %vm2779, %v2795, 1.0
  %v2812 = vmul.f32 %v2234, %v2796
  %v2813 = vmul.f32 %v2249, %v2797
  %v2814 = vmul.f32 %v2264, %v2798
  %v2815 = vmul.f32 %v2279, %v2799
  %v2816 = vmul.f32 %v2294, %v2800
  %v2817 = vmul.f32 %v2309, %v2801
  %v2818 = vmul.f32 %v2324, %v2802
  %v2819 = vmul.f32 %v2339, %v2803
  %v2820 = vmul.f32 %v2354, %v2804
  %v2821 = vmul.f32 %v2369, %v2805
  %v2822 = vmul.f32 %v2384, %v2806
  %v2823 = vmul.f32 %v2399, %v2807
  %v2824 = vmul.f32 %v2414, %v2808
  %v2825 = vmul.f32 %v2429, %v2809
  %v2826 = vmul.f32 %v2444, %v2810
  %v2827 = vmul.f32 %v2459, %v2811
  %v2828 = vmul.f32 %v2812, %v2812
  %v2829 = vmul.f32 %v2813, %v2813
  %v2830 = vmul.f32 %v2814, %v2814
  %v2831 = vmul.f32 %v2815, %v2815
  %v2832 = vmul.f32 %v2816, %v2816
  %v2833 = vmul.f32 %v2817, %v2817
  %v2834 = vmul.f32 %v2818, %v2818
  %v2835 = vmul.f32 %v2819, %v2819
  %v2836 = vmul.f32 %v2820, %v2820
  %v2837 = vmul.f32 %v2821, %v2821
  %v2838 = vmul.f32 %v2822, %v2822
  %v2839 = vmul.f32 %v2823, %v2823
  %v2840 = vmul.f32 %v2824, %v2824
  %v2841 = vmul.f32 %v2825, %v2825
  %v2842 = vmul.f32 %v2826, %v2826
  %v2843 = vmul.f32 %v2827, %v2827
  %v2844 = vsel %vm114, %v2828, 0.0
  %v2845 = vrot.slane %v2844, 4
  %v2846 = vadd.f32 %v2844, %v2845
  %v2847 = vrot.slane %v2846, 2
  %v2848 = vadd.f32 %v2846, %v2847
  %v2849 = vrot.slane %v2848, 1
  %v2850 = vadd.f32 %v2848, %v2849
  %v2851 = vsel %vm114, %v2829, 0.0
  %v2852 = vrot.slane %v2851, 4
  %v2853 = vadd.f32 %v2851, %v2852
  %v2854 = vrot.slane %v2853, 2
  %v2855 = vadd.f32 %v2853, %v2854
  %v2856 = vrot.slane %v2855, 1
  %v2857 = vadd.f32 %v2855, %v2856
  %v2858 = vsel %vm114, %v2830, 0.0
  %v2859 = vrot.slane %v2858, 4
  %v2860 = vadd.f32 %v2858, %v2859
  %v2861 = vrot.slane %v2860, 2
  %v2862 = vadd.f32 %v2860, %v2861
  %v2863 = vrot.slane %v2862, 1
  %v2864 = vadd.f32 %v2862, %v2863
  %v2865 = vsel %vm114, %v2831, 0.0
  %v2866 = vrot.slane %v2865, 4
  %v2867 = vadd.f32 %v2865, %v2866
  %v2868 = vrot.slane %v2867, 2
  %v2869 = vadd.f32 %v2867, %v2868
  %v2870 = vrot.slane %v2869, 1
  %v2871 = vadd.f32 %v2869, %v2870
  %v2872 = vsel %vm114, %v2832, 0.0
  %v2873 = vrot.slane %v2872, 4
  %v2874 = vadd.f32 %v2872, %v2873
  %v2875 = vrot.slane %v2874, 2
  %v2876 = vadd.f32 %v2874, %v2875
  %v2877 = vrot.slane %v2876, 1
  %v2878 = vadd.f32 %v2876, %v2877
  %v2879 = vsel %vm114, %v2833, 0.0
  %v2880 = vrot.slane %v2879, 4
  %v2881 = vadd.f32 %v2879, %v2880
  %v2882 = vrot.slane %v2881, 2
  %v2883 = vadd.f32 %v2881, %v2882
  %v2884 = vrot.slane %v2883, 1
  %v2885 = vadd.f32 %v2883, %v2884
  %v2886 = vsel %vm114, %v2834, 0.0
  %v2887 = vrot.slane %v2886, 4
  %v2888 = vadd.f32 %v2886, %v2887
  %v2889 = vrot.slane %v2888, 2
  %v2890 = vadd.f32 %v2888, %v2889
  %v2891 = vrot.slane %v2890, 1
  %v2892 = vadd.f32 %v2890, %v2891
  %v2893 = vsel %vm114, %v2835, 0.0
  %v2894 = vrot.slane %v2893, 4
  %v2895 = vadd.f32 %v2893, %v2894
  %v2896 = vrot.slane %v2895, 2
  %v2897 = vadd.f32 %v2895, %v2896
  %v2898 = vrot.slane %v2897, 1
  %v2899 = vadd.f32 %v2897, %v2898
  %v2900 = vsel %vm114, %v2836, 0.0
  %v2901 = vrot.slane %v2900, 4
  %v2902 = vadd.f32 %v2900, %v2901
  %v2903 = vrot.slane %v2902, 2
  %v2904 = vadd.f32 %v2902, %v2903
  %v2905 = vrot.slane %v2904, 1
  %v2906 = vadd.f32 %v2904, %v2905
  %v2907 = vsel %vm114, %v2837, 0.0
  %v2908 = vrot.slane %v2907, 4
  %v2909 = vadd.f32 %v2907, %v2908
  %v2910 = vrot.slane %v2909, 2
  %v2911 = vadd.f32 %v2909, %v2910
  %v2912 = vrot.slane %v2911, 1
  %v2913 = vadd.f32 %v2911, %v2912
  %v2914 = vsel %vm114, %v2838, 0.0
  %v2915 = vrot.slane %v2914, 4
  %v2916 = vadd.f32 %v2914, %v2915
  %v2917 = vrot.slane %v2916, 2
  %v2918 = vadd.f32 %v2916, %v2917
  %v2919 = vrot.slane %v2918, 1
  %v2920 = vadd.f32 %v2918, %v2919
  %v2921 = vsel %vm114, %v2839, 0.0
  %v2922 = vrot.slane %v2921, 4
  %v2923 = vadd.f32 %v2921, %v2922
  %v2924 = vrot.slane %v2923, 2
  %v2925 = vadd.f32 %v2923, %v2924
  %v2926 = vrot.slane %v2925, 1
  %v2927 = vadd.f32 %v2925, %v2926
  %v2928 = vsel %vm114, %v2840, 0.0
  %v2929 = vrot.slane %v2928, 4
  %v2930 = vadd.f32 %v2928, %v2929
  %v2931 = vrot.slane %v2930, 2
  %v2932 = vadd.f32 %v2930, %v2931
  %v2933 = vrot.slane %v2932, 1
  %v2934 = vadd.f32 %v2932, %v2933
  %v2935 = vsel %vm114, %v2841, 0.0
  %v2936 = vrot.slane %v2935, 4
  %v2937 = vadd.f32 %v2935, %v2936
  %v2938 = vrot.slane %v2937, 2
  %v2939 = vadd.f32 %v2937, %v2938
  %v2940 = vrot.slane %v2939, 1
  %v2941 = vadd.f32 %v2939, %v2940
  %v2942 = vsel %vm114, %v2842, 0.0
  %v2943 = vrot.slane %v2942, 4
  %v2944 = vadd.f32 %v2942, %v2943
  %v2945 = vrot.slane %v2944, 2
  %v2946 = vadd.f32 %v2944, %v2945
  %v2947 = vrot.slane %v2946, 1
  %v2948 = vadd.f32 %v2946, %v2947
  %v2949 = vsel %vm114, %v2843, 0.0
  %v2950 = vrot.slane %v2949, 4
  %v2951 = vadd.f32 %v2949, %v2950
  %v2952 = vrot.slane %v2951, 2
  %v2953 = vadd.f32 %v2951, %v2952
  %v2954 = vrot.slane %v2953, 1
  %v2955 = vadd.f32 %v2953, %v2954
  %v2956 = vmax.f32 %v2850, 1e-12
  %v2957 = vmax.f32 %v2857, 1e-12
  %v2958 = vmax.f32 %v2864, 1e-12
  %v2959 = vmax.f32 %v2871, 1e-12
  %v2960 = vmax.f32 %v2878, 1e-12
  %v2961 = vmax.f32 %v2885, 1e-12
  %v2962 = vmax.f32 %v2892, 1e-12
  %v2963 = vmax.f32 %v2899, 1e-12
  %v2964 = vmax.f32 %v2906, 1e-12
  %v2965 = vmax.f32 %v2913, 1e-12
  %v2966 = vmax.f32 %v2920, 1e-12
  %v2967 = vmax.f32 %v2927, 1e-12
  %v2968 = vmax.f32 %v2934, 1e-12
  %v2969 = vmax.f32 %v2941, 1e-12
  %v2970 = vmax.f32 %v2948, 1e-12
  %v2971 = vmax.f32 %v2955, 1e-12
  %v2972 = vrsqrt.pop %v2956
  %v2973 = vmul.f32 %v2972, %v2956
  %v2974 = vmul.f32 %v2973, %v2972
  %v2975 = vmul.f32 0.5, %v2974
  %v2976 = vsub.f32 1.5, %v2975
  %v2977 = vmul.f32 %v2972, %v2976
  %vm2978 = vweird.f32 %v2956
  %vm2979 = vweird.f32 %v2972
  %vm2980 = vmor %vm2978, %vm2979
  %v2981 = vsel %vm2980, %v2972, %v2977
  %v2982 = vrsqrt.pop %v2957
  %v2983 = vmul.f32 %v2982, %v2957
  %v2984 = vmul.f32 %v2983, %v2982
  %v2985 = vmul.f32 0.5, %v2984
  %v2986 = vsub.f32 1.5, %v2985
  %v2987 = vmul.f32 %v2982, %v2986
  %vm2988 = vweird.f32 %v2957
  %vm2989 = vweird.f32 %v2982
  %vm2990 = vmor %vm2988, %vm2989
  %v2991 = vsel %vm2990, %v2982, %v2987
  %v2992 = vrsqrt.pop %v2958
  %v2993 = vmul.f32 %v2992, %v2958
  %v2994 = vmul.f32 %v2993, %v2992
  %v2995 = vmul.f32 0.5, %v2994
  %v2996 = vsub.f32 1.5, %v2995
  %v2997 = vmul.f32 %v2992, %v2996
  %vm2998 = vweird.f32 %v2958
  %vm2999 = vweird.f32 %v2992
  %vm3000 = vmor %vm2998, %vm2999
  %v3001 = vsel %vm3000, %v2992, %v2997
  %v3002 = vrsqrt.pop %v2959
  %v3003 = vmul.f32 %v3002, %v2959
  %v3004 = vmul.f32 %v3003, %v3002
  %v3005 = vmul.f32 0.5, %v3004
  %v3006 = vsub.f32 1.5, %v3005
  %v3007 = vmul.f32 %v3002, %v3006
  %vm3008 = vweird.f32 %v2959
  %vm3009 = vweird.f32 %v3002
  %vm3010 = vmor %vm3008, %vm3009
  %v3011 = vsel %vm3010, %v3002, %v3007
  %v3012 = vrsqrt.pop %v2960
  %v3013 = vmul.f32 %v3012, %v2960
  %v3014 = vmul.f32 %v3013, %v3012
  %v3015 = vmul.f32 0.5, %v3014
  %v3016 = vsub.f32 1.5, %v3015
  %v3017 = vmul.f32 %v3012, %v3016
  %vm3018 = vweird.f32 %v2960
  %vm3019 = vweird.f32 %v3012
  %vm3020 = vmor %vm3018, %vm3019
  %v3021 = vsel %vm3020, %v3012, %v3017
  %v3022 = vrsqrt.pop %v2961
  %v3023 = vmul.f32 %v3022, %v2961
  %v3024 = vmul.f32 %v3023, %v3022
  %v3025 = vmul.f32 0.5, %v3024
  %v3026 = vsub.f32 1.5, %v3025
  %v3027 = vmul.f32 %v3022, %v3026
  %vm3028 = vweird.f32 %v2961
  %vm3029 = vweird.f32 %v3022
  %vm3030 = vmor %vm3028, %vm3029
  %v3031 = vsel %vm3030, %v3022, %v3027
  %v3032 = vrsqrt.pop %v2962
  %v3033 = vmul.f32 %v3032, %v2962
  %v3034 = vmul.f32 %v3033, %v3032
  %v3035 = vmul.f32 0.5, %v3034
  %v3036 = vsub.f32 1.5, %v3035
  %v3037 = vmul.f32 %v3032, %v3036
  %vm3038 = vweird.f32 %v2962
  %vm3039 = vweird.f32 %v3032
  %vm3040 = vmor %vm3038, %vm3039
  %v3041 = vsel %vm3040, %v3032, %v3037
  %v3042 = vrsqrt.pop %v2963
  %v3043 = vmul.f32 %v3042, %v2963
  %v3044 = vmul.f32 %v3043, %v3042
  %v3045 = vmul.f32 0.5, %v3044
  %v3046 = vsub.f32 1.5, %v3045
  %v3047 = vmul.f32 %v3042, %v3046
  %vm3048 = vweird.f32 %v2963
  %vm3049 = vweird.f32 %v3042
  %vm3050 = vmor %vm3048, %vm3049
  %v3051 = vsel %vm3050, %v3042, %v3047
  %v3052 = vrsqrt.pop %v2964
  %v3053 = vmul.f32 %v3052, %v2964
  %v3054 = vmul.f32 %v3053, %v3052
  %v3055 = vmul.f32 0.5, %v3054
  %v3056 = vsub.f32 1.5, %v3055
  %v3057 = vmul.f32 %v3052, %v3056
  %vm3058 = vweird.f32 %v2964
  %vm3059 = vweird.f32 %v3052
  %vm3060 = vmor %vm3058, %vm3059
  %v3061 = vsel %vm3060, %v3052, %v3057
  %v3062 = vrsqrt.pop %v2965
  %v3063 = vmul.f32 %v3062, %v2965
  %v3064 = vmul.f32 %v3063, %v3062
  %v3065 = vmul.f32 0.5, %v3064
  %v3066 = vsub.f32 1.5, %v3065
  %v3067 = vmul.f32 %v3062, %v3066
  %vm3068 = vweird.f32 %v2965
  %vm3069 = vweird.f32 %v3062
  %vm3070 = vmor %vm3068, %vm3069
  %v3071 = vsel %vm3070, %v3062, %v3067
  %v3072 = vrsqrt.pop %v2966
  %v3073 = vmul.f32 %v3072, %v2966
  %v3074 = vmul.f32 %v3073, %v3072
  %v3075 = vmul.f32 0.5, %v3074
  %v3076 = vsub.f32 1.5, %v3075
  %v3077 = vmul.f32 %v3072, %v3076
  %vm3078 = vweird.f32 %v2966
  %vm3079 = vweird.f32 %v3072
  %vm3080 = vmor %vm3078, %vm3079
  %v3081 = vsel %vm3080, %v3072, %v3077
  %v3082 = vrsqrt.pop %v2967
  %v3083 = vmul.f32 %v3082, %v2967
  %v3084 = vmul.f32 %v3083, %v3082
  %v3085 = vmul.f32 0.5, %v3084
  %v3086 = vsub.f32 1.5, %v3085
  %v3087 = vmul.f32 %v3082, %v3086
  %vm3088 = vweird.f32 %v2967
  %vm3089 = vweird.f32 %v3082
  %vm3090 = vmor %vm3088, %vm3089
  %v3091 = vsel %vm3090, %v3082, %v3087
  %v3092 = vrsqrt.pop %v2968
  %v3093 = vmul.f32 %v3092, %v2968
  %v3094 = vmul.f32 %v3093, %v3092
  %v3095 = vmul.f32 0.5, %v3094
  %v3096 = vsub.f32 1.5, %v3095
  %v3097 = vmul.f32 %v3092, %v3096
  %vm3098 = vweird.f32 %v2968
  %vm3099 = vweird.f32 %v3092
  %vm3100 = vmor %vm3098, %vm3099
  %v3101 = vsel %vm3100, %v3092, %v3097
  %v3102 = vrsqrt.pop %v2969
  %v3103 = vmul.f32 %v3102, %v2969
  %v3104 = vmul.f32 %v3103, %v3102
  %v3105 = vmul.f32 0.5, %v3104
  %v3106 = vsub.f32 1.5, %v3105
  %v3107 = vmul.f32 %v3102, %v3106
  %vm3108 = vweird.f32 %v2969
  %vm3109 = vweird.f32 %v3102
  %vm3110 = vmor %vm3108, %vm3109
  %v3111 = vsel %vm3110, %v3102, %v3107
  %v3112 = vrsqrt.pop %v2970
  %v3113 = vmul.f32 %v3112, %v2970
  %v3114 = vmul.f32 %v3113, %v3112
  %v3115 = vmul.f32 0.5, %v3114
  %v3116 = vsub.f32 1.5, %v3115
  %v3117 = vmul.f32 %v3112, %v3116
  %vm3118 = vweird.f32 %v2970
  %vm3119 = vweird.f32 %v3112
  %vm3120 = vmor %vm3118, %vm3119
  %v3121 = vsel %vm3120, %v3112, %v3117
  %v3122 = vrsqrt.pop %v2971
  %v3123 = vmul.f32 %v3122, %v2971
  %v3124 = vmul.f32 %v3123, %v3122
  %v3125 = vmul.f32 0.5, %v3124
  %v3126 = vsub.f32 1.5, %v3125
  %v3127 = vmul.f32 %v3122, %v3126
  %vm3128 = vweird.f32 %v2971
  %vm3129 = vweird.f32 %v3122
  %vm3130 = vmor %vm3128, %vm3129
  %v3131 = vsel %vm3130, %v3122, %v3127
  %v3132 = vmul.f32 %v2850, %v2981
  %v3133 = vmul.f32 %v2857, %v2991
  %v3134 = vmul.f32 %v2864, %v3001
  %v3135 = vmul.f32 %v2871, %v3011
  %v3136 = vmul.f32 %v2878, %v3021
  %v3137 = vmul.f32 %v2885, %v3031
  %v3138 = vmul.f32 %v2892, %v3041
  %v3139 = vmul.f32 %v2899, %v3051
  %v3140 = vmul.f32 %v2906, %v3061
  %v3141 = vmul.f32 %v2913, %v3071
  %v3142 = vmul.f32 %v2920, %v3081
  %v3143 = vmul.f32 %v2927, %v3091
  %v3144 = vmul.f32 %v2934, %v3101
  %v3145 = vmul.f32 %v2941, %v3111
  %v3146 = vmul.f32 %v2948, %v3121
  %v3147 = vmul.f32 %v2955, %v3131
  %v3148 = vmax.f32 %v3132, 1e-06
  %v3149 = vmax.f32 %v3133, 1e-06
  %v3150 = vmax.f32 %v3134, 1e-06
  %v3151 = vmax.f32 %v3135, 1e-06
  %v3152 = vmax.f32 %v3136, 1e-06
  %v3153 = vmax.f32 %v3137, 1e-06
  %v3154 = vmax.f32 %v3138, 1e-06
  %v3155 = vmax.f32 %v3139, 1e-06
  %v3156 = vmax.f32 %v3140, 1e-06
  %v3157 = vmax.f32 %v3141, 1e-06
  %v3158 = vmax.f32 %v3142, 1e-06
  %v3159 = vmax.f32 %v3143, 1e-06
  %v3160 = vmax.f32 %v3144, 1e-06
  %v3161 = vmax.f32 %v3145, 1e-06
  %v3162 = vmax.f32 %v3146, 1e-06
  %v3163 = vmax.f32 %v3147, 1e-06
  %v3164 = vmin.f32 %v3148, 0.99999
  %v3165 = vmin.f32 %v3149, 0.99999
  %v3166 = vmin.f32 %v3150, 0.99999
  %v3167 = vmin.f32 %v3151, 0.99999
  %v3168 = vmin.f32 %v3152, 0.99999
  %v3169 = vmin.f32 %v3153, 0.99999
  %v3170 = vmin.f32 %v3154, 0.99999
  %v3171 = vmin.f32 %v3155, 0.99999
  %v3172 = vmin.f32 %v3156, 0.99999
  %v3173 = vmin.f32 %v3157, 0.99999
  %v3174 = vmin.f32 %v3158, 0.99999
  %v3175 = vmin.f32 %v3159, 0.99999
  %v3176 = vmin.f32 %v3160, 0.99999
  %v3177 = vmin.f32 %v3161, 0.99999
  %v3178 = vmin.f32 %v3162, 0.99999
  %v3179 = vmin.f32 %v3163, 0.99999
  %v3180 = vmax.f32 %v3164, -0.99999
  %v3181 = vmax.f32 %v3165, -0.99999
  %v3182 = vmax.f32 %v3166, -0.99999
  %v3183 = vmax.f32 %v3167, -0.99999
  %v3184 = vmax.f32 %v3168, -0.99999
  %v3185 = vmax.f32 %v3169, -0.99999
  %v3186 = vmax.f32 %v3170, -0.99999
  %v3187 = vmax.f32 %v3171, -0.99999
  %v3188 = vmax.f32 %v3172, -0.99999
  %v3189 = vmax.f32 %v3173, -0.99999
  %v3190 = vmax.f32 %v3174, -0.99999
  %v3191 = vmax.f32 %v3175, -0.99999
  %v3192 = vmax.f32 %v3176, -0.99999
  %v3193 = vmax.f32 %v3177, -0.99999
  %v3194 = vmax.f32 %v3178, -0.99999
  %v3195 = vmax.f32 %v3179, -0.99999
  %v3196 = vmin.f32 %v3180, 0.99999
  %v3197 = vmin.f32 %v3181, 0.99999
  %v3198 = vmin.f32 %v3182, 0.99999
  %v3199 = vmin.f32 %v3183, 0.99999
  %v3200 = vmin.f32 %v3184, 0.99999
  %v3201 = vmin.f32 %v3185, 0.99999
  %v3202 = vmin.f32 %v3186, 0.99999
  %v3203 = vmin.f32 %v3187, 0.99999
  %v3204 = vmin.f32 %v3188, 0.99999
  %v3205 = vmin.f32 %v3189, 0.99999
  %v3206 = vmin.f32 %v3190, 0.99999
  %v3207 = vmin.f32 %v3191, 0.99999
  %v3208 = vmin.f32 %v3192, 0.99999
  %v3209 = vmin.f32 %v3193, 0.99999
  %v3210 = vmin.f32 %v3194, 0.99999
  %v3211 = vmin.f32 %v3195, 0.99999
  %v3212 = vadd.f32 %v3196, 1.0
  %v3213 = vadd.f32 %v3197, 1.0
  %v3214 = vadd.f32 %v3198, 1.0
  %v3215 = vadd.f32 %v3199, 1.0
  %v3216 = vadd.f32 %v3200, 1.0
  %v3217 = vadd.f32 %v3201, 1.0
  %v3218 = vadd.f32 %v3202, 1.0
  %v3219 = vadd.f32 %v3203, 1.0
  %v3220 = vadd.f32 %v3204, 1.0
  %v3221 = vadd.f32 %v3205, 1.0
  %v3222 = vadd.f32 %v3206, 1.0
  %v3223 = vadd.f32 %v3207, 1.0
  %v3224 = vadd.f32 %v3208, 1.0
  %v3225 = vadd.f32 %v3209, 1.0
  %v3226 = vadd.f32 %v3210, 1.0
  %v3227 = vadd.f32 %v3211, 1.0
  %v3228 = vsub.f32 1.0, %v3196
  %v3229 = vsub.f32 1.0, %v3197
  %v3230 = vsub.f32 1.0, %v3198
  %v3231 = vsub.f32 1.0, %v3199
  %v3232 = vsub.f32 1.0, %v3200
  %v3233 = vsub.f32 1.0, %v3201
  %v3234 = vsub.f32 1.0, %v3202
  %v3235 = vsub.f32 1.0, %v3203
  %v3236 = vsub.f32 1.0, %v3204
  %v3237 = vsub.f32 1.0, %v3205
  %v3238 = vsub.f32 1.0, %v3206
  %v3239 = vsub.f32 1.0, %v3207
  %v3240 = vsub.f32 1.0, %v3208
  %v3241 = vsub.f32 1.0, %v3209
  %v3242 = vsub.f32 1.0, %v3210
  %v3243 = vsub.f32 1.0, %v3211
  %v3244 = vrcp.pop %v3228
  %v3245 = vmul.f32 %v3228, %v3244
  %v3246 = vsub.f32 1.0, %v3245
  %v3247 = vmul.f32 %v3244, %v3246
  %v3248 = vadd.f32 %v3244, %v3247
  %vm3249 = vweird.f32 %v3228
  %vm3250 = vweird.f32 %v3244
  %vm3251 = vmor %vm3249, %vm3250
  %v3252 = vsel %vm3251, %v3244, %v3248
  %v3253 = vand.u32 2147483647, %v3228
  %vm3254 = vcmp.eq.f32.partialorder %v3253, 8.507059e+37
  %v3255 = vand.u32 %v3228, 2147483648
  %v3256 = vor.u32 1.1754944e-38, %v3255
  %v3257 = vsel %vm3254, %v3256, %v3252
  %v3258 = vmul.f32 %v3212, %v3257
  %v3259 = vrcp.pop %v3229
  %v3260 = vmul.f32 %v3229, %v3259
  %v3261 = vsub.f32 1.0, %v3260
  %v3262 = vmul.f32 %v3259, %v3261
  %v3263 = vadd.f32 %v3259, %v3262
  %vm3264 = vweird.f32 %v3229
  %vm3265 = vweird.f32 %v3259
  %vm3266 = vmor %vm3264, %vm3265
  %v3267 = vsel %vm3266, %v3259, %v3263
  %v3268 = vand.u32 2147483647, %v3229
  %vm3269 = vcmp.eq.f32.partialorder %v3268, 8.507059e+37
  %v3270 = vand.u32 %v3229, 2147483648
  %v3271 = vor.u32 1.1754944e-38, %v3270
  %v3272 = vsel %vm3269, %v3271, %v3267
  %v3273 = vmul.f32 %v3213, %v3272
  %v3274 = vrcp.pop %v3230
  %v3275 = vmul.f32 %v3230, %v3274
  %v3276 = vsub.f32 1.0, %v3275
  %v3277 = vmul.f32 %v3274, %v3276
  %v3278 = vadd.f32 %v3274, %v3277
  %vm3279 = vweird.f32 %v3230
  %vm3280 = vweird.f32 %v3274
  %vm3281 = vmor %vm3279, %vm3280
  %v3282 = vsel %vm3281, %v3274, %v3278
  %v3283 = vand.u32 2147483647, %v3230
  %vm3284 = vcmp.eq.f32.partialorder %v3283, 8.507059e+37
  %v3285 = vand.u32 %v3230, 2147483648
  %v3286 = vor.u32 1.1754944e-38, %v3285
  %v3287 = vsel %vm3284, %v3286, %v3282
  %v3288 = vmul.f32 %v3214, %v3287
  %v3289 = vrcp.pop %v3231
  %v3290 = vmul.f32 %v3231, %v3289
  %v3291 = vsub.f32 1.0, %v3290
  %v3292 = vmul.f32 %v3289, %v3291
  %v3293 = vadd.f32 %v3289, %v3292
  %vm3294 = vweird.f32 %v3231
  %vm3295 = vweird.f32 %v3289
  %vm3296 = vmor %vm3294, %vm3295
  %v3297 = vsel %vm3296, %v3289, %v3293
  %v3298 = vand.u32 2147483647, %v3231
  %vm3299 = vcmp.eq.f32.partialorder %v3298, 8.507059e+37
  %v3300 = vand.u32 %v3231, 2147483648
  %v3301 = vor.u32 1.1754944e-38, %v3300
  %v3302 = vsel %vm3299, %v3301, %v3297
  %v3303 = vmul.f32 %v3215, %v3302
  %v3304 = vrcp.pop %v3232
  %v3305 = vmul.f32 %v3232, %v3304
  %v3306 = vsub.f32 1.0, %v3305
  %v3307 = vmul.f32 %v3304, %v3306
  %v3308 = vadd.f32 %v3304, %v3307
  %vm3309 = vweird.f32 %v3232
  %vm3310 = vweird.f32 %v3304
  %vm3311 = vmor %vm3309, %vm3310
  %v3312 = vsel %vm3311, %v3304, %v3308
  %v3313 = vand.u32 2147483647, %v3232
  %vm3314 = vcmp.eq.f32.partialorder %v3313, 8.507059e+37
  %v3315 = vand.u32 %v3232, 2147483648
  %v3316 = vor.u32 1.1754944e-38, %v3315
  %v3317 = vsel %vm3314, %v3316, %v3312
  %v3318 = vmul.f32 %v3216, %v3317
  %v3319 = vrcp.pop %v3233
  %v3320 = vmul.f32 %v3233, %v3319
  %v3321 = vsub.f32 1.0, %v3320
  %v3322 = vmul.f32 %v3319, %v3321
  %v3323 = vadd.f32 %v3319, %v3322
  %vm3324 = vweird.f32 %v3233
  %vm3325 = vweird.f32 %v3319
  %vm3326 = vmor %vm3324, %vm3325
  %v3327 = vsel %vm3326, %v3319, %v3323
  %v3328 = vand.u32 2147483647, %v3233
  %vm3329 = vcmp.eq.f32.partialorder %v3328, 8.507059e+37
  %v3330 = vand.u32 %v3233, 2147483648
  %v3331 = vor.u32 1.1754944e-38, %v3330
  %v3332 = vsel %vm3329, %v3331, %v3327
  %v3333 = vmul.f32 %v3217, %v3332
  %v3334 = vrcp.pop %v3234
  %v3335 = vmul.f32 %v3234, %v3334
  %v3336 = vsub.f32 1.0, %v3335
  %v3337 = vmul.f32 %v3334, %v3336
  %v3338 = vadd.f32 %v3334, %v3337
  %vm3339 = vweird.f32 %v3234
  %vm3340 = vweird.f32 %v3334
  %vm3341 = vmor %vm3339, %vm3340
  %v3342 = vsel %vm3341, %v3334, %v3338
  %v3343 = vand.u32 2147483647, %v3234
  %vm3344 = vcmp.eq.f32.partialorder %v3343, 8.507059e+37
  %v3345 = vand.u32 %v3234, 2147483648
  %v3346 = vor.u32 1.1754944e-38, %v3345
  %v3347 = vsel %vm3344, %v3346, %v3342
  %v3348 = vmul.f32 %v3218, %v3347
  %v3349 = vrcp.pop %v3235
  %v3350 = vmul.f32 %v3235, %v3349
  %v3351 = vsub.f32 1.0, %v3350
  %v3352 = vmul.f32 %v3349, %v3351
  %v3353 = vadd.f32 %v3349, %v3352
  %vm3354 = vweird.f32 %v3235
  %vm3355 = vweird.f32 %v3349
  %vm3356 = vmor %vm3354, %vm3355
  %v3357 = vsel %vm3356, %v3349, %v3353
  %v3358 = vand.u32 2147483647, %v3235
  %vm3359 = vcmp.eq.f32.partialorder %v3358, 8.507059e+37
  %v3360 = vand.u32 %v3235, 2147483648
  %v3361 = vor.u32 1.1754944e-38, %v3360
  %v3362 = vsel %vm3359, %v3361, %v3357
  %v3363 = vmul.f32 %v3219, %v3362
  %v3364 = vrcp.pop %v3236
  %v3365 = vmul.f32 %v3236, %v3364
  %v3366 = vsub.f32 1.0, %v3365
  %v3367 = vmul.f32 %v3364, %v3366
  %v3368 = vadd.f32 %v3364, %v3367
  %vm3369 = vweird.f32 %v3236
  %vm3370 = vweird.f32 %v3364
  %vm3371 = vmor %vm3369, %vm3370
  %v3372 = vsel %vm3371, %v3364, %v3368
  %v3373 = vand.u32 2147483647, %v3236
  %vm3374 = vcmp.eq.f32.partialorder %v3373, 8.507059e+37
  %v3375 = vand.u32 %v3236, 2147483648
  %v3376 = vor.u32 1.1754944e-38, %v3375
  %v3377 = vsel %vm3374, %v3376, %v3372
  %v3378 = vmul.f32 %v3220, %v3377
  %v3379 = vrcp.pop %v3237
  %v3380 = vmul.f32 %v3237, %v3379
  %v3381 = vsub.f32 1.0, %v3380
  %v3382 = vmul.f32 %v3379, %v3381
  %v3383 = vadd.f32 %v3379, %v3382
  %vm3384 = vweird.f32 %v3237
  %vm3385 = vweird.f32 %v3379
  %vm3386 = vmor %vm3384, %vm3385
  %v3387 = vsel %vm3386, %v3379, %v3383
  %v3388 = vand.u32 2147483647, %v3237
  %vm3389 = vcmp.eq.f32.partialorder %v3388, 8.507059e+37
  %v3390 = vand.u32 %v3237, 2147483648
  %v3391 = vor.u32 1.1754944e-38, %v3390
  %v3392 = vsel %vm3389, %v3391, %v3387
  %v3393 = vmul.f32 %v3221, %v3392
  %v3394 = vrcp.pop %v3238
  %v3395 = vmul.f32 %v3238, %v3394
  %v3396 = vsub.f32 1.0, %v3395
  %v3397 = vmul.f32 %v3394, %v3396
  %v3398 = vadd.f32 %v3394, %v3397
  %vm3399 = vweird.f32 %v3238
  %vm3400 = vweird.f32 %v3394
  %vm3401 = vmor %vm3399, %vm3400
  %v3402 = vsel %vm3401, %v3394, %v3398
  %v3403 = vand.u32 2147483647, %v3238
  %vm3404 = vcmp.eq.f32.partialorder %v3403, 8.507059e+37
  %v3405 = vand.u32 %v3238, 2147483648
  %v3406 = vor.u32 1.1754944e-38, %v3405
  %v3407 = vsel %vm3404, %v3406, %v3402
  %v3408 = vmul.f32 %v3222, %v3407
  %v3409 = vrcp.pop %v3239
  %v3410 = vmul.f32 %v3239, %v3409
  %v3411 = vsub.f32 1.0, %v3410
  %v3412 = vmul.f32 %v3409, %v3411
  %v3413 = vadd.f32 %v3409, %v3412
  %vm3414 = vweird.f32 %v3239
  %vm3415 = vweird.f32 %v3409
  %vm3416 = vmor %vm3414, %vm3415
  %v3417 = vsel %vm3416, %v3409, %v3413
  %v3418 = vand.u32 2147483647, %v3239
  %vm3419 = vcmp.eq.f32.partialorder %v3418, 8.507059e+37
  %v3420 = vand.u32 %v3239, 2147483648
  %v3421 = vor.u32 1.1754944e-38, %v3420
  %v3422 = vsel %vm3419, %v3421, %v3417
  %v3423 = vmul.f32 %v3223, %v3422
  %v3424 = vrcp.pop %v3240
  %v3425 = vmul.f32 %v3240, %v3424
  %v3426 = vsub.f32 1.0, %v3425
  %v3427 = vmul.f32 %v3424, %v3426
  %v3428 = vadd.f32 %v3424, %v3427
  %vm3429 = vweird.f32 %v3240
  %vm3430 = vweird.f32 %v3424
  %vm3431 = vmor %vm3429, %vm3430
  %v3432 = vsel %vm3431, %v3424, %v3428
  %v3433 = vand.u32 2147483647, %v3240
  %vm3434 = vcmp.eq.f32.partialorder %v3433, 8.507059e+37
  %v3435 = vand.u32 %v3240, 2147483648
  %v3436 = vor.u32 1.1754944e-38, %v3435
  %v3437 = vsel %vm3434, %v3436, %v3432
  %v3438 = vmul.f32 %v3224, %v3437
  %v3439 = vrcp.pop %v3241
  %v3440 = vmul.f32 %v3241, %v3439
  %v3441 = vsub.f32 1.0, %v3440
  %v3442 = vmul.f32 %v3439, %v3441
  %v3443 = vadd.f32 %v3439, %v3442
  %vm3444 = vweird.f32 %v3241
  %vm3445 = vweird.f32 %v3439
  %vm3446 = vmor %vm3444, %vm3445
  %v3447 = vsel %vm3446, %v3439, %v3443
  %v3448 = vand.u32 2147483647, %v3241
  %vm3449 = vcmp.eq.f32.partialorder %v3448, 8.507059e+37
  %v3450 = vand.u32 %v3241, 2147483648
  %v3451 = vor.u32 1.1754944e-38, %v3450
  %v3452 = vsel %vm3449, %v3451, %v3447
  %v3453 = vmul.f32 %v3225, %v3452
  %v3454 = vrcp.pop %v3242
  %v3455 = vmul.f32 %v3242, %v3454
  %v3456 = vsub.f32 1.0, %v3455
  %v3457 = vmul.f32 %v3454, %v3456
  %v3458 = vadd.f32 %v3454, %v3457
  %vm3459 = vweird.f32 %v3242
  %vm3460 = vweird.f32 %v3454
  %vm3461 = vmor %vm3459, %vm3460
  %v3462 = vsel %vm3461, %v3454, %v3458
  %v3463 = vand.u32 2147483647, %v3242
  %vm3464 = vcmp.eq.f32.partialorder %v3463, 8.507059e+37
  %v3465 = vand.u32 %v3242, 2147483648
  %v3466 = vor.u32 1.1754944e-38, %v3465
  %v3467 = vsel %vm3464, %v3466, %v3462
  %v3468 = vmul.f32 %v3226, %v3467
  %v3469 = vrcp.pop %v3243
  %v3470 = vmul.f32 %v3243, %v3469
  %v3471 = vsub.f32 1.0, %v3470
  %v3472 = vmul.f32 %v3469, %v3471
  %v3473 = vadd.f32 %v3469, %v3472
  %vm3474 = vweird.f32 %v3243
  %vm3475 = vweird.f32 %v3469
  %vm3476 = vmor %vm3474, %vm3475
  %v3477 = vsel %vm3476, %v3469, %v3473
  %v3478 = vand.u32 2147483647, %v3243
  %vm3479 = vcmp.eq.f32.partialorder %v3478, 8.507059e+37
  %v3480 = vand.u32 %v3243, 2147483648
  %v3481 = vor.u32 1.1754944e-38, %v3480
  %v3482 = vsel %vm3479, %v3481, %v3477
  %v3483 = vmul.f32 %v3227, %v3482
  %v3484 = vlog2.pop %v3258
  %v3485 = vmul.f32 %v3484, 0.6931472
  %v3486 = vlog2.pop %v3273
  %v3487 = vmul.f32 %v3486, 0.6931472
  %v3488 = vlog2.pop %v3288
  %v3489 = vmul.f32 %v3488, 0.6931472
  %v3490 = vlog2.pop %v3303
  %v3491 = vmul.f32 %v3490, 0.6931472
  %v3492 = vlog2.pop %v3318
  %v3493 = vmul.f32 %v3492, 0.6931472
  %v3494 = vlog2.pop %v3333
  %v3495 = vmul.f32 %v3494, 0.6931472
  %v3496 = vlog2.pop %v3348
  %v3497 = vmul.f32 %v3496, 0.6931472
  %v3498 = vlog2.pop %v3363
  %v3499 = vmul.f32 %v3498, 0.6931472
  %v3500 = vlog2.pop %v3378
  %v3501 = vmul.f32 %v3500, 0.6931472
  %v3502 = vlog2.pop %v3393
  %v3503 = vmul.f32 %v3502, 0.6931472
  %v3504 = vlog2.pop %v3408
  %v3505 = vmul.f32 %v3504, 0.6931472
  %v3506 = vlog2.pop %v3423
  %v3507 = vmul.f32 %v3506, 0.6931472
  %v3508 = vlog2.pop %v3438
  %v3509 = vmul.f32 %v3508, 0.6931472
  %v3510 = vlog2.pop %v3453
  %v3511 = vmul.f32 %v3510, 0.6931472
  %v3512 = vlog2.pop %v3468
  %v3513 = vmul.f32 %v3512, 0.6931472
  %v3514 = vlog2.pop %v3483
  %v3515 = vmul.f32 %v3514, 0.6931472
  %v3516 = vmul.f32 %v3485, 0.5
  %v3517 = vmul.f32 %v3487, 0.5
  %v3518 = vmul.f32 %v3489, 0.5
  %v3519 = vmul.f32 %v3491, 0.5
  %v3520 = vmul.f32 %v3493, 0.5
  %v3521 = vmul.f32 %v3495, 0.5
  %v3522 = vmul.f32 %v3497, 0.5
  %v3523 = vmul.f32 %v3499, 0.5
  %v3524 = vmul.f32 %v3501, 0.5
  %v3525 = vmul.f32 %v3503, 0.5
  %v3526 = vmul.f32 %v3505, 0.5
  %v3527 = vmul.f32 %v3507, 0.5
  %v3528 = vmul.f32 %v3509, 0.5
  %v3529 = vmul.f32 %v3511, 0.5
  %v3530 = vmul.f32 %v3513, 0.5
  %v3531 = vmul.f32 %v3515, 0.5
  %v3532 = vmul.f32 %v3516, %v2981
  %v3533 = vmul.f32 %v3517, %v2991
  %v3534 = vmul.f32 %v3518, %v3001
  %v3535 = vmul.f32 %v3519, %v3011
  %v3536 = vmul.f32 %v3520, %v3021
  %v3537 = vmul.f32 %v3521, %v3031
  %v3538 = vmul.f32 %v3522, %v3041
  %v3539 = vmul.f32 %v3523, %v3051
  %v3540 = vmul.f32 %v3524, %v3061
  %v3541 = vmul.f32 %v3525, %v3071
  %v3542 = vmul.f32 %v3526, %v3081
  %v3543 = vmul.f32 %v3527, %v3091
  %v3544 = vmul.f32 %v3528, %v3101
  %v3545 = vmul.f32 %v3529, %v3111
  %v3546 = vmul.f32 %v3530, %v3121
  %v3547 = vmul.f32 %v3531, %v3131
  %v3548 = vmul.f32 %v2812, %v3532
  %v3549 = vmul.f32 %v2813, %v3533
  %v3550 = vmul.f32 %v2814, %v3534
  %v3551 = vmul.f32 %v2815, %v3535
  %v3552 = vmul.f32 %v2816, %v3536
  %v3553 = vmul.f32 %v2817, %v3537
  %v3554 = vmul.f32 %v2818, %v3538
  %v3555 = vmul.f32 %v2819, %v3539
  %v3556 = vmul.f32 %v2820, %v3540
  %v3557 = vmul.f32 %v2821, %v3541
  %v3558 = vmul.f32 %v2822, %v3542
  %v3559 = vmul.f32 %v2823, %v3543
  %v3560 = vmul.f32 %v2824, %v3544
  %v3561 = vmul.f32 %v2825, %v3545
  %v3562 = vmul.f32 %v2826, %v3546
  %v3563 = vmul.f32 %v2827, %v3547
  %v3564 = vmax.f32 %v3548, 0.0
  %v3565 = vmax.f32 %v3549, 0.0
  %v3566 = vmax.f32 %v3550, 0.0
  %v3567 = vmax.f32 %v3551, 0.0
  %v3568 = vmax.f32 %v3552, 0.0
  %v3569 = vmax.f32 %v3553, 0.0
  %v3570 = vmax.f32 %v3554, 0.0
  %v3571 = vmax.f32 %v3555, 0.0
  %v3572 = vmax.f32 %v3556, 0.0
  %v3573 = vmax.f32 %v3557, 0.0
  %v3574 = vmax.f32 %v3558, 0.0
  %v3575 = vmax.f32 %v3559, 0.0
  %v3576 = vmax.f32 %v3560, 0.0
  %v3577 = vmax.f32 %v3561, 0.0
  %v3578 = vmax.f32 %v3562, 0.0
  %v3579 = vmax.f32 %v3563, 0.0
  %v3596 = vrot.slane %v3565, 4
  %v3597 = vrot.slane %v3567, 4
  %v3598 = vrot.slane %v3569, 4
  %v3599 = vrot.slane %v3571, 4
  %v3600 = vrot.slane %v3573, 4
  %v3601 = vrot.slane %v3575, 4
  %v3602 = vrot.slane %v3577, 4
  %v3603 = vrot.slane %v3579, 4
  %v3604 = vsel %vm114, %v3564, %v3596
  %v3605 = vsel %vm114, %v3566, %v3597
  %v3606 = vsel %vm114, %v3568, %v3598
  %v3607 = vsel %vm114, %v3570, %v3599
  %v3608 = vsel %vm114, %v3572, %v3600
  %v3609 = vsel %vm114, %v3574, %v3601
  %v3610 = vsel %vm114, %v3576, %v3602
  %v3611 = vsel %vm114, %v3578, %v3603
  %3620 = vst [vmem:[%s6] sm:$0xff] %v3604
  %3621 = vst [vmem:[%s6 + $0x8] sm:$0xff] %v3605
  %3622 = vst [vmem:[%s6 + $0x10] sm:$0xff] %v3606
  %3623 = vst [vmem:[%s6 + $0x18] sm:$0xff] %v3607
  %3624 = vst [vmem:[%s6 + $0x20] sm:$0xff] %v3608
  %3625 = vst [vmem:[%s6 + $0x28] sm:$0xff] %v3609
  %3626 = vst [vmem:[%s6 + $0x30] sm:$0xff] %v3610
  %3627 = vst [vmem:[%s6 + $0x38] sm:$0xff] %v3611
  // Predicated region
  $region26: #{_lambda_.12} parent=0 // pred_check
    _
  $region27: #{_lambda_.12} parent=0 // pred_check_branch
    %3629 = sbr.rel (0) target = $region29
  $region28: #{_lambda_.12} parent=0 // pred_region
    _
  $region29: #{_lambda_.12} parent=0 // pred_fallthru
    _
  // Predicated region
  $region30: #{_lambda_.12} parent=0 // pred_check
    _
  $region31: #{_lambda_.12} parent=0 // pred_check_branch
    %3631 = sbr.rel (0) target = $region33
  $region32: #{_lambda_.12} parent=0 // pred_region
    _
  $region33: #{_lambda_.12} parent=0 // pred_fallthru
    _

// kernel: _lambda_.13
$region0: #{_lambda_.13}
  #allocation0 [shape = 'u32[]', space=smem, size = 0x4, offset = 0x4, fixed_abs, tag = 'smem constant byte address 0x4 - core index']
  #allocation1 [shape = 'u32[72,128]{1,0:T(1,128)}', space=vmem, size = 0x9000, scoped, tag = 'internal scratch']
  %s0 = inlined_call_operand.vmem [shape: f32[8,36], index: 0, kind: input, shape index: {}]
  %s1 = inlined_call_operand.vmem [shape: f32[36,512], index: 1, kind: input, shape index: {}]
  %s2 = inlined_call_operand.vmem [shape: f32[8,1], index: 2, kind: input, shape index: {}, may-alias: {2,4}]
  %s3 = inlined_call_operand.vmem [shape: f32[8,1], index: 3, kind: input, shape index: {}]
  %s4 = inlined_call_operand.vmem [shape: f32[8,1], index: 4, kind: input, shape index: {}, may-alias: {2,4}]
  %s5 = inlined_call_operand.vmem [shape: f32[8,512], index: 5, kind: output, shape index: {}]
  %s6 = sld [smem:[#allocation0]]
  $region30: #{_lambda_.13} parent=0
    _
  %s8 = ssub.s32 1, %s6
  %s9 = scalar_select 0, %s8, %s6
  // Predicated region
  $region2: #{_lambda_.13} parent=0 // pred_check
    _
  $region3: #{_lambda_.13} parent=0 // pred_check_branch
    %11 = sbr.rel (0) target = $region5
  $region4: #{_lambda_.13} parent=0 // pred_region
    _
  $region5: #{_lambda_.13} parent=0 // pred_fallthru
    _
  // Predicated region
  $region6: #{_lambda_.13} parent=0 // pred_check
    _
  $region7: #{_lambda_.13} parent=0 // pred_check_branch
    %13 = sbr.rel (0) target = $region9
  $region8: #{_lambda_.13} parent=0 // pred_region
    _
  $region9: #{_lambda_.13} parent=0 // pred_fallthru
    _
  // Predicated region
  $region10: #{_lambda_.13} parent=0 // pred_check
    _
  $region11: #{_lambda_.13} parent=0 // pred_check_branch
    %15 = sbr.rel (0) target = $region13
  $region12: #{_lambda_.13} parent=0 // pred_region
    _
  $region13: #{_lambda_.13} parent=0 // pred_fallthru
    _
  // Predicated region
  $region14: #{_lambda_.13} parent=0 // pred_check
    _
  $region15: #{_lambda_.13} parent=0 // pred_check_branch
    %17 = sbr.rel (0) target = $region17
  $region16: #{_lambda_.13} parent=0 // pred_region
    _
  $region17: #{_lambda_.13} parent=0 // pred_fallthru
    _
  // Predicated region
  $region18: #{_lambda_.13} parent=0 // pred_check
    _
  $region19: #{_lambda_.13} parent=0 // pred_check_branch
    %19 = sbr.rel (0) target = $region21
  $region20: #{_lambda_.13} parent=0 // pred_region
    _
  $region21: #{_lambda_.13} parent=0 // pred_fallthru
    _
  %v20 = vld [vmem:[%s0] sm:$0xff]
  %v21 = vld [vmem:[%s1] sm:$0xff]
  %v22 = vld [vmem:[%s1 + $0x8] sm:$0xff]
  %v23 = vld [vmem:[%s1 + $0x10] sm:$0xff]
  %v24 = vld [vmem:[%s1 + $0x18] sm:$0xff]
  %v25 = vld [vmem:[%s1 + $0x20] sm:$0xff]
  %v26 = vld [vmem:[%s1 + $0x28] sm:$0xff]
  %v27 = vld [vmem:[%s1 + $0x30] sm:$0xff]
  %v28 = vld [vmem:[%s1 + $0x38] sm:$0xff]
  %v29 = vld [vmem:[%s1 + $0x40] sm:$0xff]
  %v30 = vld [vmem:[%s1 + $0x48] sm:$0xff]
  %v31 = vld [vmem:[%s1 + $0x50] sm:$0xff]
  %v32 = vld [vmem:[%s1 + $0x58] sm:$0xff]
  %v33 = vld [vmem:[%s1 + $0x60] sm:$0xff]
  %v34 = vld [vmem:[%s1 + $0x68] sm:$0xff]
  %v35 = vld [vmem:[%s1 + $0x70] sm:$0xff]
  %v36 = vld [vmem:[%s1 + $0x78] sm:$0xff]
  %v37 = vld [vmem:[%s1 + $0x80] sm:$0xf]
  %v38 = vld [vmem:[%s1 + $0x88] sm:$0xf]
  %v39 = vld [vmem:[%s1 + $0x90] sm:$0xf]
  %v40 = vld [vmem:[%s1 + $0x98] sm:$0xf]
  %v41 = vld [vmem:[%s2] sm:$0xff]
  %43 = vset.pattern.permute.xlu0 0
  %44 = vperm.xlu0 %43, %v41
  %v45 = vpop.permute.xlu0 %44
  %vm47 = vcmask 293888
  %v49 = vsel %vm47, %v20, 0
  %vm51 = vcmask 1043456
  %v53 = vsel %vm51, %v37, 0
  %v56 = vsel %vm51, %v38, 0
  %v59 = vsel %vm51, %v39, 0
  %v62 = vsel %vm51, %v40, 0
  %64 = vmatpush.msra.mxu0 0.0
  %65 = vmatpush.msra.mxu0 0.0
  %66 = vmatpush.msra.mxu0 0.0
  %67 = vmatpush.msra.mxu0 0.0
  %68 = vmatpush.msra.mxu0 0.0
  %69 = vmatpush.msra.mxu0 0.0
  %70 = vmatpush.msra.mxu0 0.0
  %71 = vmatpush.msra.mxu0 0.0
  %72 = vmatpush.msra.mxu0 0.0
  %73 = vmatpush.msra.mxu0 0.0
  %74 = vmatpush.msra.mxu0 0.0
  %75 = vmatpush.msra.mxu0 %v53
  %76 = vmatpush.msra.mxu0 %v33
  %77 = vmatpush.msra.mxu0 %v29
  %78 = vmatpush.msra.mxu0 %v25
  %79 = vmatpush.msra.mxu0 %v21
  %80 = vmatmul.f32.gmra.mxu0 %v49
  %v81 = vpop.f32.mrf.mxu0
  %v82 = vadd.f32 %v45, %v81
  %83 = vdwg.mxu0
  %84 = vmatpush.msra.mxu0 0.0
  %85 = vmatpush.msra.mxu0 0.0
  %86 = vmatpush.msra.mxu0 0.0
  %87 = vmatpush.msra.mxu0 0.0
  %88 = vmatpush.msra.mxu0 0.0
  %89 = vmatpush.msra.mxu0 0.0
  %90 = vmatpush.msra.mxu0 0.0
  %91 = vmatpush.msra.mxu0 0.0
  %92 = vmatpush.msra.mxu0 0.0
  %93 = vmatpush.msra.mxu0 0.0
  %94 = vmatpush.msra.mxu0 0.0
  %95 = vmatpush.msra.mxu0 %v56
  %96 = vmatpush.msra.mxu0 %v34
  %97 = vmatpush.msra.mxu0 %v30
  %98 = vmatpush.msra.mxu0 %v26
  %99 = vmatpush.msra.mxu0 %v22
  %100 = vmatmul.f32.gmra.mxu0 %v49
  %v101 = vpop.f32.mrf.mxu0
  %v102 = vadd.f32 %v45, %v101
  %103 = vdwg.mxu0
  %104 = vmatpush.msra.mxu0 0.0
  %105 = vmatpush.msra.mxu0 0.0
  %106 = vmatpush.msra.mxu0 0.0
  %107 = vmatpush.msra.mxu0 0.0
  %108 = vmatpush.msra.mxu0 0.0
  %109 = vmatpush.msra.mxu0 0.0
  %110 = vmatpush.msra.mxu0 0.0
  %111 = vmatpush.msra.mxu0 0.0
  %112 = vmatpush.msra.mxu0 0.0
  %113 = vmatpush.msra.mxu0 0.0
  %114 = vmatpush.msra.mxu0 0.0
  %115 = vmatpush.msra.mxu0 %v59
  %116 = vmatpush.msra.mxu0 %v35
  %117 = vmatpush.msra.mxu0 %v31
  %118 = vmatpush.msra.mxu0 %v27
  %119 = vmatpush.msra.mxu0 %v23
  %120 = vmatmul.f32.gmra.mxu0 %v49
  %v121 = vpop.f32.mrf.mxu0
  %v122 = vadd.f32 %v45, %v121
  %123 = vdwg.mxu0
  %124 = vmatpush.msra.mxu0 0.0
  %125 = vmatpush.msra.mxu0 0.0
  %126 = vmatpush.msra.mxu0 0.0
  %127 = vmatpush.msra.mxu0 0.0
  %128 = vmatpush.msra.mxu0 0.0
  %129 = vmatpush.msra.mxu0 0.0
  %130 = vmatpush.msra.mxu0 0.0
  %131 = vmatpush.msra.mxu0 0.0
  %132 = vmatpush.msra.mxu0 0.0
  %133 = vmatpush.msra.mxu0 0.0
  %134 = vmatpush.msra.mxu0 0.0
  %135 = vmatpush.msra.mxu0 %v62
  %136 = vmatpush.msra.mxu0 %v36
  %137 = vmatpush.msra.mxu0 %v32
  %138 = vmatpush.msra.mxu0 %v28
  %139 = vmatpush.msra.mxu0 %v24
  %140 = vmatmul.f32.gmra.mxu0 %v49
  %v141 = vpop.f32.mrf.mxu0
  %v142 = vadd.f32 %v45, %v141
  %143 = vdwg.mxu0
  %v144 = vld [vmem:[%s3] sm:$0xff]
  %v145 = vld [vmem:[%s4] sm:$0xff]
  %v146 = vadd.f32 %v82, %v102
  %v147 = vadd.f32 %v146, %v122
  %v148 = vadd.f32 %v147, %v142
  %149 = vadd.xlane.f32.xlu0 %v148
  %v150 = vpop.xlane.xlu0 %149
  %v151 = vrcp.pop 512.0
  %v152 = vmul.f32 512.0, %v151
  %v153 = vsub.f32 1.0, %v152
  %v154 = vmul.f32 %v151, %v153
  %v155 = vadd.f32 %v151, %v154
  %vm156 = vweird.f32 %v151
  %v157 = vsel %vm156, %v151, %v155
  %v158 = vmul.f32 %v150, %v157
  %v159 = vsub.f32 %v82, %v158
  %v160 = vsub.f32 %v102, %v158
  %v161 = vsub.f32 %v122, %v158
  %v162 = vsub.f32 %v142, %v158
  %v163 = vmul.f32 %v159, %v159
  %v164 = vmul.f32 %v160, %v160
  %v165 = vmul.f32 %v161, %v161
  %v166 = vmul.f32 %v162, %v162
  %v167 = vadd.f32 %v163, %v164
  %v168 = vadd.f32 %v167, %v165
  %v169 = vadd.f32 %v168, %v166
  %170 = vadd.xlane.f32.xlu0 %v169
  %v171 = vpop.xlane.xlu0 %170
  %v172 = vmul.f32 %v171, %v157
  %v173 = vadd.f32 %v172, 1e-05
  %v174 = vrsqrt.pop %v173
  %v175 = vmul.f32 %v174, %v173
  %v176 = vmul.f32 %v175, %v174
  %v177 = vmul.f32 0.5, %v176
  %v178 = vsub.f32 1.5, %v177
  %v179 = vmul.f32 %v174, %v178
  %vm180 = vweird.f32 %v173
  %vm181 = vweird.f32 %v174
  %vm182 = vmor %vm180, %vm181
  %v183 = vsel %vm182, %v174, %v179
  %v184 = vmul.f32 %v144, %v183
  %186 = vset.pattern.permute.xlu0 0
  %187 = vperm.xlu0 %186, %v184
  %v188 = vpop.permute.xlu0 %187
  %v190 = vmul.f32 %v82, %v188
  %v191 = vmul.f32 %v102, %v188
  %v192 = vmul.f32 %v122, %v188
  %v193 = vmul.f32 %v142, %v188
  %v194 = vmul.f32 %v158, %v184
  %v195 = vsub.f32 %v145, %v194
  %197 = vset.pattern.permute.xlu0 0
  %198 = vperm.xlu0 %197, %v195
  %v199 = vpop.permute.xlu0 %198
  %v201 = vadd.f32 %v190, %v199
  %v202 = vadd.f32 %v191, %v199
  %v203 = vadd.f32 %v192, %v199
  %v204 = vadd.f32 %v193, %v199
  %v205 = vmax.f32 %v201, 0.0
  %v206 = vmax.f32 %v202, 0.0
  %v207 = vmax.f32 %v203, 0.0
  %v208 = vmax.f32 %v204, 0.0
  %209 = vst [vmem:[%s5] sm:$0xff] %v205
  %210 = vst [vmem:[%s5 + $0x8] sm:$0xff] %v206
  %211 = vst [vmem:[%s5 + $0x10] sm:$0xff] %v207
  %212 = vst [vmem:[%s5 + $0x18] sm:$0xff] %v208
  // Predicated region
  $region22: #{_lambda_.13} parent=0 // pred_check
    _
  $region23: #{_lambda_.13} parent=0 // pred_check_branch
    %214 = sbr.rel (0) target = $region25
  $region24: #{_lambda_.13} parent=0 // pred_region
    _
  $region25: #{_lambda_.13} parent=0 // pred_fallthru
    _
  // Predicated region
  $region26: #{_lambda_.13} parent=0 // pred_check
    _
  $region27: #{_lambda_.13} parent=0 // pred_check_branch
    %216 = sbr.rel (0) target = $region29
  $region28: #{_lambda_.13} parent=0 // pred_region
    _
  $region29: #{_lambda_.13} parent=0 // pred_fallthru
    _

// kernel: _lambda_.14
$region0: #{_lambda_.14}
  #allocation0 [shape = 'u32[]', space=smem, size = 0x4, offset = 0x4, fixed_abs, tag = 'smem constant byte address 0x4 - core index']
  #allocation1 [shape = 'u32[72,128]{1,0:T(1,128)}', space=vmem, size = 0x9000, scoped, tag = 'internal scratch']
  %s0 = inlined_call_operand.vmem [shape: f32[8,72], index: 0, kind: input, shape index: {}]
  %s1 = inlined_call_operand.vmem [shape: f32[72,512], index: 1, kind: input, shape index: {}]
  %s2 = inlined_call_operand.vmem [shape: f32[8,1], index: 2, kind: input, shape index: {}, may-alias: {2,4,7}]
  %s3 = inlined_call_operand.vmem [shape: f32[8,1], index: 3, kind: input, shape index: {}]
  %s4 = inlined_call_operand.vmem [shape: f32[8,1], index: 4, kind: input, shape index: {}, may-alias: {2,4,7}]
  %s5 = inlined_call_operand.vmem [shape: f32[8,4], index: 5, kind: input, shape index: {}]
  %s6 = inlined_call_operand.vmem [shape: f32[4,512], index: 6, kind: input, shape index: {}]
  %s7 = inlined_call_operand.vmem [shape: f32[8,1], index: 7, kind: input, shape index: {}, may-alias: {2,4,7}]
  %s8 = inlined_call_operand.vmem [shape: f32[8,512], index: 8, kind: output, shape index: {}]
  %s9 = sld [smem:[#allocation0]]
  $region42: #{_lambda_.14} parent=0
    _
  %s11 = ssub.s32 1, %s9
  %s12 = scalar_select 0, %s11, %s9
  // Predicated region
  $region2: #{_lambda_.14} parent=0 // pred_check
    _
  $region3: #{_lambda_.14} parent=0 // pred_check_branch
    %14 = sbr.rel (0) target = $region5
  $region4: #{_lambda_.14} parent=0 // pred_region
    _
  $region5: #{_lambda_.14} parent=0 // pred_fallthru
    _
  // Predicated region
  $region6: #{_lambda_.14} parent=0 // pred_check
    _
  $region7: #{_lambda_.14} parent=0 // pred_check_branch
    %16 = sbr.rel (0) target = $region9
  $region8: #{_lambda_.14} parent=0 // pred_region
    _
  $region9: #{_lambda_.14} parent=0 // pred_fallthru
    _
  // Predicated region
  $region10: #{_lambda_.14} parent=0 // pred_check
    _
  $region11: #{_lambda_.14} parent=0 // pred_check_branch
    %18 = sbr.rel (0) target = $region13
  $region12: #{_lambda_.14} parent=0 // pred_region
    _
  $region13: #{_lambda_.14} parent=0 // pred_fallthru
    _
  // Predicated region
  $region14: #{_lambda_.14} parent=0 // pred_check
    _
  $region15: #{_lambda_.14} parent=0 // pred_check_branch
    %20 = sbr.rel (0) target = $region17
  $region16: #{_lambda_.14} parent=0 // pred_region
    _
  $region17: #{_lambda_.14} parent=0 // pred_fallthru
    _
  // Predicated region
  $region18: #{_lambda_.14} parent=0 // pred_check
    _
  $region19: #{_lambda_.14} parent=0 // pred_check_branch
    %22 = sbr.rel (0) target = $region21
  $region20: #{_lambda_.14} parent=0 // pred_region
    _
  $region21: #{_lambda_.14} parent=0 // pred_fallthru
    _
  // Predicated region
  $region22: #{_lambda_.14} parent=0 // pred_check
    _
  $region23: #{_lambda_.14} parent=0 // pred_check_branch
    %24 = sbr.rel (0) target = $region25
  $region24: #{_lambda_.14} parent=0 // pred_region
    _
  $region25: #{_lambda_.14} parent=0 // pred_fallthru
    _
  // Predicated region
  $region26: #{_lambda_.14} parent=0 // pred_check
    _
  $region27: #{_lambda_.14} parent=0 // pred_check_branch
    %26 = sbr.rel (0) target = $region29
  $region28: #{_lambda_.14} parent=0 // pred_region
    _
  $region29: #{_lambda_.14} parent=0 // pred_fallthru
    _
  // Predicated region
  $region30: #{_lambda_.14} parent=0 // pred_check
    _
  $region31: #{_lambda_.14} parent=0 // pred_check_branch
    %28 = sbr.rel (0) target = $region33
  $region32: #{_lambda_.14} parent=0 // pred_region
    _
  $region33: #{_lambda_.14} parent=0 // pred_fallthru
    _
  %v29 = vld [vmem:[%s0] sm:$0xff]
  %v30 = vld [vmem:[%s1] sm:$0xff]
  %v31 = vld [vmem:[%s1 + $0x8] sm:$0xff]
  %v32 = vld [vmem:[%s1 + $0x10] sm:$0xff]
  %v33 = vld [vmem:[%s1 + $0x18] sm:$0xff]
  %v34 = vld [vmem:[%s1 + $0x20] sm:$0xff]
  %v35 = vld [vmem:[%s1 + $0x28] sm:$0xff]
  %v36 = vld [vmem:[%s1 + $0x30] sm:$0xff]
  %v37 = vld [vmem:[%s1 + $0x38] sm:$0xff]
  %v38 = vld [vmem:[%s1 + $0x40] sm:$0xff]
  %v39 = vld [vmem:[%s1 + $0x48] sm:$0xff]
  %v40 = vld [vmem:[%s1 + $0x50] sm:$0xff]
  %v41 = vld [vmem:[%s1 + $0x58] sm:$0xff]
  %v42 = vld [vmem:[%s1 + $0x60] sm:$0xff]
  %v43 = vld [vmem:[%s1 + $0x68] sm:$0xff]
  %v44 = vld [vmem:[%s1 + $0x70] sm:$0xff]
  %v45 = vld [vmem:[%s1 + $0x78] sm:$0xff]
  %v46 = vld [vmem:[%s1 + $0x80] sm:$0xff]
  %v47 = vld [vmem:[%s1 + $0x88] sm:$0xff]
  %v48 = vld [vmem:[%s1 + $0x90] sm:$0xff]
  %v49 = vld [vmem:[%s1 + $0x98] sm:$0xff]
  %v50 = vld [vmem:[%s1 + $0xa0] sm:$0xff]
  %v51 = vld [vmem:[%s1 + $0xa8] sm:$0xff]
  %v52 = vld [vmem:[%s1 + $0xb0] sm:$0xff]
  %v53 = vld [vmem:[%s1 + $0xb8] sm:$0xff]
  %v54 = vld [vmem:[%s1 + $0xc0] sm:$0xff]
  %v55 = vld [vmem:[%s1 + $0xc8] sm:$0xff]
  %v56 = vld [vmem:[%s1 + $0xd0] sm:$0xff]
  %v57 = vld [vmem:[%s1 + $0xd8] sm:$0xff]
  %v58 = vld [vmem:[%s1 + $0xe0] sm:$0xff]
  %v59 = vld [vmem:[%s1 + $0xe8] sm:$0xff]
  %v60 = vld [vmem:[%s1 + $0xf0] sm:$0xff]
  %v61 = vld [vmem:[%s1 + $0xf8] sm:$0xff]
  %v62 = vld [vmem:[%s1 + $0x100] sm:$0xff]
  %v63 = vld [vmem:[%s1 + $0x108] sm:$0xff]
  %v64 = vld [vmem:[%s1 + $0x110] sm:$0xff]
  %v65 = vld [vmem:[%s1 + $0x118] sm:$0xff]
  %v66 = vld [vmem:[%s2] sm:$0xff]
  %68 = vset.pattern.permute.xlu0 0
  %69 = vperm.xlu0 %68, %v66
  %v70 = vpop.permute.xlu0 %69
  %vm72 = vcmask 588800
  %v74 = vsel %vm72, %v29, 0
  %76 = vmatpush.msra.mxu0 0.0
  %77 = vmatpush.msra.mxu0 0.0
  %78 = vmatpush.msra.mxu0 0.0
  %79 = vmatpush.msra.mxu0 0.0
  %80 = vmatpush.msra.mxu0 0.0
  %81 = vmatpush.msra.mxu0 0.0
  %82 = vmatpush.msra.mxu0 0.0
  %83 = vmatpush.msra.mxu0 %v62
  %84 = vmatpush.msra.mxu0 %v58
  %85 = vmatpush.msra.mxu0 %v54
  %86 = vmatpush.msra.mxu0 %v50
  %87 = vmatpush.msra.mxu0 %v46
  %88 = vmatpush.msra.mxu0 %v42
  %89 = vmatpush.msra.mxu0 %v38
  %90 = vmatpush.msra.mxu0 %v34
  %91 = vmatpush.msra.mxu0 %v30
  %92 = vmatmul.f32.gmra.mxu0 %v74
  %v93 = vpop.f32.mrf.mxu0
  %v94 = vadd.f32 %v70, %v93
  %95 = vdwg.mxu0
  %96 = vmatpush.msra.mxu0 0.0
  %97 = vmatpush.msra.mxu0 0.0
  %98 = vmatpush.msra.mxu0 0.0
  %99 = vmatpush.msra.mxu0 0.0
  %100 = vmatpush.msra.mxu0 0.0
  %101 = vmatpush.msra.mxu0 0.0
  %102 = vmatpush.msra.mxu0 0.0
  %103 = vmatpush.msra.mxu0 %v63
  %104 = vmatpush.msra.mxu0 %v59
  %105 = vmatpush.msra.mxu0 %v55
  %106 = vmatpush.msra.mxu0 %v51
  %107 = vmatpush.msra.mxu0 %v47
  %108 = vmatpush.msra.mxu0 %v43
  %109 = vmatpush.msra.mxu0 %v39
  %110 = vmatpush.msra.mxu0 %v35
  %111 = vmatpush.msra.mxu0 %v31
  %112 = vmatmul.f32.gmra.mxu0 %v74
  %v113 = vpop.f32.mrf.mxu0
  %v114 = vadd.f32 %v70, %v113
  %115 = vdwg.mxu0
  %116 = vmatpush.msra.mxu0 0.0
  %117 = vmatpush.msra.mxu0 0.0
  %118 = vmatpush.msra.mxu0 0.0
  %119 = vmatpush.msra.mxu0 0.0
  %120 = vmatpush.msra.mxu0 0.0
  %121 = vmatpush.msra.mxu0 0.0
  %122 = vmatpush.msra.mxu0 0.0
  %123 = vmatpush.msra.mxu0 %v64
  %124 = vmatpush.msra.mxu0 %v60
  %125 = vmatpush.msra.mxu0 %v56
  %126 = vmatpush.msra.mxu0 %v52
  %127 = vmatpush.msra.mxu0 %v48
  %128 = vmatpush.msra.mxu0 %v44
  %129 = vmatpush.msra.mxu0 %v40
  %130 = vmatpush.msra.mxu0 %v36
  %131 = vmatpush.msra.mxu0 %v32
  %132 = vmatmul.f32.gmra.mxu0 %v74
  %v133 = vpop.f32.mrf.mxu0
  %v134 = vadd.f32 %v70, %v133
  %135 = vdwg.mxu0
  %136 = vmatpush.msra.mxu0 0.0
  %137 = vmatpush.msra.mxu0 0.0
  %138 = vmatpush.msra.mxu0 0.0
  %139 = vmatpush.msra.mxu0 0.0
  %140 = vmatpush.msra.mxu0 0.0
  %141 = vmatpush.msra.mxu0 0.0
  %142 = vmatpush.msra.mxu0 0.0
  %143 = vmatpush.msra.mxu0 %v65
  %144 = vmatpush.msra.mxu0 %v61
  %145 = vmatpush.msra.mxu0 %v57
  %146 = vmatpush.msra.mxu0 %v53
  %147 = vmatpush.msra.mxu0 %v49
  %148 = vmatpush.msra.mxu0 %v45
  %149 = vmatpush.msra.mxu0 %v41
  %150 = vmatpush.msra.mxu0 %v37
  %151 = vmatpush.msra.mxu0 %v33
  %152 = vmatmul.f32.gmra.mxu0 %v74
  %v153 = vpop.f32.mrf.mxu0
  %v154 = vadd.f32 %v70, %v153
  %155 = vdwg.mxu0
  %v156 = vld [vmem:[%s3] sm:$0xff]
  %v157 = vld [vmem:[%s4] sm:$0xff]
  %v158 = vadd.f32 %v94, %v114
  %v159 = vadd.f32 %v158, %v134
  %v160 = vadd.f32 %v159, %v154
  %161 = vadd.xlane.f32.xlu0 %v160
  %v162 = vpop.xlane.xlu0 %161
  %v163 = vrcp.pop 512.0
  %v164 = vmul.f32 512.0, %v163
  %v165 = vsub.f32 1.0, %v164
  %v166 = vmul.f32 %v163, %v165
  %v167 = vadd.f32 %v163, %v166
  %vm168 = vweird.f32 %v163
  %v169 = vsel %vm168, %v163, %v167
  %v170 = vmul.f32 %v162, %v169
  %v171 = vsub.f32 %v94, %v170
  %v172 = vsub.f32 %v114, %v170
  %v173 = vsub.f32 %v134, %v170
  %v174 = vsub.f32 %v154, %v170
  %v175 = vmul.f32 %v171, %v171
  %v176 = vmul.f32 %v172, %v172
  %v177 = vmul.f32 %v173, %v173
  %v178 = vmul.f32 %v174, %v174
  %v179 = vadd.f32 %v175, %v176
  %v180 = vadd.f32 %v179, %v177
  %v181 = vadd.f32 %v180, %v178
  %182 = vadd.xlane.f32.xlu0 %v181
  %v183 = vpop.xlane.xlu0 %182
  %v184 = vmul.f32 %v183, %v169
  %v185 = vadd.f32 %v184, 1e-05
  %v186 = vrsqrt.pop %v185
  %v187 = vmul.f32 %v186, %v185
  %v188 = vmul.f32 %v187, %v186
  %v189 = vmul.f32 0.5, %v188
  %v190 = vsub.f32 1.5, %v189
  %v191 = vmul.f32 %v186, %v190
  %vm192 = vweird.f32 %v185
  %vm193 = vweird.f32 %v186
  %vm194 = vmor %vm192, %vm193
  %v195 = vsel %vm194, %v186, %v191
  %v196 = vmul.f32 %v156, %v195
  %198 = vset.pattern.permute.xlu0 0
  %199 = vperm.xlu0 %198, %v196
  %v200 = vpop.permute.xlu0 %199
  %v202 = vmul.f32 %v94, %v200
  %v203 = vmul.f32 %v114, %v200
  %v204 = vmul.f32 %v134, %v200
  %v205 = vmul.f32 %v154, %v200
  %v206 = vmul.f32 %v170, %v196
  %v207 = vsub.f32 %v157, %v206
  %209 = vset.pattern.permute.xlu0 0
  %210 = vperm.xlu0 %209, %v207
  %v211 = vpop.permute.xlu0 %210
  %v213 = vadd.f32 %v202, %v211
  %v214 = vadd.f32 %v203, %v211
  %v215 = vadd.f32 %v204, %v211
  %v216 = vadd.f32 %v205, %v211
  %v217 = vld [vmem:[%s5] sm:$0xff]
  %v218 = vld [vmem:[%s6] sm:$0xff]
  %v219 = vld [vmem:[%s6 + $0x8] sm:$0xff]
  %v220 = vld [vmem:[%s7] sm:$0xff]
  %222 = vset.pattern.permute.xlu0 0
  %223 = vperm.xlu0 %222, %v220
  %v224 = vpop.permute.xlu0 %223
  %228 = vst [vmem:[#allocation1] ss:$2 sm:$0xff] %v218
  %s229 = scalar_lea.vmem [#allocation1], 16
  %230 = vst [vmem:[%s229] ss:$2 sm:$0xff] %v219
  %v231 = vld.sshfl [vmem:[#allocation1] sm:$0xff pattern:$0x75316420]
  %v232 = vld.sshfl [vmem:[#allocation1 + $0x8] sm:$0xff pattern:$0x75316420]
  %v233 = vld.sshfl [vmem:[#allocation1 + $0x10] sm:$0xff pattern:$0x75316420]
  %v234 = vld.sshfl [vmem:[#allocation1 + $0x18] sm:$0xff pattern:$0x75316420]
  %vm235 = vcmask 31744
  %v237 = vsel %vm235, %v217, 0
  %vm239 = vcmask 1043456
  %v240 = vsel %vm239, %v231, 0
  %v242 = vsel %vm239, %v232, 0
  %v244 = vsel %vm239, %v233, 0
  %v246 = vsel %vm239, %v234, 0
  %248 = vmatpush.msra.mxu0 0.0
  %249 = vmatpush.msra.mxu0 0.0
  %250 = vmatpush.msra.mxu0 0.0
  %251 = vmatpush.msra.mxu0 0.0
  %252 = vmatpush.msra.mxu0 0.0
  %253 = vmatpush.msra.mxu0 0.0
  %254 = vmatpush.msra.mxu0 0.0
  %255 = vmatpush.msra.mxu0 0.0
  %256 = vmatpush.msra.mxu0 0.0
  %257 = vmatpush.msra.mxu0 0.0
  %258 = vmatpush.msra.mxu0 0.0
  %259 = vmatpush.msra.mxu0 0.0
  %260 = vmatpush.msra.mxu0 0.0
  %261 = vmatpush.msra.mxu0 0.0
  %262 = vmatpush.msra.mxu0 0.0
  %263 = vmatpush.msra.mxu0 %v240
  %264 = vmatmul.f32.gmra.mxu0 %v237
  %v265 = vpop.f32.mrf.mxu0
  %v266 = vadd.f32 %v224, %v265
  %267 = vdwg.mxu0
  %268 = vmatpush.msra.mxu0 0.0
  %269 = vmatpush.msra.mxu0 0.0
  %270 = vmatpush.msra.mxu0 0.0
  %271 = vmatpush.msra.mxu0 0.0
  %272 = vmatpush.msra.mxu0 0.0
  %273 = vmatpush.msra.mxu0 0.0
  %274 = vmatpush.msra.mxu0 0.0
  %275 = vmatpush.msra.mxu0 0.0
  %276 = vmatpush.msra.mxu0 0.0
  %277 = vmatpush.msra.mxu0 0.0
  %278 = vmatpush.msra.mxu0 0.0
  %279 = vmatpush.msra.mxu0 0.0
  %280 = vmatpush.msra.mxu0 0.0
  %281 = vmatpush.msra.mxu0 0.0
  %282 = vmatpush.msra.mxu0 0.0
  %283 = vmatpush.msra.mxu0 %v242
  %284 = vmatmul.f32.gmra.mxu0 %v237
  %v285 = vpop.f32.mrf.mxu0
  %v286 = vadd.f32 %v224, %v285
  %287 = vdwg.mxu0
  %288 = vmatpush.msra.mxu0 0.0
  %289 = vmatpush.msra.mxu0 0.0
  %290 = vmatpush.msra.mxu0 0.0
  %291 = vmatpush.msra.mxu0 0.0
  %292 = vmatpush.msra.mxu0 0.0
  %293 = vmatpush.msra.mxu0 0.0
  %294 = vmatpush.msra.mxu0 0.0
  %295 = vmatpush.msra.mxu0 0.0
  %296 = vmatpush.msra.mxu0 0.0
  %297 = vmatpush.msra.mxu0 0.0
  %298 = vmatpush.msra.mxu0 0.0
  %299 = vmatpush.msra.mxu0 0.0
  %300 = vmatpush.msra.mxu0 0.0
  %301 = vmatpush.msra.mxu0 0.0
  %302 = vmatpush.msra.mxu0 0.0
  %303 = vmatpush.msra.mxu0 %v244
  %304 = vmatmul.f32.gmra.mxu0 %v237
  %v305 = vpop.f32.mrf.mxu0
  %v306 = vadd.f32 %v224, %v305
  %307 = vdwg.mxu0
  %308 = vmatpush.msra.mxu0 0.0
  %309 = vmatpush.msra.mxu0 0.0
  %310 = vmatpush.msra.mxu0 0.0
  %311 = vmatpush.msra.mxu0 0.0
  %312 = vmatpush.msra.mxu0 0.0
  %313 = vmatpush.msra.mxu0 0.0
  %314 = vmatpush.msra.mxu0 0.0
  %315 = vmatpush.msra.mxu0 0.0
  %316 = vmatpush.msra.mxu0 0.0
  %317 = vmatpush.msra.mxu0 0.0
  %318 = vmatpush.msra.mxu0 0.0
  %319 = vmatpush.msra.mxu0 0.0
  %320 = vmatpush.msra.mxu0 0.0
  %321 = vmatpush.msra.mxu0 0.0
  %322 = vmatpush.msra.mxu0 0.0
  %323 = vmatpush.msra.mxu0 %v246
  %324 = vmatmul.f32.gmra.mxu0 %v237
  %v325 = vpop.f32.mrf.mxu0
  %v326 = vadd.f32 %v224, %v325
  %327 = vdwg.mxu0
  %v328 = vmul.f32 %v266, %v266
  %v329 = vmul.f32 %v286, %v286
  %v330 = vmul.f32 %v306, %v306
  %v331 = vmul.f32 %v326, %v326
  %v332 = vrot.slane %v328, 4
  %v333 = vadd.f32 %v328, %v332
  %v334 = vrot.slane %v333, 2
  %v335 = vadd.f32 %v333, %v334
  %v336 = vrot.slane %v335, 1
  %v337 = vadd.f32 %v335, %v336
  %v338 = vrot.slane %v329, 4
  %v339 = vadd.f32 %v329, %v338
  %v340 = vrot.slane %v339, 2
  %v341 = vadd.f32 %v339, %v340
  %v342 = vrot.slane %v341, 1
  %v343 = vadd.f32 %v341, %v342
  %v344 = vrot.slane %v330, 4
  %v345 = vadd.f32 %v330, %v344
  %v346 = vrot.slane %v345, 2
  %v347 = vadd.f32 %v345, %v346
  %v348 = vrot.slane %v347, 1
  %v349 = vadd.f32 %v347, %v348
  %v350 = vrot.slane %v331, 4
  %v351 = vadd.f32 %v331, %v350
  %v352 = vrot.slane %v351, 2
  %v353 = vadd.f32 %v351, %v352
  %v354 = vrot.slane %v353, 1
  %v355 = vadd.f32 %v353, %v354
  %v356 = vmax.f32 %v337, 1e-12
  %v357 = vmax.f32 %v343, 1e-12
  %v358 = vmax.f32 %v349, 1e-12
  %v359 = vmax.f32 %v355, 1e-12
  %v360 = vrsqrt.pop %v356
  %v361 = vmul.f32 %v360, %v356
  %v362 = vmul.f32 %v361, %v360
  %v363 = vmul.f32 0.5, %v362
  %v364 = vsub.f32 1.5, %v363
  %v365 = vmul.f32 %v360, %v364
  %vm366 = vweird.f32 %v356
  %vm367 = vweird.f32 %v360
  %vm368 = vmor %vm366, %vm367
  %v369 = vsel %vm368, %v360, %v365
  %v370 = vrsqrt.pop %v357
  %v371 = vmul.f32 %v370, %v357
  %v372 = vmul.f32 %v371, %v370
  %v373 = vmul.f32 0.5, %v372
  %v374 = vsub.f32 1.5, %v373
  %v375 = vmul.f32 %v370, %v374
  %vm376 = vweird.f32 %v357
  %vm377 = vweird.f32 %v370
  %vm378 = vmor %vm376, %vm377
  %v379 = vsel %vm378, %v370, %v375
  %v380 = vrsqrt.pop %v358
  %v381 = vmul.f32 %v380, %v358
  %v382 = vmul.f32 %v381, %v380
  %v383 = vmul.f32 0.5, %v382
  %v384 = vsub.f32 1.5, %v383
  %v385 = vmul.f32 %v380, %v384
  %vm386 = vweird.f32 %v358
  %vm387 = vweird.f32 %v380
  %vm388 = vmor %vm386, %vm387
  %v389 = vsel %vm388, %v380, %v385
  %v390 = vrsqrt.pop %v359
  %v391 = vmul.f32 %v390, %v359
  %v392 = vmul.f32 %v391, %v390
  %v393 = vmul.f32 0.5, %v392
  %v394 = vsub.f32 1.5, %v393
  %v395 = vmul.f32 %v390, %v394
  %vm396 = vweird.f32 %v359
  %vm397 = vweird.f32 %v390
  %vm398 = vmor %vm396, %vm397
  %v399 = vsel %vm398, %v390, %v395
  %v400 = vmul.f32 %v337, %v369
  %v401 = vmul.f32 %v343, %v379
  %v402 = vmul.f32 %v349, %v389
  %v403 = vmul.f32 %v355, %v399
  %v404 = vmax.f32 %v400, 1e-06
  %v405 = vmax.f32 %v401, 1e-06
  %v406 = vmax.f32 %v402, 1e-06
  %v407 = vmax.f32 %v403, 1e-06
  %v408 = vtanh.pop %v404
  %v409 = vtanh.pop %v405
  %v410 = vtanh.pop %v406
  %v411 = vtanh.pop %v407
  %v412 = vmul.f32 %v408, %v369
  %v413 = vmul.f32 %v409, %v379
  %v414 = vmul.f32 %v410, %v389
  %v415 = vmul.f32 %v411, %v399
  %v416 = vmul.f32 %v266, %v412
  %v417 = vmul.f32 %v286, %v413
  %v418 = vmul.f32 %v306, %v414
  %v419 = vmul.f32 %v326, %v415
  %v420 = vmul.f32 %v213, %v213
  %v421 = vmul.f32 %v214, %v214
  %v422 = vmul.f32 %v215, %v215
  %v423 = vmul.f32 %v216, %v216
  %v424 = vrot.slane %v420, 4
  %v425 = vadd.f32 %v420, %v424
  %v426 = vrot.slane %v425, 2
  %v427 = vadd.f32 %v425, %v426
  %v428 = vrot.slane %v427, 1
  %v429 = vadd.f32 %v427, %v428
  %v430 = vrot.slane %v421, 4
  %v431 = vadd.f32 %v421, %v430
  %v432 = vrot.slane %v431, 2
  %v433 = vadd.f32 %v431, %v432
  %v434 = vrot.slane %v433, 1
  %v435 = vadd.f32 %v433, %v434
  %v436 = vrot.slane %v422, 4
  %v437 = vadd.f32 %v422, %v436
  %v438 = vrot.slane %v437, 2
  %v439 = vadd.f32 %v437, %v438
  %v440 = vrot.slane %v439, 1
  %v441 = vadd.f32 %v439, %v440
  %v442 = vrot.slane %v423, 4
  %v443 = vadd.f32 %v423, %v442
  %v444 = vrot.slane %v443, 2
  %v445 = vadd.f32 %v443, %v444
  %v446 = vrot.slane %v445, 1
  %v447 = vadd.f32 %v445, %v446
  %v448 = vmax.f32 %v429, 1e-12
  %v449 = vmax.f32 %v435, 1e-12
  %v450 = vmax.f32 %v441, 1e-12
  %v451 = vmax.f32 %v447, 1e-12
  %v452 = vrsqrt.pop %v448
  %v453 = vmul.f32 %v452, %v448
  %v454 = vmul.f32 %v453, %v452
  %v455 = vmul.f32 0.5, %v454
  %v456 = vsub.f32 1.5, %v455
  %v457 = vmul.f32 %v452, %v456
  %vm458 = vweird.f32 %v448
  %vm459 = vweird.f32 %v452
  %vm460 = vmor %vm458, %vm459
  %v461 = vsel %vm460, %v452, %v457
  %v462 = vrsqrt.pop %v449
  %v463 = vmul.f32 %v462, %v449
  %v464 = vmul.f32 %v463, %v462
  %v465 = vmul.f32 0.5, %v464
  %v466 = vsub.f32 1.5, %v465
  %v467 = vmul.f32 %v462, %v466
  %vm468 = vweird.f32 %v449
  %vm469 = vweird.f32 %v462
  %vm470 = vmor %vm468, %vm469
  %v471 = vsel %vm470, %v462, %v467
  %v472 = vrsqrt.pop %v450
  %v473 = vmul.f32 %v472, %v450
  %v474 = vmul.f32 %v473, %v472
  %v475 = vmul.f32 0.5, %v474
  %v476 = vsub.f32 1.5, %v475
  %v477 = vmul.f32 %v472, %v476
  %vm478 = vweird.f32 %v450
  %vm479 = vweird.f32 %v472
  %vm480 = vmor %vm478, %vm479
  %v481 = vsel %vm480, %v472, %v477
  %v482 = vrsqrt.pop %v451
  %v483 = vmul.f32 %v482, %v451
  %v484 = vmul.f32 %v483, %v482
  %v485 = vmul.f32 0.5, %v484
  %v486 = vsub.f32 1.5, %v485
  %v487 = vmul.f32 %v482, %v486
  %vm488 = vweird.f32 %v451
  %vm489 = vweird.f32 %v482
  %vm490 = vmor %vm488, %vm489
  %v491 = vsel %vm490, %v482, %v487
  %v492 = vmul.f32 %v429, %v461
  %v493 = vmul.f32 %v435, %v471
  %v494 = vmul.f32 %v441, %v481
  %v495 = vmul.f32 %v447, %v491
  %v496 = vmax.f32 %v492, 1e-06
  %v497 = vmax.f32 %v493, 1e-06
  %v498 = vmax.f32 %v494, 1e-06
  %v499 = vmax.f32 %v495, 1e-06
  %v500 = vtanh.pop %v496
  %v501 = vtanh.pop %v497
  %v502 = vtanh.pop %v498
  %v503 = vtanh.pop %v499
  %v504 = vmul.f32 %v500, %v461
  %v505 = vmul.f32 %v501, %v471
  %v506 = vmul.f32 %v502, %v481
  %v507 = vmul.f32 %v503, %v491
  %v508 = vmul.f32 %v213, %v504
  %v509 = vmul.f32 %v214, %v505
  %v510 = vmul.f32 %v215, %v506
  %v511 = vmul.f32 %v216, %v507
  %v512 = vmul.f32 %v416, %v508
  %v513 = vmul.f32 %v417, %v509
  %v514 = vmul.f32 %v418, %v510
  %v515 = vmul.f32 %v419, %v511
  %v516 = vrot.slane %v512, 4
  %v517 = vadd.f32 %v512, %v516
  %v518 = vrot.slane %v517, 2
  %v519 = vadd.f32 %v517, %v518
  %v520 = vrot.slane %v519, 1
  %v521 = vadd.f32 %v519, %v520
  %v522 = vrot.slane %v513, 4
  %v523 = vadd.f32 %v513, %v522
  %v524 = vrot.slane %v523, 2
  %v525 = vadd.f32 %v523, %v524
  %v526 = vrot.slane %v525, 1
  %v527 = vadd.f32 %v525, %v526
  %v528 = vrot.slane %v514, 4
  %v529 = vadd.f32 %v514, %v528
  %v530 = vrot.slane %v529, 2
  %v531 = vadd.f32 %v529, %v530
  %v532 = vrot.slane %v531, 1
  %v533 = vadd.f32 %v531, %v532
  %v534 = vrot.slane %v515, 4
  %v535 = vadd.f32 %v515, %v534
  %v536 = vrot.slane %v535, 2
  %v537 = vadd.f32 %v535, %v536
  %v538 = vrot.slane %v537, 1
  %v539 = vadd.f32 %v537, %v538
  %v540 = vmul.f32 %v416, %v416
  %v541 = vmul.f32 %v417, %v417
  %v542 = vmul.f32 %v418, %v418
  %v543 = vmul.f32 %v419, %v419
  %v544 = vrot.slane %v540, 4
  %v545 = vadd.f32 %v540, %v544
  %v546 = vrot.slane %v545, 2
  %v547 = vadd.f32 %v545, %v546
  %v548 = vrot.slane %v547, 1
  %v549 = vadd.f32 %v547, %v548
  %v550 = vrot.slane %v541, 4
  %v551 = vadd.f32 %v541, %v550
  %v552 = vrot.slane %v551, 2
  %v553 = vadd.f32 %v551, %v552
  %v554 = vrot.slane %v553, 1
  %v555 = vadd.f32 %v553, %v554
  %v556 = vrot.slane %v542, 4
  %v557 = vadd.f32 %v542, %v556
  %v558 = vrot.slane %v557, 2
  %v559 = vadd.f32 %v557, %v558
  %v560 = vrot.slane %v559, 1
  %v561 = vadd.f32 %v559, %v560
  %v562 = vrot.slane %v543, 4
  %v563 = vadd.f32 %v543, %v562
  %v564 = vrot.slane %v563, 2
  %v565 = vadd.f32 %v563, %v564
  %v566 = vrot.slane %v565, 1
  %v567 = vadd.f32 %v565, %v566
  %v568 = vmul.f32 %v508, %v508
  %v569 = vmul.f32 %v509, %v509
  %v570 = vmul.f32 %v510, %v510
  %v571 = vmul.f32 %v511, %v511
  %v572 = vrot.slane %v568, 4
  %v573 = vadd.f32 %v568, %v572
  %v574 = vrot.slane %v573, 2
  %v575 = vadd.f32 %v573, %v574
  %v576 = vrot.slane %v575, 1
  %v577 = vadd.f32 %v575, %v576
  %v578 = vrot.slane %v569, 4
  %v579 = vadd.f32 %v569, %v578
  %v580 = vrot.slane %v579, 2
  %v581 = vadd.f32 %v579, %v580
  %v582 = vrot.slane %v581, 1
  %v583 = vadd.f32 %v581, %v582
  %v584 = vrot.slane %v570, 4
  %v585 = vadd.f32 %v570, %v584
  %v586 = vrot.slane %v585, 2
  %v587 = vadd.f32 %v585, %v586
  %v588 = vrot.slane %v587, 1
  %v589 = vadd.f32 %v587, %v588
  %v590 = vrot.slane %v571, 4
  %v591 = vadd.f32 %v571, %v590
  %v592 = vrot.slane %v591, 2
  %v593 = vadd.f32 %v591, %v592
  %v594 = vrot.slane %v593, 1
  %v595 = vadd.f32 %v593, %v594
  %v596 = vmul.f32 %v521, 2.0
  %v597 = vmul.f32 %v527, 2.0
  %v598 = vmul.f32 %v533, 2.0
  %v599 = vmul.f32 %v539, 2.0
  %v600 = vadd.f32 %v596, 1.0
  %v601 = vadd.f32 %v597, 1.0
  %v602 = vadd.f32 %v598, 1.0
  %v603 = vadd.f32 %v599, 1.0
  %v604 = vadd.f32 %v600, %v577
  %v605 = vadd.f32 %v601, %v583
  %v606 = vadd.f32 %v602, %v589
  %v607 = vadd.f32 %v603, %v595
  %v608 = vmul.f32 %v604, %v416
  %v609 = vmul.f32 %v605, %v417
  %v610 = vmul.f32 %v606, %v418
  %v611 = vmul.f32 %v607, %v419
  %v612 = vsub.f32 1.0, %v549
  %v613 = vsub.f32 1.0, %v555
  %v614 = vsub.f32 1.0, %v561
  %v615 = vsub.f32 1.0, %v567
  %v616 = vmul.f32 %v612, %v508
  %v617 = vmul.f32 %v613, %v509
  %v618 = vmul.f32 %v614, %v510
  %v619 = vmul.f32 %v615, %v511
  %v620 = vadd.f32 %v608, %v616
  %v621 = vadd.f32 %v609, %v617
  %v622 = vadd.f32 %v610, %v618
  %v623 = vadd.f32 %v611, %v619
  %v624 = vmul.f32 %v549, %v577
  %v625 = vmul.f32 %v555, %v583
  %v626 = vmul.f32 %v561, %v589
  %v627 = vmul.f32 %v567, %v595
  %v628 = vadd.f32 %v600, %v624
  %v629 = vadd.f32 %v601, %v625
  %v630 = vadd.f32 %v602, %v626
  %v631 = vadd.f32 %v603, %v627
  %v632 = vmax.f32 %v628, 1e-06
  %v633 = vmax.f32 %v629, 1e-06
  %v634 = vmax.f32 %v630, 1e-06
  %v635 = vmax.f32 %v631, 1e-06
  %v636 = vrcp.pop %v632
  %v637 = vmul.f32 %v632, %v636
  %v638 = vsub.f32 1.0, %v637
  %v639 = vmul.f32 %v636, %v638
  %v640 = vadd.f32 %v636, %v639
  %vm641 = vweird.f32 %v632
  %vm642 = vweird.f32 %v636
  %vm643 = vmor %vm641, %vm642
  %v644 = vsel %vm643, %v636, %v640
  %v645 = vand.u32 2147483647, %v632
  %vm646 = vcmp.eq.f32.partialorder %v645, 8.507059e+37
  %v647 = vand.u32 %v632, 2147483648
  %v648 = vor.u32 1.1754944e-38, %v647
  %v649 = vsel %vm646, %v648, %v644
  %v650 = vmul.f32 %v620, %v649
  %v651 = vrcp.pop %v633
  %v652 = vmul.f32 %v633, %v651
  %v653 = vsub.f32 1.0, %v652
  %v654 = vmul.f32 %v651, %v653
  %v655 = vadd.f32 %v651, %v654
  %vm656 = vweird.f32 %v633
  %vm657 = vweird.f32 %v651
  %vm658 = vmor %vm656, %vm657
  %v659 = vsel %vm658, %v651, %v655
  %v660 = vand.u32 2147483647, %v633
  %vm661 = vcmp.eq.f32.partialorder %v660, 8.507059e+37
  %v662 = vand.u32 %v633, 2147483648
  %v663 = vor.u32 1.1754944e-38, %v662
  %v664 = vsel %vm661, %v663, %v659
  %v665 = vmul.f32 %v621, %v664
  %v666 = vrcp.pop %v634
  %v667 = vmul.f32 %v634, %v666
  %v668 = vsub.f32 1.0, %v667
  %v669 = vmul.f32 %v666, %v668
  %v670 = vadd.f32 %v666, %v669
  %vm671 = vweird.f32 %v634
  %vm672 = vweird.f32 %v666
  %vm673 = vmor %vm671, %vm672
  %v674 = vsel %vm673, %v666, %v670
  %v675 = vand.u32 2147483647, %v634
  %vm676 = vcmp.eq.f32.partialorder %v675, 8.507059e+37
  %v677 = vand.u32 %v634, 2147483648
  %v678 = vor.u32 1.1754944e-38, %v677
  %v679 = vsel %vm676, %v678, %v674
  %v680 = vmul.f32 %v622, %v679
  %v681 = vrcp.pop %v635
  %v682 = vmul.f32 %v635, %v681
  %v683 = vsub.f32 1.0, %v682
  %v684 = vmul.f32 %v681, %v683
  %v685 = vadd.f32 %v681, %v684
  %vm686 = vweird.f32 %v635
  %vm687 = vweird.f32 %v681
  %vm688 = vmor %vm686, %vm687
  %v689 = vsel %vm688, %v681, %v685
  %v690 = vand.u32 2147483647, %v635
  %vm691 = vcmp.eq.f32.partialorder %v690, 8.507059e+37
  %v692 = vand.u32 %v635, 2147483648
  %v693 = vor.u32 1.1754944e-38, %v692
  %v694 = vsel %vm691, %v693, %v689
  %v695 = vmul.f32 %v623, %v694
  %v696 = vmul.f32 %v650, %v650
  %v697 = vmul.f32 %v665, %v665
  %v698 = vmul.f32 %v680, %v680
  %v699 = vmul.f32 %v695, %v695
  %v700 = vrot.slane %v696, 4
  %v701 = vadd.f32 %v696, %v700
  %v702 = vrot.slane %v701, 2
  %v703 = vadd.f32 %v701, %v702
  %v704 = vrot.slane %v703, 1
  %v705 = vadd.f32 %v703, %v704
  %v706 = vrot.slane %v697, 4
  %v707 = vadd.f32 %v697, %v706
  %v708 = vrot.slane %v707, 2
  %v709 = vadd.f32 %v707, %v708
  %v710 = vrot.slane %v709, 1
  %v711 = vadd.f32 %v709, %v710
  %v712 = vrot.slane %v698, 4
  %v713 = vadd.f32 %v698, %v712
  %v714 = vrot.slane %v713, 2
  %v715 = vadd.f32 %v713, %v714
  %v716 = vrot.slane %v715, 1
  %v717 = vadd.f32 %v715, %v716
  %v718 = vrot.slane %v699, 4
  %v719 = vadd.f32 %v699, %v718
  %v720 = vrot.slane %v719, 2
  %v721 = vadd.f32 %v719, %v720
  %v722 = vrot.slane %v721, 1
  %v723 = vadd.f32 %v721, %v722
  %v724 = vmax.f32 %v705, 1e-12
  %v725 = vmax.f32 %v711, 1e-12
  %v726 = vmax.f32 %v717, 1e-12
  %v727 = vmax.f32 %v723, 1e-12
  %v728 = vrsqrt.pop %v724
  %v729 = vmul.f32 %v728, %v724
  %v730 = vmul.f32 %v729, %v728
  %v731 = vmul.f32 0.5, %v730
  %v732 = vsub.f32 1.5, %v731
  %v733 = vmul.f32 %v728, %v732
  %vm734 = vweird.f32 %v724
  %vm735 = vweird.f32 %v728
  %vm736 = vmor %vm734, %vm735
  %v737 = vsel %vm736, %v728, %v733
  %v738 = vrsqrt.pop %v725
  %v739 = vmul.f32 %v738, %v725
  %v740 = vmul.f32 %v739, %v738
  %v741 = vmul.f32 0.5, %v740
  %v742 = vsub.f32 1.5, %v741
  %v743 = vmul.f32 %v738, %v742
  %vm744 = vweird.f32 %v725
  %vm745 = vweird.f32 %v738
  %vm746 = vmor %vm744, %vm745
  %v747 = vsel %vm746, %v738, %v743
  %v748 = vrsqrt.pop %v726
  %v749 = vmul.f32 %v748, %v726
  %v750 = vmul.f32 %v749, %v748
  %v751 = vmul.f32 0.5, %v750
  %v752 = vsub.f32 1.5, %v751
  %v753 = vmul.f32 %v748, %v752
  %vm754 = vweird.f32 %v726
  %vm755 = vweird.f32 %v748
  %vm756 = vmor %vm754, %vm755
  %v757 = vsel %vm756, %v748, %v753
  %v758 = vrsqrt.pop %v727
  %v759 = vmul.f32 %v758, %v727
  %v760 = vmul.f32 %v759, %v758
  %v761 = vmul.f32 0.5, %v760
  %v762 = vsub.f32 1.5, %v761
  %v763 = vmul.f32 %v758, %v762
  %vm764 = vweird.f32 %v727
  %vm765 = vweird.f32 %v758
  %vm766 = vmor %vm764, %vm765
  %v767 = vsel %vm766, %v758, %v763
  %vm768 = vcmp.gt.f32.partialorder %v705, 0.99998
  %vm769 = vcmp.gt.f32.partialorder %v711, 0.99998
  %vm770 = vcmp.gt.f32.partialorder %v717, 0.99998
  %vm771 = vcmp.gt.f32.partialorder %v723, 0.99998
  %v772 = vmul.f32 %v737, 0.99999
  %v773 = vmul.f32 %v747, 0.99999
  %v774 = vmul.f32 %v757, 0.99999
  %v775 = vmul.f32 %v767, 0.99999
  %v776 = vsel %vm768, %v772, 1.0
  %v777 = vsel %vm769, %v773, 1.0
  %v778 = vsel %vm770, %v774, 1.0
  %v779 = vsel %vm771, %v775, 1.0
  %v780 = vmul.f32 %v650, %v776
  %v781 = vmul.f32 %v665, %v777
  %v782 = vmul.f32 %v680, %v778
  %v783 = vmul.f32 %v695, %v779
  %v784 = vmul.f32 %v780, %v780
  %v785 = vmul.f32 %v781, %v781
  %v786 = vmul.f32 %v782, %v782
  %v787 = vmul.f32 %v783, %v783
  %v788 = vrot.slane %v784, 4
  %v789 = vadd.f32 %v784, %v788
  %v790 = vrot.slane %v789, 2
  %v791 = vadd.f32 %v789, %v790
  %v792 = vrot.slane %v791, 1
  %v793 = vadd.f32 %v791, %v792
  %v794 = vrot.slane %v785, 4
  %v795 = vadd.f32 %v785, %v794
  %v796 = vrot.slane %v795, 2
  %v797 = vadd.f32 %v795, %v796
  %v798 = vrot.slane %v797, 1
  %v799 = vadd.f32 %v797, %v798
  %v800 = vrot.slane %v786, 4
  %v801 = vadd.f32 %v786, %v800
  %v802 = vrot.slane %v801, 2
  %v803 = vadd.f32 %v801, %v802
  %v804 = vrot.slane %v803, 1
  %v805 = vadd.f32 %v803, %v804
  %v806 = vrot.slane %v787, 4
  %v807 = vadd.f32 %v787, %v806
  %v808 = vrot.slane %v807, 2
  %v809 = vadd.f32 %v807, %v808
  %v810 = vrot.slane %v809, 1
  %v811 = vadd.f32 %v809, %v810
  %v812 = vmax.f32 %v793, 1e-12
  %v813 = vmax.f32 %v799, 1e-12
  %v814 = vmax.f32 %v805, 1e-12
  %v815 = vmax.f32 %v811, 1e-12
  %v816 = vrsqrt.pop %v812
  %v817 = vmul.f32 %v816, %v812
  %v818 = vmul.f32 %v817, %v816
  %v819 = vmul.f32 0.5, %v818
  %v820 = vsub.f32 1.5, %v819
  %v821 = vmul.f32 %v816, %v820
  %vm822 = vweird.f32 %v812
  %vm823 = vweird.f32 %v816
  %vm824 = vmor %vm822, %vm823
  %v825 = vsel %vm824, %v816, %v821
  %v826 = vrsqrt.pop %v813
  %v827 = vmul.f32 %v826, %v813
  %v828 = vmul.f32 %v827, %v826
  %v829 = vmul.f32 0.5, %v828
  %v830 = vsub.f32 1.5, %v829
  %v831 = vmul.f32 %v826, %v830
  %vm832 = vweird.f32 %v813
  %vm833 = vweird.f32 %v826
  %vm834 = vmor %vm832, %vm833
  %v835 = vsel %vm834, %v826, %v831
  %v836 = vrsqrt.pop %v814
  %v837 = vmul.f32 %v836, %v814
  %v838 = vmul.f32 %v837, %v836
  %v839 = vmul.f32 0.5, %v838
  %v840 = vsub.f32 1.5, %v839
  %v841 = vmul.f32 %v836, %v840
  %vm842 = vweird.f32 %v814
  %vm843 = vweird.f32 %v836
  %vm844 = vmor %vm842, %vm843
  %v845 = vsel %vm844, %v836, %v841
  %v846 = vrsqrt.pop %v815
  %v847 = vmul.f32 %v846, %v815
  %v848 = vmul.f32 %v847, %v846
  %v849 = vmul.f32 0.5, %v848
  %v850 = vsub.f32 1.5, %v849
  %v851 = vmul.f32 %v846, %v850
  %vm852 = vweird.f32 %v815
  %vm853 = vweird.f32 %v846
  %vm854 = vmor %vm852, %vm853
  %v855 = vsel %vm854, %v846, %v851
  %v856 = vmul.f32 %v793, %v825
  %v857 = vmul.f32 %v799, %v835
  %v858 = vmul.f32 %v805, %v845
  %v859 = vmul.f32 %v811, %v855
  %v860 = vmax.f32 %v856, 1e-06
  %v861 = vmax.f32 %v857, 1e-06
  %v862 = vmax.f32 %v858, 1e-06
  %v863 = vmax.f32 %v859, 1e-06
  %v864 = vmin.f32 %v860, 0.99999
  %v865 = vmin.f32 %v861, 0.99999
  %v866 = vmin.f32 %v862, 0.99999
  %v867 = vmin.f32 %v863, 0.99999
  %v868 = vmax.f32 %v864, -0.99999
  %v869 = vmax.f32 %v865, -0.99999
  %v870 = vmax.f32 %v866, -0.99999
  %v871 = vmax.f32 %v867, -0.99999
  %v872 = vmin.f32 %v868, 0.99999
  %v873 = vmin.f32 %v869, 0.99999
  %v874 = vmin.f32 %v870, 0.99999
  %v875 = vmin.f32 %v871, 0.99999
  %v876 = vadd.f32 %v872, 1.0
  %v877 = vadd.f32 %v873, 1.0
  %v878 = vadd.f32 %v874, 1.0
  %v879 = vadd.f32 %v875, 1.0
  %v880 = vsub.f32 1.0, %v872
  %v881 = vsub.f32 1.0, %v873
  %v882 = vsub.f32 1.0, %v874
  %v883 = vsub.f32 1.0, %v875
  %v884 = vrcp.pop %v880
  %v885 = vmul.f32 %v880, %v884
  %v886 = vsub.f32 1.0, %v885
  %v887 = vmul.f32 %v884, %v886
  %v888 = vadd.f32 %v884, %v887
  %vm889 = vweird.f32 %v880
  %vm890 = vweird.f32 %v884
  %vm891 = vmor %vm889, %vm890
  %v892 = vsel %vm891, %v884, %v888
  %v893 = vand.u32 2147483647, %v880
  %vm894 = vcmp.eq.f32.partialorder %v893, 8.507059e+37
  %v895 = vand.u32 %v880, 2147483648
  %v896 = vor.u32 1.1754944e-38, %v895
  %v897 = vsel %vm894, %v896, %v892
  %v898 = vmul.f32 %v876, %v897
  %v899 = vrcp.pop %v881
  %v900 = vmul.f32 %v881, %v899
  %v901 = vsub.f32 1.0, %v900
  %v902 = vmul.f32 %v899, %v901
  %v903 = vadd.f32 %v899, %v902
  %vm904 = vweird.f32 %v881
  %vm905 = vweird.f32 %v899
  %vm906 = vmor %vm904, %vm905
  %v907 = vsel %vm906, %v899, %v903
  %v908 = vand.u32 2147483647, %v881
  %vm909 = vcmp.eq.f32.partialorder %v908, 8.507059e+37
  %v910 = vand.u32 %v881, 2147483648
  %v911 = vor.u32 1.1754944e-38, %v910
  %v912 = vsel %vm909, %v911, %v907
  %v913 = vmul.f32 %v877, %v912
  %v914 = vrcp.pop %v882
  %v915 = vmul.f32 %v882, %v914
  %v916 = vsub.f32 1.0, %v915
  %v917 = vmul.f32 %v914, %v916
  %v918 = vadd.f32 %v914, %v917
  %vm919 = vweird.f32 %v882
  %vm920 = vweird.f32 %v914
  %vm921 = vmor %vm919, %vm920
  %v922 = vsel %vm921, %v914, %v918
  %v923 = vand.u32 2147483647, %v882
  %vm924 = vcmp.eq.f32.partialorder %v923, 8.507059e+37
  %v925 = vand.u32 %v882, 2147483648
  %v926 = vor.u32 1.1754944e-38, %v925
  %v927 = vsel %vm924, %v926, %v922
  %v928 = vmul.f32 %v878, %v927
  %v929 = vrcp.pop %v883
  %v930 = vmul.f32 %v883, %v929
  %v931 = vsub.f32 1.0, %v930
  %v932 = vmul.f32 %v929, %v931
  %v933 = vadd.f32 %v929, %v932
  %vm934 = vweird.f32 %v883
  %vm935 = vweird.f32 %v929
  %vm936 = vmor %vm934, %vm935
  %v937 = vsel %vm936, %v929, %v933
  %v938 = vand.u32 2147483647, %v883
  %vm939 = vcmp.eq.f32.partialorder %v938, 8.507059e+37
  %v940 = vand.u32 %v883, 2147483648
  %v941 = vor.u32 1.1754944e-38, %v940
  %v942 = vsel %vm939, %v941, %v937
  %v943 = vmul.f32 %v879, %v942
  %v944 = vlog2.pop %v898
  %v945 = vmul.f32 %v944, 0.6931472
  %v946 = vlog2.pop %v913
  %v947 = vmul.f32 %v946, 0.6931472
  %v948 = vlog2.pop %v928
  %v949 = vmul.f32 %v948, 0.6931472
  %v950 = vlog2.pop %v943
  %v951 = vmul.f32 %v950, 0.6931472
  %v952 = vmul.f32 %v945, 0.5
  %v953 = vmul.f32 %v947, 0.5
  %v954 = vmul.f32 %v949, 0.5
  %v955 = vmul.f32 %v951, 0.5
  %v956 = vmul.f32 %v952, %v825
  %v957 = vmul.f32 %v953, %v835
  %v958 = vmul.f32 %v954, %v845
  %v959 = vmul.f32 %v955, %v855
  %v960 = vmul.f32 %v780, %v956
  %v961 = vmul.f32 %v781, %v957
  %v962 = vmul.f32 %v782, %v958
  %v963 = vmul.f32 %v783, %v959
  %v964 = vmax.f32 %v960, 0.0
  %v965 = vmax.f32 %v961, 0.0
  %v966 = vmax.f32 %v962, 0.0
  %v967 = vmax.f32 %v963, 0.0
  %968 = vst [vmem:[%s8] sm:$0xff] %v964
  %969 = vst [vmem:[%s8 + $0x8] sm:$0xff] %v965
  %970 = vst [vmem:[%s8 + $0x10] sm:$0xff] %v966
  %971 = vst [vmem:[%s8 + $0x18] sm:$0xff] %v967
  // Predicated region
  $region34: #{_lambda_.14} parent=0 // pred_check
    _
  $region35: #{_lambda_.14} parent=0 // pred_check_branch
    %973 = sbr.rel (0) target = $region37
  $region36: #{_lambda_.14} parent=0 // pred_region
    _
  $region37: #{_lambda_.14} parent=0 // pred_fallthru
    _
  // Predicated region
  $region38: #{_lambda_.14} parent=0 // pred_check
    _
  $region39: #{_lambda_.14} parent=0 // pred_check_branch
    %975 = sbr.rel (0) target = $region41
  $region40: #{_lambda_.14} parent=0 // pred_region
    _
  $region41: #{_lambda_.14} parent=0 // pred_fallthru
    _

// kernel: _lambda_.15
$region0: #{_lambda_.15}
  #allocation0 [shape = 'u32[]', space=smem, size = 0x4, offset = 0x4, fixed_abs, tag = 'smem constant byte address 0x4 - core index']
  #allocation1 [shape = 'u32[72,128]{1,0:T(1,128)}', space=vmem, size = 0x9000, scoped, tag = 'internal scratch']
  %s0 = inlined_call_operand.vmem [shape: f32[16,72], index: 0, kind: input, shape index: {}]
  %s1 = inlined_call_operand.vmem [shape: f32[72,128], index: 1, kind: input, shape index: {}]
  %s2 = inlined_call_operand.vmem [shape: f32[16,1], index: 2, kind: input, shape index: {}, may-alias: {2,4}]
  %s3 = inlined_call_operand.vmem [shape: f32[16,1], index: 3, kind: input, shape index: {}]
  %s4 = inlined_call_operand.vmem [shape: f32[16,1], index: 4, kind: input, shape index: {}, may-alias: {2,4}]
  %s5 = inlined_call_operand.vmem [shape: f32[16,128], index: 5, kind: output, shape index: {}]
  %s6 = sld [smem:[#allocation0]]
  $region30: #{_lambda_.15} parent=0
    _
  %s8 = ssub.s32 1, %s6
  %s9 = scalar_select 0, %s8, %s6
  // Predicated region
  $region2: #{_lambda_.15} parent=0 // pred_check
    _
  $region3: #{_lambda_.15} parent=0 // pred_check_branch
    %11 = sbr.rel (0) target = $region5
  $region4: #{_lambda_.15} parent=0 // pred_region
    _
  $region5: #{_lambda_.15} parent=0 // pred_fallthru
    _
  // Predicated region
  $region6: #{_lambda_.15} parent=0 // pred_check
    _
  $region7: #{_lambda_.15} parent=0 // pred_check_branch
    %13 = sbr.rel (0) target = $region9
  $region8: #{_lambda_.15} parent=0 // pred_region
    _
  $region9: #{_lambda_.15} parent=0 // pred_fallthru
    _
  // Predicated region
  $region10: #{_lambda_.15} parent=0 // pred_check
    _
  $region11: #{_lambda_.15} parent=0 // pred_check_branch
    %15 = sbr.rel (0) target = $region13
  $region12: #{_lambda_.15} parent=0 // pred_region
    _
  $region13: #{_lambda_.15} parent=0 // pred_fallthru
    _
  // Predicated region
  $region14: #{_lambda_.15} parent=0 // pred_check
    _
  $region15: #{_lambda_.15} parent=0 // pred_check_branch
    %17 = sbr.rel (0) target = $region17
  $region16: #{_lambda_.15} parent=0 // pred_region
    _
  $region17: #{_lambda_.15} parent=0 // pred_fallthru
    _
  // Predicated region
  $region18: #{_lambda_.15} parent=0 // pred_check
    _
  $region19: #{_lambda_.15} parent=0 // pred_check_branch
    %19 = sbr.rel (0) target = $region21
  $region20: #{_lambda_.15} parent=0 // pred_region
    _
  $region21: #{_lambda_.15} parent=0 // pred_fallthru
    _
  %v20 = vld [vmem:[%s0] sm:$0xff]
  %v21 = vld [vmem:[%s0 + $0x8] sm:$0xff]
  %v22 = vld [vmem:[%s1] sm:$0xff]
  %v23 = vld [vmem:[%s1 + $0x8] sm:$0xff]
  %v24 = vld [vmem:[%s1 + $0x10] sm:$0xff]
  %v25 = vld [vmem:[%s1 + $0x18] sm:$0xff]
  %v26 = vld [vmem:[%s1 + $0x20] sm:$0xff]
  %v27 = vld [vmem:[%s1 + $0x28] sm:$0xff]
  %v28 = vld [vmem:[%s1 + $0x30] sm:$0xff]
  %v29 = vld [vmem:[%s1 + $0x38] sm:$0xff]
  %v30 = vld [vmem:[%s1 + $0x40] sm:$0xff]
  %v31 = vld [vmem:[%s2] sm:$0xff]
  %v32 = vld [vmem:[%s2 + $0x8] sm:$0xff]
  %34 = vset.pattern.permute.xlu0 0
  %35 = vperm.xlu0 %34, %v31
  %v36 = vpop.permute.xlu0 %35
  %39 = vset.pattern.permute.xlu0 0
  %40 = vperm.xlu0 %39, %v32
  %v41 = vpop.permute.xlu0 %40
  %vm43 = vcmask 588800
  %v45 = vsel %vm43, %v20, 0
  %v48 = vsel %vm43, %v21, 0
  %50 = vmatpush.msra.mxu0 0.0
  %51 = vmatpush.msra.mxu0 0.0
  %52 = vmatpush.msra.mxu0 0.0
  %53 = vmatpush.msra.mxu0 0.0
  %54 = vmatpush.msra.mxu0 0.0
  %55 = vmatpush.msra.mxu0 0.0
  %56 = vmatpush.msra.mxu0 0.0
  %57 = vmatpush.msra.mxu0 %v30
  %58 = vmatpush.msra.mxu0 %v29
  %59 = vmatpush.msra.mxu0 %v28
  %60 = vmatpush.msra.mxu0 %v27
  %61 = vmatpush.msra.mxu0 %v26
  %62 = vmatpush.msra.mxu0 %v25
  %63 = vmatpush.msra.mxu0 %v24
  %64 = vmatpush.msra.mxu0 %v23
  %65 = vmatpush.msra.mxu0 %v22
  %66 = vmatmul.f32.gmra.mxu0 %v45
  %v67 = vpop.f32.mrf.mxu0
  %v68 = vadd.f32 %v36, %v67
  %69 = vmatmul.f32.gmra.mxu0 %v48
  %v70 = vpop.f32.mrf.mxu0
  %v71 = vadd.f32 %v41, %v70
  %72 = vdwg.mxu0
  %v73 = vld [vmem:[%s3] sm:$0xff]
  %v74 = vld [vmem:[%s3 + $0x8] sm:$0xff]
  %v75 = vld [vmem:[%s4] sm:$0xff]
  %v76 = vld [vmem:[%s4 + $0x8] sm:$0xff]
  %77 = vadd.xlane.f32.xlu0 %v68
  %v78 = vpop.xlane.xlu0 %77
  %79 = vadd.xlane.f32.xlu0 %v71
  %v80 = vpop.xlane.xlu0 %79
  %v81 = vrcp.pop 128.0
  %v82 = vmul.f32 128.0, %v81
  %v83 = vsub.f32 1.0, %v82
  %v84 = vmul.f32 %v81, %v83
  %v85 = vadd.f32 %v81, %v84
  %vm86 = vweird.f32 %v81
  %v87 = vsel %vm86, %v81, %v85
  %v88 = vmul.f32 %v78, %v87
  %v89 = vmul.f32 %v80, %v87
  %v90 = vsub.f32 %v68, %v88
  %v91 = vsub.f32 %v71, %v89
  %v92 = vmul.f32 %v90, %v90
  %v93 = vmul.f32 %v91, %v91
  %94 = vadd.xlane.f32.xlu0 %v92
  %v95 = vpop.xlane.xlu0 %94
  %96 = vadd.xlane.f32.xlu0 %v93
  %v97 = vpop.xlane.xlu0 %96
  %v98 = vmul.f32 %v95, %v87
  %v99 = vmul.f32 %v97, %v87
  %v100 = vadd.f32 %v98, 1e-05
  %v101 = vadd.f32 %v99, 1e-05
  %v102 = vrsqrt.pop %v100
  %v103 = vmul.f32 %v102, %v100
  %v104 = vmul.f32 %v103, %v102
  %v105 = vmul.f32 0.5, %v104
  %v106 = vsub.f32 1.5, %v105
  %v107 = vmul.f32 %v102, %v106
  %vm108 = vweird.f32 %v100
  %vm109 = vweird.f32 %v102
  %vm110 = vmor %vm108, %vm109
  %v111 = vsel %vm110, %v102, %v107
  %v112 = vrsqrt.pop %v101
  %v113 = vmul.f32 %v112, %v101
  %v114 = vmul.f32 %v113, %v112
  %v115 = vmul.f32 0.5, %v114
  %v116 = vsub.f32 1.5, %v115
  %v117 = vmul.f32 %v112, %v116
  %vm118 = vweird.f32 %v101
  %vm119 = vweird.f32 %v112
  %vm120 = vmor %vm118, %vm119
  %v121 = vsel %vm120, %v112, %v117
  %v122 = vmul.f32 %v73, %v111
  %v123 = vmul.f32 %v74, %v121
  %125 = vset.pattern.permute.xlu0 0
  %126 = vperm.xlu0 %125, %v122
  %v127 = vpop.permute.xlu0 %126
  %130 = vset.pattern.permute.xlu0 0
  %131 = vperm.xlu0 %130, %v123
  %v132 = vpop.permute.xlu0 %131
  %v134 = vmul.f32 %v68, %v127
  %v135 = vmul.f32 %v71, %v132
  %v136 = vmul.f32 %v88, %v122
  %v137 = vmul.f32 %v89, %v123
  %v138 = vsub.f32 %v75, %v136
  %v139 = vsub.f32 %v76, %v137
  %141 = vset.pattern.permute.xlu0 0
  %142 = vperm.xlu0 %141, %v138
  %v143 = vpop.permute.xlu0 %142
  %146 = vset.pattern.permute.xlu0 0
  %147 = vperm.xlu0 %146, %v139
  %v148 = vpop.permute.xlu0 %147
  %v150 = vadd.f32 %v134, %v143
  %v151 = vadd.f32 %v135, %v148
  %v152 = vmax.f32 %v150, 0.0
  %v153 = vmax.f32 %v151, 0.0
  %154 = vst [vmem:[%s5] sm:$0xff] %v152
  %155 = vst [vmem:[%s5 + $0x8] sm:$0xff] %v153
  // Predicated region
  $region22: #{_lambda_.15} parent=0 // pred_check
    _
  $region23: #{_lambda_.15} parent=0 // pred_check_branch
    %157 = sbr.rel (0) target = $region25
  $region24: #{_lambda_.15} parent=0 // pred_region
    _
  $region25: #{_lambda_.15} parent=0 // pred_fallthru
    _
  // Predicated region
  $region26: #{_lambda_.15} parent=0 // pred_check
    _
  $region27: #{_lambda_.15} parent=0 // pred_check_branch
    %159 = sbr.rel (0) target = $region29
  $region28: #{_lambda_.15} parent=0 // pred_region
    _
  $region29: #{_lambda_.15} parent=0 // pred_fallthru
    _

// kernel: _lambda_.17
$region0: #{_lambda_.17}
  #allocation0 [shape = 'u32[]', space=smem, size = 0x4, offset = 0x4, fixed_abs, tag = 'smem constant byte address 0x4 - core index']
  #allocation1 [shape = 'u32[72,128]{1,0:T(1,128)}', space=vmem, size = 0x9000, scoped, tag = 'internal scratch']
  %s0 = inlined_call_operand.vmem [shape: f32[16,128], index: 0, kind: input, shape index: {}]
  %s1 = inlined_call_operand.vmem [shape: f32[128,2], index: 1, kind: input, shape index: {}]
  %s2 = inlined_call_operand.vmem [shape: f32[10,16], index: 2, kind: input, shape index: {}]
  %s3 = inlined_call_operand.vmem [shape: f32[10,1], index: 3, kind: input, shape index: {}]
  %s4 = inlined_call_operand.vmem [shape: f32[10,2], index: 4, kind: output, shape index: {}]
  %s5 = sld [smem:[#allocation0]]
  $region26: #{_lambda_.17} parent=0
    _
  %s7 = ssub.s32 1, %s5
  %s8 = scalar_select 0, %s7, %s5
  // Predicated region
  $region2: #{_lambda_.17} parent=0 // pred_check
    _
  $region3: #{_lambda_.17} parent=0 // pred_check_branch
    %10 = sbr.rel (0) target = $region5
  $region4: #{_lambda_.17} parent=0 // pred_region
    _
  $region5: #{_lambda_.17} parent=0 // pred_fallthru
    _
  // Predicated region
  $region6: #{_lambda_.17} parent=0 // pred_check
    _
  $region7: #{_lambda_.17} parent=0 // pred_check_branch
    %12 = sbr.rel (0) target = $region9
  $region8: #{_lambda_.17} parent=0 // pred_region
    _
  $region9: #{_lambda_.17} parent=0 // pred_fallthru
    _
  // Predicated region
  $region10: #{_lambda_.17} parent=0 // pred_check
    _
  $region11: #{_lambda_.17} parent=0 // pred_check_branch
    %14 = sbr.rel (0) target = $region13
  $region12: #{_lambda_.17} parent=0 // pred_region
    _
  $region13: #{_lambda_.17} parent=0 // pred_fallthru
    _
  // Predicated region
  $region14: #{_lambda_.17} parent=0 // pred_check
    _
  $region15: #{_lambda_.17} parent=0 // pred_check_branch
    %16 = sbr.rel (0) target = $region17
  $region16: #{_lambda_.17} parent=0 // pred_region
    _
  $region17: #{_lambda_.17} parent=0 // pred_fallthru
    _
  %v17 = vld [vmem:[%s0] sm:$0xff]
  %v18 = vld [vmem:[%s0 + $0x8] sm:$0xff]
  %v19 = vld [vmem:[%s1] sm:$0xff]
  %v20 = vld [vmem:[%s1 + $0x8] sm:$0xff]
  %v21 = vld [vmem:[%s1 + $0x10] sm:$0xff]
  %v22 = vld [vmem:[%s1 + $0x18] sm:$0xff]
  %v23 = vld [vmem:[%s1 + $0x20] sm:$0xff]
  %v24 = vld [vmem:[%s1 + $0x28] sm:$0xff]
  %v25 = vld [vmem:[%s1 + $0x30] sm:$0xff]
  %v26 = vld [vmem:[%s1 + $0x38] sm:$0xff]
  %v27 = vld [vmem:[%s1 + $0x40] sm:$0xff]
  %v28 = vld [vmem:[%s1 + $0x48] sm:$0xff]
  %v29 = vld [vmem:[%s1 + $0x50] sm:$0xff]
  %v30 = vld [vmem:[%s1 + $0x58] sm:$0xff]
  %v31 = vld [vmem:[%s1 + $0x60] sm:$0xff]
  %v32 = vld [vmem:[%s1 + $0x68] sm:$0xff]
  %v33 = vld [vmem:[%s1 + $0x70] sm:$0xff]
  %v34 = vld [vmem:[%s1 + $0x78] sm:$0xff]
  %35 = vmatpush.msra.mxu0 %v34
  %36 = vmatpush.msra.mxu0 %v33
  %37 = vmatpush.msra.mxu0 %v32
  %38 = vmatpush.msra.mxu0 %v31
  %39 = vmatpush.msra.mxu0 %v30
  %40 = vmatpush.msra.mxu0 %v29
  %41 = vmatpush.msra.mxu0 %v28
  %42 = vmatpush.msra.mxu0 %v27
  %43 = vmatpush.msra.mxu0 %v26
  %44 = vmatpush.msra.mxu0 %v25
  %45 = vmatpush.msra.mxu0 %v24
  %46 = vmatpush.msra.mxu0 %v23
  %47 = vmatpush.msra.mxu0 %v22
  %48 = vmatpush.msra.mxu0 %v21
  %49 = vmatpush.msra.mxu0 %v20
  %50 = vmatpush.msra.mxu0 %v19
  %51 = vmatmul.f32.gmra.mxu0 %v17
  %v52 = vpop.f32.mrf.mxu0
  %v53 = vadd.f32 0.0, %v52
  %54 = vmatmul.f32.gmra.mxu0 %v18
  %v55 = vpop.f32.mrf.mxu0
  %v56 = vadd.f32 0.0, %v55
  %57 = vdwg.mxu0
  %v58 = vld [vmem:[%s2] sm:$0xff]
  %v59 = vld [vmem:[%s2 + $0x8] sm:$0x3]
  %v60 = vld [vmem:[%s3] sm:$0xff]
  %v61 = vld [vmem:[%s3 + $0x8] sm:$0x3]
  %63 = vset.pattern.permute.xlu0 0
  %64 = vperm.xlu0 %63, %v60
  %v65 = vpop.permute.xlu0 %64
  %68 = vset.pattern.permute.xlu0 0
  %69 = vperm.xlu0 %68, %v61
  %v70 = vpop.permute.xlu0 %69
  %vm72 = vcmask 130048
  %v74 = vsel %vm72, %v58, 0
  %v77 = vsel %vm72, %v59, 0
  %79 = vmatpush.msra.mxu0 0.0
  %80 = vmatpush.msra.mxu0 0.0
  %81 = vmatpush.msra.mxu0 0.0
  %82 = vmatpush.msra.mxu0 0.0
  %83 = vmatpush.msra.mxu0 0.0
  %84 = vmatpush.msra.mxu0 0.0
  %85 = vmatpush.msra.mxu0 0.0
  %86 = vmatpush.msra.mxu0 0.0
  %87 = vmatpush.msra.mxu0 0.0
  %88 = vmatpush.msra.mxu0 0.0
  %89 = vmatpush.msra.mxu0 0.0
  %90 = vmatpush.msra.mxu0 0.0
  %91 = vmatpush.msra.mxu0 0.0
  %92 = vmatpush.msra.mxu0 0.0
  %93 = vmatpush.msra.mxu0 %v56
  %94 = vmatpush.msra.mxu0 %v53
  %95 = vmatmul.f32.gmra.mxu0 %v74
  %v96 = vpop.f32.mrf.mxu0
  %v97 = vadd.f32 %v65, %v96
  %98 = vmatmul.f32.gmra.mxu0 %v77
  %v99 = vpop.f32.mrf.mxu0
  %v100 = vadd.f32 %v70, %v99
  %101 = vdwg.mxu0
  %v102 = vmul.f32 %v97, %v97
  %v103 = vmul.f32 %v100, %v100
  %vm104 = vcmask 15360
  %v105 = vsel %vm104, %v102, 0.0
  %vm106 = vcmask 9216
  %v107 = vsel %vm106, %v103, 0.0
  %v108 = vadd.f32 %v105, %v107
  %v109 = vrot.slane %v108, 4
  %v110 = vadd.f32 %v108, %v109
  %v111 = vrot.slane %v110, 2
  %v112 = vadd.f32 %v110, %v111
  %v113 = vrot.slane %v112, 1
  %v114 = vadd.f32 %v112, %v113
  %v115 = vmax.f32 %v114, 1e-12
  %v116 = vrsqrt.pop %v115
  %v117 = vmul.f32 %v116, %v115
  %v118 = vmul.f32 %v117, %v116
  %v119 = vmul.f32 0.5, %v118
  %v120 = vsub.f32 1.5, %v119
  %v121 = vmul.f32 %v116, %v120
  %vm122 = vweird.f32 %v115
  %vm123 = vweird.f32 %v116
  %vm124 = vmor %vm122, %vm123
  %v125 = vsel %vm124, %v116, %v121
  %v126 = vmul.f32 %v114, %v125
  %v127 = vmax.f32 %v126, 1e-06
  %v128 = vtanh.pop %v127
  %v129 = vmul.f32 %v128, %v125
  %v130 = vmul.f32 %v97, %v129
  %v131 = vmul.f32 %v100, %v129
  %132 = vst.msk [vmem:[%s4] sm:$0xff] %vm104, %v130
  %133 = vst.msk [vmem:[%s4 + $0x8] sm:$0x3] %vm106, %v131
  // Predicated region
  $region18: #{_lambda_.17} parent=0 // pred_check
    _
  $region19: #{_lambda_.17} parent=0 // pred_check_branch
    %135 = sbr.rel (0) target = $region21
  $region20: #{_lambda_.17} parent=0 // pred_region
    _
  $region21: #{_lambda_.17} parent=0 // pred_fallthru
    _
  // Predicated region
  $region22: #{_lambda_.17} parent=0 // pred_check
    _
  $region23: #{_lambda_.17} parent=0 // pred_check_branch
    %137 = sbr.rel (0) target = $region25
  $region24: #{_lambda_.17} parent=0 // pred_region
    _
  $region25: #{_lambda_.17} parent=0 // pred_fallthru
    _

// kernel: _lambda_.16
$region0: #{_lambda_.16}
  #allocation0 [shape = 'u32[]', space=smem, size = 0x4, offset = 0x4, fixed_abs, tag = 'smem constant byte address 0x4 - core index']
  #allocation1 [shape = 'u32[72,128]{1,0:T(1,128)}', space=vmem, size = 0x9000, scoped, tag = 'internal scratch']
  %s0 = inlined_call_operand.vmem [shape: f32[16,144], index: 0, kind: input, shape index: {}]
  %s1 = inlined_call_operand.vmem [shape: f32[144,128], index: 1, kind: input, shape index: {}]
  %s2 = inlined_call_operand.vmem [shape: f32[16,1], index: 2, kind: input, shape index: {}, may-alias: {2,4,7}]
  %s3 = inlined_call_operand.vmem [shape: f32[16,1], index: 3, kind: input, shape index: {}]
  %s4 = inlined_call_operand.vmem [shape: f32[16,1], index: 4, kind: input, shape index: {}, may-alias: {2,4,7}]
  %s5 = inlined_call_operand.vmem [shape: f32[16,8], index: 5, kind: input, shape index: {}]
  %s6 = inlined_call_operand.vmem [shape: f32[8,128], index: 6, kind: input, shape index: {}]
  %s7 = inlined_call_operand.vmem [shape: f32[16,1], index: 7, kind: input, shape index: {}, may-alias: {2,4,7}]
  %s8 = inlined_call_operand.vmem [shape: f32[16,128], index: 8, kind: output, shape index: {}]
  %s9 = sld [smem:[#allocation0]]
  $region42: #{_lambda_.16} parent=0
    _
  %s11 = ssub.s32 1, %s9
  %s12 = scalar_select 0, %s11, %s9
  // Predicated region
  $region2: #{_lambda_.16} parent=0 // pred_check
    _
  $region3: #{_lambda_.16} parent=0 // pred_check_branch
    %14 = sbr.rel (0) target = $region5
  $region4: #{_lambda_.16} parent=0 // pred_region
    _
  $region5: #{_lambda_.16} parent=0 // pred_fallthru
    _
  // Predicated region
  $region6: #{_lambda_.16} parent=0 // pred_check
    _
  $region7: #{_lambda_.16} parent=0 // pred_check_branch
    %16 = sbr.rel (0) target = $region9
  $region8: #{_lambda_.16} parent=0 // pred_region
    _
  $region9: #{_lambda_.16} parent=0 // pred_fallthru
    _
  // Predicated region
  $region10: #{_lambda_.16} parent=0 // pred_check
    _
  $region11: #{_lambda_.16} parent=0 // pred_check_branch
    %18 = sbr.rel (0) target = $region13
  $region12: #{_lambda_.16} parent=0 // pred_region
    _
  $region13: #{_lambda_.16} parent=0 // pred_fallthru
    _
  // Predicated region
  $region14: #{_lambda_.16} parent=0 // pred_check
    _
  $region15: #{_lambda_.16} parent=0 // pred_check_branch
    %20 = sbr.rel (0) target = $region17
  $region16: #{_lambda_.16} parent=0 // pred_region
    _
  $region17: #{_lambda_.16} parent=0 // pred_fallthru
    _
  // Predicated region
  $region18: #{_lambda_.16} parent=0 // pred_check
    _
  $region19: #{_lambda_.16} parent=0 // pred_check_branch
    %22 = sbr.rel (0) target = $region21
  $region20: #{_lambda_.16} parent=0 // pred_region
    _
  $region21: #{_lambda_.16} parent=0 // pred_fallthru
    _
  // Predicated region
  $region22: #{_lambda_.16} parent=0 // pred_check
    _
  $region23: #{_lambda_.16} parent=0 // pred_check_branch
    %24 = sbr.rel (0) target = $region25
  $region24: #{_lambda_.16} parent=0 // pred_region
    _
  $region25: #{_lambda_.16} parent=0 // pred_fallthru
    _
  // Predicated region
  $region26: #{_lambda_.16} parent=0 // pred_check
    _
  $region27: #{_lambda_.16} parent=0 // pred_check_branch
    %26 = sbr.rel (0) target = $region29
  $region28: #{_lambda_.16} parent=0 // pred_region
    _
  $region29: #{_lambda_.16} parent=0 // pred_fallthru
    _
  // Predicated region
  $region30: #{_lambda_.16} parent=0 // pred_check
    _
  $region31: #{_lambda_.16} parent=0 // pred_check_branch
    %28 = sbr.rel (0) target = $region33
  $region32: #{_lambda_.16} parent=0 // pred_region
    _
  $region33: #{_lambda_.16} parent=0 // pred_fallthru
    _
  %v29 = vld [vmem:[%s0] sm:$0xff]
  %v30 = vld [vmem:[%s0 + $0x8] sm:$0xff]
  %v31 = vld [vmem:[%s0 + $0x10] sm:$0xff]
  %v32 = vld [vmem:[%s0 + $0x18] sm:$0xff]
  %v33 = vld [vmem:[%s1] sm:$0xff]
  %v34 = vld [vmem:[%s1 + $0x8] sm:$0xff]
  %v35 = vld [vmem:[%s1 + $0x10] sm:$0xff]
  %v36 = vld [vmem:[%s1 + $0x18] sm:$0xff]
  %v37 = vld [vmem:[%s1 + $0x20] sm:$0xff]
  %v38 = vld [vmem:[%s1 + $0x28] sm:$0xff]
  %v39 = vld [vmem:[%s1 + $0x30] sm:$0xff]
  %v40 = vld [vmem:[%s1 + $0x38] sm:$0xff]
  %v41 = vld [vmem:[%s1 + $0x40] sm:$0xff]
  %v42 = vld [vmem:[%s1 + $0x48] sm:$0xff]
  %v43 = vld [vmem:[%s1 + $0x50] sm:$0xff]
  %v44 = vld [vmem:[%s1 + $0x58] sm:$0xff]
  %v45 = vld [vmem:[%s1 + $0x60] sm:$0xff]
  %v46 = vld [vmem:[%s1 + $0x68] sm:$0xff]
  %v47 = vld [vmem:[%s1 + $0x70] sm:$0xff]
  %v48 = vld [vmem:[%s1 + $0x78] sm:$0xff]
  %v49 = vld [vmem:[%s1 + $0x80] sm:$0xff]
  %v50 = vld [vmem:[%s1 + $0x88] sm:$0xff]
  %v51 = vld [vmem:[%s2] sm:$0xff]
  %v52 = vld [vmem:[%s2 + $0x8] sm:$0xff]
  %54 = vset.pattern.permute.xlu0 0
  %55 = vperm.xlu0 %54, %v51
  %v56 = vpop.permute.xlu0 %55
  %59 = vset.pattern.permute.xlu0 0
  %60 = vperm.xlu0 %59, %v52
  %v61 = vpop.permute.xlu0 %60
  %vm63 = vcmask 130048
  %v65 = vsel %vm63, %v30, 0
  %v68 = vsel %vm63, %v32, 0
  %70 = vmatpush.msra.mxu0 %v48
  %71 = vmatpush.msra.mxu0 %v47
  %72 = vmatpush.msra.mxu0 %v46
  %73 = vmatpush.msra.mxu0 %v45
  %74 = vmatpush.msra.mxu0 %v44
  %75 = vmatpush.msra.mxu0 %v43
  %76 = vmatpush.msra.mxu0 %v42
  %77 = vmatpush.msra.mxu0 %v41
  %78 = vmatpush.msra.mxu0 %v40
  %79 = vmatpush.msra.mxu0 %v39
  %80 = vmatpush.msra.mxu0 %v38
  %81 = vmatpush.msra.mxu0 %v37
  %82 = vmatpush.msra.mxu0 %v36
  %83 = vmatpush.msra.mxu0 %v35
  %84 = vmatpush.msra.mxu0 %v34
  %85 = vmatpush.msra.mxu0 %v33
  %86 = vmatmul.f32.gmra.mxu0 %v29
  %v87 = vpop.f32.mrf.mxu0
  %v88 = vadd.f32 %v56, %v87
  %89 = vmatmul.f32.gmra.mxu0 %v31
  %v90 = vpop.f32.mrf.mxu0
  %v91 = vadd.f32 %v61, %v90
  %92 = vdwg.mxu0
  %93 = vmatpush.msra.mxu0 0.0
  %94 = vmatpush.msra.mxu0 0.0
  %95 = vmatpush.msra.mxu0 0.0
  %96 = vmatpush.msra.mxu0 0.0
  %97 = vmatpush.msra.mxu0 0.0
  %98 = vmatpush.msra.mxu0 0.0
  %99 = vmatpush.msra.mxu0 0.0
  %100 = vmatpush.msra.mxu0 0.0
  %101 = vmatpush.msra.mxu0 0.0
  %102 = vmatpush.msra.mxu0 0.0
  %103 = vmatpush.msra.mxu0 0.0
  %104 = vmatpush.msra.mxu0 0.0
  %105 = vmatpush.msra.mxu0 0.0
  %106 = vmatpush.msra.mxu0 0.0
  %107 = vmatpush.msra.mxu0 %v50
  %108 = vmatpush.msra.mxu0 %v49
  %109 = vmatmul.f32.gmra.mxu0 %v65
  %v110 = vpop.f32.mrf.mxu0
  %v111 = vadd.f32 %v88, %v110
  %112 = vmatmul.f32.gmra.mxu0 %v68
  %v113 = vpop.f32.mrf.mxu0
  %v114 = vadd.f32 %v91, %v113
  %115 = vdwg.mxu0
  %v116 = vld [vmem:[%s3] sm:$0xff]
  %v117 = vld [vmem:[%s3 + $0x8] sm:$0xff]
  %v118 = vld [vmem:[%s4] sm:$0xff]
  %v119 = vld [vmem:[%s4 + $0x8] sm:$0xff]
  %120 = vadd.xlane.f32.xlu0 %v111
  %v121 = vpop.xlane.xlu0 %120
  %122 = vadd.xlane.f32.xlu0 %v114
  %v123 = vpop.xlane.xlu0 %122
  %v124 = vrcp.pop 128.0
  %v125 = vmul.f32 128.0, %v124
  %v126 = vsub.f32 1.0, %v125
  %v127 = vmul.f32 %v124, %v126
  %v128 = vadd.f32 %v124, %v127
  %vm129 = vweird.f32 %v124
  %v130 = vsel %vm129, %v124, %v128
  %v131 = vmul.f32 %v121, %v130
  %v132 = vmul.f32 %v123, %v130
  %v133 = vsub.f32 %v111, %v131
  %v134 = vsub.f32 %v114, %v132
  %v135 = vmul.f32 %v133, %v133
  %v136 = vmul.f32 %v134, %v134
  %137 = vadd.xlane.f32.xlu0 %v135
  %v138 = vpop.xlane.xlu0 %137
  %139 = vadd.xlane.f32.xlu0 %v136
  %v140 = vpop.xlane.xlu0 %139
  %v141 = vmul.f32 %v138, %v130
  %v142 = vmul.f32 %v140, %v130
  %v143 = vadd.f32 %v141, 1e-05
  %v144 = vadd.f32 %v142, 1e-05
  %v145 = vrsqrt.pop %v143
  %v146 = vmul.f32 %v145, %v143
  %v147 = vmul.f32 %v146, %v145
  %v148 = vmul.f32 0.5, %v147
  %v149 = vsub.f32 1.5, %v148
  %v150 = vmul.f32 %v145, %v149
  %vm151 = vweird.f32 %v143
  %vm152 = vweird.f32 %v145
  %vm153 = vmor %vm151, %vm152
  %v154 = vsel %vm153, %v145, %v150
  %v155 = vrsqrt.pop %v144
  %v156 = vmul.f32 %v155, %v144
  %v157 = vmul.f32 %v156, %v155
  %v158 = vmul.f32 0.5, %v157
  %v159 = vsub.f32 1.5, %v158
  %v160 = vmul.f32 %v155, %v159
  %vm161 = vweird.f32 %v144
  %vm162 = vweird.f32 %v155
  %vm163 = vmor %vm161, %vm162
  %v164 = vsel %vm163, %v155, %v160
  %v165 = vmul.f32 %v116, %v154
  %v166 = vmul.f32 %v117, %v164
  %168 = vset.pattern.permute.xlu0 0
  %169 = vperm.xlu0 %168, %v165
  %v170 = vpop.permute.xlu0 %169
  %173 = vset.pattern.permute.xlu0 0
  %174 = vperm.xlu0 %173, %v166
  %v175 = vpop.permute.xlu0 %174
  %v177 = vmul.f32 %v111, %v170
  %v178 = vmul.f32 %v114, %v175
  %v179 = vmul.f32 %v131, %v165
  %v180 = vmul.f32 %v132, %v166
  %v181 = vsub.f32 %v118, %v179
  %v182 = vsub.f32 %v119, %v180
  %184 = vset.pattern.permute.xlu0 0
  %185 = vperm.xlu0 %184, %v181
  %v186 = vpop.permute.xlu0 %185
  %189 = vset.pattern.permute.xlu0 0
  %190 = vperm.xlu0 %189, %v182
  %v191 = vpop.permute.xlu0 %190
  %v193 = vadd.f32 %v177, %v186
  %v194 = vadd.f32 %v178, %v191
  %v195 = vld [vmem:[%s5] sm:$0xff]
  %v196 = vld [vmem:[%s5 + $0x8] sm:$0xff]
  %v197 = vld [vmem:[%s6] sm:$0xff]
  %v198 = vld [vmem:[%s7] sm:$0xff]
  %v199 = vld [vmem:[%s7 + $0x8] sm:$0xff]
  %201 = vset.pattern.permute.xlu0 0
  %202 = vperm.xlu0 %201, %v198
  %v203 = vpop.permute.xlu0 %202
  %206 = vset.pattern.permute.xlu0 0
  %207 = vperm.xlu0 %206, %v199
  %v208 = vpop.permute.xlu0 %207
  %vm210 = vcmask 64512
  %v212 = vsel %vm210, %v195, 0
  %v215 = vsel %vm210, %v196, 0
  %217 = vmatpush.msra.mxu0 0.0
  %218 = vmatpush.msra.mxu0 0.0
  %219 = vmatpush.msra.mxu0 0.0
  %220 = vmatpush.msra.mxu0 0.0
  %221 = vmatpush.msra.mxu0 0.0
  %222 = vmatpush.msra.mxu0 0.0
  %223 = vmatpush.msra.mxu0 0.0
  %224 = vmatpush.msra.mxu0 0.0
  %225 = vmatpush.msra.mxu0 0.0
  %226 = vmatpush.msra.mxu0 0.0
  %227 = vmatpush.msra.mxu0 0.0
  %228 = vmatpush.msra.mxu0 0.0
  %229 = vmatpush.msra.mxu0 0.0
  %230 = vmatpush.msra.mxu0 0.0
  %231 = vmatpush.msra.mxu0 0.0
  %232 = vmatpush.msra.mxu0 %v197
  %233 = vmatmul.f32.gmra.mxu0 %v212
  %v234 = vpop.f32.mrf.mxu0
  %v235 = vadd.f32 %v203, %v234
  %236 = vmatmul.f32.gmra.mxu0 %v215
  %v237 = vpop.f32.mrf.mxu0
  %v238 = vadd.f32 %v208, %v237
  %239 = vdwg.mxu0
  %v240 = vmul.f32 %v235, %v235
  %v241 = vmul.f32 %v238, %v238
  %v242 = vadd.f32 %v240, %v241
  %v243 = vrot.slane %v242, 4
  %v244 = vadd.f32 %v242, %v243
  %v245 = vrot.slane %v244, 2
  %v246 = vadd.f32 %v244, %v245
  %v247 = vrot.slane %v246, 1
  %v248 = vadd.f32 %v246, %v247
  %v249 = vmax.f32 %v248, 1e-12
  %v250 = vrsqrt.pop %v249
  %v251 = vmul.f32 %v250, %v249
  %v252 = vmul.f32 %v251, %v250
  %v253 = vmul.f32 0.5, %v252
  %v254 = vsub.f32 1.5, %v253
  %v255 = vmul.f32 %v250, %v254
  %vm256 = vweird.f32 %v249
  %vm257 = vweird.f32 %v250
  %vm258 = vmor %vm256, %vm257
  %v259 = vsel %vm258, %v250, %v255
  %v260 = vmul.f32 %v248, %v259
  %v261 = vmax.f32 %v260, 1e-06
  %v262 = vtanh.pop %v261
  %v263 = vmul.f32 %v262, %v259
  %v264 = vmul.f32 %v235, %v263
  %v265 = vmul.f32 %v238, %v263
  %v266 = vmul.f32 %v193, %v193
  %v267 = vmul.f32 %v194, %v194
  %v268 = vadd.f32 %v266, %v267
  %v269 = vrot.slane %v268, 4
  %v270 = vadd.f32 %v268, %v269
  %v271 = vrot.slane %v270, 2
  %v272 = vadd.f32 %v270, %v271
  %v273 = vrot.slane %v272, 1
  %v274 = vadd.f32 %v272, %v273
  %v275 = vmax.f32 %v274, 1e-12
  %v276 = vrsqrt.pop %v275
  %v277 = vmul.f32 %v276, %v275
  %v278 = vmul.f32 %v277, %v276
  %v279 = vmul.f32 0.5, %v278
  %v280 = vsub.f32 1.5, %v279
  %v281 = vmul.f32 %v276, %v280
  %vm282 = vweird.f32 %v275
  %vm283 = vweird.f32 %v276
  %vm284 = vmor %vm282, %vm283
  %v285 = vsel %vm284, %v276, %v281
  %v286 = vmul.f32 %v274, %v285
  %v287 = vmax.f32 %v286, 1e-06
  %v288 = vtanh.pop %v287
  %v289 = vmul.f32 %v288, %v285
  %v290 = vmul.f32 %v193, %v289
  %v291 = vmul.f32 %v194, %v289
  %v292 = vmul.f32 %v264, %v290
  %v293 = vmul.f32 %v265, %v291
  %v294 = vadd.f32 %v292, %v293
  %v295 = vrot.slane %v294, 4
  %v296 = vadd.f32 %v294, %v295
  %v297 = vrot.slane %v296, 2
  %v298 = vadd.f32 %v296, %v297
  %v299 = vrot.slane %v298, 1
  %v300 = vadd.f32 %v298, %v299
  %v301 = vmul.f32 %v264, %v264
  %v302 = vmul.f32 %v265, %v265
  %v303 = vadd.f32 %v301, %v302
  %v304 = vrot.slane %v303, 4
  %v305 = vadd.f32 %v303, %v304
  %v306 = vrot.slane %v305, 2
  %v307 = vadd.f32 %v305, %v306
  %v308 = vrot.slane %v307, 1
  %v309 = vadd.f32 %v307, %v308
  %v310 = vmul.f32 %v290, %v290
  %v311 = vmul.f32 %v291, %v291
  %v312 = vadd.f32 %v310, %v311
  %v313 = vrot.slane %v312, 4
  %v314 = vadd.f32 %v312, %v313
  %v315 = vrot.slane %v314, 2
  %v316 = vadd.f32 %v314, %v315
  %v317 = vrot.slane %v316, 1
  %v318 = vadd.f32 %v316, %v317
  %v319 = vmul.f32 %v300, 2.0
  %v320 = vadd.f32 %v319, 1.0
  %v321 = vadd.f32 %v320, %v318
  %v322 = vmul.f32 %v321, %v264
  %v323 = vmul.f32 %v321, %v265
  %v324 = vsub.f32 1.0, %v309
  %v325 = vmul.f32 %v324, %v290
  %v326 = vmul.f32 %v324, %v291
  %v327 = vadd.f32 %v322, %v325
  %v328 = vadd.f32 %v323, %v326
  %v329 = vmul.f32 %v309, %v318
  %v330 = vadd.f32 %v320, %v329
  %v331 = vmax.f32 %v330, 1e-06
  %v332 = vrcp.pop %v331
  %v333 = vmul.f32 %v331, %v332
  %v334 = vsub.f32 1.0, %v333
  %v335 = vmul.f32 %v332, %v334
  %v336 = vadd.f32 %v332, %v335
  %vm337 = vweird.f32 %v331
  %vm338 = vweird.f32 %v332
  %vm339 = vmor %vm337, %vm338
  %v340 = vsel %vm339, %v332, %v336
  %v341 = vand.u32 2147483647, %v331
  %vm342 = vcmp.eq.f32.partialorder %v341, 8.507059e+37
  %v343 = vand.u32 %v331, 2147483648
  %v344 = vor.u32 1.1754944e-38, %v343
  %v345 = vsel %vm342, %v344, %v340
  %v346 = vmul.f32 %v327, %v345
  %v347 = vmul.f32 %v328, %v345
  %v348 = vmul.f32 %v346, %v346
  %v349 = vmul.f32 %v347, %v347
  %v350 = vadd.f32 %v348, %v349
  %v351 = vrot.slane %v350, 4
  %v352 = vadd.f32 %v350, %v351
  %v353 = vrot.slane %v352, 2
  %v354 = vadd.f32 %v352, %v353
  %v355 = vrot.slane %v354, 1
  %v356 = vadd.f32 %v354, %v355
  %v357 = vmax.f32 %v356, 1e-12
  %v358 = vrsqrt.pop %v357
  %v359 = vmul.f32 %v358, %v357
  %v360 = vmul.f32 %v359, %v358
  %v361 = vmul.f32 0.5, %v360
  %v362 = vsub.f32 1.5, %v361
  %v363 = vmul.f32 %v358, %v362
  %vm364 = vweird.f32 %v357
  %vm365 = vweird.f32 %v358
  %vm366 = vmor %vm364, %vm365
  %v367 = vsel %vm366, %v358, %v363
  %vm368 = vcmp.gt.f32.partialorder %v356, 0.99998
  %v369 = vmul.f32 %v367, 0.99999
  %v370 = vsel %vm368, %v369, 1.0
  %v371 = vmul.f32 %v346, %v370
  %v372 = vmul.f32 %v347, %v370
  %v373 = vmul.f32 %v371, %v371
  %v374 = vmul.f32 %v372, %v372
  %v375 = vadd.f32 %v373, %v374
  %v376 = vrot.slane %v375, 4
  %v377 = vadd.f32 %v375, %v376
  %v378 = vrot.slane %v377, 2
  %v379 = vadd.f32 %v377, %v378
  %v380 = vrot.slane %v379, 1
  %v381 = vadd.f32 %v379, %v380
  %v382 = vmax.f32 %v381, 1e-12
  %v383 = vrsqrt.pop %v382
  %v384 = vmul.f32 %v383, %v382
  %v385 = vmul.f32 %v384, %v383
  %v386 = vmul.f32 0.5, %v385
  %v387 = vsub.f32 1.5, %v386
  %v388 = vmul.f32 %v383, %v387
  %vm389 = vweird.f32 %v382
  %vm390 = vweird.f32 %v383
  %vm391 = vmor %vm389, %vm390
  %v392 = vsel %vm391, %v383, %v388
  %v393 = vmul.f32 %v381, %v392
  %v394 = vmax.f32 %v393, 1e-06
  %v395 = vmin.f32 %v394, 0.99999
  %v396 = vmax.f32 %v395, -0.99999
  %v397 = vmin.f32 %v396, 0.99999
  %v398 = vadd.f32 %v397, 1.0
  %v399 = vsub.f32 1.0, %v397
  %v400 = vrcp.pop %v399
  %v401 = vmul.f32 %v399, %v400
  %v402 = vsub.f32 1.0, %v401
  %v403 = vmul.f32 %v400, %v402
  %v404 = vadd.f32 %v400, %v403
  %vm405 = vweird.f32 %v399
  %vm406 = vweird.f32 %v400
  %vm407 = vmor %vm405, %vm406
  %v408 = vsel %vm407, %v400, %v404
  %v409 = vand.u32 2147483647, %v399
  %vm410 = vcmp.eq.f32.partialorder %v409, 8.507059e+37
  %v411 = vand.u32 %v399, 2147483648
  %v412 = vor.u32 1.1754944e-38, %v411
  %v413 = vsel %vm410, %v412, %v408
  %v414 = vmul.f32 %v398, %v413
  %v415 = vlog2.pop %v414
  %v416 = vmul.f32 %v415, 0.6931472
  %v417 = vmul.f32 %v416, 0.5
  %v418 = vmul.f32 %v417, %v392
  %v419 = vmul.f32 %v371, %v418
  %v420 = vmul.f32 %v372, %v418
  %v421 = vmax.f32 %v419, 0.0
  %v422 = vmax.f32 %v420, 0.0
  %423 = vst [vmem:[%s8] sm:$0xff] %v421
  %424 = vst [vmem:[%s8 + $0x8] sm:$0xff] %v422
  // Predicated region
  $region34: #{_lambda_.16} parent=0 // pred_check
    _
  $region35: #{_lambda_.16} parent=0 // pred_check_branch
    %426 = sbr.rel (0) target = $region37
  $region36: #{_lambda_.16} parent=0 // pred_region
    _
  $region37: #{_lambda_.16} parent=0 // pred_fallthru
    _
  // Predicated region
  $region38: #{_lambda_.16} parent=0 // pred_check
    _
  $region39: #{_lambda_.16} parent=0 // pred_check_branch
    %428 = sbr.rel (0) target = $region41
  $region40: #{_lambda_.16} parent=0 // pred_region
    _
  $region41: #{_lambda_.16} parent=0 // pred_fallthru
    _

</llo_original>
